<compile_context>
chip_gen: v5e
topology: v5e:2x2
jax: 0.10.0
libtpu: 0.0.40
codegen_flags: <defaults>
</compile_context>

<pallas_src>
import functools

import jax
import jax.numpy as jnp
from jax.experimental import pallas as pl
from jax.experimental.pallas import tpu as pltpu


LATENT_C = 64      # AutoEncoder1d latent channels (module hard-codes 64*256)
LATENT_T = 256     # AutoEncoder1d latent length
TEXT_DIM = 768     # roberta-base hidden size


# ---------------------------------------------------------------------------
# Fused Pallas kernel: signal encoder + flatten + signal MLP + text gather + text MLP
# ---------------------------------------------------------------------------

def _fused_forward_kernel(ids_ref,                       # (TB, 1)       int32
                          x_ref,                         # (T, TB, Cp)   bf16
                          enc_w_ref, enc_b_ref,          # (Cp, 64) bf16 / (1, 64) f32
                          w1_ref,                        # (T, HID, 64)  bf16
                          b1_ref,                        # (1, HID)      f32
                          head_w_ref, head_b_ref,        # (2*HID, 2P) bf16 / (1, 2P) f32
                          emb_ref,                       # (VOCAB, 768)  bf16
                          tw1_ref, tb1_ref,              # (768, HID) bf16 / (1, HID) f32
                          o_ref,                         # (TB, OUT_PAD) f32
                          *, TB, T, Cp, HID, P, VOCAB, OUT_PAD):
    # ---- signal path -------------------------------------------------------
    # 1) one patch-encode matmul over every (t, b) row + tanh bottleneck.
    #    The (T, TB, 64) latent lives only in VMEM/vregs.
    x2 = x_ref[...].reshape(T * TB, Cp)                          # bf16, leading-dim merge
    lat = jnp.tanh(
        jnp.dot(x2, enc_w_ref[...], preferred_element_type=jnp.float32)
        + enc_b_ref[...])                                        # (T*TB, 64) f32
    lat = lat.astype(jnp.bfloat16).reshape(T, TB, LATENT_C)      # (T, TB, 64)

    # 2) one batched contraction with W1 (channel-major flatten is baked into the
    #    wrapper-side W1 re-layout), then a leading-axis sum:
    #    h[b, j] = sum_{t, c} lat[t, b, c] * w1[t, j, c]
    psum = jnp.einsum('tbc,thc->tbh', lat, w1_ref[...],
                      preferred_element_type=jnp.float32)        # (T, TB, HID) f32
    h_sig = jnp.maximum(jnp.sum(psum, axis=0) + b1_ref[...], 0.0)   # (TB, HID)

    # ---- text path: one-hot MXU gather of the CLS embedding + text MLP fc1 --
    ids = ids_ref[...]                                           # (TB, 1) int32
    iota = jax.lax.broadcasted_iota(jnp.int32, (TB, VOCAB), 1)
    onehot = jnp.where(iota == ids, 1.0, 0.0).astype(jnp.bfloat16)   # (TB, VOCAB)
    cls = jnp.dot(onehot, emb_ref[...],
                  preferred_element_type=jnp.float32)            # exact gather, (TB, 768)
    h_txt = jnp.maximum(
        jnp.dot(cls.astype(jnp.bfloat16), tw1_ref[...],
                preferred_element_type=jnp.float32) + tb1_ref[...], 0.0)   # (TB, HID)

    # ---- fused projection-head tails: [h_sig | h_txt] @ blockdiag(w2, tw2) ---
    hh = jnp.concatenate([h_sig, h_txt], axis=1).astype(jnp.bfloat16)   # (TB, 2*HID)
    out2p = jnp.dot(hh, head_w_ref[...],
                    preferred_element_type=jnp.float32) + head_b_ref[...]   # (TB, 2P)

    # lane-dense output slab: [ signal_proj | text_proj | zero pad ] = 128 lanes
    pad = jnp.zeros((TB, OUT_PAD - 2 * P), jnp.float32)
    o_ref[...] = jnp.concatenate([out2p, pad], axis=1)


def contrastive_forward(params, signal, input_ids, *, patch):
    B, C, L = signal.shape
    T = L // patch
    assert L == patch * LATENT_T and T == LATENT_T, "signal length must be patch*256"
    Cp = C * patch
    hid = params["sig_b1"].shape[-1]
    P2 = params["head_b"].shape[-1]                    # 2 * projection_dim
    P = P2 // 2
    OUT_PAD = max(128, ((P2 + 127) // 128) * 128)      # lane-dense output width
    VOCAB = params["tok_emb"].shape[0]

    # Batch tiling: whole batch for small B (fewest grid steps on 1-TC chips); for
    # B >= 16 split into >=2 multiple-of-8 tiles so the "parallel" grid axis can
    # shard across v7x's two TensorCores while keeping the per-tile VMEM working
    # set (x/lat/psum intermediates) bounded.
    if B < 16:
        TB = B
    else:
        TB = 16 if B % 16 == 0 else 8
        assert B % TB == 0, "pad B to a multiple of 8 for large batches"
    nb = B // TB

    # time-major patch layout: x_r[t, b, c*patch + p] == signal[b, c, t*patch + p]
    # (tiny 8 KB transpose in the wrapper; the big latent transpose/flatten is gone)
    x_r = signal.astype(jnp.bfloat16).reshape(B, C, T, patch)
    x_r = jnp.transpose(x_r, (2, 0, 1, 3)).reshape(T, B, Cp)

    cls_ids = input_ids[:, 0].astype(jnp.int32).reshape(B, 1)

    kernel = functools.partial(_fused_forward_kernel,
                               TB=TB, T=T, Cp=Cp, HID=hid, P=P,
                               VOCAB=VOCAB, OUT_PAD=OUT_PAD)

    grid_spec = pltpu.PrefetchScalarGridSpec(
        num_scalar_prefetch=0,
        grid=(nb,),                                               # batch tiles only
        in_specs=[
            pl.BlockSpec((TB, 1), lambda i: (i, 0)),              # cls ids (VMEM)
            pl.BlockSpec((T, TB, Cp), lambda i: (0, i, 0)),       # x (time-major)
            pl.BlockSpec((Cp, LATENT_C), lambda i: (0, 0)),       # enc_w
            pl.BlockSpec((1, LATENT_C), lambda i: (0, 0)),        # enc_b
            pl.BlockSpec((T, hid, LATENT_C), lambda i: (0, 0, 0)),  # W1 (T, hid, 64)
            pl.BlockSpec((1, hid), lambda i: (0, 0)),             # b1
            pl.BlockSpec((2 * hid, P2), lambda i: (0, 0)),        # blockdiag(w2, tw2)
            pl.BlockSpec((1, P2), lambda i: (0, 0)),              # [b2 | tb2]
            pl.BlockSpec(params["tok_emb"].shape, lambda i: (0, 0)),  # tok_emb (VMEM-resident)
            pl.BlockSpec((TEXT_DIM, hid), lambda i: (0, 0)),      # txt_w1
            pl.BlockSpec((1, hid), lambda i: (0, 0)),             # txt_b1
        ],
        out_specs=pl.BlockSpec((TB, OUT_PAD), lambda i: (i, 0)),
    )

    out = pl.pallas_call(
        kernel,
        out_shape=jax.ShapeDtypeStruct((B, OUT_PAD), jnp.float32),
        grid_spec=grid_spec,
        compiler_params=pltpu.CompilerParams(
            # batch tiles shard across TensorCores on v7x; no reduction axis left.
            dimension_semantics=("parallel",),
            # working set incl. layout padding: W1 bufs ~4 MiB + x bufs ~2 MiB +
            # latent/psum intermediates ~2.5 MiB + tables/misc ~1 MiB  ->  ~10 MiB.
            vmem_limit_bytes=24 * 1024 * 1024,
        ),
    )(cls_ids, x_r,
      params["enc_w"], params["enc_b"],
      params["sig_w1_r"], params["sig_b1"],
      params["head_w"], params["head_b"],
      params["tok_emb"],
      params["txt_w1"], params["txt_b1"])

    signal_embedding = out[:, :P]
    text_embedding = out[:, P:P2]
    return signal_embedding, text_embedding


# ---------------------------------------------------------------------------
# Model wrapper
# ---------------------------------------------------------------------------

class ContrastiveModelPallas:
    def __init__(self, config, key):
        self.in_channels = config["ae_in_channels"]
        self.patch = config["ae_patch_size"]
        hid = config["mlp_hidden_dim"]
        proj = config["mlp_projection_dim"]
        Cp = self.in_channels * self.patch
        sig_flat = LATENT_C * LATENT_T                     # 64 * 256 = 16384

        keys = jax.random.split(key, 7)

        # signal patch-encoder stand-in (AutoEncoder1d.encode + TanhBottleneck)
        enc_w = jax.random.normal(keys[0], (Cp, LATENT_C), jnp.float32) * 0.1
        enc_b = jax.random.normal(keys[1], (1, LATENT_C), jnp.float32) * 0.01

        # signal_projection_head = MLP(64*256, hid, proj)
        sig_w1 = jax.random.normal(keys[2], (sig_flat, hid), jnp.float32) * 0.01
        # re-layout for the fused kernel: (64*256, hid) -> (256, hid, 64) such that
        # sig_w1_r[t, h, c] == sig_w1[c*256 + t, h]   (matches latent.view(B, -1),
        # and keeps 64 as the minor dim -> 2x instead of 4x lane padding in VMEM)
        sig_w1_r = sig_w1.reshape(LATENT_C, LATENT_T, hid).transpose(1, 2, 0)
        sig_w2 = jax.random.normal(keys[3], (hid, proj), jnp.float32) * 0.1

        # text_projection_head = MLP(768, hid, proj)
        txt_w1 = jax.random.normal(keys[4], (TEXT_DIM, hid), jnp.float32) * 0.02
        txt_w2 = jax.random.normal(keys[5], (hid, proj), jnp.float32) * 0.1

        # fused head tail: block-diagonal [sig_w2 0; 0 txt_w2], bias [b2 | tb2]
        head_w = jnp.zeros((2 * hid, 2 * proj), jnp.float32)
        head_w = head_w.at[:hid, :proj].set(sig_w2)
        head_w = head_w.at[hid:, proj:].set(txt_w2)
        head_b = jnp.zeros((1, 2 * proj), jnp.float32)

        # text embedding table (stand-in for roberta-base CLS output)
        self.vocab = 100
        tok_emb = jax.random.normal(keys[6], (self.vocab, TEXT_DIM), jnp.float32) * 0.05

        # bf16 for everything that feeds the MXU; biases stay f32 (f32 accumulation)
        self.params = {
            "enc_w":    enc_w.astype(jnp.bfloat16),
            "enc_b":    enc_b,
            "sig_w1_r": sig_w1_r.astype(jnp.bfloat16),
            "sig_b1":   jnp.zeros((1, hid), jnp.float32),
            "head_w":   head_w.astype(jnp.bfloat16),
            "head_b":   head_b,
            "txt_w1":   txt_w1.astype(jnp.bfloat16),
            "txt_b1":   jnp.zeros((1, hid), jnp.float32),
            "tok_emb":  tok_emb.astype(jnp.bfloat16),
        }

        self._forward = jax.jit(functools.partial(contrastive_forward, patch=self.patch))

    def __call__(self, signal, input_ids):
        return self._forward(self.params, signal, input_ids)


# ---------------------------------------------------------------------------
# Pure-JAX reference (mirrors the kernel math, incl. bf16 rounding points)
# ---------------------------------------------------------------------------

def reference_forward(params, signal, input_ids, patch):
    f32 = jnp.float32
    B, C, L = signal.shape
    T = L // patch
    hid = params["sig_b1"].shape[-1]
    P = params["head_b"].shape[-1] // 2

    x = signal.astype(jnp.bfloat16).astype(f32)
    x = x.reshape(B, C, T, patch).transpose(0, 2, 1, 3).reshape(B, T, C * patch)
    lat = jnp.tanh(x @ params["enc_w"].astype(f32) + params["enc_b"])      # (B, T, 64)
    lat = lat.astype(jnp.bfloat16).astype(f32)
    lat = jnp.transpose(lat, (0, 2, 1)).reshape(B, -1)                     # == .view(B, -1)
    # reconstruct the flat (64*256, hid) W1 from the kernel layout (T, hid, 64)
    w1 = params["sig_w1_r"].astype(f32).transpose(2, 0, 1).reshape(LATENT_C * T, hid)
    h = jnp.maximum(lat @ w1 + params["sig_b1"], 0.0)
    h = h.astype(jnp.bfloat16).astype(f32)
    sig = h @ params["head_w"].astype(f32)[:hid, :P] + params["head_b"][:, :P]

    cls = params["tok_emb"].astype(f32)[input_ids[:, 0]]
    th = jnp.maximum(cls @ params["txt_w1"].astype(f32) + params["txt_b1"], 0.0)
    th = th.astype(jnp.bfloat16).astype(f32)
    txt = th @ params["head_w"].astype(f32)[hid:, P:] + params["head_b"][:, P:]
    return sig, txt


# ---------------------------------------------------------------------------
# Main
# ---------------------------------------------------------------------------

if __name__ == "__main__":
    config = {
        "ae_in_channels": 2,
        "ae_channels": 32,
        "ae_multipliers": [1, 2],
        "ae_factors": [2],
        "ae_num_blocks": [2],
        "ae_patch_size": 4,
        "ae_resnet_groups": 4,
        "mlp_hidden_dim": 32,
        "mlp_projection_dim": 16,
    }

    key = jax.random.PRNGKey(0)
    k_model, k_sig, k_txt = jax.random.split(key, 3)

    model = ContrastiveModelPallas(config, k_model)

    B = 2
    L = config["ae_patch_size"] * LATENT_T                 # 1024
    signal = jax.random.normal(k_sig, (B, config["ae_in_channels"], L), jnp.float32)
    input_ids = jax.random.randint(k_txt, (B, 8), 0, model.vocab, dtype=jnp.int32)

    sig_emb, txt_emb = model(signal, input_ids)
    jax.block_until_ready((sig_emb, txt_emb))

    assert sig_emb.shape == (B, config["mlp_projection_dim"])
    assert txt_emb.shape == (B, config["mlp_projection_dim"])

    ref_sig, ref_txt = reference_forward(model.params, signal, input_ids,
                                         config["ae_patch_size"])
    assert float(jnp.max(jnp.abs(sig_emb - ref_sig))) < 2e-2
    assert float(jnp.max(jnp.abs(txt_emb - ref_txt))) < 2e-2

    print("KERNEL_OK")
</pallas_src>

<mosaic_0001>
module attributes {stable_mosaic.version = 11 : i64} {
  func.func @_fused_forward_kernel(%arg0: i32, %arg1: memref<2x1xi32, #tpu.memory_space<vmem>>, %arg2: memref<256x2x8xbf16, #tpu.memory_space<vmem>>, %arg3: memref<8x64xbf16, #tpu.memory_space<vmem>>, %arg4: memref<1x64xf32, #tpu.memory_space<vmem>>, %arg5: memref<256x32x64xbf16, #tpu.memory_space<vmem>>, %arg6: memref<1x32xf32, #tpu.memory_space<vmem>>, %arg7: memref<64x32xbf16, #tpu.memory_space<vmem>>, %arg8: memref<1x32xf32, #tpu.memory_space<vmem>>, %arg9: memref<100x768xbf16, #tpu.memory_space<vmem>>, %arg10: memref<768x32xbf16, #tpu.memory_space<vmem>>, %arg11: memref<1x32xf32, #tpu.memory_space<vmem>>, %arg12: memref<2x128xf32, #tpu.memory_space<vmem>>) attributes {dimension_semantics = [#tpu.dimension_semantics<parallel>], iteration_bounds = array<i64: 1>, scalar_prefetch = 0 : i64, scratch_operands = 0 : i64, tpu.core_type = #tpu.core_type<tc>, window_params = [{transform_indices = @transform_0, window_bounds = array<i64: 2, 1>}, {transform_indices = @transform_1, window_bounds = array<i64: 256, 2, 8>}, {pipeline_mode = #tpu.pipeline_mode<synchronous>, transform_indices = @transform_2, window_bounds = array<i64: 8, 64>}, {pipeline_mode = #tpu.pipeline_mode<synchronous>, transform_indices = @transform_3, window_bounds = array<i64: 1, 64>}, {pipeline_mode = #tpu.pipeline_mode<synchronous>, transform_indices = @transform_4, window_bounds = array<i64: 256, 32, 64>}, {pipeline_mode = #tpu.pipeline_mode<synchronous>, transform_indices = @transform_5, window_bounds = array<i64: 1, 32>}, {pipeline_mode = #tpu.pipeline_mode<synchronous>, transform_indices = @transform_6, window_bounds = array<i64: 64, 32>}, {pipeline_mode = #tpu.pipeline_mode<synchronous>, transform_indices = @transform_7, window_bounds = array<i64: 1, 32>}, {pipeline_mode = #tpu.pipeline_mode<synchronous>, transform_indices = @transform_8, window_bounds = array<i64: 100, 768>}, {pipeline_mode = #tpu.pipeline_mode<synchronous>, transform_indices = @transform_9, window_bounds = array<i64: 768, 32>}, {pipeline_mode = #tpu.pipeline_mode<synchronous>, transform_indices = @transform_10, window_bounds = array<i64: 1, 32>}, {transform_indices = @transform_11, window_bounds = array<i64: 2, 128>}]} {
    %c0 = arith.constant 0 : index
    %c0_0 = arith.constant 0 : index
    %c0_1 = arith.constant 0 : index
    %0 = vector.load %arg2[%c0, %c0_0, %c0_1] : memref<256x2x8xbf16, #tpu.memory_space<vmem>>, vector<256x2x8xbf16>
    %1 = vector.shape_cast %0 : vector<256x2x8xbf16> to vector<512x8xbf16>
    %c0_2 = arith.constant 0 : index
    %c0_3 = arith.constant 0 : index
    %2 = vector.load %arg3[%c0_2, %c0_3] : memref<8x64xbf16, #tpu.memory_space<vmem>>, vector<8x64xbf16>
    %cst = arith.constant dense<0.000000e+00> : vector<512x64xf32>
    %3 = tpu.matmul %1, %2, %cst {dimension_numbers = #tpu.dot_dimension_numbers<[1], [0], [0], [1], [0, 0, 1, 1], [], []>} : vector<512x8xbf16>, vector<8x64xbf16>, vector<512x64xf32> -> vector<512x64xf32>
    %c0_4 = arith.constant 0 : index
    %c0_5 = arith.constant 0 : index
    %4 = vector.load %arg4[%c0_4, %c0_5] : memref<1x64xf32, #tpu.memory_space<vmem>>, vector<1x64xf32>
    %5 = vector.broadcast %4 : vector<1x64xf32> to vector<512x64xf32>
    %6 = arith.addf %3, %5 : vector<512x64xf32>
    %7 = math.tanh %6 : vector<512x64xf32>
    %8 = arith.truncf %7 : vector<512x64xf32> to vector<512x64xbf16>
    %9 = vector.shape_cast %8 : vector<512x64xbf16> to vector<256x2x64xbf16>
    %c0_6 = arith.constant 0 : index
    %c0_7 = arith.constant 0 : index
    %c0_8 = arith.constant 0 : index
    %10 = vector.load %arg5[%c0_6, %c0_7, %c0_8] : memref<256x32x64xbf16, #tpu.memory_space<vmem>>, vector<256x32x64xbf16>
    "tpu.trace_start"() <{level = 10 : i32, message = "tbc,thc->tbh"}> : () -> ()
    %cst_9 = arith.constant dense<0.000000e+00> : vector<256x2x32xf32>
    %11 = tpu.matmul %9, %10, %cst_9 {dimension_numbers = #tpu.dot_dimension_numbers<[2], [2], [1], [1], [0, 0, 0, 1, 1, 1], [0], [0]>} : vector<256x2x64xbf16>, vector<256x32x64xbf16>, vector<256x2x32xf32> -> vector<256x2x32xf32>
    "tpu.trace_stop"() : () -> ()
    %cst_10 = arith.constant dense<0.000000e+00> : vector<2x32xf32>
    %12 = vector.multi_reduction <add>, %11, %cst_10 [0] : vector<256x2x32xf32> to vector<2x32xf32>
    %c0_11 = arith.constant 0 : index
    %c0_12 = arith.constant 0 : index
    %13 = vector.load %arg6[%c0_11, %c0_12] : memref<1x32xf32, #tpu.memory_space<vmem>>, vector<1x32xf32>
    %14 = vector.broadcast %13 : vector<1x32xf32> to vector<2x32xf32>
    %15 = arith.addf %12, %14 : vector<2x32xf32>
    %cst_13 = arith.constant 0.000000e+00 : f32
    %16 = vector.broadcast %cst_13 : f32 to vector<2x32xf32>
    %17 = arith.maximumf %15, %16 : vector<2x32xf32>
    %c0_14 = arith.constant 0 : index
    %c0_15 = arith.constant 0 : index
    %18 = vector.load %arg1[%c0_14, %c0_15] : memref<2x1xi32, #tpu.memory_space<vmem>>, vector<2x1xi32>
    %19 = tpu.iota {dimensions = array<i32: 1>} : vector<2x100xi32>
    %20 = vector.broadcast %18 : vector<2x1xi32> to vector<2x100xi32>
    %21 = arith.cmpi eq, %19, %20 : vector<2x100xi32>
    %cst_16 = arith.constant 1.000000e+00 : f32
    %cst_17 = arith.constant 0.000000e+00 : f32
    %22 = vector.broadcast %cst_16 : f32 to vector<2x100xf32>
    %23 = vector.broadcast %cst_17 : f32 to vector<2x100xf32>
    %24 = arith.select %21, %22, %23 : vector<2x100xi1>, vector<2x100xf32>
    %25 = arith.truncf %24 : vector<2x100xf32> to vector<2x100xbf16>
    %c0_18 = arith.constant 0 : index
    %c0_19 = arith.constant 0 : index
    %26 = vector.load %arg9[%c0_18, %c0_19] : memref<100x768xbf16, #tpu.memory_space<vmem>>, vector<100x768xbf16>
    %cst_20 = arith.constant dense<0.000000e+00> : vector<2x768xf32>
    %27 = tpu.matmul %25, %26, %cst_20 {dimension_numbers = #tpu.dot_dimension_numbers<[1], [0], [0], [1], [0, 0, 1, 1], [], []>} : vector<2x100xbf16>, vector<100x768xbf16>, vector<2x768xf32> -> vector<2x768xf32>
    %28 = arith.truncf %27 : vector<2x768xf32> to vector<2x768xbf16>
    %c0_21 = arith.constant 0 : index
    %c0_22 = arith.constant 0 : index
    %29 = vector.load %arg10[%c0_21, %c0_22] : memref<768x32xbf16, #tpu.memory_space<vmem>>, vector<768x32xbf16>
    %cst_23 = arith.constant dense<0.000000e+00> : vector<2x32xf32>
    %30 = tpu.matmul %28, %29, %cst_23 {dimension_numbers = #tpu.dot_dimension_numbers<[1], [0], [0], [1], [0, 0, 1, 1], [], []>} : vector<2x768xbf16>, vector<768x32xbf16>, vector<2x32xf32> -> vector<2x32xf32>
    %c0_24 = arith.constant 0 : index
    %c0_25 = arith.constant 0 : index
    %31 = vector.load %arg11[%c0_24, %c0_25] : memref<1x32xf32, #tpu.memory_space<vmem>>, vector<1x32xf32>
    %32 = vector.broadcast %31 : vector<1x32xf32> to vector<2x32xf32>
    %33 = arith.addf %30, %32 : vector<2x32xf32>
    %cst_26 = arith.constant 0.000000e+00 : f32
    %34 = vector.broadcast %cst_26 : f32 to vector<2x32xf32>
    %35 = arith.maximumf %33, %34 : vector<2x32xf32>
    %36 = tpu.concatenate %17, %35 in 1 : vector<2x32xf32>, vector<2x32xf32> -> vector<2x64xf32>
    %37 = arith.truncf %36 : vector<2x64xf32> to vector<2x64xbf16>
    %c0_27 = arith.constant 0 : index
    %c0_28 = arith.constant 0 : index
    %38 = vector.load %arg7[%c0_27, %c0_28] : memref<64x32xbf16, #tpu.memory_space<vmem>>, vector<64x32xbf16>
    %cst_29 = arith.constant dense<0.000000e+00> : vector<2x32xf32>
    %39 = tpu.matmul %37, %38, %cst_29 {dimension_numbers = #tpu.dot_dimension_numbers<[1], [0], [0], [1], [0, 0, 1, 1], [], []>} : vector<2x64xbf16>, vector<64x32xbf16>, vector<2x32xf32> -> vector<2x32xf32>
    %c0_30 = arith.constant 0 : index
    %c0_31 = arith.constant 0 : index
    %40 = vector.load %arg8[%c0_30, %c0_31] : memref<1x32xf32, #tpu.memory_space<vmem>>, vector<1x32xf32>
    %41 = vector.broadcast %40 : vector<1x32xf32> to vector<2x32xf32>
    %42 = arith.addf %39, %41 : vector<2x32xf32>
    %cst_32 = arith.constant 0.000000e+00 : f32
    %43 = vector.broadcast %cst_32 : f32 to vector<2x96xf32>
    %44 = tpu.concatenate %42, %43 in 1 : vector<2x32xf32>, vector<2x96xf32> -> vector<2x128xf32>
    %c0_33 = arith.constant 0 : index
    %c0_34 = arith.constant 0 : index
    %45 = vector.load %arg12[%c0_33, %c0_34] : memref<2x128xf32, #tpu.memory_space<vmem>>, vector<2x128xf32>
    tpu.vector_store %arg12[%c0_33, %c0_34], %44 {strides = array<i32>} : memref<2x128xf32, #tpu.memory_space<vmem>>, vector<2x128xf32>,
    return
  }
  func.func @transform_0(%arg0: i32) -> (i32, i32) {
    %c0_i32 = arith.constant 0 : i32
    %c0_i32_0 = arith.constant 0 : i32
    return %arg0, %c0_i32 : i32, i32
  }
  func.func @transform_1(%arg0: i32) -> (i32, i32, i32) {
    %c0_i32 = arith.constant 0 : i32
    %c0_i32_0 = arith.constant 0 : i32
    %c0_i32_1 = arith.constant 0 : i32
    return %c0_i32, %arg0, %c0_i32_0 : i32, i32, i32
  }
  func.func @transform_2(%arg0: i32) -> (i32, i32) {
    %c0_i32 = arith.constant 0 : i32
    %c0_i32_0 = arith.constant 0 : i32
    %c0_i32_1 = arith.constant 0 : i32
    return %c0_i32, %c0_i32_0 : i32, i32
  }
  func.func @transform_3(%arg0: i32) -> (i32, i32) {
    %c0_i32 = arith.constant 0 : i32
    %c0_i32_0 = arith.constant 0 : i32
    %c0_i32_1 = arith.constant 0 : i32
    return %c0_i32, %c0_i32_0 : i32, i32
  }
  func.func @transform_4(%arg0: i32) -> (i32, i32, i32) {
    %c0_i32 = arith.constant 0 : i32
    %c0_i32_0 = arith.constant 0 : i32
    %c0_i32_1 = arith.constant 0 : i32
    %c0_i32_2 = arith.constant 0 : i32
    return %c0_i32, %c0_i32_0, %c0_i32_1 : i32, i32, i32
  }
  func.func @transform_5(%arg0: i32) -> (i32, i32) {
    %c0_i32 = arith.constant 0 : i32
    %c0_i32_0 = arith.constant 0 : i32
    %c0_i32_1 = arith.constant 0 : i32
    return %c0_i32, %c0_i32_0 : i32, i32
  }
  func.func @transform_6(%arg0: i32) -> (i32, i32) {
    %c0_i32 = arith.constant 0 : i32
    %c0_i32_0 = arith.constant 0 : i32
    %c0_i32_1 = arith.constant 0 : i32
    return %c0_i32, %c0_i32_0 : i32, i32
  }
  func.func @transform_7(%arg0: i32) -> (i32, i32) {
    %c0_i32 = arith.constant 0 : i32
    %c0_i32_0 = arith.constant 0 : i32
    %c0_i32_1 = arith.constant 0 : i32
    return %c0_i32, %c0_i32_0 : i32, i32
  }
  func.func @transform_8(%arg0: i32) -> (i32, i32) {
    %c0_i32 = arith.constant 0 : i32
    %c0_i32_0 = arith.constant 0 : i32
    %c0_i32_1 = arith.constant 0 : i32
    return %c0_i32, %c0_i32_0 : i32, i32
  }
  func.func @transform_9(%arg0: i32) -> (i32, i32) {
    %c0_i32 = arith.constant 0 : i32
    %c0_i32_0 = arith.constant 0 : i32
    %c0_i32_1 = arith.constant 0 : i32
    return %c0_i32, %c0_i32_0 : i32, i32
  }
  func.func @transform_10(%arg0: i32) -> (i32, i32) {
    %c0_i32 = arith.constant 0 : i32
    %c0_i32_0 = arith.constant 0 : i32
    %c0_i32_1 = arith.constant 0 : i32
    return %c0_i32, %c0_i32_0 : i32, i32
  }
  func.func @transform_11(%arg0: i32) -> (i32, i32) {
    %c0_i32 = arith.constant 0 : i32
    %c0_i32_0 = arith.constant 0 : i32
    return %arg0, %c0_i32 : i32, i32
  }
}

</mosaic_0001>

<llo_original>
// kernel: contrastive_forward.1
$region0: #{contrastive_forward.1}
  #allocation0 [shape = 'u32[]', space=smem, size = 0x4, offset = 0x4, fixed_abs, tag = 'smem constant byte address 0x4 - core index']
  #allocation1 [shape = 'u32[72,128]{1,0:T(1,128)}', space=vmem, size = 0x9000, scoped, tag = 'internal scratch']
  %s0 = inlined_call_operand.vmem [shape: s32[2,1], index: 0, kind: input, shape index: {}]
  %s1 = inlined_call_operand.vmem [shape: bf16[256,2,8], index: 1, kind: input, shape index: {}]
  %s2 = inlined_call_operand.vmem [shape: bf16[8,64], index: 2, kind: input, shape index: {}]
  %s3 = inlined_call_operand.vmem [shape: f32[1,64], index: 3, kind: input, shape index: {}]
  %s4 = inlined_call_operand.vmem [shape: bf16[256,32,64], index: 4, kind: input, shape index: {}]
  %s5 = inlined_call_operand.vmem [shape: f32[1,32], index: 5, kind: input, shape index: {}]
  %s6 = inlined_call_operand.vmem [shape: bf16[64,32], index: 6, kind: input, shape index: {}]
  %s7 = inlined_call_operand.vmem [shape: f32[1,32], index: 7, kind: input, shape index: {}]
  %s8 = inlined_call_operand.vmem [shape: bf16[100,768], index: 8, kind: input, shape index: {}]
  %s9 = inlined_call_operand.vmem [shape: bf16[768,32], index: 9, kind: input, shape index: {}]
  %s10 = inlined_call_operand.vmem [shape: f32[1,32], index: 10, kind: input, shape index: {}]
  %s11 = inlined_call_operand.vmem [shape: f32[2,128], index: 11, kind: output, shape index: {}]
  %s12 = sld [smem:[#allocation0]]
  $region54: #{contrastive_forward.1} parent=0
    _
  %s14 = ssub.s32 1, %s12
  %s15 = scalar_select 0, %s14, %s12
  // Predicated region
  $region2: #{contrastive_forward.1} parent=0 // pred_check
    _
  $region3: #{contrastive_forward.1} parent=0 // pred_check_branch
    %17 = sbr.rel (0) target = $region5
  $region4: #{contrastive_forward.1} parent=0 // pred_region
    _
  $region5: #{contrastive_forward.1} parent=0 // pred_fallthru
    _
  // Predicated region
  $region6: #{contrastive_forward.1} parent=0 // pred_check
    _
  $region7: #{contrastive_forward.1} parent=0 // pred_check_branch
    %19 = sbr.rel (0) target = $region9
  $region8: #{contrastive_forward.1} parent=0 // pred_region
    _
  $region9: #{contrastive_forward.1} parent=0 // pred_fallthru
    _
  // Predicated region
  $region10: #{contrastive_forward.1} parent=0 // pred_check
    _
  $region11: #{contrastive_forward.1} parent=0 // pred_check_branch
    %21 = sbr.rel (0) target = $region13
  $region12: #{contrastive_forward.1} parent=0 // pred_region
    _
  $region13: #{contrastive_forward.1} parent=0 // pred_fallthru
    _
  // Predicated region
  $region14: #{contrastive_forward.1} parent=0 // pred_check
    _
  $region15: #{contrastive_forward.1} parent=0 // pred_check_branch
    %23 = sbr.rel (0) target = $region17
  $region16: #{contrastive_forward.1} parent=0 // pred_region
    _
  $region17: #{contrastive_forward.1} parent=0 // pred_fallthru
    _
  // Predicated region
  $region18: #{contrastive_forward.1} parent=0 // pred_check
    _
  $region19: #{contrastive_forward.1} parent=0 // pred_check_branch
    %25 = sbr.rel (0) target = $region21
  $region20: #{contrastive_forward.1} parent=0 // pred_region
    _
  $region21: #{contrastive_forward.1} parent=0 // pred_fallthru
    _
  // Predicated region
  $region22: #{contrastive_forward.1} parent=0 // pred_check
    _
  $region23: #{contrastive_forward.1} parent=0 // pred_check_branch
    %27 = sbr.rel (0) target = $region25
  $region24: #{contrastive_forward.1} parent=0 // pred_region
    _
  $region25: #{contrastive_forward.1} parent=0 // pred_fallthru
    _
  // Predicated region
  $region26: #{contrastive_forward.1} parent=0 // pred_check
    _
  $region27: #{contrastive_forward.1} parent=0 // pred_check_branch
    %29 = sbr.rel (0) target = $region29
  $region28: #{contrastive_forward.1} parent=0 // pred_region
    _
  $region29: #{contrastive_forward.1} parent=0 // pred_fallthru
    _
  // Predicated region
  $region30: #{contrastive_forward.1} parent=0 // pred_check
    _
  $region31: #{contrastive_forward.1} parent=0 // pred_check_branch
    %31 = sbr.rel (0) target = $region33
  $region32: #{contrastive_forward.1} parent=0 // pred_region
    _
  $region33: #{contrastive_forward.1} parent=0 // pred_fallthru
    _
  // Predicated region
  $region34: #{contrastive_forward.1} parent=0 // pred_check
    _
  $region35: #{contrastive_forward.1} parent=0 // pred_check_branch
    %33 = sbr.rel (0) target = $region37
  $region36: #{contrastive_forward.1} parent=0 // pred_region
    _
  $region37: #{contrastive_forward.1} parent=0 // pred_fallthru
    _
  // Predicated region
  $region38: #{contrastive_forward.1} parent=0 // pred_check
    _
  $region39: #{contrastive_forward.1} parent=0 // pred_check_branch
    %35 = sbr.rel (0) target = $region41
  $region40: #{contrastive_forward.1} parent=0 // pred_region
    _
  $region41: #{contrastive_forward.1} parent=0 // pred_fallthru
    _
  // Predicated region
  $region42: #{contrastive_forward.1} parent=0 // pred_check
    _
  $region43: #{contrastive_forward.1} parent=0 // pred_check_branch
    %37 = sbr.rel (0) target = $region45
  $region44: #{contrastive_forward.1} parent=0 // pred_region
    _
  $region45: #{contrastive_forward.1} parent=0 // pred_fallthru
    _
  %v39 = vld [vmem:[%s1] sm:$0x1]
  %v40 = vld [vmem:[%s1 + $0x1] sm:$0x1]
  %v41 = vld [vmem:[%s1 + $0x2] sm:$0x1]
  %v42 = vld [vmem:[%s1 + $0x3] sm:$0x1]
  %v43 = vld [vmem:[%s1 + $0x4] sm:$0x1]
  %v44 = vld [vmem:[%s1 + $0x5] sm:$0x1]
  %v45 = vld [vmem:[%s1 + $0x6] sm:$0x1]
  %v46 = vld [vmem:[%s1 + $0x7] sm:$0x1]
  %v47 = vld [vmem:[%s1 + $0x8] sm:$0x1]
  %v48 = vld [vmem:[%s1 + $0x9] sm:$0x1]
  %v49 = vld [vmem:[%s1 + $0xa] sm:$0x1]
  %v50 = vld [vmem:[%s1 + $0xb] sm:$0x1]
  %v51 = vld [vmem:[%s1 + $0xc] sm:$0x1]
  %v52 = vld [vmem:[%s1 + $0xd] sm:$0x1]
  %v53 = vld [vmem:[%s1 + $0xe] sm:$0x1]
  %v54 = vld [vmem:[%s1 + $0xf] sm:$0x1]
  %v55 = vld [vmem:[%s1 + $0x10] sm:$0x1]
  %v56 = vld [vmem:[%s1 + $0x11] sm:$0x1]
  %v57 = vld [vmem:[%s1 + $0x12] sm:$0x1]
  %v58 = vld [vmem:[%s1 + $0x13] sm:$0x1]
  %v59 = vld [vmem:[%s1 + $0x14] sm:$0x1]
  %v60 = vld [vmem:[%s1 + $0x15] sm:$0x1]
  %v61 = vld [vmem:[%s1 + $0x16] sm:$0x1]
  %v62 = vld [vmem:[%s1 + $0x17] sm:$0x1]
  %v63 = vld [vmem:[%s1 + $0x18] sm:$0x1]
  %v64 = vld [vmem:[%s1 + $0x19] sm:$0x1]
  %v65 = vld [vmem:[%s1 + $0x1a] sm:$0x1]
  %v66 = vld [vmem:[%s1 + $0x1b] sm:$0x1]
  %v67 = vld [vmem:[%s1 + $0x1c] sm:$0x1]
  %v68 = vld [vmem:[%s1 + $0x1d] sm:$0x1]
  %v69 = vld [vmem:[%s1 + $0x1e] sm:$0x1]
  %v70 = vld [vmem:[%s1 + $0x1f] sm:$0x1]
  %v71 = vld [vmem:[%s1 + $0x20] sm:$0x1]
  %v72 = vld [vmem:[%s1 + $0x21] sm:$0x1]
  %v73 = vld [vmem:[%s1 + $0x22] sm:$0x1]
  %v74 = vld [vmem:[%s1 + $0x23] sm:$0x1]
  %v75 = vld [vmem:[%s1 + $0x24] sm:$0x1]
  %v76 = vld [vmem:[%s1 + $0x25] sm:$0x1]
  %v77 = vld [vmem:[%s1 + $0x26] sm:$0x1]
  %v78 = vld [vmem:[%s1 + $0x27] sm:$0x1]
  %v79 = vld [vmem:[%s1 + $0x28] sm:$0x1]
  %v80 = vld [vmem:[%s1 + $0x29] sm:$0x1]
  %v81 = vld [vmem:[%s1 + $0x2a] sm:$0x1]
  %v82 = vld [vmem:[%s1 + $0x2b] sm:$0x1]
  %v83 = vld [vmem:[%s1 + $0x2c] sm:$0x1]
  %v84 = vld [vmem:[%s1 + $0x2d] sm:$0x1]
  %v85 = vld [vmem:[%s1 + $0x2e] sm:$0x1]
  %v86 = vld [vmem:[%s1 + $0x2f] sm:$0x1]
  %v87 = vld [vmem:[%s1 + $0x30] sm:$0x1]
  %v88 = vld [vmem:[%s1 + $0x31] sm:$0x1]
  %v89 = vld [vmem:[%s1 + $0x32] sm:$0x1]
  %v90 = vld [vmem:[%s1 + $0x33] sm:$0x1]
  %v91 = vld [vmem:[%s1 + $0x34] sm:$0x1]
  %v92 = vld [vmem:[%s1 + $0x35] sm:$0x1]
  %v93 = vld [vmem:[%s1 + $0x36] sm:$0x1]
  %v94 = vld [vmem:[%s1 + $0x37] sm:$0x1]
  %v95 = vld [vmem:[%s1 + $0x38] sm:$0x1]
  %v96 = vld [vmem:[%s1 + $0x39] sm:$0x1]
  %v97 = vld [vmem:[%s1 + $0x3a] sm:$0x1]
  %v98 = vld [vmem:[%s1 + $0x3b] sm:$0x1]
  %v99 = vld [vmem:[%s1 + $0x3c] sm:$0x1]
  %v100 = vld [vmem:[%s1 + $0x3d] sm:$0x1]
  %v101 = vld [vmem:[%s1 + $0x3e] sm:$0x1]
  %v102 = vld [vmem:[%s1 + $0x3f] sm:$0x1]
  %v103 = vld [vmem:[%s1 + $0x40] sm:$0x1]
  %v104 = vld [vmem:[%s1 + $0x41] sm:$0x1]
  %v105 = vld [vmem:[%s1 + $0x42] sm:$0x1]
  %v106 = vld [vmem:[%s1 + $0x43] sm:$0x1]
  %v107 = vld [vmem:[%s1 + $0x44] sm:$0x1]
  %v108 = vld [vmem:[%s1 + $0x45] sm:$0x1]
  %v109 = vld [vmem:[%s1 + $0x46] sm:$0x1]
  %v110 = vld [vmem:[%s1 + $0x47] sm:$0x1]
  %v111 = vld [vmem:[%s1 + $0x48] sm:$0x1]
  %v112 = vld [vmem:[%s1 + $0x49] sm:$0x1]
  %v113 = vld [vmem:[%s1 + $0x4a] sm:$0x1]
  %v114 = vld [vmem:[%s1 + $0x4b] sm:$0x1]
  %v115 = vld [vmem:[%s1 + $0x4c] sm:$0x1]
  %v116 = vld [vmem:[%s1 + $0x4d] sm:$0x1]
  %v117 = vld [vmem:[%s1 + $0x4e] sm:$0x1]
  %v118 = vld [vmem:[%s1 + $0x4f] sm:$0x1]
  %v119 = vld [vmem:[%s1 + $0x50] sm:$0x1]
  %v120 = vld [vmem:[%s1 + $0x51] sm:$0x1]
  %v121 = vld [vmem:[%s1 + $0x52] sm:$0x1]
  %v122 = vld [vmem:[%s1 + $0x53] sm:$0x1]
  %v123 = vld [vmem:[%s1 + $0x54] sm:$0x1]
  %v124 = vld [vmem:[%s1 + $0x55] sm:$0x1]
  %v125 = vld [vmem:[%s1 + $0x56] sm:$0x1]
  %v126 = vld [vmem:[%s1 + $0x57] sm:$0x1]
  %v127 = vld [vmem:[%s1 + $0x58] sm:$0x1]
  %v128 = vld [vmem:[%s1 + $0x59] sm:$0x1]
  %v129 = vld [vmem:[%s1 + $0x5a] sm:$0x1]
  %v130 = vld [vmem:[%s1 + $0x5b] sm:$0x1]
  %v131 = vld [vmem:[%s1 + $0x5c] sm:$0x1]
  %v132 = vld [vmem:[%s1 + $0x5d] sm:$0x1]
  %v133 = vld [vmem:[%s1 + $0x5e] sm:$0x1]
  %v134 = vld [vmem:[%s1 + $0x5f] sm:$0x1]
  %v135 = vld [vmem:[%s1 + $0x60] sm:$0x1]
  %v136 = vld [vmem:[%s1 + $0x61] sm:$0x1]
  %v137 = vld [vmem:[%s1 + $0x62] sm:$0x1]
  %v138 = vld [vmem:[%s1 + $0x63] sm:$0x1]
  %v139 = vld [vmem:[%s1 + $0x64] sm:$0x1]
  %v140 = vld [vmem:[%s1 + $0x65] sm:$0x1]
  %v141 = vld [vmem:[%s1 + $0x66] sm:$0x1]
  %v142 = vld [vmem:[%s1 + $0x67] sm:$0x1]
  %v143 = vld [vmem:[%s1 + $0x68] sm:$0x1]
  %v144 = vld [vmem:[%s1 + $0x69] sm:$0x1]
  %v145 = vld [vmem:[%s1 + $0x6a] sm:$0x1]
  %v146 = vld [vmem:[%s1 + $0x6b] sm:$0x1]
  %v147 = vld [vmem:[%s1 + $0x6c] sm:$0x1]
  %v148 = vld [vmem:[%s1 + $0x6d] sm:$0x1]
  %v149 = vld [vmem:[%s1 + $0x6e] sm:$0x1]
  %v150 = vld [vmem:[%s1 + $0x6f] sm:$0x1]
  %v151 = vld [vmem:[%s1 + $0x70] sm:$0x1]
  %v152 = vld [vmem:[%s1 + $0x71] sm:$0x1]
  %v153 = vld [vmem:[%s1 + $0x72] sm:$0x1]
  %v154 = vld [vmem:[%s1 + $0x73] sm:$0x1]
  %v155 = vld [vmem:[%s1 + $0x74] sm:$0x1]
  %v156 = vld [vmem:[%s1 + $0x75] sm:$0x1]
  %v157 = vld [vmem:[%s1 + $0x76] sm:$0x1]
  %v158 = vld [vmem:[%s1 + $0x77] sm:$0x1]
  %v159 = vld [vmem:[%s1 + $0x78] sm:$0x1]
  %v160 = vld [vmem:[%s1 + $0x79] sm:$0x1]
  %v161 = vld [vmem:[%s1 + $0x7a] sm:$0x1]
  %v162 = vld [vmem:[%s1 + $0x7b] sm:$0x1]
  %v163 = vld [vmem:[%s1 + $0x7c] sm:$0x1]
  %v164 = vld [vmem:[%s1 + $0x7d] sm:$0x1]
  %v165 = vld [vmem:[%s1 + $0x7e] sm:$0x1]
  %v166 = vld [vmem:[%s1 + $0x7f] sm:$0x1]
  %v167 = vld [vmem:[%s1 + $0x80] sm:$0x1]
  %v168 = vld [vmem:[%s1 + $0x81] sm:$0x1]
  %v169 = vld [vmem:[%s1 + $0x82] sm:$0x1]
  %v170 = vld [vmem:[%s1 + $0x83] sm:$0x1]
  %v171 = vld [vmem:[%s1 + $0x84] sm:$0x1]
  %v172 = vld [vmem:[%s1 + $0x85] sm:$0x1]
  %v173 = vld [vmem:[%s1 + $0x86] sm:$0x1]
  %v174 = vld [vmem:[%s1 + $0x87] sm:$0x1]
  %v175 = vld [vmem:[%s1 + $0x88] sm:$0x1]
  %v176 = vld [vmem:[%s1 + $0x89] sm:$0x1]
  %v177 = vld [vmem:[%s1 + $0x8a] sm:$0x1]
  %v178 = vld [vmem:[%s1 + $0x8b] sm:$0x1]
  %v179 = vld [vmem:[%s1 + $0x8c] sm:$0x1]
  %v180 = vld [vmem:[%s1 + $0x8d] sm:$0x1]
  %v181 = vld [vmem:[%s1 + $0x8e] sm:$0x1]
  %v182 = vld [vmem:[%s1 + $0x8f] sm:$0x1]
  %v183 = vld [vmem:[%s1 + $0x90] sm:$0x1]
  %v184 = vld [vmem:[%s1 + $0x91] sm:$0x1]
  %v185 = vld [vmem:[%s1 + $0x92] sm:$0x1]
  %v186 = vld [vmem:[%s1 + $0x93] sm:$0x1]
  %v187 = vld [vmem:[%s1 + $0x94] sm:$0x1]
  %v188 = vld [vmem:[%s1 + $0x95] sm:$0x1]
  %v189 = vld [vmem:[%s1 + $0x96] sm:$0x1]
  %v190 = vld [vmem:[%s1 + $0x97] sm:$0x1]
  %v191 = vld [vmem:[%s1 + $0x98] sm:$0x1]
  %v192 = vld [vmem:[%s1 + $0x99] sm:$0x1]
  %v193 = vld [vmem:[%s1 + $0x9a] sm:$0x1]
  %v194 = vld [vmem:[%s1 + $0x9b] sm:$0x1]
  %v195 = vld [vmem:[%s1 + $0x9c] sm:$0x1]
  %v196 = vld [vmem:[%s1 + $0x9d] sm:$0x1]
  %v197 = vld [vmem:[%s1 + $0x9e] sm:$0x1]
  %v198 = vld [vmem:[%s1 + $0x9f] sm:$0x1]
  %v199 = vld [vmem:[%s1 + $0xa0] sm:$0x1]
  %v200 = vld [vmem:[%s1 + $0xa1] sm:$0x1]
  %v201 = vld [vmem:[%s1 + $0xa2] sm:$0x1]
  %v202 = vld [vmem:[%s1 + $0xa3] sm:$0x1]
  %v203 = vld [vmem:[%s1 + $0xa4] sm:$0x1]
  %v204 = vld [vmem:[%s1 + $0xa5] sm:$0x1]
  %v205 = vld [vmem:[%s1 + $0xa6] sm:$0x1]
  %v206 = vld [vmem:[%s1 + $0xa7] sm:$0x1]
  %v207 = vld [vmem:[%s1 + $0xa8] sm:$0x1]
  %v208 = vld [vmem:[%s1 + $0xa9] sm:$0x1]
  %v209 = vld [vmem:[%s1 + $0xaa] sm:$0x1]
  %v210 = vld [vmem:[%s1 + $0xab] sm:$0x1]
  %v211 = vld [vmem:[%s1 + $0xac] sm:$0x1]
  %v212 = vld [vmem:[%s1 + $0xad] sm:$0x1]
  %v213 = vld [vmem:[%s1 + $0xae] sm:$0x1]
  %v214 = vld [vmem:[%s1 + $0xaf] sm:$0x1]
  %v215 = vld [vmem:[%s1 + $0xb0] sm:$0x1]
  %v216 = vld [vmem:[%s1 + $0xb1] sm:$0x1]
  %v217 = vld [vmem:[%s1 + $0xb2] sm:$0x1]
  %v218 = vld [vmem:[%s1 + $0xb3] sm:$0x1]
  %v219 = vld [vmem:[%s1 + $0xb4] sm:$0x1]
  %v220 = vld [vmem:[%s1 + $0xb5] sm:$0x1]
  %v221 = vld [vmem:[%s1 + $0xb6] sm:$0x1]
  %v222 = vld [vmem:[%s1 + $0xb7] sm:$0x1]
  %v223 = vld [vmem:[%s1 + $0xb8] sm:$0x1]
  %v224 = vld [vmem:[%s1 + $0xb9] sm:$0x1]
  %v225 = vld [vmem:[%s1 + $0xba] sm:$0x1]
  %v226 = vld [vmem:[%s1 + $0xbb] sm:$0x1]
  %v227 = vld [vmem:[%s1 + $0xbc] sm:$0x1]
  %v228 = vld [vmem:[%s1 + $0xbd] sm:$0x1]
  %v229 = vld [vmem:[%s1 + $0xbe] sm:$0x1]
  %v230 = vld [vmem:[%s1 + $0xbf] sm:$0x1]
  %v231 = vld [vmem:[%s1 + $0xc0] sm:$0x1]
  %v232 = vld [vmem:[%s1 + $0xc1] sm:$0x1]
  %v233 = vld [vmem:[%s1 + $0xc2] sm:$0x1]
  %v234 = vld [vmem:[%s1 + $0xc3] sm:$0x1]
  %v235 = vld [vmem:[%s1 + $0xc4] sm:$0x1]
  %v236 = vld [vmem:[%s1 + $0xc5] sm:$0x1]
  %v237 = vld [vmem:[%s1 + $0xc6] sm:$0x1]
  %v238 = vld [vmem:[%s1 + $0xc7] sm:$0x1]
  %v239 = vld [vmem:[%s1 + $0xc8] sm:$0x1]
  %v240 = vld [vmem:[%s1 + $0xc9] sm:$0x1]
  %v241 = vld [vmem:[%s1 + $0xca] sm:$0x1]
  %v242 = vld [vmem:[%s1 + $0xcb] sm:$0x1]
  %v243 = vld [vmem:[%s1 + $0xcc] sm:$0x1]
  %v244 = vld [vmem:[%s1 + $0xcd] sm:$0x1]
  %v245 = vld [vmem:[%s1 + $0xce] sm:$0x1]
  %v246 = vld [vmem:[%s1 + $0xcf] sm:$0x1]
  %v247 = vld [vmem:[%s1 + $0xd0] sm:$0x1]
  %v248 = vld [vmem:[%s1 + $0xd1] sm:$0x1]
  %v249 = vld [vmem:[%s1 + $0xd2] sm:$0x1]
  %v250 = vld [vmem:[%s1 + $0xd3] sm:$0x1]
  %v251 = vld [vmem:[%s1 + $0xd4] sm:$0x1]
  %v252 = vld [vmem:[%s1 + $0xd5] sm:$0x1]
  %v253 = vld [vmem:[%s1 + $0xd6] sm:$0x1]
  %v254 = vld [vmem:[%s1 + $0xd7] sm:$0x1]
  %v255 = vld [vmem:[%s1 + $0xd8] sm:$0x1]
  %v256 = vld [vmem:[%s1 + $0xd9] sm:$0x1]
  %v257 = vld [vmem:[%s1 + $0xda] sm:$0x1]
  %v258 = vld [vmem:[%s1 + $0xdb] sm:$0x1]
  %v259 = vld [vmem:[%s1 + $0xdc] sm:$0x1]
  %v260 = vld [vmem:[%s1 + $0xdd] sm:$0x1]
  %v261 = vld [vmem:[%s1 + $0xde] sm:$0x1]
  %v262 = vld [vmem:[%s1 + $0xdf] sm:$0x1]
  %v263 = vld [vmem:[%s1 + $0xe0] sm:$0x1]
  %v264 = vld [vmem:[%s1 + $0xe1] sm:$0x1]
  %v265 = vld [vmem:[%s1 + $0xe2] sm:$0x1]
  %v266 = vld [vmem:[%s1 + $0xe3] sm:$0x1]
  %v267 = vld [vmem:[%s1 + $0xe4] sm:$0x1]
  %v268 = vld [vmem:[%s1 + $0xe5] sm:$0x1]
  %v269 = vld [vmem:[%s1 + $0xe6] sm:$0x1]
  %v270 = vld [vmem:[%s1 + $0xe7] sm:$0x1]
  %v271 = vld [vmem:[%s1 + $0xe8] sm:$0x1]
  %v272 = vld [vmem:[%s1 + $0xe9] sm:$0x1]
  %v273 = vld [vmem:[%s1 + $0xea] sm:$0x1]
  %v274 = vld [vmem:[%s1 + $0xeb] sm:$0x1]
  %v275 = vld [vmem:[%s1 + $0xec] sm:$0x1]
  %v276 = vld [vmem:[%s1 + $0xed] sm:$0x1]
  %v277 = vld [vmem:[%s1 + $0xee] sm:$0x1]
  %v278 = vld [vmem:[%s1 + $0xef] sm:$0x1]
  %v279 = vld [vmem:[%s1 + $0xf0] sm:$0x1]
  %v280 = vld [vmem:[%s1 + $0xf1] sm:$0x1]
  %v281 = vld [vmem:[%s1 + $0xf2] sm:$0x1]
  %v282 = vld [vmem:[%s1 + $0xf3] sm:$0x1]
  %v283 = vld [vmem:[%s1 + $0xf4] sm:$0x1]
  %v284 = vld [vmem:[%s1 + $0xf5] sm:$0x1]
  %v285 = vld [vmem:[%s1 + $0xf6] sm:$0x1]
  %v286 = vld [vmem:[%s1 + $0xf7] sm:$0x1]
  %v287 = vld [vmem:[%s1 + $0xf8] sm:$0x1]
  %v288 = vld [vmem:[%s1 + $0xf9] sm:$0x1]
  %v289 = vld [vmem:[%s1 + $0xfa] sm:$0x1]
  %v290 = vld [vmem:[%s1 + $0xfb] sm:$0x1]
  %v291 = vld [vmem:[%s1 + $0xfc] sm:$0x1]
  %v292 = vld [vmem:[%s1 + $0xfd] sm:$0x1]
  %v293 = vld [vmem:[%s1 + $0xfe] sm:$0x1]
  %v294 = vld [vmem:[%s1 + $0xff] sm:$0x1]
  %v295 = vld [vmem:[%s2] sm:$0xf]
  %v296 = vld [vmem:[%s3] sm:$0x1]
  %v298 = vperm.slane %v296, 0
  %301 = vst [vmem:[#allocation1] ss:$9 sm:$0xff] %v39
  %s303 = scalar_lea.vmem [#allocation1], 1
  %304 = vst [vmem:[%s303] ss:$9 sm:$0xff] %v40
  %s306 = scalar_lea.vmem [#allocation1], 2
  %307 = vst [vmem:[%s306] ss:$9 sm:$0xff] %v41
  %s309 = scalar_lea.vmem [#allocation1], 3
  %310 = vst [vmem:[%s309] ss:$9 sm:$0xff] %v42
  %s312 = scalar_lea.vmem [#allocation1], 4
  %313 = vst [vmem:[%s312] ss:$9 sm:$0xff] %v43
  %s315 = scalar_lea.vmem [#allocation1], 5
  %316 = vst [vmem:[%s315] ss:$9 sm:$0xff] %v44
  %s318 = scalar_lea.vmem [#allocation1], 6
  %319 = vst [vmem:[%s318] ss:$9 sm:$0xff] %v45
  %s321 = scalar_lea.vmem [#allocation1], 7
  %322 = vst [vmem:[%s321] ss:$9 sm:$0xff] %v46
  %v323 = vld [vmem:[#allocation1] sm:$0xff]
  %325 = vst [vmem:[#allocation1] ss:$9 sm:$0xff] %v47
  %327 = vst [vmem:[%s303] ss:$9 sm:$0xff] %v48
  %329 = vst [vmem:[%s306] ss:$9 sm:$0xff] %v49
  %331 = vst [vmem:[%s309] ss:$9 sm:$0xff] %v50
  %333 = vst [vmem:[%s312] ss:$9 sm:$0xff] %v51
  %335 = vst [vmem:[%s315] ss:$9 sm:$0xff] %v52
  %337 = vst [vmem:[%s318] ss:$9 sm:$0xff] %v53
  %339 = vst [vmem:[%s321] ss:$9 sm:$0xff] %v54
  %v340 = vld [vmem:[#allocation1] sm:$0xff]
  %342 = vst [vmem:[#allocation1] ss:$9 sm:$0xff] %v55
  %344 = vst [vmem:[%s303] ss:$9 sm:$0xff] %v56
  %346 = vst [vmem:[%s306] ss:$9 sm:$0xff] %v57
  %348 = vst [vmem:[%s309] ss:$9 sm:$0xff] %v58
  %350 = vst [vmem:[%s312] ss:$9 sm:$0xff] %v59
  %352 = vst [vmem:[%s315] ss:$9 sm:$0xff] %v60
  %354 = vst [vmem:[%s318] ss:$9 sm:$0xff] %v61
  %356 = vst [vmem:[%s321] ss:$9 sm:$0xff] %v62
  %v357 = vld [vmem:[#allocation1] sm:$0xff]
  %359 = vst [vmem:[#allocation1] ss:$9 sm:$0xff] %v63
  %361 = vst [vmem:[%s303] ss:$9 sm:$0xff] %v64
  %363 = vst [vmem:[%s306] ss:$9 sm:$0xff] %v65
  %365 = vst [vmem:[%s309] ss:$9 sm:$0xff] %v66
  %367 = vst [vmem:[%s312] ss:$9 sm:$0xff] %v67
  %369 = vst [vmem:[%s315] ss:$9 sm:$0xff] %v68
  %371 = vst [vmem:[%s318] ss:$9 sm:$0xff] %v69
  %373 = vst [vmem:[%s321] ss:$9 sm:$0xff] %v70
  %v374 = vld [vmem:[#allocation1] sm:$0xff]
  %376 = vst [vmem:[#allocation1] ss:$9 sm:$0xff] %v71
  %378 = vst [vmem:[%s303] ss:$9 sm:$0xff] %v72
  %380 = vst [vmem:[%s306] ss:$9 sm:$0xff] %v73
  %382 = vst [vmem:[%s309] ss:$9 sm:$0xff] %v74
  %384 = vst [vmem:[%s312] ss:$9 sm:$0xff] %v75
  %386 = vst [vmem:[%s315] ss:$9 sm:$0xff] %v76
  %388 = vst [vmem:[%s318] ss:$9 sm:$0xff] %v77
  %390 = vst [vmem:[%s321] ss:$9 sm:$0xff] %v78
  %v391 = vld [vmem:[#allocation1] sm:$0xff]
  %393 = vst [vmem:[#allocation1] ss:$9 sm:$0xff] %v79
  %395 = vst [vmem:[%s303] ss:$9 sm:$0xff] %v80
  %397 = vst [vmem:[%s306] ss:$9 sm:$0xff] %v81
  %399 = vst [vmem:[%s309] ss:$9 sm:$0xff] %v82
  %401 = vst [vmem:[%s312] ss:$9 sm:$0xff] %v83
  %403 = vst [vmem:[%s315] ss:$9 sm:$0xff] %v84
  %405 = vst [vmem:[%s318] ss:$9 sm:$0xff] %v85
  %407 = vst [vmem:[%s321] ss:$9 sm:$0xff] %v86
  %v408 = vld [vmem:[#allocation1] sm:$0xff]
  %410 = vst [vmem:[#allocation1] ss:$9 sm:$0xff] %v87
  %412 = vst [vmem:[%s303] ss:$9 sm:$0xff] %v88
  %414 = vst [vmem:[%s306] ss:$9 sm:$0xff] %v89
  %416 = vst [vmem:[%s309] ss:$9 sm:$0xff] %v90
  %418 = vst [vmem:[%s312] ss:$9 sm:$0xff] %v91
  %420 = vst [vmem:[%s315] ss:$9 sm:$0xff] %v92
  %422 = vst [vmem:[%s318] ss:$9 sm:$0xff] %v93
  %424 = vst [vmem:[%s321] ss:$9 sm:$0xff] %v94
  %v425 = vld [vmem:[#allocation1] sm:$0xff]
  %427 = vst [vmem:[#allocation1] ss:$9 sm:$0xff] %v95
  %429 = vst [vmem:[%s303] ss:$9 sm:$0xff] %v96
  %431 = vst [vmem:[%s306] ss:$9 sm:$0xff] %v97
  %433 = vst [vmem:[%s309] ss:$9 sm:$0xff] %v98
  %435 = vst [vmem:[%s312] ss:$9 sm:$0xff] %v99
  %437 = vst [vmem:[%s315] ss:$9 sm:$0xff] %v100
  %439 = vst [vmem:[%s318] ss:$9 sm:$0xff] %v101
  %441 = vst [vmem:[%s321] ss:$9 sm:$0xff] %v102
  %v442 = vld [vmem:[#allocation1] sm:$0xff]
  %444 = vst [vmem:[#allocation1] ss:$9 sm:$0xff] %v103
  %446 = vst [vmem:[%s303] ss:$9 sm:$0xff] %v104
  %448 = vst [vmem:[%s306] ss:$9 sm:$0xff] %v105
  %450 = vst [vmem:[%s309] ss:$9 sm:$0xff] %v106
  %452 = vst [vmem:[%s312] ss:$9 sm:$0xff] %v107
  %454 = vst [vmem:[%s315] ss:$9 sm:$0xff] %v108
  %456 = vst [vmem:[%s318] ss:$9 sm:$0xff] %v109
  %458 = vst [vmem:[%s321] ss:$9 sm:$0xff] %v110
  %v459 = vld [vmem:[#allocation1] sm:$0xff]
  %461 = vst [vmem:[#allocation1] ss:$9 sm:$0xff] %v111
  %463 = vst [vmem:[%s303] ss:$9 sm:$0xff] %v112
  %465 = vst [vmem:[%s306] ss:$9 sm:$0xff] %v113
  %467 = vst [vmem:[%s309] ss:$9 sm:$0xff] %v114
  %469 = vst [vmem:[%s312] ss:$9 sm:$0xff] %v115
  %471 = vst [vmem:[%s315] ss:$9 sm:$0xff] %v116
  %473 = vst [vmem:[%s318] ss:$9 sm:$0xff] %v117
  %475 = vst [vmem:[%s321] ss:$9 sm:$0xff] %v118
  %v476 = vld [vmem:[#allocation1] sm:$0xff]
  %478 = vst [vmem:[#allocation1] ss:$9 sm:$0xff] %v119
  %480 = vst [vmem:[%s303] ss:$9 sm:$0xff] %v120
  %482 = vst [vmem:[%s306] ss:$9 sm:$0xff] %v121
  %484 = vst [vmem:[%s309] ss:$9 sm:$0xff] %v122
  %486 = vst [vmem:[%s312] ss:$9 sm:$0xff] %v123
  %488 = vst [vmem:[%s315] ss:$9 sm:$0xff] %v124
  %490 = vst [vmem:[%s318] ss:$9 sm:$0xff] %v125
  %492 = vst [vmem:[%s321] ss:$9 sm:$0xff] %v126
  %v493 = vld [vmem:[#allocation1] sm:$0xff]
  %495 = vst [vmem:[#allocation1] ss:$9 sm:$0xff] %v127
  %497 = vst [vmem:[%s303] ss:$9 sm:$0xff] %v128
  %499 = vst [vmem:[%s306] ss:$9 sm:$0xff] %v129
  %501 = vst [vmem:[%s309] ss:$9 sm:$0xff] %v130
  %503 = vst [vmem:[%s312] ss:$9 sm:$0xff] %v131
  %505 = vst [vmem:[%s315] ss:$9 sm:$0xff] %v132
  %507 = vst [vmem:[%s318] ss:$9 sm:$0xff] %v133
  %509 = vst [vmem:[%s321] ss:$9 sm:$0xff] %v134
  %v510 = vld [vmem:[#allocation1] sm:$0xff]
  %512 = vst [vmem:[#allocation1] ss:$9 sm:$0xff] %v135
  %514 = vst [vmem:[%s303] ss:$9 sm:$0xff] %v136
  %516 = vst [vmem:[%s306] ss:$9 sm:$0xff] %v137
  %518 = vst [vmem:[%s309] ss:$9 sm:$0xff] %v138
  %520 = vst [vmem:[%s312] ss:$9 sm:$0xff] %v139
  %522 = vst [vmem:[%s315] ss:$9 sm:$0xff] %v140
  %524 = vst [vmem:[%s318] ss:$9 sm:$0xff] %v141
  %526 = vst [vmem:[%s321] ss:$9 sm:$0xff] %v142
  %v527 = vld [vmem:[#allocation1] sm:$0xff]
  %529 = vst [vmem:[#allocation1] ss:$9 sm:$0xff] %v143
  %531 = vst [vmem:[%s303] ss:$9 sm:$0xff] %v144
  %533 = vst [vmem:[%s306] ss:$9 sm:$0xff] %v145
  %535 = vst [vmem:[%s309] ss:$9 sm:$0xff] %v146
  %537 = vst [vmem:[%s312] ss:$9 sm:$0xff] %v147
  %539 = vst [vmem:[%s315] ss:$9 sm:$0xff] %v148
  %541 = vst [vmem:[%s318] ss:$9 sm:$0xff] %v149
  %543 = vst [vmem:[%s321] ss:$9 sm:$0xff] %v150
  %v544 = vld [vmem:[#allocation1] sm:$0xff]
  %546 = vst [vmem:[#allocation1] ss:$9 sm:$0xff] %v151
  %548 = vst [vmem:[%s303] ss:$9 sm:$0xff] %v152
  %550 = vst [vmem:[%s306] ss:$9 sm:$0xff] %v153
  %552 = vst [vmem:[%s309] ss:$9 sm:$0xff] %v154
  %554 = vst [vmem:[%s312] ss:$9 sm:$0xff] %v155
  %556 = vst [vmem:[%s315] ss:$9 sm:$0xff] %v156
  %558 = vst [vmem:[%s318] ss:$9 sm:$0xff] %v157
  %560 = vst [vmem:[%s321] ss:$9 sm:$0xff] %v158
  %v561 = vld [vmem:[#allocation1] sm:$0xff]
  %563 = vst [vmem:[#allocation1] ss:$9 sm:$0xff] %v159
  %565 = vst [vmem:[%s303] ss:$9 sm:$0xff] %v160
  %567 = vst [vmem:[%s306] ss:$9 sm:$0xff] %v161
  %569 = vst [vmem:[%s309] ss:$9 sm:$0xff] %v162
  %571 = vst [vmem:[%s312] ss:$9 sm:$0xff] %v163
  %573 = vst [vmem:[%s315] ss:$9 sm:$0xff] %v164
  %575 = vst [vmem:[%s318] ss:$9 sm:$0xff] %v165
  %577 = vst [vmem:[%s321] ss:$9 sm:$0xff] %v166
  %v578 = vld [vmem:[#allocation1] sm:$0xff]
  %580 = vst [vmem:[#allocation1] ss:$9 sm:$0xff] %v167
  %582 = vst [vmem:[%s303] ss:$9 sm:$0xff] %v168
  %584 = vst [vmem:[%s306] ss:$9 sm:$0xff] %v169
  %586 = vst [vmem:[%s309] ss:$9 sm:$0xff] %v170
  %588 = vst [vmem:[%s312] ss:$9 sm:$0xff] %v171
  %590 = vst [vmem:[%s315] ss:$9 sm:$0xff] %v172
  %592 = vst [vmem:[%s318] ss:$9 sm:$0xff] %v173
  %594 = vst [vmem:[%s321] ss:$9 sm:$0xff] %v174
  %v595 = vld [vmem:[#allocation1] sm:$0xff]
  %597 = vst [vmem:[#allocation1] ss:$9 sm:$0xff] %v175
  %599 = vst [vmem:[%s303] ss:$9 sm:$0xff] %v176
  %601 = vst [vmem:[%s306] ss:$9 sm:$0xff] %v177
  %603 = vst [vmem:[%s309] ss:$9 sm:$0xff] %v178
  %605 = vst [vmem:[%s312] ss:$9 sm:$0xff] %v179
  %607 = vst [vmem:[%s315] ss:$9 sm:$0xff] %v180
  %609 = vst [vmem:[%s318] ss:$9 sm:$0xff] %v181
  %611 = vst [vmem:[%s321] ss:$9 sm:$0xff] %v182
  %v612 = vld [vmem:[#allocation1] sm:$0xff]
  %614 = vst [vmem:[#allocation1] ss:$9 sm:$0xff] %v183
  %616 = vst [vmem:[%s303] ss:$9 sm:$0xff] %v184
  %618 = vst [vmem:[%s306] ss:$9 sm:$0xff] %v185
  %620 = vst [vmem:[%s309] ss:$9 sm:$0xff] %v186
  %622 = vst [vmem:[%s312] ss:$9 sm:$0xff] %v187
  %624 = vst [vmem:[%s315] ss:$9 sm:$0xff] %v188
  %626 = vst [vmem:[%s318] ss:$9 sm:$0xff] %v189
  %628 = vst [vmem:[%s321] ss:$9 sm:$0xff] %v190
  %v629 = vld [vmem:[#allocation1] sm:$0xff]
  %631 = vst [vmem:[#allocation1] ss:$9 sm:$0xff] %v191
  %633 = vst [vmem:[%s303] ss:$9 sm:$0xff] %v192
  %635 = vst [vmem:[%s306] ss:$9 sm:$0xff] %v193
  %637 = vst [vmem:[%s309] ss:$9 sm:$0xff] %v194
  %639 = vst [vmem:[%s312] ss:$9 sm:$0xff] %v195
  %641 = vst [vmem:[%s315] ss:$9 sm:$0xff] %v196
  %643 = vst [vmem:[%s318] ss:$9 sm:$0xff] %v197
  %645 = vst [vmem:[%s321] ss:$9 sm:$0xff] %v198
  %v646 = vld [vmem:[#allocation1] sm:$0xff]
  %648 = vst [vmem:[#allocation1] ss:$9 sm:$0xff] %v199
  %650 = vst [vmem:[%s303] ss:$9 sm:$0xff] %v200
  %652 = vst [vmem:[%s306] ss:$9 sm:$0xff] %v201
  %654 = vst [vmem:[%s309] ss:$9 sm:$0xff] %v202
  %656 = vst [vmem:[%s312] ss:$9 sm:$0xff] %v203
  %658 = vst [vmem:[%s315] ss:$9 sm:$0xff] %v204
  %660 = vst [vmem:[%s318] ss:$9 sm:$0xff] %v205
  %662 = vst [vmem:[%s321] ss:$9 sm:$0xff] %v206
  %v663 = vld [vmem:[#allocation1] sm:$0xff]
  %665 = vst [vmem:[#allocation1] ss:$9 sm:$0xff] %v207
  %667 = vst [vmem:[%s303] ss:$9 sm:$0xff] %v208
  %669 = vst [vmem:[%s306] ss:$9 sm:$0xff] %v209
  %671 = vst [vmem:[%s309] ss:$9 sm:$0xff] %v210
  %673 = vst [vmem:[%s312] ss:$9 sm:$0xff] %v211
  %675 = vst [vmem:[%s315] ss:$9 sm:$0xff] %v212
  %677 = vst [vmem:[%s318] ss:$9 sm:$0xff] %v213
  %679 = vst [vmem:[%s321] ss:$9 sm:$0xff] %v214
  %v680 = vld [vmem:[#allocation1] sm:$0xff]
  %682 = vst [vmem:[#allocation1] ss:$9 sm:$0xff] %v215
  %684 = vst [vmem:[%s303] ss:$9 sm:$0xff] %v216
  %686 = vst [vmem:[%s306] ss:$9 sm:$0xff] %v217
  %688 = vst [vmem:[%s309] ss:$9 sm:$0xff] %v218
  %690 = vst [vmem:[%s312] ss:$9 sm:$0xff] %v219
  %692 = vst [vmem:[%s315] ss:$9 sm:$0xff] %v220
  %694 = vst [vmem:[%s318] ss:$9 sm:$0xff] %v221
  %696 = vst [vmem:[%s321] ss:$9 sm:$0xff] %v222
  %v697 = vld [vmem:[#allocation1] sm:$0xff]
  %699 = vst [vmem:[#allocation1] ss:$9 sm:$0xff] %v223
  %701 = vst [vmem:[%s303] ss:$9 sm:$0xff] %v224
  %703 = vst [vmem:[%s306] ss:$9 sm:$0xff] %v225
  %705 = vst [vmem:[%s309] ss:$9 sm:$0xff] %v226
  %707 = vst [vmem:[%s312] ss:$9 sm:$0xff] %v227
  %709 = vst [vmem:[%s315] ss:$9 sm:$0xff] %v228
  %711 = vst [vmem:[%s318] ss:$9 sm:$0xff] %v229
  %713 = vst [vmem:[%s321] ss:$9 sm:$0xff] %v230
  %v714 = vld [vmem:[#allocation1] sm:$0xff]
  %716 = vst [vmem:[#allocation1] ss:$9 sm:$0xff] %v231
  %718 = vst [vmem:[%s303] ss:$9 sm:$0xff] %v232
  %720 = vst [vmem:[%s306] ss:$9 sm:$0xff] %v233
  %722 = vst [vmem:[%s309] ss:$9 sm:$0xff] %v234
  %724 = vst [vmem:[%s312] ss:$9 sm:$0xff] %v235
  %726 = vst [vmem:[%s315] ss:$9 sm:$0xff] %v236
  %728 = vst [vmem:[%s318] ss:$9 sm:$0xff] %v237
  %730 = vst [vmem:[%s321] ss:$9 sm:$0xff] %v238
  %v731 = vld [vmem:[#allocation1] sm:$0xff]
  %733 = vst [vmem:[#allocation1] ss:$9 sm:$0xff] %v239
  %735 = vst [vmem:[%s303] ss:$9 sm:$0xff] %v240
  %737 = vst [vmem:[%s306] ss:$9 sm:$0xff] %v241
  %739 = vst [vmem:[%s309] ss:$9 sm:$0xff] %v242
  %741 = vst [vmem:[%s312] ss:$9 sm:$0xff] %v243
  %743 = vst [vmem:[%s315] ss:$9 sm:$0xff] %v244
  %745 = vst [vmem:[%s318] ss:$9 sm:$0xff] %v245
  %747 = vst [vmem:[%s321] ss:$9 sm:$0xff] %v246
  %v748 = vld [vmem:[#allocation1] sm:$0xff]
  %750 = vst [vmem:[#allocation1] ss:$9 sm:$0xff] %v247
  %752 = vst [vmem:[%s303] ss:$9 sm:$0xff] %v248
  %754 = vst [vmem:[%s306] ss:$9 sm:$0xff] %v249
  %756 = vst [vmem:[%s309] ss:$9 sm:$0xff] %v250
  %758 = vst [vmem:[%s312] ss:$9 sm:$0xff] %v251
  %760 = vst [vmem:[%s315] ss:$9 sm:$0xff] %v252
  %762 = vst [vmem:[%s318] ss:$9 sm:$0xff] %v253
  %764 = vst [vmem:[%s321] ss:$9 sm:$0xff] %v254
  %v765 = vld [vmem:[#allocation1] sm:$0xff]
  %767 = vst [vmem:[#allocation1] ss:$9 sm:$0xff] %v255
  %769 = vst [vmem:[%s303] ss:$9 sm:$0xff] %v256
  %771 = vst [vmem:[%s306] ss:$9 sm:$0xff] %v257
  %773 = vst [vmem:[%s309] ss:$9 sm:$0xff] %v258
  %775 = vst [vmem:[%s312] ss:$9 sm:$0xff] %v259
  %777 = vst [vmem:[%s315] ss:$9 sm:$0xff] %v260
  %779 = vst [vmem:[%s318] ss:$9 sm:$0xff] %v261
  %781 = vst [vmem:[%s321] ss:$9 sm:$0xff] %v262
  %v782 = vld [vmem:[#allocation1] sm:$0xff]
  %784 = vst [vmem:[#allocation1] ss:$9 sm:$0xff] %v263
  %786 = vst [vmem:[%s303] ss:$9 sm:$0xff] %v264
  %788 = vst [vmem:[%s306] ss:$9 sm:$0xff] %v265
  %790 = vst [vmem:[%s309] ss:$9 sm:$0xff] %v266
  %792 = vst [vmem:[%s312] ss:$9 sm:$0xff] %v267
  %794 = vst [vmem:[%s315] ss:$9 sm:$0xff] %v268
  %796 = vst [vmem:[%s318] ss:$9 sm:$0xff] %v269
  %798 = vst [vmem:[%s321] ss:$9 sm:$0xff] %v270
  %v799 = vld [vmem:[#allocation1] sm:$0xff]
  %801 = vst [vmem:[#allocation1] ss:$9 sm:$0xff] %v271
  %803 = vst [vmem:[%s303] ss:$9 sm:$0xff] %v272
  %805 = vst [vmem:[%s306] ss:$9 sm:$0xff] %v273
  %807 = vst [vmem:[%s309] ss:$9 sm:$0xff] %v274
  %809 = vst [vmem:[%s312] ss:$9 sm:$0xff] %v275
  %811 = vst [vmem:[%s315] ss:$9 sm:$0xff] %v276
  %813 = vst [vmem:[%s318] ss:$9 sm:$0xff] %v277
  %815 = vst [vmem:[%s321] ss:$9 sm:$0xff] %v278
  %v816 = vld [vmem:[#allocation1] sm:$0xff]
  %818 = vst [vmem:[#allocation1] ss:$9 sm:$0xff] %v279
  %820 = vst [vmem:[%s303] ss:$9 sm:$0xff] %v280
  %822 = vst [vmem:[%s306] ss:$9 sm:$0xff] %v281
  %824 = vst [vmem:[%s309] ss:$9 sm:$0xff] %v282
  %826 = vst [vmem:[%s312] ss:$9 sm:$0xff] %v283
  %828 = vst [vmem:[%s315] ss:$9 sm:$0xff] %v284
  %830 = vst [vmem:[%s318] ss:$9 sm:$0xff] %v285
  %832 = vst [vmem:[%s321] ss:$9 sm:$0xff] %v286
  %v833 = vld [vmem:[#allocation1] sm:$0xff]
  %835 = vst [vmem:[#allocation1] ss:$9 sm:$0xff] %v287
  %837 = vst [vmem:[%s303] ss:$9 sm:$0xff] %v288
  %839 = vst [vmem:[%s306] ss:$9 sm:$0xff] %v289
  %841 = vst [vmem:[%s309] ss:$9 sm:$0xff] %v290
  %843 = vst [vmem:[%s312] ss:$9 sm:$0xff] %v291
  %845 = vst [vmem:[%s315] ss:$9 sm:$0xff] %v292
  %847 = vst [vmem:[%s318] ss:$9 sm:$0xff] %v293
  %849 = vst [vmem:[%s321] ss:$9 sm:$0xff] %v294
  %v850 = vld [vmem:[#allocation1] sm:$0xff]
  %vm851 = vcmask 64512
  %v852 = vsel %vm851, %v323, 0
  %v854 = vsel %vm851, %v340, 0
  %v856 = vsel %vm851, %v357, 0
  %v858 = vsel %vm851, %v374, 0
  %v860 = vsel %vm851, %v391, 0
  %v862 = vsel %vm851, %v408, 0
  %v864 = vsel %vm851, %v425, 0
  %v866 = vsel %vm851, %v442, 0
  %v868 = vsel %vm851, %v459, 0
  %v870 = vsel %vm851, %v476, 0
  %v872 = vsel %vm851, %v493, 0
  %v874 = vsel %vm851, %v510, 0
  %v876 = vsel %vm851, %v527, 0
  %v878 = vsel %vm851, %v544, 0
  %v880 = vsel %vm851, %v561, 0
  %v882 = vsel %vm851, %v578, 0
  %v884 = vsel %vm851, %v595, 0
  %v886 = vsel %vm851, %v612, 0
  %v888 = vsel %vm851, %v629, 0
  %v890 = vsel %vm851, %v646, 0
  %v892 = vsel %vm851, %v663, 0
  %v894 = vsel %vm851, %v680, 0
  %v896 = vsel %vm851, %v697, 0
  %v898 = vsel %vm851, %v714, 0
  %v900 = vsel %vm851, %v731, 0
  %v902 = vsel %vm851, %v748, 0
  %v904 = vsel %vm851, %v765, 0
  %v906 = vsel %vm851, %v782, 0
  %v908 = vsel %vm851, %v799, 0
  %v910 = vsel %vm851, %v816, 0
  %v912 = vsel %vm851, %v833, 0
  %v914 = vsel %vm851, %v850, 0
  %vm916 = vcmask 1043456
  %v918 = vsel %vm916, %v295, 0
  %920 = vmatpush.bf16.msra.mxu0 0
  %921 = vmatpush.bf16.msra.mxu0 0
  %922 = vmatpush.bf16.msra.mxu0 0
  %923 = vmatpush.bf16.msra.mxu0 0
  %924 = vmatpush.bf16.msra.mxu0 0
  %925 = vmatpush.bf16.msra.mxu0 0
  %926 = vmatpush.bf16.msra.mxu0 0
  %927 = vmatpush.bf16.msra.mxu0 %v918
  %928 = vmatmul.bf16.gmra.mxu0 %v852
  %v929 = vpop.f32.mrf.mxu0
  %v930 = vadd.f32 %v298, %v929
  %v931 = vpop.f32.mrf.mxu0
  %v932 = vadd.f32 %v298, %v931
  %933 = vmatmul.bf16.gmra.mxu0 %v854
  %v934 = vpop.f32.mrf.mxu0
  %v935 = vadd.f32 %v298, %v934
  %v936 = vpop.f32.mrf.mxu0
  %v937 = vadd.f32 %v298, %v936
  %938 = vmatmul.bf16.gmra.mxu0 %v856
  %v939 = vpop.f32.mrf.mxu0
  %v940 = vadd.f32 %v298, %v939
  %v941 = vpop.f32.mrf.mxu0
  %v942 = vadd.f32 %v298, %v941
  %943 = vmatmul.bf16.gmra.mxu0 %v858
  %v944 = vpop.f32.mrf.mxu0
  %v945 = vadd.f32 %v298, %v944
  %v946 = vpop.f32.mrf.mxu0
  %v947 = vadd.f32 %v298, %v946
  %948 = vmatmul.bf16.gmra.mxu0 %v860
  %v949 = vpop.f32.mrf.mxu0
  %v950 = vadd.f32 %v298, %v949
  %v951 = vpop.f32.mrf.mxu0
  %v952 = vadd.f32 %v298, %v951
  %953 = vmatmul.bf16.gmra.mxu0 %v862
  %v954 = vpop.f32.mrf.mxu0
  %v955 = vadd.f32 %v298, %v954
  %v956 = vpop.f32.mrf.mxu0
  %v957 = vadd.f32 %v298, %v956
  %958 = vmatmul.bf16.gmra.mxu0 %v864
  %v959 = vpop.f32.mrf.mxu0
  %v960 = vadd.f32 %v298, %v959
  %v961 = vpop.f32.mrf.mxu0
  %v962 = vadd.f32 %v298, %v961
  %963 = vmatmul.bf16.gmra.mxu0 %v866
  %v964 = vpop.f32.mrf.mxu0
  %v965 = vadd.f32 %v298, %v964
  %v966 = vpop.f32.mrf.mxu0
  %v967 = vadd.f32 %v298, %v966
  %968 = vmatmul.bf16.gmra.mxu0 %v868
  %v969 = vpop.f32.mrf.mxu0
  %v970 = vadd.f32 %v298, %v969
  %v971 = vpop.f32.mrf.mxu0
  %v972 = vadd.f32 %v298, %v971
  %973 = vmatmul.bf16.gmra.mxu0 %v870
  %v974 = vpop.f32.mrf.mxu0
  %v975 = vadd.f32 %v298, %v974
  %v976 = vpop.f32.mrf.mxu0
  %v977 = vadd.f32 %v298, %v976
  %978 = vmatmul.bf16.gmra.mxu0 %v872
  %v979 = vpop.f32.mrf.mxu0
  %v980 = vadd.f32 %v298, %v979
  %v981 = vpop.f32.mrf.mxu0
  %v982 = vadd.f32 %v298, %v981
  %983 = vmatmul.bf16.gmra.mxu0 %v874
  %v984 = vpop.f32.mrf.mxu0
  %v985 = vadd.f32 %v298, %v984
  %v986 = vpop.f32.mrf.mxu0
  %v987 = vadd.f32 %v298, %v986
  %988 = vmatmul.bf16.gmra.mxu0 %v876
  %v989 = vpop.f32.mrf.mxu0
  %v990 = vadd.f32 %v298, %v989
  %v991 = vpop.f32.mrf.mxu0
  %v992 = vadd.f32 %v298, %v991
  %993 = vmatmul.bf16.gmra.mxu0 %v878
  %v994 = vpop.f32.mrf.mxu0
  %v995 = vadd.f32 %v298, %v994
  %v996 = vpop.f32.mrf.mxu0
  %v997 = vadd.f32 %v298, %v996
  %998 = vmatmul.bf16.gmra.mxu0 %v880
  %v999 = vpop.f32.mrf.mxu0
  %v1000 = vadd.f32 %v298, %v999
  %v1001 = vpop.f32.mrf.mxu0
  %v1002 = vadd.f32 %v298, %v1001
  %1003 = vmatmul.bf16.gmra.mxu0 %v882
  %v1004 = vpop.f32.mrf.mxu0
  %v1005 = vadd.f32 %v298, %v1004
  %v1006 = vpop.f32.mrf.mxu0
  %v1007 = vadd.f32 %v298, %v1006
  %1008 = vmatmul.bf16.gmra.mxu0 %v884
  %v1009 = vpop.f32.mrf.mxu0
  %v1010 = vadd.f32 %v298, %v1009
  %v1011 = vpop.f32.mrf.mxu0
  %v1012 = vadd.f32 %v298, %v1011
  %1013 = vmatmul.bf16.gmra.mxu0 %v886
  %v1014 = vpop.f32.mrf.mxu0
  %v1015 = vadd.f32 %v298, %v1014
  %v1016 = vpop.f32.mrf.mxu0
  %v1017 = vadd.f32 %v298, %v1016
  %1018 = vmatmul.bf16.gmra.mxu0 %v888
  %v1019 = vpop.f32.mrf.mxu0
  %v1020 = vadd.f32 %v298, %v1019
  %v1021 = vpop.f32.mrf.mxu0
  %v1022 = vadd.f32 %v298, %v1021
  %1023 = vmatmul.bf16.gmra.mxu0 %v890
  %v1024 = vpop.f32.mrf.mxu0
  %v1025 = vadd.f32 %v298, %v1024
  %v1026 = vpop.f32.mrf.mxu0
  %v1027 = vadd.f32 %v298, %v1026
  %1028 = vmatmul.bf16.gmra.mxu0 %v892
  %v1029 = vpop.f32.mrf.mxu0
  %v1030 = vadd.f32 %v298, %v1029
  %v1031 = vpop.f32.mrf.mxu0
  %v1032 = vadd.f32 %v298, %v1031
  %1033 = vmatmul.bf16.gmra.mxu0 %v894
  %v1034 = vpop.f32.mrf.mxu0
  %v1035 = vadd.f32 %v298, %v1034
  %v1036 = vpop.f32.mrf.mxu0
  %v1037 = vadd.f32 %v298, %v1036
  %1038 = vmatmul.bf16.gmra.mxu0 %v896
  %v1039 = vpop.f32.mrf.mxu0
  %v1040 = vadd.f32 %v298, %v1039
  %v1041 = vpop.f32.mrf.mxu0
  %v1042 = vadd.f32 %v298, %v1041
  %1043 = vmatmul.bf16.gmra.mxu0 %v898
  %v1044 = vpop.f32.mrf.mxu0
  %v1045 = vadd.f32 %v298, %v1044
  %v1046 = vpop.f32.mrf.mxu0
  %v1047 = vadd.f32 %v298, %v1046
  %1048 = vmatmul.bf16.gmra.mxu0 %v900
  %v1049 = vpop.f32.mrf.mxu0
  %v1050 = vadd.f32 %v298, %v1049
  %v1051 = vpop.f32.mrf.mxu0
  %v1052 = vadd.f32 %v298, %v1051
  %1053 = vmatmul.bf16.gmra.mxu0 %v902
  %v1054 = vpop.f32.mrf.mxu0
  %v1055 = vadd.f32 %v298, %v1054
  %v1056 = vpop.f32.mrf.mxu0
  %v1057 = vadd.f32 %v298, %v1056
  %1058 = vmatmul.bf16.gmra.mxu0 %v904
  %v1059 = vpop.f32.mrf.mxu0
  %v1060 = vadd.f32 %v298, %v1059
  %v1061 = vpop.f32.mrf.mxu0
  %v1062 = vadd.f32 %v298, %v1061
  %1063 = vmatmul.bf16.gmra.mxu0 %v906
  %v1064 = vpop.f32.mrf.mxu0
  %v1065 = vadd.f32 %v298, %v1064
  %v1066 = vpop.f32.mrf.mxu0
  %v1067 = vadd.f32 %v298, %v1066
  %1068 = vmatmul.bf16.gmra.mxu0 %v908
  %v1069 = vpop.f32.mrf.mxu0
  %v1070 = vadd.f32 %v298, %v1069
  %v1071 = vpop.f32.mrf.mxu0
  %v1072 = vadd.f32 %v298, %v1071
  %1073 = vmatmul.bf16.gmra.mxu0 %v910
  %v1074 = vpop.f32.mrf.mxu0
  %v1075 = vadd.f32 %v298, %v1074
  %v1076 = vpop.f32.mrf.mxu0
  %v1077 = vadd.f32 %v298, %v1076
  %1078 = vmatmul.bf16.gmra.mxu0 %v912
  %v1079 = vpop.f32.mrf.mxu0
  %v1080 = vadd.f32 %v298, %v1079
  %v1081 = vpop.f32.mrf.mxu0
  %v1082 = vadd.f32 %v298, %v1081
  %1083 = vmatmul.bf16.gmra.mxu0 %v914
  %v1084 = vpop.f32.mrf.mxu0
  %v1085 = vadd.f32 %v298, %v1084
  %v1086 = vpop.f32.mrf.mxu0
  %v1087 = vadd.f32 %v298, %v1086
  %1088 = vdwg.mxu0
  %v1089 = vtanh.pop %v930
  %v1090 = vtanh.pop %v932
  %v1091 = vtanh.pop %v935
  %v1092 = vtanh.pop %v937
  %v1093 = vtanh.pop %v940
  %v1094 = vtanh.pop %v942
  %v1095 = vtanh.pop %v945
  %v1096 = vtanh.pop %v947
  %v1097 = vtanh.pop %v950
  %v1098 = vtanh.pop %v952
  %v1099 = vtanh.pop %v955
  %v1100 = vtanh.pop %v957
  %v1101 = vtanh.pop %v960
  %v1102 = vtanh.pop %v962
  %v1103 = vtanh.pop %v965
  %v1104 = vtanh.pop %v967
  %v1105 = vtanh.pop %v970
  %v1106 = vtanh.pop %v972
  %v1107 = vtanh.pop %v975
  %v1108 = vtanh.pop %v977
  %v1109 = vtanh.pop %v980
  %v1110 = vtanh.pop %v982
  %v1111 = vtanh.pop %v985
  %v1112 = vtanh.pop %v987
  %v1113 = vtanh.pop %v990
  %v1114 = vtanh.pop %v992
  %v1115 = vtanh.pop %v995
  %v1116 = vtanh.pop %v997
  %v1117 = vtanh.pop %v1000
  %v1118 = vtanh.pop %v1002
  %v1119 = vtanh.pop %v1005
  %v1120 = vtanh.pop %v1007
  %v1121 = vtanh.pop %v1010
  %v1122 = vtanh.pop %v1012
  %v1123 = vtanh.pop %v1015
  %v1124 = vtanh.pop %v1017
  %v1125 = vtanh.pop %v1020
  %v1126 = vtanh.pop %v1022
  %v1127 = vtanh.pop %v1025
  %v1128 = vtanh.pop %v1027
  %v1129 = vtanh.pop %v1030
  %v1130 = vtanh.pop %v1032
  %v1131 = vtanh.pop %v1035
  %v1132 = vtanh.pop %v1037
  %v1133 = vtanh.pop %v1040
  %v1134 = vtanh.pop %v1042
  %v1135 = vtanh.pop %v1045
  %v1136 = vtanh.pop %v1047
  %v1137 = vtanh.pop %v1050
  %v1138 = vtanh.pop %v1052
  %v1139 = vtanh.pop %v1055
  %v1140 = vtanh.pop %v1057
  %v1141 = vtanh.pop %v1060
  %v1142 = vtanh.pop %v1062
  %v1143 = vtanh.pop %v1065
  %v1144 = vtanh.pop %v1067
  %v1145 = vtanh.pop %v1070
  %v1146 = vtanh.pop %v1072
  %v1147 = vtanh.pop %v1075
  %v1148 = vtanh.pop %v1077
  %v1149 = vtanh.pop %v1080
  %v1150 = vtanh.pop %v1082
  %v1151 = vtanh.pop %v1085
  %v1152 = vtanh.pop %v1087
  %v1153 = vpack.c.bf16 %v1089, %v1089
  %v1154 = vpack.c.bf16 %v1090, %v1090
  %v1155 = vpack.c.bf16 %v1091, %v1091
  %v1156 = vpack.c.bf16 %v1092, %v1092
  %v1157 = vpack.c.bf16 %v1093, %v1093
  %v1158 = vpack.c.bf16 %v1094, %v1094
  %v1159 = vpack.c.bf16 %v1095, %v1095
  %v1160 = vpack.c.bf16 %v1096, %v1096
  %v1161 = vpack.c.bf16 %v1097, %v1097
  %v1162 = vpack.c.bf16 %v1098, %v1098
  %v1163 = vpack.c.bf16 %v1099, %v1099
  %v1164 = vpack.c.bf16 %v1100, %v1100
  %v1165 = vpack.c.bf16 %v1101, %v1101
  %v1166 = vpack.c.bf16 %v1102, %v1102
  %v1167 = vpack.c.bf16 %v1103, %v1103
  %v1168 = vpack.c.bf16 %v1104, %v1104
  %v1169 = vpack.c.bf16 %v1105, %v1105
  %v1170 = vpack.c.bf16 %v1106, %v1106
  %v1171 = vpack.c.bf16 %v1107, %v1107
  %v1172 = vpack.c.bf16 %v1108, %v1108
  %v1173 = vpack.c.bf16 %v1109, %v1109
  %v1174 = vpack.c.bf16 %v1110, %v1110
  %v1175 = vpack.c.bf16 %v1111, %v1111
  %v1176 = vpack.c.bf16 %v1112, %v1112
  %v1177 = vpack.c.bf16 %v1113, %v1113
  %v1178 = vpack.c.bf16 %v1114, %v1114
  %v1179 = vpack.c.bf16 %v1115, %v1115
  %v1180 = vpack.c.bf16 %v1116, %v1116
  %v1181 = vpack.c.bf16 %v1117, %v1117
  %v1182 = vpack.c.bf16 %v1118, %v1118
  %v1183 = vpack.c.bf16 %v1119, %v1119
  %v1184 = vpack.c.bf16 %v1120, %v1120
  %v1185 = vpack.c.bf16 %v1121, %v1121
  %v1186 = vpack.c.bf16 %v1122, %v1122
  %v1187 = vpack.c.bf16 %v1123, %v1123
  %v1188 = vpack.c.bf16 %v1124, %v1124
  %v1189 = vpack.c.bf16 %v1125, %v1125
  %v1190 = vpack.c.bf16 %v1126, %v1126
  %v1191 = vpack.c.bf16 %v1127, %v1127
  %v1192 = vpack.c.bf16 %v1128, %v1128
  %v1193 = vpack.c.bf16 %v1129, %v1129
  %v1194 = vpack.c.bf16 %v1130, %v1130
  %v1195 = vpack.c.bf16 %v1131, %v1131
  %v1196 = vpack.c.bf16 %v1132, %v1132
  %v1197 = vpack.c.bf16 %v1133, %v1133
  %v1198 = vpack.c.bf16 %v1134, %v1134
  %v1199 = vpack.c.bf16 %v1135, %v1135
  %v1200 = vpack.c.bf16 %v1136, %v1136
  %v1201 = vpack.c.bf16 %v1137, %v1137
  %v1202 = vpack.c.bf16 %v1138, %v1138
  %v1203 = vpack.c.bf16 %v1139, %v1139
  %v1204 = vpack.c.bf16 %v1140, %v1140
  %v1205 = vpack.c.bf16 %v1141, %v1141
  %v1206 = vpack.c.bf16 %v1142, %v1142
  %v1207 = vpack.c.bf16 %v1143, %v1143
  %v1208 = vpack.c.bf16 %v1144, %v1144
  %v1209 = vpack.c.bf16 %v1145, %v1145
  %v1210 = vpack.c.bf16 %v1146, %v1146
  %v1211 = vpack.c.bf16 %v1147, %v1147
  %v1212 = vpack.c.bf16 %v1148, %v1148
  %v1213 = vpack.c.bf16 %v1149, %v1149
  %v1214 = vpack.c.bf16 %v1150, %v1150
  %v1215 = vpack.c.bf16 %v1151, %v1151
  %v1216 = vpack.c.bf16 %v1152, %v1152
  %v1281 = vrot.slane %v1153, 3
  %v1282 = vrot.slane %v1154, 3
  %v1283 = vrot.slane %v1155, 3
  %v1284 = vrot.slane %v1156, 3
  %v1285 = vrot.slane %v1157, 3
  %v1286 = vrot.slane %v1158, 3
  %v1287 = vrot.slane %v1159, 3
  %v1288 = vrot.slane %v1160, 3
  %v1289 = vrot.slane %v1161, 3
  %v1290 = vrot.slane %v1162, 3
  %v1291 = vrot.slane %v1163, 3
  %v1292 = vrot.slane %v1164, 3
  %v1293 = vrot.slane %v1165, 3
  %v1294 = vrot.slane %v1166, 3
  %v1295 = vrot.slane %v1167, 3
  %v1296 = vrot.slane %v1168, 3
  %v1297 = vrot.slane %v1169, 3
  %v1298 = vrot.slane %v1170, 3
  %v1299 = vrot.slane %v1171, 3
  %v1300 = vrot.slane %v1172, 3
  %v1301 = vrot.slane %v1173, 3
  %v1302 = vrot.slane %v1174, 3
  %v1303 = vrot.slane %v1175, 3
  %v1304 = vrot.slane %v1176, 3
  %v1305 = vrot.slane %v1177, 3
  %v1306 = vrot.slane %v1178, 3
  %v1307 = vrot.slane %v1179, 3
  %v1308 = vrot.slane %v1180, 3
  %v1309 = vrot.slane %v1181, 3
  %v1310 = vrot.slane %v1182, 3
  %v1311 = vrot.slane %v1183, 3
  %v1312 = vrot.slane %v1184, 3
  %v1313 = vrot.slane %v1185, 3
  %v1314 = vrot.slane %v1186, 3
  %v1315 = vrot.slane %v1187, 3
  %v1316 = vrot.slane %v1188, 3
  %v1317 = vrot.slane %v1189, 3
  %v1318 = vrot.slane %v1190, 3
  %v1319 = vrot.slane %v1191, 3
  %v1320 = vrot.slane %v1192, 3
  %v1321 = vrot.slane %v1193, 3
  %v1322 = vrot.slane %v1194, 3
  %v1323 = vrot.slane %v1195, 3
  %v1324 = vrot.slane %v1196, 3
  %v1325 = vrot.slane %v1197, 3
  %v1326 = vrot.slane %v1198, 3
  %v1327 = vrot.slane %v1199, 3
  %v1328 = vrot.slane %v1200, 3
  %v1329 = vrot.slane %v1201, 3
  %v1330 = vrot.slane %v1202, 3
  %v1331 = vrot.slane %v1203, 3
  %v1332 = vrot.slane %v1204, 3
  %v1333 = vrot.slane %v1205, 3
  %v1334 = vrot.slane %v1206, 3
  %v1335 = vrot.slane %v1207, 3
  %v1336 = vrot.slane %v1208, 3
  %v1337 = vrot.slane %v1209, 3
  %v1338 = vrot.slane %v1210, 3
  %v1339 = vrot.slane %v1211, 3
  %v1340 = vrot.slane %v1212, 3
  %v1341 = vrot.slane %v1213, 3
  %v1342 = vrot.slane %v1214, 3
  %v1343 = vrot.slane %v1215, 3
  %v1344 = vrot.slane %v1216, 3
  %vm1345 = vcmask 1040384
  %v1348 = vsel %vm1345, %v1153, %v1281
  %vm1349 = vcmask 1041409
  %v1350 = vsel %vm1349, %v1153, %v1281
  %v1352 = vrot.slane %v1350, 1
  %vm1353 = vcmask 1042434
  %v1354 = vsel %vm1353, %v1153, %v1281
  %v1356 = vrot.slane %v1354, 2
  %vm1357 = vcmask 1043459
  %v1358 = vsel %vm1357, %v1153, %v1281
  %v1360 = vrot.slane %v1358, 3
  %v1363 = vsel %vm1345, %v1154, %v1282
  %v1364 = vsel %vm1349, %v1154, %v1282
  %v1366 = vrot.slane %v1364, 1
  %v1367 = vsel %vm1353, %v1154, %v1282
  %v1369 = vrot.slane %v1367, 2
  %v1370 = vsel %vm1357, %v1154, %v1282
  %v1372 = vrot.slane %v1370, 3
  %v1375 = vsel %vm1345, %v1155, %v1283
  %v1376 = vsel %vm1349, %v1155, %v1283
  %v1378 = vrot.slane %v1376, 1
  %v1379 = vsel %vm1353, %v1155, %v1283
  %v1381 = vrot.slane %v1379, 2
  %v1382 = vsel %vm1357, %v1155, %v1283
  %v1384 = vrot.slane %v1382, 3
  %v1387 = vsel %vm1345, %v1156, %v1284
  %v1388 = vsel %vm1349, %v1156, %v1284
  %v1390 = vrot.slane %v1388, 1
  %v1391 = vsel %vm1353, %v1156, %v1284
  %v1393 = vrot.slane %v1391, 2
  %v1394 = vsel %vm1357, %v1156, %v1284
  %v1396 = vrot.slane %v1394, 3
  %v1399 = vsel %vm1345, %v1157, %v1285
  %v1400 = vsel %vm1349, %v1157, %v1285
  %v1402 = vrot.slane %v1400, 1
  %v1403 = vsel %vm1353, %v1157, %v1285
  %v1405 = vrot.slane %v1403, 2
  %v1406 = vsel %vm1357, %v1157, %v1285
  %v1408 = vrot.slane %v1406, 3
  %v1411 = vsel %vm1345, %v1158, %v1286
  %v1412 = vsel %vm1349, %v1158, %v1286
  %v1414 = vrot.slane %v1412, 1
  %v1415 = vsel %vm1353, %v1158, %v1286
  %v1417 = vrot.slane %v1415, 2
  %v1418 = vsel %vm1357, %v1158, %v1286
  %v1420 = vrot.slane %v1418, 3
  %v1423 = vsel %vm1345, %v1159, %v1287
  %v1424 = vsel %vm1349, %v1159, %v1287
  %v1426 = vrot.slane %v1424, 1
  %v1427 = vsel %vm1353, %v1159, %v1287
  %v1429 = vrot.slane %v1427, 2
  %v1430 = vsel %vm1357, %v1159, %v1287
  %v1432 = vrot.slane %v1430, 3
  %v1435 = vsel %vm1345, %v1160, %v1288
  %v1436 = vsel %vm1349, %v1160, %v1288
  %v1438 = vrot.slane %v1436, 1
  %v1439 = vsel %vm1353, %v1160, %v1288
  %v1441 = vrot.slane %v1439, 2
  %v1442 = vsel %vm1357, %v1160, %v1288
  %v1444 = vrot.slane %v1442, 3
  %v1447 = vsel %vm1345, %v1161, %v1289
  %v1448 = vsel %vm1349, %v1161, %v1289
  %v1450 = vrot.slane %v1448, 1
  %v1451 = vsel %vm1353, %v1161, %v1289
  %v1453 = vrot.slane %v1451, 2
  %v1454 = vsel %vm1357, %v1161, %v1289
  %v1456 = vrot.slane %v1454, 3
  %v1459 = vsel %vm1345, %v1162, %v1290
  %v1460 = vsel %vm1349, %v1162, %v1290
  %v1462 = vrot.slane %v1460, 1
  %v1463 = vsel %vm1353, %v1162, %v1290
  %v1465 = vrot.slane %v1463, 2
  %v1466 = vsel %vm1357, %v1162, %v1290
  %v1468 = vrot.slane %v1466, 3
  %v1471 = vsel %vm1345, %v1163, %v1291
  %v1472 = vsel %vm1349, %v1163, %v1291
  %v1474 = vrot.slane %v1472, 1
  %v1475 = vsel %vm1353, %v1163, %v1291
  %v1477 = vrot.slane %v1475, 2
  %v1478 = vsel %vm1357, %v1163, %v1291
  %v1480 = vrot.slane %v1478, 3
  %v1483 = vsel %vm1345, %v1164, %v1292
  %v1484 = vsel %vm1349, %v1164, %v1292
  %v1486 = vrot.slane %v1484, 1
  %v1487 = vsel %vm1353, %v1164, %v1292
  %v1489 = vrot.slane %v1487, 2
  %v1490 = vsel %vm1357, %v1164, %v1292
  %v1492 = vrot.slane %v1490, 3
  %v1495 = vsel %vm1345, %v1165, %v1293
  %v1496 = vsel %vm1349, %v1165, %v1293
  %v1498 = vrot.slane %v1496, 1
  %v1499 = vsel %vm1353, %v1165, %v1293
  %v1501 = vrot.slane %v1499, 2
  %v1502 = vsel %vm1357, %v1165, %v1293
  %v1504 = vrot.slane %v1502, 3
  %v1507 = vsel %vm1345, %v1166, %v1294
  %v1508 = vsel %vm1349, %v1166, %v1294
  %v1510 = vrot.slane %v1508, 1
  %v1511 = vsel %vm1353, %v1166, %v1294
  %v1513 = vrot.slane %v1511, 2
  %v1514 = vsel %vm1357, %v1166, %v1294
  %v1516 = vrot.slane %v1514, 3
  %v1519 = vsel %vm1345, %v1167, %v1295
  %v1520 = vsel %vm1349, %v1167, %v1295
  %v1522 = vrot.slane %v1520, 1
  %v1523 = vsel %vm1353, %v1167, %v1295
  %v1525 = vrot.slane %v1523, 2
  %v1526 = vsel %vm1357, %v1167, %v1295
  %v1528 = vrot.slane %v1526, 3
  %v1531 = vsel %vm1345, %v1168, %v1296
  %v1532 = vsel %vm1349, %v1168, %v1296
  %v1534 = vrot.slane %v1532, 1
  %v1535 = vsel %vm1353, %v1168, %v1296
  %v1537 = vrot.slane %v1535, 2
  %v1538 = vsel %vm1357, %v1168, %v1296
  %v1540 = vrot.slane %v1538, 3
  %v1543 = vsel %vm1345, %v1169, %v1297
  %v1544 = vsel %vm1349, %v1169, %v1297
  %v1546 = vrot.slane %v1544, 1
  %v1547 = vsel %vm1353, %v1169, %v1297
  %v1549 = vrot.slane %v1547, 2
  %v1550 = vsel %vm1357, %v1169, %v1297
  %v1552 = vrot.slane %v1550, 3
  %v1555 = vsel %vm1345, %v1170, %v1298
  %v1556 = vsel %vm1349, %v1170, %v1298
  %v1558 = vrot.slane %v1556, 1
  %v1559 = vsel %vm1353, %v1170, %v1298
  %v1561 = vrot.slane %v1559, 2
  %v1562 = vsel %vm1357, %v1170, %v1298
  %v1564 = vrot.slane %v1562, 3
  %v1567 = vsel %vm1345, %v1171, %v1299
  %v1568 = vsel %vm1349, %v1171, %v1299
  %v1570 = vrot.slane %v1568, 1
  %v1571 = vsel %vm1353, %v1171, %v1299
  %v1573 = vrot.slane %v1571, 2
  %v1574 = vsel %vm1357, %v1171, %v1299
  %v1576 = vrot.slane %v1574, 3
  %v1579 = vsel %vm1345, %v1172, %v1300
  %v1580 = vsel %vm1349, %v1172, %v1300
  %v1582 = vrot.slane %v1580, 1
  %v1583 = vsel %vm1353, %v1172, %v1300
  %v1585 = vrot.slane %v1583, 2
  %v1586 = vsel %vm1357, %v1172, %v1300
  %v1588 = vrot.slane %v1586, 3
  %v1591 = vsel %vm1345, %v1173, %v1301
  %v1592 = vsel %vm1349, %v1173, %v1301
  %v1594 = vrot.slane %v1592, 1
  %v1595 = vsel %vm1353, %v1173, %v1301
  %v1597 = vrot.slane %v1595, 2
  %v1598 = vsel %vm1357, %v1173, %v1301
  %v1600 = vrot.slane %v1598, 3
  %v1603 = vsel %vm1345, %v1174, %v1302
  %v1604 = vsel %vm1349, %v1174, %v1302
  %v1606 = vrot.slane %v1604, 1
  %v1607 = vsel %vm1353, %v1174, %v1302
  %v1609 = vrot.slane %v1607, 2
  %v1610 = vsel %vm1357, %v1174, %v1302
  %v1612 = vrot.slane %v1610, 3
  %v1615 = vsel %vm1345, %v1175, %v1303
  %v1616 = vsel %vm1349, %v1175, %v1303
  %v1618 = vrot.slane %v1616, 1
  %v1619 = vsel %vm1353, %v1175, %v1303
  %v1621 = vrot.slane %v1619, 2
  %v1622 = vsel %vm1357, %v1175, %v1303
  %v1624 = vrot.slane %v1622, 3
  %v1627 = vsel %vm1345, %v1176, %v1304
  %v1628 = vsel %vm1349, %v1176, %v1304
  %v1630 = vrot.slane %v1628, 1
  %v1631 = vsel %vm1353, %v1176, %v1304
  %v1633 = vrot.slane %v1631, 2
  %v1634 = vsel %vm1357, %v1176, %v1304
  %v1636 = vrot.slane %v1634, 3
  %v1639 = vsel %vm1345, %v1177, %v1305
  %v1640 = vsel %vm1349, %v1177, %v1305
  %v1642 = vrot.slane %v1640, 1
  %v1643 = vsel %vm1353, %v1177, %v1305
  %v1645 = vrot.slane %v1643, 2
  %v1646 = vsel %vm1357, %v1177, %v1305
  %v1648 = vrot.slane %v1646, 3
  %v1651 = vsel %vm1345, %v1178, %v1306
  %v1652 = vsel %vm1349, %v1178, %v1306
  %v1654 = vrot.slane %v1652, 1
  %v1655 = vsel %vm1353, %v1178, %v1306
  %v1657 = vrot.slane %v1655, 2
  %v1658 = vsel %vm1357, %v1178, %v1306
  %v1660 = vrot.slane %v1658, 3
  %v1663 = vsel %vm1345, %v1179, %v1307
  %v1664 = vsel %vm1349, %v1179, %v1307
  %v1666 = vrot.slane %v1664, 1
  %v1667 = vsel %vm1353, %v1179, %v1307
  %v1669 = vrot.slane %v1667, 2
  %v1670 = vsel %vm1357, %v1179, %v1307
  %v1672 = vrot.slane %v1670, 3
  %v1675 = vsel %vm1345, %v1180, %v1308
  %v1676 = vsel %vm1349, %v1180, %v1308
  %v1678 = vrot.slane %v1676, 1
  %v1679 = vsel %vm1353, %v1180, %v1308
  %v1681 = vrot.slane %v1679, 2
  %v1682 = vsel %vm1357, %v1180, %v1308
  %v1684 = vrot.slane %v1682, 3
  %v1687 = vsel %vm1345, %v1181, %v1309
  %v1688 = vsel %vm1349, %v1181, %v1309
  %v1690 = vrot.slane %v1688, 1
  %v1691 = vsel %vm1353, %v1181, %v1309
  %v1693 = vrot.slane %v1691, 2
  %v1694 = vsel %vm1357, %v1181, %v1309
  %v1696 = vrot.slane %v1694, 3
  %v1699 = vsel %vm1345, %v1182, %v1310
  %v1700 = vsel %vm1349, %v1182, %v1310
  %v1702 = vrot.slane %v1700, 1
  %v1703 = vsel %vm1353, %v1182, %v1310
  %v1705 = vrot.slane %v1703, 2
  %v1706 = vsel %vm1357, %v1182, %v1310
  %v1708 = vrot.slane %v1706, 3
  %v1711 = vsel %vm1345, %v1183, %v1311
  %v1712 = vsel %vm1349, %v1183, %v1311
  %v1714 = vrot.slane %v1712, 1
  %v1715 = vsel %vm1353, %v1183, %v1311
  %v1717 = vrot.slane %v1715, 2
  %v1718 = vsel %vm1357, %v1183, %v1311
  %v1720 = vrot.slane %v1718, 3
  %v1723 = vsel %vm1345, %v1184, %v1312
  %v1724 = vsel %vm1349, %v1184, %v1312
  %v1726 = vrot.slane %v1724, 1
  %v1727 = vsel %vm1353, %v1184, %v1312
  %v1729 = vrot.slane %v1727, 2
  %v1730 = vsel %vm1357, %v1184, %v1312
  %v1732 = vrot.slane %v1730, 3
  %v1735 = vsel %vm1345, %v1185, %v1313
  %v1736 = vsel %vm1349, %v1185, %v1313
  %v1738 = vrot.slane %v1736, 1
  %v1739 = vsel %vm1353, %v1185, %v1313
  %v1741 = vrot.slane %v1739, 2
  %v1742 = vsel %vm1357, %v1185, %v1313
  %v1744 = vrot.slane %v1742, 3
  %v1747 = vsel %vm1345, %v1186, %v1314
  %v1748 = vsel %vm1349, %v1186, %v1314
  %v1750 = vrot.slane %v1748, 1
  %v1751 = vsel %vm1353, %v1186, %v1314
  %v1753 = vrot.slane %v1751, 2
  %v1754 = vsel %vm1357, %v1186, %v1314
  %v1756 = vrot.slane %v1754, 3
  %v1759 = vsel %vm1345, %v1187, %v1315
  %v1760 = vsel %vm1349, %v1187, %v1315
  %v1762 = vrot.slane %v1760, 1
  %v1763 = vsel %vm1353, %v1187, %v1315
  %v1765 = vrot.slane %v1763, 2
  %v1766 = vsel %vm1357, %v1187, %v1315
  %v1768 = vrot.slane %v1766, 3
  %v1771 = vsel %vm1345, %v1188, %v1316
  %v1772 = vsel %vm1349, %v1188, %v1316
  %v1774 = vrot.slane %v1772, 1
  %v1775 = vsel %vm1353, %v1188, %v1316
  %v1777 = vrot.slane %v1775, 2
  %v1778 = vsel %vm1357, %v1188, %v1316
  %v1780 = vrot.slane %v1778, 3
  %v1783 = vsel %vm1345, %v1189, %v1317
  %v1784 = vsel %vm1349, %v1189, %v1317
  %v1786 = vrot.slane %v1784, 1
  %v1787 = vsel %vm1353, %v1189, %v1317
  %v1789 = vrot.slane %v1787, 2
  %v1790 = vsel %vm1357, %v1189, %v1317
  %v1792 = vrot.slane %v1790, 3
  %v1795 = vsel %vm1345, %v1190, %v1318
  %v1796 = vsel %vm1349, %v1190, %v1318
  %v1798 = vrot.slane %v1796, 1
  %v1799 = vsel %vm1353, %v1190, %v1318
  %v1801 = vrot.slane %v1799, 2
  %v1802 = vsel %vm1357, %v1190, %v1318
  %v1804 = vrot.slane %v1802, 3
  %v1807 = vsel %vm1345, %v1191, %v1319
  %v1808 = vsel %vm1349, %v1191, %v1319
  %v1810 = vrot.slane %v1808, 1
  %v1811 = vsel %vm1353, %v1191, %v1319
  %v1813 = vrot.slane %v1811, 2
  %v1814 = vsel %vm1357, %v1191, %v1319
  %v1816 = vrot.slane %v1814, 3
  %v1819 = vsel %vm1345, %v1192, %v1320
  %v1820 = vsel %vm1349, %v1192, %v1320
  %v1822 = vrot.slane %v1820, 1
  %v1823 = vsel %vm1353, %v1192, %v1320
  %v1825 = vrot.slane %v1823, 2
  %v1826 = vsel %vm1357, %v1192, %v1320
  %v1828 = vrot.slane %v1826, 3
  %v1831 = vsel %vm1345, %v1193, %v1321
  %v1832 = vsel %vm1349, %v1193, %v1321
  %v1834 = vrot.slane %v1832, 1
  %v1835 = vsel %vm1353, %v1193, %v1321
  %v1837 = vrot.slane %v1835, 2
  %v1838 = vsel %vm1357, %v1193, %v1321
  %v1840 = vrot.slane %v1838, 3
  %v1843 = vsel %vm1345, %v1194, %v1322
  %v1844 = vsel %vm1349, %v1194, %v1322
  %v1846 = vrot.slane %v1844, 1
  %v1847 = vsel %vm1353, %v1194, %v1322
  %v1849 = vrot.slane %v1847, 2
  %v1850 = vsel %vm1357, %v1194, %v1322
  %v1852 = vrot.slane %v1850, 3
  %v1855 = vsel %vm1345, %v1195, %v1323
  %v1856 = vsel %vm1349, %v1195, %v1323
  %v1858 = vrot.slane %v1856, 1
  %v1859 = vsel %vm1353, %v1195, %v1323
  %v1861 = vrot.slane %v1859, 2
  %v1862 = vsel %vm1357, %v1195, %v1323
  %v1864 = vrot.slane %v1862, 3
  %v1867 = vsel %vm1345, %v1196, %v1324
  %v1868 = vsel %vm1349, %v1196, %v1324
  %v1870 = vrot.slane %v1868, 1
  %v1871 = vsel %vm1353, %v1196, %v1324
  %v1873 = vrot.slane %v1871, 2
  %v1874 = vsel %vm1357, %v1196, %v1324
  %v1876 = vrot.slane %v1874, 3
  %v1879 = vsel %vm1345, %v1197, %v1325
  %v1880 = vsel %vm1349, %v1197, %v1325
  %v1882 = vrot.slane %v1880, 1
  %v1883 = vsel %vm1353, %v1197, %v1325
  %v1885 = vrot.slane %v1883, 2
  %v1886 = vsel %vm1357, %v1197, %v1325
  %v1888 = vrot.slane %v1886, 3
  %v1891 = vsel %vm1345, %v1198, %v1326
  %v1892 = vsel %vm1349, %v1198, %v1326
  %v1894 = vrot.slane %v1892, 1
  %v1895 = vsel %vm1353, %v1198, %v1326
  %v1897 = vrot.slane %v1895, 2
  %v1898 = vsel %vm1357, %v1198, %v1326
  %v1900 = vrot.slane %v1898, 3
  %v1903 = vsel %vm1345, %v1199, %v1327
  %v1904 = vsel %vm1349, %v1199, %v1327
  %v1906 = vrot.slane %v1904, 1
  %v1907 = vsel %vm1353, %v1199, %v1327
  %v1909 = vrot.slane %v1907, 2
  %v1910 = vsel %vm1357, %v1199, %v1327
  %v1912 = vrot.slane %v1910, 3
  %v1915 = vsel %vm1345, %v1200, %v1328
  %v1916 = vsel %vm1349, %v1200, %v1328
  %v1918 = vrot.slane %v1916, 1
  %v1919 = vsel %vm1353, %v1200, %v1328
  %v1921 = vrot.slane %v1919, 2
  %v1922 = vsel %vm1357, %v1200, %v1328
  %v1924 = vrot.slane %v1922, 3
  %v1927 = vsel %vm1345, %v1201, %v1329
  %v1928 = vsel %vm1349, %v1201, %v1329
  %v1930 = vrot.slane %v1928, 1
  %v1931 = vsel %vm1353, %v1201, %v1329
  %v1933 = vrot.slane %v1931, 2
  %v1934 = vsel %vm1357, %v1201, %v1329
  %v1936 = vrot.slane %v1934, 3
  %v1939 = vsel %vm1345, %v1202, %v1330
  %v1940 = vsel %vm1349, %v1202, %v1330
  %v1942 = vrot.slane %v1940, 1
  %v1943 = vsel %vm1353, %v1202, %v1330
  %v1945 = vrot.slane %v1943, 2
  %v1946 = vsel %vm1357, %v1202, %v1330
  %v1948 = vrot.slane %v1946, 3
  %v1951 = vsel %vm1345, %v1203, %v1331
  %v1952 = vsel %vm1349, %v1203, %v1331
  %v1954 = vrot.slane %v1952, 1
  %v1955 = vsel %vm1353, %v1203, %v1331
  %v1957 = vrot.slane %v1955, 2
  %v1958 = vsel %vm1357, %v1203, %v1331
  %v1960 = vrot.slane %v1958, 3
  %v1963 = vsel %vm1345, %v1204, %v1332
  %v1964 = vsel %vm1349, %v1204, %v1332
  %v1966 = vrot.slane %v1964, 1
  %v1967 = vsel %vm1353, %v1204, %v1332
  %v1969 = vrot.slane %v1967, 2
  %v1970 = vsel %vm1357, %v1204, %v1332
  %v1972 = vrot.slane %v1970, 3
  %v1975 = vsel %vm1345, %v1205, %v1333
  %v1976 = vsel %vm1349, %v1205, %v1333
  %v1978 = vrot.slane %v1976, 1
  %v1979 = vsel %vm1353, %v1205, %v1333
  %v1981 = vrot.slane %v1979, 2
  %v1982 = vsel %vm1357, %v1205, %v1333
  %v1984 = vrot.slane %v1982, 3
  %v1987 = vsel %vm1345, %v1206, %v1334
  %v1988 = vsel %vm1349, %v1206, %v1334
  %v1990 = vrot.slane %v1988, 1
  %v1991 = vsel %vm1353, %v1206, %v1334
  %v1993 = vrot.slane %v1991, 2
  %v1994 = vsel %vm1357, %v1206, %v1334
  %v1996 = vrot.slane %v1994, 3
  %v1999 = vsel %vm1345, %v1207, %v1335
  %v2000 = vsel %vm1349, %v1207, %v1335
  %v2002 = vrot.slane %v2000, 1
  %v2003 = vsel %vm1353, %v1207, %v1335
  %v2005 = vrot.slane %v2003, 2
  %v2006 = vsel %vm1357, %v1207, %v1335
  %v2008 = vrot.slane %v2006, 3
  %v2011 = vsel %vm1345, %v1208, %v1336
  %v2012 = vsel %vm1349, %v1208, %v1336
  %v2014 = vrot.slane %v2012, 1
  %v2015 = vsel %vm1353, %v1208, %v1336
  %v2017 = vrot.slane %v2015, 2
  %v2018 = vsel %vm1357, %v1208, %v1336
  %v2020 = vrot.slane %v2018, 3
  %v2023 = vsel %vm1345, %v1209, %v1337
  %v2024 = vsel %vm1349, %v1209, %v1337
  %v2026 = vrot.slane %v2024, 1
  %v2027 = vsel %vm1353, %v1209, %v1337
  %v2029 = vrot.slane %v2027, 2
  %v2030 = vsel %vm1357, %v1209, %v1337
  %v2032 = vrot.slane %v2030, 3
  %v2035 = vsel %vm1345, %v1210, %v1338
  %v2036 = vsel %vm1349, %v1210, %v1338
  %v2038 = vrot.slane %v2036, 1
  %v2039 = vsel %vm1353, %v1210, %v1338
  %v2041 = vrot.slane %v2039, 2
  %v2042 = vsel %vm1357, %v1210, %v1338
  %v2044 = vrot.slane %v2042, 3
  %v2047 = vsel %vm1345, %v1211, %v1339
  %v2048 = vsel %vm1349, %v1211, %v1339
  %v2050 = vrot.slane %v2048, 1
  %v2051 = vsel %vm1353, %v1211, %v1339
  %v2053 = vrot.slane %v2051, 2
  %v2054 = vsel %vm1357, %v1211, %v1339
  %v2056 = vrot.slane %v2054, 3
  %v2059 = vsel %vm1345, %v1212, %v1340
  %v2060 = vsel %vm1349, %v1212, %v1340
  %v2062 = vrot.slane %v2060, 1
  %v2063 = vsel %vm1353, %v1212, %v1340
  %v2065 = vrot.slane %v2063, 2
  %v2066 = vsel %vm1357, %v1212, %v1340
  %v2068 = vrot.slane %v2066, 3
  %v2071 = vsel %vm1345, %v1213, %v1341
  %v2072 = vsel %vm1349, %v1213, %v1341
  %v2074 = vrot.slane %v2072, 1
  %v2075 = vsel %vm1353, %v1213, %v1341
  %v2077 = vrot.slane %v2075, 2
  %v2078 = vsel %vm1357, %v1213, %v1341
  %v2080 = vrot.slane %v2078, 3
  %v2083 = vsel %vm1345, %v1214, %v1342
  %v2084 = vsel %vm1349, %v1214, %v1342
  %v2086 = vrot.slane %v2084, 1
  %v2087 = vsel %vm1353, %v1214, %v1342
  %v2089 = vrot.slane %v2087, 2
  %v2090 = vsel %vm1357, %v1214, %v1342
  %v2092 = vrot.slane %v2090, 3
  %v2095 = vsel %vm1345, %v1215, %v1343
  %v2096 = vsel %vm1349, %v1215, %v1343
  %v2098 = vrot.slane %v2096, 1
  %v2099 = vsel %vm1353, %v1215, %v1343
  %v2101 = vrot.slane %v2099, 2
  %v2102 = vsel %vm1357, %v1215, %v1343
  %v2104 = vrot.slane %v2102, 3
  %v2107 = vsel %vm1345, %v1216, %v1344
  %v2108 = vsel %vm1349, %v1216, %v1344
  %v2110 = vrot.slane %v2108, 1
  %v2111 = vsel %vm1353, %v1216, %v1344
  %v2113 = vrot.slane %v2111, 2
  %v2114 = vsel %vm1357, %v1216, %v1344
  %v2116 = vrot.slane %v2114, 3
  %v2117 = vld [vmem:[%s4] sm:$0xf]
  %v2118 = vld [vmem:[%s4 + $0x4] sm:$0xf]
  %v2119 = vld [vmem:[%s4 + $0x8] sm:$0xf]
  %v2120 = vld [vmem:[%s4 + $0xc] sm:$0xf]
  %v2121 = vld [vmem:[%s4 + $0x10] sm:$0xf]
  %v2122 = vld [vmem:[%s4 + $0x14] sm:$0xf]
  %v2123 = vld [vmem:[%s4 + $0x18] sm:$0xf]
  %v2124 = vld [vmem:[%s4 + $0x1c] sm:$0xf]
  %v2125 = vld [vmem:[%s4 + $0x20] sm:$0xf]
  %v2126 = vld [vmem:[%s4 + $0x24] sm:$0xf]
  %v2127 = vld [vmem:[%s4 + $0x28] sm:$0xf]
  %v2128 = vld [vmem:[%s4 + $0x2c] sm:$0xf]
  %v2129 = vld [vmem:[%s4 + $0x30] sm:$0xf]
  %v2130 = vld [vmem:[%s4 + $0x34] sm:$0xf]
  %v2131 = vld [vmem:[%s4 + $0x38] sm:$0xf]
  %v2132 = vld [vmem:[%s4 + $0x3c] sm:$0xf]
  %v2133 = vld [vmem:[%s4 + $0x40] sm:$0xf]
  %v2134 = vld [vmem:[%s4 + $0x44] sm:$0xf]
  %v2135 = vld [vmem:[%s4 + $0x48] sm:$0xf]
  %v2136 = vld [vmem:[%s4 + $0x4c] sm:$0xf]
  %v2137 = vld [vmem:[%s4 + $0x50] sm:$0xf]
  %v2138 = vld [vmem:[%s4 + $0x54] sm:$0xf]
  %v2139 = vld [vmem:[%s4 + $0x58] sm:$0xf]
  %v2140 = vld [vmem:[%s4 + $0x5c] sm:$0xf]
  %v2141 = vld [vmem:[%s4 + $0x60] sm:$0xf]
  %v2142 = vld [vmem:[%s4 + $0x64] sm:$0xf]
  %v2143 = vld [vmem:[%s4 + $0x68] sm:$0xf]
  %v2144 = vld [vmem:[%s4 + $0x6c] sm:$0xf]
  %v2145 = vld [vmem:[%s4 + $0x70] sm:$0xf]
  %v2146 = vld [vmem:[%s4 + $0x74] sm:$0xf]
  %v2147 = vld [vmem:[%s4 + $0x78] sm:$0xf]
  %v2148 = vld [vmem:[%s4 + $0x7c] sm:$0xf]
  %v2149 = vld [vmem:[%s4 + $0x80] sm:$0xf]
  %v2150 = vld [vmem:[%s4 + $0x84] sm:$0xf]
  %v2151 = vld [vmem:[%s4 + $0x88] sm:$0xf]
  %v2152 = vld [vmem:[%s4 + $0x8c] sm:$0xf]
  %v2153 = vld [vmem:[%s4 + $0x90] sm:$0xf]
  %v2154 = vld [vmem:[%s4 + $0x94] sm:$0xf]
  %v2155 = vld [vmem:[%s4 + $0x98] sm:$0xf]
  %v2156 = vld [vmem:[%s4 + $0x9c] sm:$0xf]
  %v2157 = vld [vmem:[%s4 + $0xa0] sm:$0xf]
  %v2158 = vld [vmem:[%s4 + $0xa4] sm:$0xf]
  %v2159 = vld [vmem:[%s4 + $0xa8] sm:$0xf]
  %v2160 = vld [vmem:[%s4 + $0xac] sm:$0xf]
  %v2161 = vld [vmem:[%s4 + $0xb0] sm:$0xf]
  %v2162 = vld [vmem:[%s4 + $0xb4] sm:$0xf]
  %v2163 = vld [vmem:[%s4 + $0xb8] sm:$0xf]
  %v2164 = vld [vmem:[%s4 + $0xbc] sm:$0xf]
  %v2165 = vld [vmem:[%s4 + $0xc0] sm:$0xf]
  %v2166 = vld [vmem:[%s4 + $0xc4] sm:$0xf]
  %v2167 = vld [vmem:[%s4 + $0xc8] sm:$0xf]
  %v2168 = vld [vmem:[%s4 + $0xcc] sm:$0xf]
  %v2169 = vld [vmem:[%s4 + $0xd0] sm:$0xf]
  %v2170 = vld [vmem:[%s4 + $0xd4] sm:$0xf]
  %v2171 = vld [vmem:[%s4 + $0xd8] sm:$0xf]
  %v2172 = vld [vmem:[%s4 + $0xdc] sm:$0xf]
  %v2173 = vld [vmem:[%s4 + $0xe0] sm:$0xf]
  %v2174 = vld [vmem:[%s4 + $0xe4] sm:$0xf]
  %v2175 = vld [vmem:[%s4 + $0xe8] sm:$0xf]
  %v2176 = vld [vmem:[%s4 + $0xec] sm:$0xf]
  %v2177 = vld [vmem:[%s4 + $0xf0] sm:$0xf]
  %v2178 = vld [vmem:[%s4 + $0xf4] sm:$0xf]
  %v2179 = vld [vmem:[%s4 + $0xf8] sm:$0xf]
  %v2180 = vld [vmem:[%s4 + $0xfc] sm:$0xf]
  %v2181 = vld [vmem:[%s4 + $0x100] sm:$0xf]
  %v2182 = vld [vmem:[%s4 + $0x104] sm:$0xf]
  %v2183 = vld [vmem:[%s4 + $0x108] sm:$0xf]
  %v2184 = vld [vmem:[%s4 + $0x10c] sm:$0xf]
  %v2185 = vld [vmem:[%s4 + $0x110] sm:$0xf]
  %v2186 = vld [vmem:[%s4 + $0x114] sm:$0xf]
  %v2187 = vld [vmem:[%s4 + $0x118] sm:$0xf]
  %v2188 = vld [vmem:[%s4 + $0x11c] sm:$0xf]
  %v2189 = vld [vmem:[%s4 + $0x120] sm:$0xf]
  %v2190 = vld [vmem:[%s4 + $0x124] sm:$0xf]
  %v2191 = vld [vmem:[%s4 + $0x128] sm:$0xf]
  %v2192 = vld [vmem:[%s4 + $0x12c] sm:$0xf]
  %v2193 = vld [vmem:[%s4 + $0x130] sm:$0xf]
  %v2194 = vld [vmem:[%s4 + $0x134] sm:$0xf]
  %v2195 = vld [vmem:[%s4 + $0x138] sm:$0xf]
  %v2196 = vld [vmem:[%s4 + $0x13c] sm:$0xf]
  %v2197 = vld [vmem:[%s4 + $0x140] sm:$0xf]
  %v2198 = vld [vmem:[%s4 + $0x144] sm:$0xf]
  %v2199 = vld [vmem:[%s4 + $0x148] sm:$0xf]
  %v2200 = vld [vmem:[%s4 + $0x14c] sm:$0xf]
  %v2201 = vld [vmem:[%s4 + $0x150] sm:$0xf]
  %v2202 = vld [vmem:[%s4 + $0x154] sm:$0xf]
  %v2203 = vld [vmem:[%s4 + $0x158] sm:$0xf]
  %v2204 = vld [vmem:[%s4 + $0x15c] sm:$0xf]
  %v2205 = vld [vmem:[%s4 + $0x160] sm:$0xf]
  %v2206 = vld [vmem:[%s4 + $0x164] sm:$0xf]
  %v2207 = vld [vmem:[%s4 + $0x168] sm:$0xf]
  %v2208 = vld [vmem:[%s4 + $0x16c] sm:$0xf]
  %v2209 = vld [vmem:[%s4 + $0x170] sm:$0xf]
  %v2210 = vld [vmem:[%s4 + $0x174] sm:$0xf]
  %v2211 = vld [vmem:[%s4 + $0x178] sm:$0xf]
  %v2212 = vld [vmem:[%s4 + $0x17c] sm:$0xf]
  %v2213 = vld [vmem:[%s4 + $0x180] sm:$0xf]
  %v2214 = vld [vmem:[%s4 + $0x184] sm:$0xf]
  %v2215 = vld [vmem:[%s4 + $0x188] sm:$0xf]
  %v2216 = vld [vmem:[%s4 + $0x18c] sm:$0xf]
  %v2217 = vld [vmem:[%s4 + $0x190] sm:$0xf]
  %v2218 = vld [vmem:[%s4 + $0x194] sm:$0xf]
  %v2219 = vld [vmem:[%s4 + $0x198] sm:$0xf]
  %v2220 = vld [vmem:[%s4 + $0x19c] sm:$0xf]
  %v2221 = vld [vmem:[%s4 + $0x1a0] sm:$0xf]
  %v2222 = vld [vmem:[%s4 + $0x1a4] sm:$0xf]
  %v2223 = vld [vmem:[%s4 + $0x1a8] sm:$0xf]
  %v2224 = vld [vmem:[%s4 + $0x1ac] sm:$0xf]
  %v2225 = vld [vmem:[%s4 + $0x1b0] sm:$0xf]
  %v2226 = vld [vmem:[%s4 + $0x1b4] sm:$0xf]
  %v2227 = vld [vmem:[%s4 + $0x1b8] sm:$0xf]
  %v2228 = vld [vmem:[%s4 + $0x1bc] sm:$0xf]
  %v2229 = vld [vmem:[%s4 + $0x1c0] sm:$0xf]
  %v2230 = vld [vmem:[%s4 + $0x1c4] sm:$0xf]
  %v2231 = vld [vmem:[%s4 + $0x1c8] sm:$0xf]
  %v2232 = vld [vmem:[%s4 + $0x1cc] sm:$0xf]
  %v2233 = vld [vmem:[%s4 + $0x1d0] sm:$0xf]
  %v2234 = vld [vmem:[%s4 + $0x1d4] sm:$0xf]
  %v2235 = vld [vmem:[%s4 + $0x1d8] sm:$0xf]
  %v2236 = vld [vmem:[%s4 + $0x1dc] sm:$0xf]
  %v2237 = vld [vmem:[%s4 + $0x1e0] sm:$0xf]
  %v2238 = vld [vmem:[%s4 + $0x1e4] sm:$0xf]
  %v2239 = vld [vmem:[%s4 + $0x1e8] sm:$0xf]
  %v2240 = vld [vmem:[%s4 + $0x1ec] sm:$0xf]
  %v2241 = vld [vmem:[%s4 + $0x1f0] sm:$0xf]
  %v2242 = vld [vmem:[%s4 + $0x1f4] sm:$0xf]
  %v2243 = vld [vmem:[%s4 + $0x1f8] sm:$0xf]
  %v2244 = vld [vmem:[%s4 + $0x1fc] sm:$0xf]
  %v2245 = vld [vmem:[%s4 + $0x200] sm:$0xf]
  %v2246 = vld [vmem:[%s4 + $0x204] sm:$0xf]
  %v2247 = vld [vmem:[%s4 + $0x208] sm:$0xf]
  %v2248 = vld [vmem:[%s4 + $0x20c] sm:$0xf]
  %v2249 = vld [vmem:[%s4 + $0x210] sm:$0xf]
  %v2250 = vld [vmem:[%s4 + $0x214] sm:$0xf]
  %v2251 = vld [vmem:[%s4 + $0x218] sm:$0xf]
  %v2252 = vld [vmem:[%s4 + $0x21c] sm:$0xf]
  %v2253 = vld [vmem:[%s4 + $0x220] sm:$0xf]
  %v2254 = vld [vmem:[%s4 + $0x224] sm:$0xf]
  %v2255 = vld [vmem:[%s4 + $0x228] sm:$0xf]
  %v2256 = vld [vmem:[%s4 + $0x22c] sm:$0xf]
  %v2257 = vld [vmem:[%s4 + $0x230] sm:$0xf]
  %v2258 = vld [vmem:[%s4 + $0x234] sm:$0xf]
  %v2259 = vld [vmem:[%s4 + $0x238] sm:$0xf]
  %v2260 = vld [vmem:[%s4 + $0x23c] sm:$0xf]
  %v2261 = vld [vmem:[%s4 + $0x240] sm:$0xf]
  %v2262 = vld [vmem:[%s4 + $0x244] sm:$0xf]
  %v2263 = vld [vmem:[%s4 + $0x248] sm:$0xf]
  %v2264 = vld [vmem:[%s4 + $0x24c] sm:$0xf]
  %v2265 = vld [vmem:[%s4 + $0x250] sm:$0xf]
  %v2266 = vld [vmem:[%s4 + $0x254] sm:$0xf]
  %v2267 = vld [vmem:[%s4 + $0x258] sm:$0xf]
  %v2268 = vld [vmem:[%s4 + $0x25c] sm:$0xf]
  %v2269 = vld [vmem:[%s4 + $0x260] sm:$0xf]
  %v2270 = vld [vmem:[%s4 + $0x264] sm:$0xf]
  %v2271 = vld [vmem:[%s4 + $0x268] sm:$0xf]
  %v2272 = vld [vmem:[%s4 + $0x26c] sm:$0xf]
  %v2273 = vld [vmem:[%s4 + $0x270] sm:$0xf]
  %v2274 = vld [vmem:[%s4 + $0x274] sm:$0xf]
  %v2275 = vld [vmem:[%s4 + $0x278] sm:$0xf]
  %v2276 = vld [vmem:[%s4 + $0x27c] sm:$0xf]
  %v2277 = vld [vmem:[%s4 + $0x280] sm:$0xf]
  %v2278 = vld [vmem:[%s4 + $0x284] sm:$0xf]
  %v2279 = vld [vmem:[%s4 + $0x288] sm:$0xf]
  %v2280 = vld [vmem:[%s4 + $0x28c] sm:$0xf]
  %v2281 = vld [vmem:[%s4 + $0x290] sm:$0xf]
  %v2282 = vld [vmem:[%s4 + $0x294] sm:$0xf]
  %v2283 = vld [vmem:[%s4 + $0x298] sm:$0xf]
  %v2284 = vld [vmem:[%s4 + $0x29c] sm:$0xf]
  %v2285 = vld [vmem:[%s4 + $0x2a0] sm:$0xf]
  %v2286 = vld [vmem:[%s4 + $0x2a4] sm:$0xf]
  %v2287 = vld [vmem:[%s4 + $0x2a8] sm:$0xf]
  %v2288 = vld [vmem:[%s4 + $0x2ac] sm:$0xf]
  %v2289 = vld [vmem:[%s4 + $0x2b0] sm:$0xf]
  %v2290 = vld [vmem:[%s4 + $0x2b4] sm:$0xf]
  %v2291 = vld [vmem:[%s4 + $0x2b8] sm:$0xf]
  %v2292 = vld [vmem:[%s4 + $0x2bc] sm:$0xf]
  %v2293 = vld [vmem:[%s4 + $0x2c0] sm:$0xf]
  %v2294 = vld [vmem:[%s4 + $0x2c4] sm:$0xf]
  %v2295 = vld [vmem:[%s4 + $0x2c8] sm:$0xf]
  %v2296 = vld [vmem:[%s4 + $0x2cc] sm:$0xf]
  %v2297 = vld [vmem:[%s4 + $0x2d0] sm:$0xf]
  %v2298 = vld [vmem:[%s4 + $0x2d4] sm:$0xf]
  %v2299 = vld [vmem:[%s4 + $0x2d8] sm:$0xf]
  %v2300 = vld [vmem:[%s4 + $0x2dc] sm:$0xf]
  %v2301 = vld [vmem:[%s4 + $0x2e0] sm:$0xf]
  %v2302 = vld [vmem:[%s4 + $0x2e4] sm:$0xf]
  %v2303 = vld [vmem:[%s4 + $0x2e8] sm:$0xf]
  %v2304 = vld [vmem:[%s4 + $0x2ec] sm:$0xf]
  %v2305 = vld [vmem:[%s4 + $0x2f0] sm:$0xf]
  %v2306 = vld [vmem:[%s4 + $0x2f4] sm:$0xf]
  %v2307 = vld [vmem:[%s4 + $0x2f8] sm:$0xf]
  %v2308 = vld [vmem:[%s4 + $0x2fc] sm:$0xf]
  %v2309 = vld [vmem:[%s4 + $0x300] sm:$0xf]
  %v2310 = vld [vmem:[%s4 + $0x304] sm:$0xf]
  %v2311 = vld [vmem:[%s4 + $0x308] sm:$0xf]
  %v2312 = vld [vmem:[%s4 + $0x30c] sm:$0xf]
  %v2313 = vld [vmem:[%s4 + $0x310] sm:$0xf]
  %v2314 = vld [vmem:[%s4 + $0x314] sm:$0xf]
  %v2315 = vld [vmem:[%s4 + $0x318] sm:$0xf]
  %v2316 = vld [vmem:[%s4 + $0x31c] sm:$0xf]
  %v2317 = vld [vmem:[%s4 + $0x320] sm:$0xf]
  %v2318 = vld [vmem:[%s4 + $0x324] sm:$0xf]
  %v2319 = vld [vmem:[%s4 + $0x328] sm:$0xf]
  %v2320 = vld [vmem:[%s4 + $0x32c] sm:$0xf]
  %v2321 = vld [vmem:[%s4 + $0x330] sm:$0xf]
  %v2322 = vld [vmem:[%s4 + $0x334] sm:$0xf]
  %v2323 = vld [vmem:[%s4 + $0x338] sm:$0xf]
  %v2324 = vld [vmem:[%s4 + $0x33c] sm:$0xf]
  %v2325 = vld [vmem:[%s4 + $0x340] sm:$0xf]
  %v2326 = vld [vmem:[%s4 + $0x344] sm:$0xf]
  %v2327 = vld [vmem:[%s4 + $0x348] sm:$0xf]
  %v2328 = vld [vmem:[%s4 + $0x34c] sm:$0xf]
  %v2329 = vld [vmem:[%s4 + $0x350] sm:$0xf]
  %v2330 = vld [vmem:[%s4 + $0x354] sm:$0xf]
  %v2331 = vld [vmem:[%s4 + $0x358] sm:$0xf]
  %v2332 = vld [vmem:[%s4 + $0x35c] sm:$0xf]
  %v2333 = vld [vmem:[%s4 + $0x360] sm:$0xf]
  %v2334 = vld [vmem:[%s4 + $0x364] sm:$0xf]
  %v2335 = vld [vmem:[%s4 + $0x368] sm:$0xf]
  %v2336 = vld [vmem:[%s4 + $0x36c] sm:$0xf]
  %v2337 = vld [vmem:[%s4 + $0x370] sm:$0xf]
  %v2338 = vld [vmem:[%s4 + $0x374] sm:$0xf]
  %v2339 = vld [vmem:[%s4 + $0x378] sm:$0xf]
  %v2340 = vld [vmem:[%s4 + $0x37c] sm:$0xf]
  %v2341 = vld [vmem:[%s4 + $0x380] sm:$0xf]
  %v2342 = vld [vmem:[%s4 + $0x384] sm:$0xf]
  %v2343 = vld [vmem:[%s4 + $0x388] sm:$0xf]
  %v2344 = vld [vmem:[%s4 + $0x38c] sm:$0xf]
  %v2345 = vld [vmem:[%s4 + $0x390] sm:$0xf]
  %v2346 = vld [vmem:[%s4 + $0x394] sm:$0xf]
  %v2347 = vld [vmem:[%s4 + $0x398] sm:$0xf]
  %v2348 = vld [vmem:[%s4 + $0x39c] sm:$0xf]
  %v2349 = vld [vmem:[%s4 + $0x3a0] sm:$0xf]
  %v2350 = vld [vmem:[%s4 + $0x3a4] sm:$0xf]
  %v2351 = vld [vmem:[%s4 + $0x3a8] sm:$0xf]
  %v2352 = vld [vmem:[%s4 + $0x3ac] sm:$0xf]
  %v2353 = vld [vmem:[%s4 + $0x3b0] sm:$0xf]
  %v2354 = vld [vmem:[%s4 + $0x3b4] sm:$0xf]
  %v2355 = vld [vmem:[%s4 + $0x3b8] sm:$0xf]
  %v2356 = vld [vmem:[%s4 + $0x3bc] sm:$0xf]
  %v2357 = vld [vmem:[%s4 + $0x3c0] sm:$0xf]
  %v2358 = vld [vmem:[%s4 + $0x3c4] sm:$0xf]
  %v2359 = vld [vmem:[%s4 + $0x3c8] sm:$0xf]
  %v2360 = vld [vmem:[%s4 + $0x3cc] sm:$0xf]
  %v2361 = vld [vmem:[%s4 + $0x3d0] sm:$0xf]
  %v2362 = vld [vmem:[%s4 + $0x3d4] sm:$0xf]
  %v2363 = vld [vmem:[%s4 + $0x3d8] sm:$0xf]
  %v2364 = vld [vmem:[%s4 + $0x3dc] sm:$0xf]
  %v2365 = vld [vmem:[%s4 + $0x3e0] sm:$0xf]
  %v2366 = vld [vmem:[%s4 + $0x3e4] sm:$0xf]
  %v2367 = vld [vmem:[%s4 + $0x3e8] sm:$0xf]
  %v2368 = vld [vmem:[%s4 + $0x3ec] sm:$0xf]
  %v2369 = vld [vmem:[%s4 + $0x3f0] sm:$0xf]
  %v2370 = vld [vmem:[%s4 + $0x3f4] sm:$0xf]
  %v2371 = vld [vmem:[%s4 + $0x3f8] sm:$0xf]
  %v2372 = vld [vmem:[%s4 + $0x3fc] sm:$0xf]
  %v2373 = vld [vmem:[%s4 + $0x400] sm:$0xf]
  %v2374 = vld [vmem:[%s4 + $0x404] sm:$0xf]
  %v2375 = vld [vmem:[%s4 + $0x408] sm:$0xf]
  %v2376 = vld [vmem:[%s4 + $0x40c] sm:$0xf]
  %v2377 = vld [vmem:[%s4 + $0x410] sm:$0xf]
  %v2378 = vld [vmem:[%s4 + $0x414] sm:$0xf]
  %v2379 = vld [vmem:[%s4 + $0x418] sm:$0xf]
  %v2380 = vld [vmem:[%s4 + $0x41c] sm:$0xf]
  %v2381 = vld [vmem:[%s4 + $0x420] sm:$0xf]
  %v2382 = vld [vmem:[%s4 + $0x424] sm:$0xf]
  %v2383 = vld [vmem:[%s4 + $0x428] sm:$0xf]
  %v2384 = vld [vmem:[%s4 + $0x42c] sm:$0xf]
  %v2385 = vld [vmem:[%s4 + $0x430] sm:$0xf]
  %v2386 = vld [vmem:[%s4 + $0x434] sm:$0xf]
  %v2387 = vld [vmem:[%s4 + $0x438] sm:$0xf]
  %v2388 = vld [vmem:[%s4 + $0x43c] sm:$0xf]
  %v2389 = vld [vmem:[%s4 + $0x440] sm:$0xf]
  %v2390 = vld [vmem:[%s4 + $0x444] sm:$0xf]
  %v2391 = vld [vmem:[%s4 + $0x448] sm:$0xf]
  %v2392 = vld [vmem:[%s4 + $0x44c] sm:$0xf]
  %v2393 = vld [vmem:[%s4 + $0x450] sm:$0xf]
  %v2394 = vld [vmem:[%s4 + $0x454] sm:$0xf]
  %v2395 = vld [vmem:[%s4 + $0x458] sm:$0xf]
  %v2396 = vld [vmem:[%s4 + $0x45c] sm:$0xf]
  %v2397 = vld [vmem:[%s4 + $0x460] sm:$0xf]
  %v2398 = vld [vmem:[%s4 + $0x464] sm:$0xf]
  %v2399 = vld [vmem:[%s4 + $0x468] sm:$0xf]
  %v2400 = vld [vmem:[%s4 + $0x46c] sm:$0xf]
  %v2401 = vld [vmem:[%s4 + $0x470] sm:$0xf]
  %v2402 = vld [vmem:[%s4 + $0x474] sm:$0xf]
  %v2403 = vld [vmem:[%s4 + $0x478] sm:$0xf]
  %v2404 = vld [vmem:[%s4 + $0x47c] sm:$0xf]
  %v2405 = vld [vmem:[%s4 + $0x480] sm:$0xf]
  %v2406 = vld [vmem:[%s4 + $0x484] sm:$0xf]
  %v2407 = vld [vmem:[%s4 + $0x488] sm:$0xf]
  %v2408 = vld [vmem:[%s4 + $0x48c] sm:$0xf]
  %v2409 = vld [vmem:[%s4 + $0x490] sm:$0xf]
  %v2410 = vld [vmem:[%s4 + $0x494] sm:$0xf]
  %v2411 = vld [vmem:[%s4 + $0x498] sm:$0xf]
  %v2412 = vld [vmem:[%s4 + $0x49c] sm:$0xf]
  %v2413 = vld [vmem:[%s4 + $0x4a0] sm:$0xf]
  %v2414 = vld [vmem:[%s4 + $0x4a4] sm:$0xf]
  %v2415 = vld [vmem:[%s4 + $0x4a8] sm:$0xf]
  %v2416 = vld [vmem:[%s4 + $0x4ac] sm:$0xf]
  %v2417 = vld [vmem:[%s4 + $0x4b0] sm:$0xf]
  %v2418 = vld [vmem:[%s4 + $0x4b4] sm:$0xf]
  %v2419 = vld [vmem:[%s4 + $0x4b8] sm:$0xf]
  %v2420 = vld [vmem:[%s4 + $0x4bc] sm:$0xf]
  %v2421 = vld [vmem:[%s4 + $0x4c0] sm:$0xf]
  %v2422 = vld [vmem:[%s4 + $0x4c4] sm:$0xf]
  %v2423 = vld [vmem:[%s4 + $0x4c8] sm:$0xf]
  %v2424 = vld [vmem:[%s4 + $0x4cc] sm:$0xf]
  %v2425 = vld [vmem:[%s4 + $0x4d0] sm:$0xf]
  %v2426 = vld [vmem:[%s4 + $0x4d4] sm:$0xf]
  %v2427 = vld [vmem:[%s4 + $0x4d8] sm:$0xf]
  %v2428 = vld [vmem:[%s4 + $0x4dc] sm:$0xf]
  %v2429 = vld [vmem:[%s4 + $0x4e0] sm:$0xf]
  %v2430 = vld [vmem:[%s4 + $0x4e4] sm:$0xf]
  %v2431 = vld [vmem:[%s4 + $0x4e8] sm:$0xf]
  %v2432 = vld [vmem:[%s4 + $0x4ec] sm:$0xf]
  %v2433 = vld [vmem:[%s4 + $0x4f0] sm:$0xf]
  %v2434 = vld [vmem:[%s4 + $0x4f4] sm:$0xf]
  %v2435 = vld [vmem:[%s4 + $0x4f8] sm:$0xf]
  %v2436 = vld [vmem:[%s4 + $0x4fc] sm:$0xf]
  %v2437 = vld [vmem:[%s4 + $0x500] sm:$0xf]
  %v2438 = vld [vmem:[%s4 + $0x504] sm:$0xf]
  %v2439 = vld [vmem:[%s4 + $0x508] sm:$0xf]
  %v2440 = vld [vmem:[%s4 + $0x50c] sm:$0xf]
  %v2441 = vld [vmem:[%s4 + $0x510] sm:$0xf]
  %v2442 = vld [vmem:[%s4 + $0x514] sm:$0xf]
  %v2443 = vld [vmem:[%s4 + $0x518] sm:$0xf]
  %v2444 = vld [vmem:[%s4 + $0x51c] sm:$0xf]
  %v2445 = vld [vmem:[%s4 + $0x520] sm:$0xf]
  %v2446 = vld [vmem:[%s4 + $0x524] sm:$0xf]
  %v2447 = vld [vmem:[%s4 + $0x528] sm:$0xf]
  %v2448 = vld [vmem:[%s4 + $0x52c] sm:$0xf]
  %v2449 = vld [vmem:[%s4 + $0x530] sm:$0xf]
  %v2450 = vld [vmem:[%s4 + $0x534] sm:$0xf]
  %v2451 = vld [vmem:[%s4 + $0x538] sm:$0xf]
  %v2452 = vld [vmem:[%s4 + $0x53c] sm:$0xf]
  %v2453 = vld [vmem:[%s4 + $0x540] sm:$0xf]
  %v2454 = vld [vmem:[%s4 + $0x544] sm:$0xf]
  %v2455 = vld [vmem:[%s4 + $0x548] sm:$0xf]
  %v2456 = vld [vmem:[%s4 + $0x54c] sm:$0xf]
  %v2457 = vld [vmem:[%s4 + $0x550] sm:$0xf]
  %v2458 = vld [vmem:[%s4 + $0x554] sm:$0xf]
  %v2459 = vld [vmem:[%s4 + $0x558] sm:$0xf]
  %v2460 = vld [vmem:[%s4 + $0x55c] sm:$0xf]
  %v2461 = vld [vmem:[%s4 + $0x560] sm:$0xf]
  %v2462 = vld [vmem:[%s4 + $0x564] sm:$0xf]
  %v2463 = vld [vmem:[%s4 + $0x568] sm:$0xf]
  %v2464 = vld [vmem:[%s4 + $0x56c] sm:$0xf]
  %v2465 = vld [vmem:[%s4 + $0x570] sm:$0xf]
  %v2466 = vld [vmem:[%s4 + $0x574] sm:$0xf]
  %v2467 = vld [vmem:[%s4 + $0x578] sm:$0xf]
  %v2468 = vld [vmem:[%s4 + $0x57c] sm:$0xf]
  %v2469 = vld [vmem:[%s4 + $0x580] sm:$0xf]
  %v2470 = vld [vmem:[%s4 + $0x584] sm:$0xf]
  %v2471 = vld [vmem:[%s4 + $0x588] sm:$0xf]
  %v2472 = vld [vmem:[%s4 + $0x58c] sm:$0xf]
  %v2473 = vld [vmem:[%s4 + $0x590] sm:$0xf]
  %v2474 = vld [vmem:[%s4 + $0x594] sm:$0xf]
  %v2475 = vld [vmem:[%s4 + $0x598] sm:$0xf]
  %v2476 = vld [vmem:[%s4 + $0x59c] sm:$0xf]
  %v2477 = vld [vmem:[%s4 + $0x5a0] sm:$0xf]
  %v2478 = vld [vmem:[%s4 + $0x5a4] sm:$0xf]
  %v2479 = vld [vmem:[%s4 + $0x5a8] sm:$0xf]
  %v2480 = vld [vmem:[%s4 + $0x5ac] sm:$0xf]
  %v2481 = vld [vmem:[%s4 + $0x5b0] sm:$0xf]
  %v2482 = vld [vmem:[%s4 + $0x5b4] sm:$0xf]
  %v2483 = vld [vmem:[%s4 + $0x5b8] sm:$0xf]
  %v2484 = vld [vmem:[%s4 + $0x5bc] sm:$0xf]
  %v2485 = vld [vmem:[%s4 + $0x5c0] sm:$0xf]
  %v2486 = vld [vmem:[%s4 + $0x5c4] sm:$0xf]
  %v2487 = vld [vmem:[%s4 + $0x5c8] sm:$0xf]
  %v2488 = vld [vmem:[%s4 + $0x5cc] sm:$0xf]
  %v2489 = vld [vmem:[%s4 + $0x5d0] sm:$0xf]
  %v2490 = vld [vmem:[%s4 + $0x5d4] sm:$0xf]
  %v2491 = vld [vmem:[%s4 + $0x5d8] sm:$0xf]
  %v2492 = vld [vmem:[%s4 + $0x5dc] sm:$0xf]
  %v2493 = vld [vmem:[%s4 + $0x5e0] sm:$0xf]
  %v2494 = vld [vmem:[%s4 + $0x5e4] sm:$0xf]
  %v2495 = vld [vmem:[%s4 + $0x5e8] sm:$0xf]
  %v2496 = vld [vmem:[%s4 + $0x5ec] sm:$0xf]
  %v2497 = vld [vmem:[%s4 + $0x5f0] sm:$0xf]
  %v2498 = vld [vmem:[%s4 + $0x5f4] sm:$0xf]
  %v2499 = vld [vmem:[%s4 + $0x5f8] sm:$0xf]
  %v2500 = vld [vmem:[%s4 + $0x5fc] sm:$0xf]
  %v2501 = vld [vmem:[%s4 + $0x600] sm:$0xf]
  %v2502 = vld [vmem:[%s4 + $0x604] sm:$0xf]
  %v2503 = vld [vmem:[%s4 + $0x608] sm:$0xf]
  %v2504 = vld [vmem:[%s4 + $0x60c] sm:$0xf]
  %v2505 = vld [vmem:[%s4 + $0x610] sm:$0xf]
  %v2506 = vld [vmem:[%s4 + $0x614] sm:$0xf]
  %v2507 = vld [vmem:[%s4 + $0x618] sm:$0xf]
  %v2508 = vld [vmem:[%s4 + $0x61c] sm:$0xf]
  %v2509 = vld [vmem:[%s4 + $0x620] sm:$0xf]
  %v2510 = vld [vmem:[%s4 + $0x624] sm:$0xf]
  %v2511 = vld [vmem:[%s4 + $0x628] sm:$0xf]
  %v2512 = vld [vmem:[%s4 + $0x62c] sm:$0xf]
  %v2513 = vld [vmem:[%s4 + $0x630] sm:$0xf]
  %v2514 = vld [vmem:[%s4 + $0x634] sm:$0xf]
  %v2515 = vld [vmem:[%s4 + $0x638] sm:$0xf]
  %v2516 = vld [vmem:[%s4 + $0x63c] sm:$0xf]
  %v2517 = vld [vmem:[%s4 + $0x640] sm:$0xf]
  %v2518 = vld [vmem:[%s4 + $0x644] sm:$0xf]
  %v2519 = vld [vmem:[%s4 + $0x648] sm:$0xf]
  %v2520 = vld [vmem:[%s4 + $0x64c] sm:$0xf]
  %v2521 = vld [vmem:[%s4 + $0x650] sm:$0xf]
  %v2522 = vld [vmem:[%s4 + $0x654] sm:$0xf]
  %v2523 = vld [vmem:[%s4 + $0x658] sm:$0xf]
  %v2524 = vld [vmem:[%s4 + $0x65c] sm:$0xf]
  %v2525 = vld [vmem:[%s4 + $0x660] sm:$0xf]
  %v2526 = vld [vmem:[%s4 + $0x664] sm:$0xf]
  %v2527 = vld [vmem:[%s4 + $0x668] sm:$0xf]
  %v2528 = vld [vmem:[%s4 + $0x66c] sm:$0xf]
  %v2529 = vld [vmem:[%s4 + $0x670] sm:$0xf]
  %v2530 = vld [vmem:[%s4 + $0x674] sm:$0xf]
  %v2531 = vld [vmem:[%s4 + $0x678] sm:$0xf]
  %v2532 = vld [vmem:[%s4 + $0x67c] sm:$0xf]
  %v2533 = vld [vmem:[%s4 + $0x680] sm:$0xf]
  %v2534 = vld [vmem:[%s4 + $0x684] sm:$0xf]
  %v2535 = vld [vmem:[%s4 + $0x688] sm:$0xf]
  %v2536 = vld [vmem:[%s4 + $0x68c] sm:$0xf]
  %v2537 = vld [vmem:[%s4 + $0x690] sm:$0xf]
  %v2538 = vld [vmem:[%s4 + $0x694] sm:$0xf]
  %v2539 = vld [vmem:[%s4 + $0x698] sm:$0xf]
  %v2540 = vld [vmem:[%s4 + $0x69c] sm:$0xf]
  %v2541 = vld [vmem:[%s4 + $0x6a0] sm:$0xf]
  %v2542 = vld [vmem:[%s4 + $0x6a4] sm:$0xf]
  %v2543 = vld [vmem:[%s4 + $0x6a8] sm:$0xf]
  %v2544 = vld [vmem:[%s4 + $0x6ac] sm:$0xf]
  %v2545 = vld [vmem:[%s4 + $0x6b0] sm:$0xf]
  %v2546 = vld [vmem:[%s4 + $0x6b4] sm:$0xf]
  %v2547 = vld [vmem:[%s4 + $0x6b8] sm:$0xf]
  %v2548 = vld [vmem:[%s4 + $0x6bc] sm:$0xf]
  %v2549 = vld [vmem:[%s4 + $0x6c0] sm:$0xf]
  %v2550 = vld [vmem:[%s4 + $0x6c4] sm:$0xf]
  %v2551 = vld [vmem:[%s4 + $0x6c8] sm:$0xf]
  %v2552 = vld [vmem:[%s4 + $0x6cc] sm:$0xf]
  %v2553 = vld [vmem:[%s4 + $0x6d0] sm:$0xf]
  %v2554 = vld [vmem:[%s4 + $0x6d4] sm:$0xf]
  %v2555 = vld [vmem:[%s4 + $0x6d8] sm:$0xf]
  %v2556 = vld [vmem:[%s4 + $0x6dc] sm:$0xf]
  %v2557 = vld [vmem:[%s4 + $0x6e0] sm:$0xf]
  %v2558 = vld [vmem:[%s4 + $0x6e4] sm:$0xf]
  %v2559 = vld [vmem:[%s4 + $0x6e8] sm:$0xf]
  %v2560 = vld [vmem:[%s4 + $0x6ec] sm:$0xf]
  %v2561 = vld [vmem:[%s4 + $0x6f0] sm:$0xf]
  %v2562 = vld [vmem:[%s4 + $0x6f4] sm:$0xf]
  %v2563 = vld [vmem:[%s4 + $0x6f8] sm:$0xf]
  %v2564 = vld [vmem:[%s4 + $0x6fc] sm:$0xf]
  %v2565 = vld [vmem:[%s4 + $0x700] sm:$0xf]
  %v2566 = vld [vmem:[%s4 + $0x704] sm:$0xf]
  %v2567 = vld [vmem:[%s4 + $0x708] sm:$0xf]
  %v2568 = vld [vmem:[%s4 + $0x70c] sm:$0xf]
  %v2569 = vld [vmem:[%s4 + $0x710] sm:$0xf]
  %v2570 = vld [vmem:[%s4 + $0x714] sm:$0xf]
  %v2571 = vld [vmem:[%s4 + $0x718] sm:$0xf]
  %v2572 = vld [vmem:[%s4 + $0x71c] sm:$0xf]
  %v2573 = vld [vmem:[%s4 + $0x720] sm:$0xf]
  %v2574 = vld [vmem:[%s4 + $0x724] sm:$0xf]
  %v2575 = vld [vmem:[%s4 + $0x728] sm:$0xf]
  %v2576 = vld [vmem:[%s4 + $0x72c] sm:$0xf]
  %v2577 = vld [vmem:[%s4 + $0x730] sm:$0xf]
  %v2578 = vld [vmem:[%s4 + $0x734] sm:$0xf]
  %v2579 = vld [vmem:[%s4 + $0x738] sm:$0xf]
  %v2580 = vld [vmem:[%s4 + $0x73c] sm:$0xf]
  %v2581 = vld [vmem:[%s4 + $0x740] sm:$0xf]
  %v2582 = vld [vmem:[%s4 + $0x744] sm:$0xf]
  %v2583 = vld [vmem:[%s4 + $0x748] sm:$0xf]
  %v2584 = vld [vmem:[%s4 + $0x74c] sm:$0xf]
  %v2585 = vld [vmem:[%s4 + $0x750] sm:$0xf]
  %v2586 = vld [vmem:[%s4 + $0x754] sm:$0xf]
  %v2587 = vld [vmem:[%s4 + $0x758] sm:$0xf]
  %v2588 = vld [vmem:[%s4 + $0x75c] sm:$0xf]
  %v2589 = vld [vmem:[%s4 + $0x760] sm:$0xf]
  %v2590 = vld [vmem:[%s4 + $0x764] sm:$0xf]
  %v2591 = vld [vmem:[%s4 + $0x768] sm:$0xf]
  %v2592 = vld [vmem:[%s4 + $0x76c] sm:$0xf]
  %v2593 = vld [vmem:[%s4 + $0x770] sm:$0xf]
  %v2594 = vld [vmem:[%s4 + $0x774] sm:$0xf]
  %v2595 = vld [vmem:[%s4 + $0x778] sm:$0xf]
  %v2596 = vld [vmem:[%s4 + $0x77c] sm:$0xf]
  %v2597 = vld [vmem:[%s4 + $0x780] sm:$0xf]
  %v2598 = vld [vmem:[%s4 + $0x784] sm:$0xf]
  %v2599 = vld [vmem:[%s4 + $0x788] sm:$0xf]
  %v2600 = vld [vmem:[%s4 + $0x78c] sm:$0xf]
  %v2601 = vld [vmem:[%s4 + $0x790] sm:$0xf]
  %v2602 = vld [vmem:[%s4 + $0x794] sm:$0xf]
  %v2603 = vld [vmem:[%s4 + $0x798] sm:$0xf]
  %v2604 = vld [vmem:[%s4 + $0x79c] sm:$0xf]
  %v2605 = vld [vmem:[%s4 + $0x7a0] sm:$0xf]
  %v2606 = vld [vmem:[%s4 + $0x7a4] sm:$0xf]
  %v2607 = vld [vmem:[%s4 + $0x7a8] sm:$0xf]
  %v2608 = vld [vmem:[%s4 + $0x7ac] sm:$0xf]
  %v2609 = vld [vmem:[%s4 + $0x7b0] sm:$0xf]
  %v2610 = vld [vmem:[%s4 + $0x7b4] sm:$0xf]
  %v2611 = vld [vmem:[%s4 + $0x7b8] sm:$0xf]
  %v2612 = vld [vmem:[%s4 + $0x7bc] sm:$0xf]
  %v2613 = vld [vmem:[%s4 + $0x7c0] sm:$0xf]
  %v2614 = vld [vmem:[%s4 + $0x7c4] sm:$0xf]
  %v2615 = vld [vmem:[%s4 + $0x7c8] sm:$0xf]
  %v2616 = vld [vmem:[%s4 + $0x7cc] sm:$0xf]
  %v2617 = vld [vmem:[%s4 + $0x7d0] sm:$0xf]
  %v2618 = vld [vmem:[%s4 + $0x7d4] sm:$0xf]
  %v2619 = vld [vmem:[%s4 + $0x7d8] sm:$0xf]
  %v2620 = vld [vmem:[%s4 + $0x7dc] sm:$0xf]
  %v2621 = vld [vmem:[%s4 + $0x7e0] sm:$0xf]
  %v2622 = vld [vmem:[%s4 + $0x7e4] sm:$0xf]
  %v2623 = vld [vmem:[%s4 + $0x7e8] sm:$0xf]
  %v2624 = vld [vmem:[%s4 + $0x7ec] sm:$0xf]
  %v2625 = vld [vmem:[%s4 + $0x7f0] sm:$0xf]
  %v2626 = vld [vmem:[%s4 + $0x7f4] sm:$0xf]
  %v2627 = vld [vmem:[%s4 + $0x7f8] sm:$0xf]
  %v2628 = vld [vmem:[%s4 + $0x7fc] sm:$0xf]
  %v2629 = vld [vmem:[%s4 + $0x800] sm:$0xf]
  %v2630 = vld [vmem:[%s4 + $0x804] sm:$0xf]
  %v2631 = vld [vmem:[%s4 + $0x808] sm:$0xf]
  %v2632 = vld [vmem:[%s4 + $0x80c] sm:$0xf]
  %v2633 = vld [vmem:[%s4 + $0x810] sm:$0xf]
  %v2634 = vld [vmem:[%s4 + $0x814] sm:$0xf]
  %v2635 = vld [vmem:[%s4 + $0x818] sm:$0xf]
  %v2636 = vld [vmem:[%s4 + $0x81c] sm:$0xf]
  %v2637 = vld [vmem:[%s4 + $0x820] sm:$0xf]
  %v2638 = vld [vmem:[%s4 + $0x824] sm:$0xf]
  %v2639 = vld [vmem:[%s4 + $0x828] sm:$0xf]
  %v2640 = vld [vmem:[%s4 + $0x82c] sm:$0xf]
  %v2641 = vld [vmem:[%s4 + $0x830] sm:$0xf]
  %v2642 = vld [vmem:[%s4 + $0x834] sm:$0xf]
  %v2643 = vld [vmem:[%s4 + $0x838] sm:$0xf]
  %v2644 = vld [vmem:[%s4 + $0x83c] sm:$0xf]
  %v2645 = vld [vmem:[%s4 + $0x840] sm:$0xf]
  %v2646 = vld [vmem:[%s4 + $0x844] sm:$0xf]
  %v2647 = vld [vmem:[%s4 + $0x848] sm:$0xf]
  %v2648 = vld [vmem:[%s4 + $0x84c] sm:$0xf]
  %v2649 = vld [vmem:[%s4 + $0x850] sm:$0xf]
  %v2650 = vld [vmem:[%s4 + $0x854] sm:$0xf]
  %v2651 = vld [vmem:[%s4 + $0x858] sm:$0xf]
  %v2652 = vld [vmem:[%s4 + $0x85c] sm:$0xf]
  %v2653 = vld [vmem:[%s4 + $0x860] sm:$0xf]
  %v2654 = vld [vmem:[%s4 + $0x864] sm:$0xf]
  %v2655 = vld [vmem:[%s4 + $0x868] sm:$0xf]
  %v2656 = vld [vmem:[%s4 + $0x86c] sm:$0xf]
  %v2657 = vld [vmem:[%s4 + $0x870] sm:$0xf]
  %v2658 = vld [vmem:[%s4 + $0x874] sm:$0xf]
  %v2659 = vld [vmem:[%s4 + $0x878] sm:$0xf]
  %v2660 = vld [vmem:[%s4 + $0x87c] sm:$0xf]
  %v2661 = vld [vmem:[%s4 + $0x880] sm:$0xf]
  %v2662 = vld [vmem:[%s4 + $0x884] sm:$0xf]
  %v2663 = vld [vmem:[%s4 + $0x888] sm:$0xf]
  %v2664 = vld [vmem:[%s4 + $0x88c] sm:$0xf]
  %v2665 = vld [vmem:[%s4 + $0x890] sm:$0xf]
  %v2666 = vld [vmem:[%s4 + $0x894] sm:$0xf]
  %v2667 = vld [vmem:[%s4 + $0x898] sm:$0xf]
  %v2668 = vld [vmem:[%s4 + $0x89c] sm:$0xf]
  %v2669 = vld [vmem:[%s4 + $0x8a0] sm:$0xf]
  %v2670 = vld [vmem:[%s4 + $0x8a4] sm:$0xf]
  %v2671 = vld [vmem:[%s4 + $0x8a8] sm:$0xf]
  %v2672 = vld [vmem:[%s4 + $0x8ac] sm:$0xf]
  %v2673 = vld [vmem:[%s4 + $0x8b0] sm:$0xf]
  %v2674 = vld [vmem:[%s4 + $0x8b4] sm:$0xf]
  %v2675 = vld [vmem:[%s4 + $0x8b8] sm:$0xf]
  %v2676 = vld [vmem:[%s4 + $0x8bc] sm:$0xf]
  %v2677 = vld [vmem:[%s4 + $0x8c0] sm:$0xf]
  %v2678 = vld [vmem:[%s4 + $0x8c4] sm:$0xf]
  %v2679 = vld [vmem:[%s4 + $0x8c8] sm:$0xf]
  %v2680 = vld [vmem:[%s4 + $0x8cc] sm:$0xf]
  %v2681 = vld [vmem:[%s4 + $0x8d0] sm:$0xf]
  %v2682 = vld [vmem:[%s4 + $0x8d4] sm:$0xf]
  %v2683 = vld [vmem:[%s4 + $0x8d8] sm:$0xf]
  %v2684 = vld [vmem:[%s4 + $0x8dc] sm:$0xf]
  %v2685 = vld [vmem:[%s4 + $0x8e0] sm:$0xf]
  %v2686 = vld [vmem:[%s4 + $0x8e4] sm:$0xf]
  %v2687 = vld [vmem:[%s4 + $0x8e8] sm:$0xf]
  %v2688 = vld [vmem:[%s4 + $0x8ec] sm:$0xf]
  %v2689 = vld [vmem:[%s4 + $0x8f0] sm:$0xf]
  %v2690 = vld [vmem:[%s4 + $0x8f4] sm:$0xf]
  %v2691 = vld [vmem:[%s4 + $0x8f8] sm:$0xf]
  %v2692 = vld [vmem:[%s4 + $0x8fc] sm:$0xf]
  %v2693 = vld [vmem:[%s4 + $0x900] sm:$0xf]
  %v2694 = vld [vmem:[%s4 + $0x904] sm:$0xf]
  %v2695 = vld [vmem:[%s4 + $0x908] sm:$0xf]
  %v2696 = vld [vmem:[%s4 + $0x90c] sm:$0xf]
  %v2697 = vld [vmem:[%s4 + $0x910] sm:$0xf]
  %v2698 = vld [vmem:[%s4 + $0x914] sm:$0xf]
  %v2699 = vld [vmem:[%s4 + $0x918] sm:$0xf]
  %v2700 = vld [vmem:[%s4 + $0x91c] sm:$0xf]
  %v2701 = vld [vmem:[%s4 + $0x920] sm:$0xf]
  %v2702 = vld [vmem:[%s4 + $0x924] sm:$0xf]
  %v2703 = vld [vmem:[%s4 + $0x928] sm:$0xf]
  %v2704 = vld [vmem:[%s4 + $0x92c] sm:$0xf]
  %v2705 = vld [vmem:[%s4 + $0x930] sm:$0xf]
  %v2706 = vld [vmem:[%s4 + $0x934] sm:$0xf]
  %v2707 = vld [vmem:[%s4 + $0x938] sm:$0xf]
  %v2708 = vld [vmem:[%s4 + $0x93c] sm:$0xf]
  %v2709 = vld [vmem:[%s4 + $0x940] sm:$0xf]
  %v2710 = vld [vmem:[%s4 + $0x944] sm:$0xf]
  %v2711 = vld [vmem:[%s4 + $0x948] sm:$0xf]
  %v2712 = vld [vmem:[%s4 + $0x94c] sm:$0xf]
  %v2713 = vld [vmem:[%s4 + $0x950] sm:$0xf]
  %v2714 = vld [vmem:[%s4 + $0x954] sm:$0xf]
  %v2715 = vld [vmem:[%s4 + $0x958] sm:$0xf]
  %v2716 = vld [vmem:[%s4 + $0x95c] sm:$0xf]
  %v2717 = vld [vmem:[%s4 + $0x960] sm:$0xf]
  %v2718 = vld [vmem:[%s4 + $0x964] sm:$0xf]
  %v2719 = vld [vmem:[%s4 + $0x968] sm:$0xf]
  %v2720 = vld [vmem:[%s4 + $0x96c] sm:$0xf]
  %v2721 = vld [vmem:[%s4 + $0x970] sm:$0xf]
  %v2722 = vld [vmem:[%s4 + $0x974] sm:$0xf]
  %v2723 = vld [vmem:[%s4 + $0x978] sm:$0xf]
  %v2724 = vld [vmem:[%s4 + $0x97c] sm:$0xf]
  %v2725 = vld [vmem:[%s4 + $0x980] sm:$0xf]
  %v2726 = vld [vmem:[%s4 + $0x984] sm:$0xf]
  %v2727 = vld [vmem:[%s4 + $0x988] sm:$0xf]
  %v2728 = vld [vmem:[%s4 + $0x98c] sm:$0xf]
  %v2729 = vld [vmem:[%s4 + $0x990] sm:$0xf]
  %v2730 = vld [vmem:[%s4 + $0x994] sm:$0xf]
  %v2731 = vld [vmem:[%s4 + $0x998] sm:$0xf]
  %v2732 = vld [vmem:[%s4 + $0x99c] sm:$0xf]
  %v2733 = vld [vmem:[%s4 + $0x9a0] sm:$0xf]
  %v2734 = vld [vmem:[%s4 + $0x9a4] sm:$0xf]
  %v2735 = vld [vmem:[%s4 + $0x9a8] sm:$0xf]
  %v2736 = vld [vmem:[%s4 + $0x9ac] sm:$0xf]
  %v2737 = vld [vmem:[%s4 + $0x9b0] sm:$0xf]
  %v2738 = vld [vmem:[%s4 + $0x9b4] sm:$0xf]
  %v2739 = vld [vmem:[%s4 + $0x9b8] sm:$0xf]
  %v2740 = vld [vmem:[%s4 + $0x9bc] sm:$0xf]
  %v2741 = vld [vmem:[%s4 + $0x9c0] sm:$0xf]
  %v2742 = vld [vmem:[%s4 + $0x9c4] sm:$0xf]
  %v2743 = vld [vmem:[%s4 + $0x9c8] sm:$0xf]
  %v2744 = vld [vmem:[%s4 + $0x9cc] sm:$0xf]
  %v2745 = vld [vmem:[%s4 + $0x9d0] sm:$0xf]
  %v2746 = vld [vmem:[%s4 + $0x9d4] sm:$0xf]
  %v2747 = vld [vmem:[%s4 + $0x9d8] sm:$0xf]
  %v2748 = vld [vmem:[%s4 + $0x9dc] sm:$0xf]
  %v2749 = vld [vmem:[%s4 + $0x9e0] sm:$0xf]
  %v2750 = vld [vmem:[%s4 + $0x9e4] sm:$0xf]
  %v2751 = vld [vmem:[%s4 + $0x9e8] sm:$0xf]
  %v2752 = vld [vmem:[%s4 + $0x9ec] sm:$0xf]
  %v2753 = vld [vmem:[%s4 + $0x9f0] sm:$0xf]
  %v2754 = vld [vmem:[%s4 + $0x9f4] sm:$0xf]
  %v2755 = vld [vmem:[%s4 + $0x9f8] sm:$0xf]
  %v2756 = vld [vmem:[%s4 + $0x9fc] sm:$0xf]
  %v2757 = vld [vmem:[%s4 + $0xa00] sm:$0xf]
  %v2758 = vld [vmem:[%s4 + $0xa04] sm:$0xf]
  %v2759 = vld [vmem:[%s4 + $0xa08] sm:$0xf]
  %v2760 = vld [vmem:[%s4 + $0xa0c] sm:$0xf]
  %v2761 = vld [vmem:[%s4 + $0xa10] sm:$0xf]
  %v2762 = vld [vmem:[%s4 + $0xa14] sm:$0xf]
  %v2763 = vld [vmem:[%s4 + $0xa18] sm:$0xf]
  %v2764 = vld [vmem:[%s4 + $0xa1c] sm:$0xf]
  %v2765 = vld [vmem:[%s4 + $0xa20] sm:$0xf]
  %v2766 = vld [vmem:[%s4 + $0xa24] sm:$0xf]
  %v2767 = vld [vmem:[%s4 + $0xa28] sm:$0xf]
  %v2768 = vld [vmem:[%s4 + $0xa2c] sm:$0xf]
  %v2769 = vld [vmem:[%s4 + $0xa30] sm:$0xf]
  %v2770 = vld [vmem:[%s4 + $0xa34] sm:$0xf]
  %v2771 = vld [vmem:[%s4 + $0xa38] sm:$0xf]
  %v2772 = vld [vmem:[%s4 + $0xa3c] sm:$0xf]
  %v2773 = vld [vmem:[%s4 + $0xa40] sm:$0xf]
  %v2774 = vld [vmem:[%s4 + $0xa44] sm:$0xf]
  %v2775 = vld [vmem:[%s4 + $0xa48] sm:$0xf]
  %v2776 = vld [vmem:[%s4 + $0xa4c] sm:$0xf]
  %v2777 = vld [vmem:[%s4 + $0xa50] sm:$0xf]
  %v2778 = vld [vmem:[%s4 + $0xa54] sm:$0xf]
  %v2779 = vld [vmem:[%s4 + $0xa58] sm:$0xf]
  %v2780 = vld [vmem:[%s4 + $0xa5c] sm:$0xf]
  %v2781 = vld [vmem:[%s4 + $0xa60] sm:$0xf]
  %v2782 = vld [vmem:[%s4 + $0xa64] sm:$0xf]
  %v2783 = vld [vmem:[%s4 + $0xa68] sm:$0xf]
  %v2784 = vld [vmem:[%s4 + $0xa6c] sm:$0xf]
  %v2785 = vld [vmem:[%s4 + $0xa70] sm:$0xf]
  %v2786 = vld [vmem:[%s4 + $0xa74] sm:$0xf]
  %v2787 = vld [vmem:[%s4 + $0xa78] sm:$0xf]
  %v2788 = vld [vmem:[%s4 + $0xa7c] sm:$0xf]
  %v2789 = vld [vmem:[%s4 + $0xa80] sm:$0xf]
  %v2790 = vld [vmem:[%s4 + $0xa84] sm:$0xf]
  %v2791 = vld [vmem:[%s4 + $0xa88] sm:$0xf]
  %v2792 = vld [vmem:[%s4 + $0xa8c] sm:$0xf]
  %v2793 = vld [vmem:[%s4 + $0xa90] sm:$0xf]
  %v2794 = vld [vmem:[%s4 + $0xa94] sm:$0xf]
  %v2795 = vld [vmem:[%s4 + $0xa98] sm:$0xf]
  %v2796 = vld [vmem:[%s4 + $0xa9c] sm:$0xf]
  %v2797 = vld [vmem:[%s4 + $0xaa0] sm:$0xf]
  %v2798 = vld [vmem:[%s4 + $0xaa4] sm:$0xf]
  %v2799 = vld [vmem:[%s4 + $0xaa8] sm:$0xf]
  %v2800 = vld [vmem:[%s4 + $0xaac] sm:$0xf]
  %v2801 = vld [vmem:[%s4 + $0xab0] sm:$0xf]
  %v2802 = vld [vmem:[%s4 + $0xab4] sm:$0xf]
  %v2803 = vld [vmem:[%s4 + $0xab8] sm:$0xf]
  %v2804 = vld [vmem:[%s4 + $0xabc] sm:$0xf]
  %v2805 = vld [vmem:[%s4 + $0xac0] sm:$0xf]
  %v2806 = vld [vmem:[%s4 + $0xac4] sm:$0xf]
  %v2807 = vld [vmem:[%s4 + $0xac8] sm:$0xf]
  %v2808 = vld [vmem:[%s4 + $0xacc] sm:$0xf]
  %v2809 = vld [vmem:[%s4 + $0xad0] sm:$0xf]
  %v2810 = vld [vmem:[%s4 + $0xad4] sm:$0xf]
  %v2811 = vld [vmem:[%s4 + $0xad8] sm:$0xf]
  %v2812 = vld [vmem:[%s4 + $0xadc] sm:$0xf]
  %v2813 = vld [vmem:[%s4 + $0xae0] sm:$0xf]
  %v2814 = vld [vmem:[%s4 + $0xae4] sm:$0xf]
  %v2815 = vld [vmem:[%s4 + $0xae8] sm:$0xf]
  %v2816 = vld [vmem:[%s4 + $0xaec] sm:$0xf]
  %v2817 = vld [vmem:[%s4 + $0xaf0] sm:$0xf]
  %v2818 = vld [vmem:[%s4 + $0xaf4] sm:$0xf]
  %v2819 = vld [vmem:[%s4 + $0xaf8] sm:$0xf]
  %v2820 = vld [vmem:[%s4 + $0xafc] sm:$0xf]
  %v2821 = vld [vmem:[%s4 + $0xb00] sm:$0xf]
  %v2822 = vld [vmem:[%s4 + $0xb04] sm:$0xf]
  %v2823 = vld [vmem:[%s4 + $0xb08] sm:$0xf]
  %v2824 = vld [vmem:[%s4 + $0xb0c] sm:$0xf]
  %v2825 = vld [vmem:[%s4 + $0xb10] sm:$0xf]
  %v2826 = vld [vmem:[%s4 + $0xb14] sm:$0xf]
  %v2827 = vld [vmem:[%s4 + $0xb18] sm:$0xf]
  %v2828 = vld [vmem:[%s4 + $0xb1c] sm:$0xf]
  %v2829 = vld [vmem:[%s4 + $0xb20] sm:$0xf]
  %v2830 = vld [vmem:[%s4 + $0xb24] sm:$0xf]
  %v2831 = vld [vmem:[%s4 + $0xb28] sm:$0xf]
  %v2832 = vld [vmem:[%s4 + $0xb2c] sm:$0xf]
  %v2833 = vld [vmem:[%s4 + $0xb30] sm:$0xf]
  %v2834 = vld [vmem:[%s4 + $0xb34] sm:$0xf]
  %v2835 = vld [vmem:[%s4 + $0xb38] sm:$0xf]
  %v2836 = vld [vmem:[%s4 + $0xb3c] sm:$0xf]
  %v2837 = vld [vmem:[%s4 + $0xb40] sm:$0xf]
  %v2838 = vld [vmem:[%s4 + $0xb44] sm:$0xf]
  %v2839 = vld [vmem:[%s4 + $0xb48] sm:$0xf]
  %v2840 = vld [vmem:[%s4 + $0xb4c] sm:$0xf]
  %v2841 = vld [vmem:[%s4 + $0xb50] sm:$0xf]
  %v2842 = vld [vmem:[%s4 + $0xb54] sm:$0xf]
  %v2843 = vld [vmem:[%s4 + $0xb58] sm:$0xf]
  %v2844 = vld [vmem:[%s4 + $0xb5c] sm:$0xf]
  %v2845 = vld [vmem:[%s4 + $0xb60] sm:$0xf]
  %v2846 = vld [vmem:[%s4 + $0xb64] sm:$0xf]
  %v2847 = vld [vmem:[%s4 + $0xb68] sm:$0xf]
  %v2848 = vld [vmem:[%s4 + $0xb6c] sm:$0xf]
  %v2849 = vld [vmem:[%s4 + $0xb70] sm:$0xf]
  %v2850 = vld [vmem:[%s4 + $0xb74] sm:$0xf]
  %v2851 = vld [vmem:[%s4 + $0xb78] sm:$0xf]
  %v2852 = vld [vmem:[%s4 + $0xb7c] sm:$0xf]
  %v2853 = vld [vmem:[%s4 + $0xb80] sm:$0xf]
  %v2854 = vld [vmem:[%s4 + $0xb84] sm:$0xf]
  %v2855 = vld [vmem:[%s4 + $0xb88] sm:$0xf]
  %v2856 = vld [vmem:[%s4 + $0xb8c] sm:$0xf]
  %v2857 = vld [vmem:[%s4 + $0xb90] sm:$0xf]
  %v2858 = vld [vmem:[%s4 + $0xb94] sm:$0xf]
  %v2859 = vld [vmem:[%s4 + $0xb98] sm:$0xf]
  %v2860 = vld [vmem:[%s4 + $0xb9c] sm:$0xf]
  %v2861 = vld [vmem:[%s4 + $0xba0] sm:$0xf]
  %v2862 = vld [vmem:[%s4 + $0xba4] sm:$0xf]
  %v2863 = vld [vmem:[%s4 + $0xba8] sm:$0xf]
  %v2864 = vld [vmem:[%s4 + $0xbac] sm:$0xf]
  %v2865 = vld [vmem:[%s4 + $0xbb0] sm:$0xf]
  %v2866 = vld [vmem:[%s4 + $0xbb4] sm:$0xf]
  %v2867 = vld [vmem:[%s4 + $0xbb8] sm:$0xf]
  %v2868 = vld [vmem:[%s4 + $0xbbc] sm:$0xf]
  %v2869 = vld [vmem:[%s4 + $0xbc0] sm:$0xf]
  %v2870 = vld [vmem:[%s4 + $0xbc4] sm:$0xf]
  %v2871 = vld [vmem:[%s4 + $0xbc8] sm:$0xf]
  %v2872 = vld [vmem:[%s4 + $0xbcc] sm:$0xf]
  %v2873 = vld [vmem:[%s4 + $0xbd0] sm:$0xf]
  %v2874 = vld [vmem:[%s4 + $0xbd4] sm:$0xf]
  %v2875 = vld [vmem:[%s4 + $0xbd8] sm:$0xf]
  %v2876 = vld [vmem:[%s4 + $0xbdc] sm:$0xf]
  %v2877 = vld [vmem:[%s4 + $0xbe0] sm:$0xf]
  %v2878 = vld [vmem:[%s4 + $0xbe4] sm:$0xf]
  %v2879 = vld [vmem:[%s4 + $0xbe8] sm:$0xf]
  %v2880 = vld [vmem:[%s4 + $0xbec] sm:$0xf]
  %v2881 = vld [vmem:[%s4 + $0xbf0] sm:$0xf]
  %v2882 = vld [vmem:[%s4 + $0xbf4] sm:$0xf]
  %v2883 = vld [vmem:[%s4 + $0xbf8] sm:$0xf]
  %v2884 = vld [vmem:[%s4 + $0xbfc] sm:$0xf]
  %v2885 = vld [vmem:[%s4 + $0xc00] sm:$0xf]
  %v2886 = vld [vmem:[%s4 + $0xc04] sm:$0xf]
  %v2887 = vld [vmem:[%s4 + $0xc08] sm:$0xf]
  %v2888 = vld [vmem:[%s4 + $0xc0c] sm:$0xf]
  %v2889 = vld [vmem:[%s4 + $0xc10] sm:$0xf]
  %v2890 = vld [vmem:[%s4 + $0xc14] sm:$0xf]
  %v2891 = vld [vmem:[%s4 + $0xc18] sm:$0xf]
  %v2892 = vld [vmem:[%s4 + $0xc1c] sm:$0xf]
  %v2893 = vld [vmem:[%s4 + $0xc20] sm:$0xf]
  %v2894 = vld [vmem:[%s4 + $0xc24] sm:$0xf]
  %v2895 = vld [vmem:[%s4 + $0xc28] sm:$0xf]
  %v2896 = vld [vmem:[%s4 + $0xc2c] sm:$0xf]
  %v2897 = vld [vmem:[%s4 + $0xc30] sm:$0xf]
  %v2898 = vld [vmem:[%s4 + $0xc34] sm:$0xf]
  %v2899 = vld [vmem:[%s4 + $0xc38] sm:$0xf]
  %v2900 = vld [vmem:[%s4 + $0xc3c] sm:$0xf]
  %v2901 = vld [vmem:[%s4 + $0xc40] sm:$0xf]
  %v2902 = vld [vmem:[%s4 + $0xc44] sm:$0xf]
  %v2903 = vld [vmem:[%s4 + $0xc48] sm:$0xf]
  %v2904 = vld [vmem:[%s4 + $0xc4c] sm:$0xf]
  %v2905 = vld [vmem:[%s4 + $0xc50] sm:$0xf]
  %v2906 = vld [vmem:[%s4 + $0xc54] sm:$0xf]
  %v2907 = vld [vmem:[%s4 + $0xc58] sm:$0xf]
  %v2908 = vld [vmem:[%s4 + $0xc5c] sm:$0xf]
  %v2909 = vld [vmem:[%s4 + $0xc60] sm:$0xf]
  %v2910 = vld [vmem:[%s4 + $0xc64] sm:$0xf]
  %v2911 = vld [vmem:[%s4 + $0xc68] sm:$0xf]
  %v2912 = vld [vmem:[%s4 + $0xc6c] sm:$0xf]
  %v2913 = vld [vmem:[%s4 + $0xc70] sm:$0xf]
  %v2914 = vld [vmem:[%s4 + $0xc74] sm:$0xf]
  %v2915 = vld [vmem:[%s4 + $0xc78] sm:$0xf]
  %v2916 = vld [vmem:[%s4 + $0xc7c] sm:$0xf]
  %v2917 = vld [vmem:[%s4 + $0xc80] sm:$0xf]
  %v2918 = vld [vmem:[%s4 + $0xc84] sm:$0xf]
  %v2919 = vld [vmem:[%s4 + $0xc88] sm:$0xf]
  %v2920 = vld [vmem:[%s4 + $0xc8c] sm:$0xf]
  %v2921 = vld [vmem:[%s4 + $0xc90] sm:$0xf]
  %v2922 = vld [vmem:[%s4 + $0xc94] sm:$0xf]
  %v2923 = vld [vmem:[%s4 + $0xc98] sm:$0xf]
  %v2924 = vld [vmem:[%s4 + $0xc9c] sm:$0xf]
  %v2925 = vld [vmem:[%s4 + $0xca0] sm:$0xf]
  %v2926 = vld [vmem:[%s4 + $0xca4] sm:$0xf]
  %v2927 = vld [vmem:[%s4 + $0xca8] sm:$0xf]
  %v2928 = vld [vmem:[%s4 + $0xcac] sm:$0xf]
  %v2929 = vld [vmem:[%s4 + $0xcb0] sm:$0xf]
  %v2930 = vld [vmem:[%s4 + $0xcb4] sm:$0xf]
  %v2931 = vld [vmem:[%s4 + $0xcb8] sm:$0xf]
  %v2932 = vld [vmem:[%s4 + $0xcbc] sm:$0xf]
  %v2933 = vld [vmem:[%s4 + $0xcc0] sm:$0xf]
  %v2934 = vld [vmem:[%s4 + $0xcc4] sm:$0xf]
  %v2935 = vld [vmem:[%s4 + $0xcc8] sm:$0xf]
  %v2936 = vld [vmem:[%s4 + $0xccc] sm:$0xf]
  %v2937 = vld [vmem:[%s4 + $0xcd0] sm:$0xf]
  %v2938 = vld [vmem:[%s4 + $0xcd4] sm:$0xf]
  %v2939 = vld [vmem:[%s4 + $0xcd8] sm:$0xf]
  %v2940 = vld [vmem:[%s4 + $0xcdc] sm:$0xf]
  %v2941 = vld [vmem:[%s4 + $0xce0] sm:$0xf]
  %v2942 = vld [vmem:[%s4 + $0xce4] sm:$0xf]
  %v2943 = vld [vmem:[%s4 + $0xce8] sm:$0xf]
  %v2944 = vld [vmem:[%s4 + $0xcec] sm:$0xf]
  %v2945 = vld [vmem:[%s4 + $0xcf0] sm:$0xf]
  %v2946 = vld [vmem:[%s4 + $0xcf4] sm:$0xf]
  %v2947 = vld [vmem:[%s4 + $0xcf8] sm:$0xf]
  %v2948 = vld [vmem:[%s4 + $0xcfc] sm:$0xf]
  %v2949 = vld [vmem:[%s4 + $0xd00] sm:$0xf]
  %v2950 = vld [vmem:[%s4 + $0xd04] sm:$0xf]
  %v2951 = vld [vmem:[%s4 + $0xd08] sm:$0xf]
  %v2952 = vld [vmem:[%s4 + $0xd0c] sm:$0xf]
  %v2953 = vld [vmem:[%s4 + $0xd10] sm:$0xf]
  %v2954 = vld [vmem:[%s4 + $0xd14] sm:$0xf]
  %v2955 = vld [vmem:[%s4 + $0xd18] sm:$0xf]
  %v2956 = vld [vmem:[%s4 + $0xd1c] sm:$0xf]
  %v2957 = vld [vmem:[%s4 + $0xd20] sm:$0xf]
  %v2958 = vld [vmem:[%s4 + $0xd24] sm:$0xf]
  %v2959 = vld [vmem:[%s4 + $0xd28] sm:$0xf]
  %v2960 = vld [vmem:[%s4 + $0xd2c] sm:$0xf]
  %v2961 = vld [vmem:[%s4 + $0xd30] sm:$0xf]
  %v2962 = vld [vmem:[%s4 + $0xd34] sm:$0xf]
  %v2963 = vld [vmem:[%s4 + $0xd38] sm:$0xf]
  %v2964 = vld [vmem:[%s4 + $0xd3c] sm:$0xf]
  %v2965 = vld [vmem:[%s4 + $0xd40] sm:$0xf]
  %v2966 = vld [vmem:[%s4 + $0xd44] sm:$0xf]
  %v2967 = vld [vmem:[%s4 + $0xd48] sm:$0xf]
  %v2968 = vld [vmem:[%s4 + $0xd4c] sm:$0xf]
  %v2969 = vld [vmem:[%s4 + $0xd50] sm:$0xf]
  %v2970 = vld [vmem:[%s4 + $0xd54] sm:$0xf]
  %v2971 = vld [vmem:[%s4 + $0xd58] sm:$0xf]
  %v2972 = vld [vmem:[%s4 + $0xd5c] sm:$0xf]
  %v2973 = vld [vmem:[%s4 + $0xd60] sm:$0xf]
  %v2974 = vld [vmem:[%s4 + $0xd64] sm:$0xf]
  %v2975 = vld [vmem:[%s4 + $0xd68] sm:$0xf]
  %v2976 = vld [vmem:[%s4 + $0xd6c] sm:$0xf]
  %v2977 = vld [vmem:[%s4 + $0xd70] sm:$0xf]
  %v2978 = vld [vmem:[%s4 + $0xd74] sm:$0xf]
  %v2979 = vld [vmem:[%s4 + $0xd78] sm:$0xf]
  %v2980 = vld [vmem:[%s4 + $0xd7c] sm:$0xf]
  %v2981 = vld [vmem:[%s4 + $0xd80] sm:$0xf]
  %v2982 = vld [vmem:[%s4 + $0xd84] sm:$0xf]
  %v2983 = vld [vmem:[%s4 + $0xd88] sm:$0xf]
  %v2984 = vld [vmem:[%s4 + $0xd8c] sm:$0xf]
  %v2985 = vld [vmem:[%s4 + $0xd90] sm:$0xf]
  %v2986 = vld [vmem:[%s4 + $0xd94] sm:$0xf]
  %v2987 = vld [vmem:[%s4 + $0xd98] sm:$0xf]
  %v2988 = vld [vmem:[%s4 + $0xd9c] sm:$0xf]
  %v2989 = vld [vmem:[%s4 + $0xda0] sm:$0xf]
  %v2990 = vld [vmem:[%s4 + $0xda4] sm:$0xf]
  %v2991 = vld [vmem:[%s4 + $0xda8] sm:$0xf]
  %v2992 = vld [vmem:[%s4 + $0xdac] sm:$0xf]
  %v2993 = vld [vmem:[%s4 + $0xdb0] sm:$0xf]
  %v2994 = vld [vmem:[%s4 + $0xdb4] sm:$0xf]
  %v2995 = vld [vmem:[%s4 + $0xdb8] sm:$0xf]
  %v2996 = vld [vmem:[%s4 + $0xdbc] sm:$0xf]
  %v2997 = vld [vmem:[%s4 + $0xdc0] sm:$0xf]
  %v2998 = vld [vmem:[%s4 + $0xdc4] sm:$0xf]
  %v2999 = vld [vmem:[%s4 + $0xdc8] sm:$0xf]
  %v3000 = vld [vmem:[%s4 + $0xdcc] sm:$0xf]
  %v3001 = vld [vmem:[%s4 + $0xdd0] sm:$0xf]
  %v3002 = vld [vmem:[%s4 + $0xdd4] sm:$0xf]
  %v3003 = vld [vmem:[%s4 + $0xdd8] sm:$0xf]
  %v3004 = vld [vmem:[%s4 + $0xddc] sm:$0xf]
  %v3005 = vld [vmem:[%s4 + $0xde0] sm:$0xf]
  %v3006 = vld [vmem:[%s4 + $0xde4] sm:$0xf]
  %v3007 = vld [vmem:[%s4 + $0xde8] sm:$0xf]
  %v3008 = vld [vmem:[%s4 + $0xdec] sm:$0xf]
  %v3009 = vld [vmem:[%s4 + $0xdf0] sm:$0xf]
  %v3010 = vld [vmem:[%s4 + $0xdf4] sm:$0xf]
  %v3011 = vld [vmem:[%s4 + $0xdf8] sm:$0xf]
  %v3012 = vld [vmem:[%s4 + $0xdfc] sm:$0xf]
  %v3013 = vld [vmem:[%s4 + $0xe00] sm:$0xf]
  %v3014 = vld [vmem:[%s4 + $0xe04] sm:$0xf]
  %v3015 = vld [vmem:[%s4 + $0xe08] sm:$0xf]
  %v3016 = vld [vmem:[%s4 + $0xe0c] sm:$0xf]
  %v3017 = vld [vmem:[%s4 + $0xe10] sm:$0xf]
  %v3018 = vld [vmem:[%s4 + $0xe14] sm:$0xf]
  %v3019 = vld [vmem:[%s4 + $0xe18] sm:$0xf]
  %v3020 = vld [vmem:[%s4 + $0xe1c] sm:$0xf]
  %v3021 = vld [vmem:[%s4 + $0xe20] sm:$0xf]
  %v3022 = vld [vmem:[%s4 + $0xe24] sm:$0xf]
  %v3023 = vld [vmem:[%s4 + $0xe28] sm:$0xf]
  %v3024 = vld [vmem:[%s4 + $0xe2c] sm:$0xf]
  %v3025 = vld [vmem:[%s4 + $0xe30] sm:$0xf]
  %v3026 = vld [vmem:[%s4 + $0xe34] sm:$0xf]
  %v3027 = vld [vmem:[%s4 + $0xe38] sm:$0xf]
  %v3028 = vld [vmem:[%s4 + $0xe3c] sm:$0xf]
  %v3029 = vld [vmem:[%s4 + $0xe40] sm:$0xf]
  %v3030 = vld [vmem:[%s4 + $0xe44] sm:$0xf]
  %v3031 = vld [vmem:[%s4 + $0xe48] sm:$0xf]
  %v3032 = vld [vmem:[%s4 + $0xe4c] sm:$0xf]
  %v3033 = vld [vmem:[%s4 + $0xe50] sm:$0xf]
  %v3034 = vld [vmem:[%s4 + $0xe54] sm:$0xf]
  %v3035 = vld [vmem:[%s4 + $0xe58] sm:$0xf]
  %v3036 = vld [vmem:[%s4 + $0xe5c] sm:$0xf]
  %v3037 = vld [vmem:[%s4 + $0xe60] sm:$0xf]
  %v3038 = vld [vmem:[%s4 + $0xe64] sm:$0xf]
  %v3039 = vld [vmem:[%s4 + $0xe68] sm:$0xf]
  %v3040 = vld [vmem:[%s4 + $0xe6c] sm:$0xf]
  %v3041 = vld [vmem:[%s4 + $0xe70] sm:$0xf]
  %v3042 = vld [vmem:[%s4 + $0xe74] sm:$0xf]
  %v3043 = vld [vmem:[%s4 + $0xe78] sm:$0xf]
  %v3044 = vld [vmem:[%s4 + $0xe7c] sm:$0xf]
  %v3045 = vld [vmem:[%s4 + $0xe80] sm:$0xf]
  %v3046 = vld [vmem:[%s4 + $0xe84] sm:$0xf]
  %v3047 = vld [vmem:[%s4 + $0xe88] sm:$0xf]
  %v3048 = vld [vmem:[%s4 + $0xe8c] sm:$0xf]
  %v3049 = vld [vmem:[%s4 + $0xe90] sm:$0xf]
  %v3050 = vld [vmem:[%s4 + $0xe94] sm:$0xf]
  %v3051 = vld [vmem:[%s4 + $0xe98] sm:$0xf]
  %v3052 = vld [vmem:[%s4 + $0xe9c] sm:$0xf]
  %v3053 = vld [vmem:[%s4 + $0xea0] sm:$0xf]
  %v3054 = vld [vmem:[%s4 + $0xea4] sm:$0xf]
  %v3055 = vld [vmem:[%s4 + $0xea8] sm:$0xf]
  %v3056 = vld [vmem:[%s4 + $0xeac] sm:$0xf]
  %v3057 = vld [vmem:[%s4 + $0xeb0] sm:$0xf]
  %v3058 = vld [vmem:[%s4 + $0xeb4] sm:$0xf]
  %v3059 = vld [vmem:[%s4 + $0xeb8] sm:$0xf]
  %v3060 = vld [vmem:[%s4 + $0xebc] sm:$0xf]
  %v3061 = vld [vmem:[%s4 + $0xec0] sm:$0xf]
  %v3062 = vld [vmem:[%s4 + $0xec4] sm:$0xf]
  %v3063 = vld [vmem:[%s4 + $0xec8] sm:$0xf]
  %v3064 = vld [vmem:[%s4 + $0xecc] sm:$0xf]
  %v3065 = vld [vmem:[%s4 + $0xed0] sm:$0xf]
  %v3066 = vld [vmem:[%s4 + $0xed4] sm:$0xf]
  %v3067 = vld [vmem:[%s4 + $0xed8] sm:$0xf]
  %v3068 = vld [vmem:[%s4 + $0xedc] sm:$0xf]
  %v3069 = vld [vmem:[%s4 + $0xee0] sm:$0xf]
  %v3070 = vld [vmem:[%s4 + $0xee4] sm:$0xf]
  %v3071 = vld [vmem:[%s4 + $0xee8] sm:$0xf]
  %v3072 = vld [vmem:[%s4 + $0xeec] sm:$0xf]
  %v3073 = vld [vmem:[%s4 + $0xef0] sm:$0xf]
  %v3074 = vld [vmem:[%s4 + $0xef4] sm:$0xf]
  %v3075 = vld [vmem:[%s4 + $0xef8] sm:$0xf]
  %v3076 = vld [vmem:[%s4 + $0xefc] sm:$0xf]
  %v3077 = vld [vmem:[%s4 + $0xf00] sm:$0xf]
  %v3078 = vld [vmem:[%s4 + $0xf04] sm:$0xf]
  %v3079 = vld [vmem:[%s4 + $0xf08] sm:$0xf]
  %v3080 = vld [vmem:[%s4 + $0xf0c] sm:$0xf]
  %v3081 = vld [vmem:[%s4 + $0xf10] sm:$0xf]
  %v3082 = vld [vmem:[%s4 + $0xf14] sm:$0xf]
  %v3083 = vld [vmem:[%s4 + $0xf18] sm:$0xf]
  %v3084 = vld [vmem:[%s4 + $0xf1c] sm:$0xf]
  %v3085 = vld [vmem:[%s4 + $0xf20] sm:$0xf]
  %v3086 = vld [vmem:[%s4 + $0xf24] sm:$0xf]
  %v3087 = vld [vmem:[%s4 + $0xf28] sm:$0xf]
  %v3088 = vld [vmem:[%s4 + $0xf2c] sm:$0xf]
  %v3089 = vld [vmem:[%s4 + $0xf30] sm:$0xf]
  %v3090 = vld [vmem:[%s4 + $0xf34] sm:$0xf]
  %v3091 = vld [vmem:[%s4 + $0xf38] sm:$0xf]
  %v3092 = vld [vmem:[%s4 + $0xf3c] sm:$0xf]
  %v3093 = vld [vmem:[%s4 + $0xf40] sm:$0xf]
  %v3094 = vld [vmem:[%s4 + $0xf44] sm:$0xf]
  %v3095 = vld [vmem:[%s4 + $0xf48] sm:$0xf]
  %v3096 = vld [vmem:[%s4 + $0xf4c] sm:$0xf]
  %v3097 = vld [vmem:[%s4 + $0xf50] sm:$0xf]
  %v3098 = vld [vmem:[%s4 + $0xf54] sm:$0xf]
  %v3099 = vld [vmem:[%s4 + $0xf58] sm:$0xf]
  %v3100 = vld [vmem:[%s4 + $0xf5c] sm:$0xf]
  %v3101 = vld [vmem:[%s4 + $0xf60] sm:$0xf]
  %v3102 = vld [vmem:[%s4 + $0xf64] sm:$0xf]
  %v3103 = vld [vmem:[%s4 + $0xf68] sm:$0xf]
  %v3104 = vld [vmem:[%s4 + $0xf6c] sm:$0xf]
  %v3105 = vld [vmem:[%s4 + $0xf70] sm:$0xf]
  %v3106 = vld [vmem:[%s4 + $0xf74] sm:$0xf]
  %v3107 = vld [vmem:[%s4 + $0xf78] sm:$0xf]
  %v3108 = vld [vmem:[%s4 + $0xf7c] sm:$0xf]
  %v3109 = vld [vmem:[%s4 + $0xf80] sm:$0xf]
  %v3110 = vld [vmem:[%s4 + $0xf84] sm:$0xf]
  %v3111 = vld [vmem:[%s4 + $0xf88] sm:$0xf]
  %v3112 = vld [vmem:[%s4 + $0xf8c] sm:$0xf]
  %v3113 = vld [vmem:[%s4 + $0xf90] sm:$0xf]
  %v3114 = vld [vmem:[%s4 + $0xf94] sm:$0xf]
  %v3115 = vld [vmem:[%s4 + $0xf98] sm:$0xf]
  %v3116 = vld [vmem:[%s4 + $0xf9c] sm:$0xf]
  %v3117 = vld [vmem:[%s4 + $0xfa0] sm:$0xf]
  %v3118 = vld [vmem:[%s4 + $0xfa4] sm:$0xf]
  %v3119 = vld [vmem:[%s4 + $0xfa8] sm:$0xf]
  %v3120 = vld [vmem:[%s4 + $0xfac] sm:$0xf]
  %v3121 = vld [vmem:[%s4 + $0xfb0] sm:$0xf]
  %v3122 = vld [vmem:[%s4 + $0xfb4] sm:$0xf]
  %v3123 = vld [vmem:[%s4 + $0xfb8] sm:$0xf]
  %v3124 = vld [vmem:[%s4 + $0xfbc] sm:$0xf]
  %v3125 = vld [vmem:[%s4 + $0xfc0] sm:$0xf]
  %v3126 = vld [vmem:[%s4 + $0xfc4] sm:$0xf]
  %v3127 = vld [vmem:[%s4 + $0xfc8] sm:$0xf]
  %v3128 = vld [vmem:[%s4 + $0xfcc] sm:$0xf]
  %v3129 = vld [vmem:[%s4 + $0xfd0] sm:$0xf]
  %v3130 = vld [vmem:[%s4 + $0xfd4] sm:$0xf]
  %v3131 = vld [vmem:[%s4 + $0xfd8] sm:$0xf]
  %v3132 = vld [vmem:[%s4 + $0xfdc] sm:$0xf]
  %v3133 = vld [vmem:[%s4 + $0xfe0] sm:$0xf]
  %v3134 = vld [vmem:[%s4 + $0xfe4] sm:$0xf]
  %v3135 = vld [vmem:[%s4 + $0xfe8] sm:$0xf]
  %v3136 = vld [vmem:[%s4 + $0xfec] sm:$0xf]
  %v3137 = vld [vmem:[%s4 + $0xff0] sm:$0xf]
  %v3138 = vld [vmem:[%s4 + $0xff4] sm:$0xf]
  %v3139 = vld [vmem:[%s4 + $0xff8] sm:$0xf]
  %v3140 = vld [vmem:[%s4 + $0xffc] sm:$0xf]
  %v3145 = vunpack.c.l.b16 %v2117
  %v3146 = vunpack.c.l.b16 %v2118
  %v3147 = vunpack.c.l.b16 %v2119
  %v3148 = vunpack.c.l.b16 %v2120
  %v3149 = vpack.c.b16 %v3146, %v3145
  %v3150 = vpack.c.b16 %v3148, %v3147
  %vm3151 = vcmask 523264
  %v3152 = vsel %vm3151, %v1348, 0
  %v3155 = vsel %vm3151, %v3149, 0
  %v3158 = vsel %vm3151, %v3150, 0
  %3160 = vmatpush.bf16.xpose.msra.mxu0 0
  %3161 = vmatpush.bf16.xpose.msra.mxu0 0
  %3162 = vmatpush.bf16.xpose.msra.mxu0 0
  %3163 = vmatpush.bf16.xpose.msra.mxu0 0
  %3164 = vmatpush.bf16.xpose.msra.mxu0 0
  %3165 = vmatpush.bf16.xpose.msra.mxu0 0
  %3166 = vmatpush.bf16.xpose.msra.mxu0 %v3158
  %3167 = vmatpush.bf16.xpose.msra.mxu0 %v3155
  %3168 = vmatmul.bf16.gmra.mxu0 %v3152
  %v3169 = vpop.f32.mrf.mxu0
  %v3170 = vadd.f32 0.0, %v3169
  %v3171 = vpop.f32.mrf.mxu0
  %3172 = vdwg.mxu0
  %v3177 = vunpack.c.l.b16 %v2121
  %v3178 = vunpack.c.l.b16 %v2122
  %v3179 = vunpack.c.l.b16 %v2123
  %v3180 = vunpack.c.l.b16 %v2124
  %v3181 = vpack.c.b16 %v3178, %v3177
  %v3182 = vpack.c.b16 %v3180, %v3179
  %v3184 = vsel %vm3151, %v1352, 0
  %v3187 = vsel %vm3151, %v3181, 0
  %v3190 = vsel %vm3151, %v3182, 0
  %3192 = vmatpush.bf16.xpose.msra.mxu0 0
  %3193 = vmatpush.bf16.xpose.msra.mxu0 0
  %3194 = vmatpush.bf16.xpose.msra.mxu0 0
  %3195 = vmatpush.bf16.xpose.msra.mxu0 0
  %3196 = vmatpush.bf16.xpose.msra.mxu0 0
  %3197 = vmatpush.bf16.xpose.msra.mxu0 0
  %3198 = vmatpush.bf16.xpose.msra.mxu0 %v3190
  %3199 = vmatpush.bf16.xpose.msra.mxu0 %v3187
  %3200 = vmatmul.bf16.gmra.mxu0 %v3184
  %v3201 = vpop.f32.mrf.mxu0
  %v3202 = vadd.f32 0.0, %v3201
  %v3203 = vpop.f32.mrf.mxu0
  %3204 = vdwg.mxu0
  %v3209 = vunpack.c.l.b16 %v2125
  %v3210 = vunpack.c.l.b16 %v2126
  %v3211 = vunpack.c.l.b16 %v2127
  %v3212 = vunpack.c.l.b16 %v2128
  %v3213 = vpack.c.b16 %v3210, %v3209
  %v3214 = vpack.c.b16 %v3212, %v3211
  %v3216 = vsel %vm3151, %v1356, 0
  %v3219 = vsel %vm3151, %v3213, 0
  %v3222 = vsel %vm3151, %v3214, 0
  %3224 = vmatpush.bf16.xpose.msra.mxu0 0
  %3225 = vmatpush.bf16.xpose.msra.mxu0 0
  %3226 = vmatpush.bf16.xpose.msra.mxu0 0
  %3227 = vmatpush.bf16.xpose.msra.mxu0 0
  %3228 = vmatpush.bf16.xpose.msra.mxu0 0
  %3229 = vmatpush.bf16.xpose.msra.mxu0 0
  %3230 = vmatpush.bf16.xpose.msra.mxu0 %v3222
  %3231 = vmatpush.bf16.xpose.msra.mxu0 %v3219
  %3232 = vmatmul.bf16.gmra.mxu0 %v3216
  %v3233 = vpop.f32.mrf.mxu0
  %v3234 = vadd.f32 0.0, %v3233
  %v3235 = vpop.f32.mrf.mxu0
  %3236 = vdwg.mxu0
  %v3241 = vunpack.c.l.b16 %v2129
  %v3242 = vunpack.c.l.b16 %v2130
  %v3243 = vunpack.c.l.b16 %v2131
  %v3244 = vunpack.c.l.b16 %v2132
  %v3245 = vpack.c.b16 %v3242, %v3241
  %v3246 = vpack.c.b16 %v3244, %v3243
  %v3248 = vsel %vm3151, %v1360, 0
  %v3251 = vsel %vm3151, %v3245, 0
  %v3254 = vsel %vm3151, %v3246, 0
  %3256 = vmatpush.bf16.xpose.msra.mxu0 0
  %3257 = vmatpush.bf16.xpose.msra.mxu0 0
  %3258 = vmatpush.bf16.xpose.msra.mxu0 0
  %3259 = vmatpush.bf16.xpose.msra.mxu0 0
  %3260 = vmatpush.bf16.xpose.msra.mxu0 0
  %3261 = vmatpush.bf16.xpose.msra.mxu0 0
  %3262 = vmatpush.bf16.xpose.msra.mxu0 %v3254
  %3263 = vmatpush.bf16.xpose.msra.mxu0 %v3251
  %3264 = vmatmul.bf16.gmra.mxu0 %v3248
  %v3265 = vpop.f32.mrf.mxu0
  %v3266 = vadd.f32 0.0, %v3265
  %v3267 = vpop.f32.mrf.mxu0
  %3268 = vdwg.mxu0
  %v3273 = vunpack.c.l.b16 %v2133
  %v3274 = vunpack.c.l.b16 %v2134
  %v3275 = vunpack.c.l.b16 %v2135
  %v3276 = vunpack.c.l.b16 %v2136
  %v3277 = vpack.c.b16 %v3274, %v3273
  %v3278 = vpack.c.b16 %v3276, %v3275
  %v3279 = vsel %vm3151, %v1363, 0
  %v3282 = vsel %vm3151, %v3277, 0
  %v3285 = vsel %vm3151, %v3278, 0
  %3287 = vmatpush.bf16.xpose.msra.mxu0 0
  %3288 = vmatpush.bf16.xpose.msra.mxu0 0
  %3289 = vmatpush.bf16.xpose.msra.mxu0 0
  %3290 = vmatpush.bf16.xpose.msra.mxu0 0
  %3291 = vmatpush.bf16.xpose.msra.mxu0 0
  %3292 = vmatpush.bf16.xpose.msra.mxu0 0
  %3293 = vmatpush.bf16.xpose.msra.mxu0 %v3285
  %3294 = vmatpush.bf16.xpose.msra.mxu0 %v3282
  %3295 = vmatmul.bf16.gmra.mxu0 %v3279
  %v3296 = vpop.f32.mrf.mxu0
  %v3297 = vadd.f32 0.0, %v3296
  %v3298 = vpop.f32.mrf.mxu0
  %3299 = vdwg.mxu0
  %v3304 = vunpack.c.l.b16 %v2137
  %v3305 = vunpack.c.l.b16 %v2138
  %v3306 = vunpack.c.l.b16 %v2139
  %v3307 = vunpack.c.l.b16 %v2140
  %v3308 = vpack.c.b16 %v3305, %v3304
  %v3309 = vpack.c.b16 %v3307, %v3306
  %v3311 = vsel %vm3151, %v1366, 0
  %v3314 = vsel %vm3151, %v3308, 0
  %v3317 = vsel %vm3151, %v3309, 0
  %3319 = vmatpush.bf16.xpose.msra.mxu0 0
  %3320 = vmatpush.bf16.xpose.msra.mxu0 0
  %3321 = vmatpush.bf16.xpose.msra.mxu0 0
  %3322 = vmatpush.bf16.xpose.msra.mxu0 0
  %3323 = vmatpush.bf16.xpose.msra.mxu0 0
  %3324 = vmatpush.bf16.xpose.msra.mxu0 0
  %3325 = vmatpush.bf16.xpose.msra.mxu0 %v3317
  %3326 = vmatpush.bf16.xpose.msra.mxu0 %v3314
  %3327 = vmatmul.bf16.gmra.mxu0 %v3311
  %v3328 = vpop.f32.mrf.mxu0
  %v3329 = vadd.f32 0.0, %v3328
  %v3330 = vpop.f32.mrf.mxu0
  %3331 = vdwg.mxu0
  %v3336 = vunpack.c.l.b16 %v2141
  %v3337 = vunpack.c.l.b16 %v2142
  %v3338 = vunpack.c.l.b16 %v2143
  %v3339 = vunpack.c.l.b16 %v2144
  %v3340 = vpack.c.b16 %v3337, %v3336
  %v3341 = vpack.c.b16 %v3339, %v3338
  %v3343 = vsel %vm3151, %v1369, 0
  %v3346 = vsel %vm3151, %v3340, 0
  %v3349 = vsel %vm3151, %v3341, 0
  %3351 = vmatpush.bf16.xpose.msra.mxu0 0
  %3352 = vmatpush.bf16.xpose.msra.mxu0 0
  %3353 = vmatpush.bf16.xpose.msra.mxu0 0
  %3354 = vmatpush.bf16.xpose.msra.mxu0 0
  %3355 = vmatpush.bf16.xpose.msra.mxu0 0
  %3356 = vmatpush.bf16.xpose.msra.mxu0 0
  %3357 = vmatpush.bf16.xpose.msra.mxu0 %v3349
  %3358 = vmatpush.bf16.xpose.msra.mxu0 %v3346
  %3359 = vmatmul.bf16.gmra.mxu0 %v3343
  %v3360 = vpop.f32.mrf.mxu0
  %v3361 = vadd.f32 0.0, %v3360
  %v3362 = vpop.f32.mrf.mxu0
  %3363 = vdwg.mxu0
  %v3368 = vunpack.c.l.b16 %v2145
  %v3369 = vunpack.c.l.b16 %v2146
  %v3370 = vunpack.c.l.b16 %v2147
  %v3371 = vunpack.c.l.b16 %v2148
  %v3372 = vpack.c.b16 %v3369, %v3368
  %v3373 = vpack.c.b16 %v3371, %v3370
  %v3375 = vsel %vm3151, %v1372, 0
  %v3378 = vsel %vm3151, %v3372, 0
  %v3381 = vsel %vm3151, %v3373, 0
  %3383 = vmatpush.bf16.xpose.msra.mxu0 0
  %3384 = vmatpush.bf16.xpose.msra.mxu0 0
  %3385 = vmatpush.bf16.xpose.msra.mxu0 0
  %3386 = vmatpush.bf16.xpose.msra.mxu0 0
  %3387 = vmatpush.bf16.xpose.msra.mxu0 0
  %3388 = vmatpush.bf16.xpose.msra.mxu0 0
  %3389 = vmatpush.bf16.xpose.msra.mxu0 %v3381
  %3390 = vmatpush.bf16.xpose.msra.mxu0 %v3378
  %3391 = vmatmul.bf16.gmra.mxu0 %v3375
  %v3392 = vpop.f32.mrf.mxu0
  %v3393 = vadd.f32 0.0, %v3392
  %v3394 = vpop.f32.mrf.mxu0
  %3395 = vdwg.mxu0
  %v3400 = vunpack.c.l.b16 %v2149
  %v3401 = vunpack.c.l.b16 %v2150
  %v3402 = vunpack.c.l.b16 %v2151
  %v3403 = vunpack.c.l.b16 %v2152
  %v3404 = vpack.c.b16 %v3401, %v3400
  %v3405 = vpack.c.b16 %v3403, %v3402
  %v3406 = vsel %vm3151, %v1375, 0
  %v3409 = vsel %vm3151, %v3404, 0
  %v3412 = vsel %vm3151, %v3405, 0
  %3414 = vmatpush.bf16.xpose.msra.mxu0 0
  %3415 = vmatpush.bf16.xpose.msra.mxu0 0
  %3416 = vmatpush.bf16.xpose.msra.mxu0 0
  %3417 = vmatpush.bf16.xpose.msra.mxu0 0
  %3418 = vmatpush.bf16.xpose.msra.mxu0 0
  %3419 = vmatpush.bf16.xpose.msra.mxu0 0
  %3420 = vmatpush.bf16.xpose.msra.mxu0 %v3412
  %3421 = vmatpush.bf16.xpose.msra.mxu0 %v3409
  %3422 = vmatmul.bf16.gmra.mxu0 %v3406
  %v3423 = vpop.f32.mrf.mxu0
  %v3424 = vadd.f32 0.0, %v3423
  %v3425 = vpop.f32.mrf.mxu0
  %3426 = vdwg.mxu0
  %v3431 = vunpack.c.l.b16 %v2153
  %v3432 = vunpack.c.l.b16 %v2154
  %v3433 = vunpack.c.l.b16 %v2155
  %v3434 = vunpack.c.l.b16 %v2156
  %v3435 = vpack.c.b16 %v3432, %v3431
  %v3436 = vpack.c.b16 %v3434, %v3433
  %v3438 = vsel %vm3151, %v1378, 0
  %v3441 = vsel %vm3151, %v3435, 0
  %v3444 = vsel %vm3151, %v3436, 0
  %3446 = vmatpush.bf16.xpose.msra.mxu0 0
  %3447 = vmatpush.bf16.xpose.msra.mxu0 0
  %3448 = vmatpush.bf16.xpose.msra.mxu0 0
  %3449 = vmatpush.bf16.xpose.msra.mxu0 0
  %3450 = vmatpush.bf16.xpose.msra.mxu0 0
  %3451 = vmatpush.bf16.xpose.msra.mxu0 0
  %3452 = vmatpush.bf16.xpose.msra.mxu0 %v3444
  %3453 = vmatpush.bf16.xpose.msra.mxu0 %v3441
  %3454 = vmatmul.bf16.gmra.mxu0 %v3438
  %v3455 = vpop.f32.mrf.mxu0
  %v3456 = vadd.f32 0.0, %v3455
  %v3457 = vpop.f32.mrf.mxu0
  %3458 = vdwg.mxu0
  %v3463 = vunpack.c.l.b16 %v2157
  %v3464 = vunpack.c.l.b16 %v2158
  %v3465 = vunpack.c.l.b16 %v2159
  %v3466 = vunpack.c.l.b16 %v2160
  %v3467 = vpack.c.b16 %v3464, %v3463
  %v3468 = vpack.c.b16 %v3466, %v3465
  %v3470 = vsel %vm3151, %v1381, 0
  %v3473 = vsel %vm3151, %v3467, 0
  %v3476 = vsel %vm3151, %v3468, 0
  %3478 = vmatpush.bf16.xpose.msra.mxu0 0
  %3479 = vmatpush.bf16.xpose.msra.mxu0 0
  %3480 = vmatpush.bf16.xpose.msra.mxu0 0
  %3481 = vmatpush.bf16.xpose.msra.mxu0 0
  %3482 = vmatpush.bf16.xpose.msra.mxu0 0
  %3483 = vmatpush.bf16.xpose.msra.mxu0 0
  %3484 = vmatpush.bf16.xpose.msra.mxu0 %v3476
  %3485 = vmatpush.bf16.xpose.msra.mxu0 %v3473
  %3486 = vmatmul.bf16.gmra.mxu0 %v3470
  %v3487 = vpop.f32.mrf.mxu0
  %v3488 = vadd.f32 0.0, %v3487
  %v3489 = vpop.f32.mrf.mxu0
  %3490 = vdwg.mxu0
  %v3495 = vunpack.c.l.b16 %v2161
  %v3496 = vunpack.c.l.b16 %v2162
  %v3497 = vunpack.c.l.b16 %v2163
  %v3498 = vunpack.c.l.b16 %v2164
  %v3499 = vpack.c.b16 %v3496, %v3495
  %v3500 = vpack.c.b16 %v3498, %v3497
  %v3502 = vsel %vm3151, %v1384, 0
  %v3505 = vsel %vm3151, %v3499, 0
  %v3508 = vsel %vm3151, %v3500, 0
  %3510 = vmatpush.bf16.xpose.msra.mxu0 0
  %3511 = vmatpush.bf16.xpose.msra.mxu0 0
  %3512 = vmatpush.bf16.xpose.msra.mxu0 0
  %3513 = vmatpush.bf16.xpose.msra.mxu0 0
  %3514 = vmatpush.bf16.xpose.msra.mxu0 0
  %3515 = vmatpush.bf16.xpose.msra.mxu0 0
  %3516 = vmatpush.bf16.xpose.msra.mxu0 %v3508
  %3517 = vmatpush.bf16.xpose.msra.mxu0 %v3505
  %3518 = vmatmul.bf16.gmra.mxu0 %v3502
  %v3519 = vpop.f32.mrf.mxu0
  %v3520 = vadd.f32 0.0, %v3519
  %v3521 = vpop.f32.mrf.mxu0
  %3522 = vdwg.mxu0
  %v3527 = vunpack.c.l.b16 %v2165
  %v3528 = vunpack.c.l.b16 %v2166
  %v3529 = vunpack.c.l.b16 %v2167
  %v3530 = vunpack.c.l.b16 %v2168
  %v3531 = vpack.c.b16 %v3528, %v3527
  %v3532 = vpack.c.b16 %v3530, %v3529
  %v3533 = vsel %vm3151, %v1387, 0
  %v3536 = vsel %vm3151, %v3531, 0
  %v3539 = vsel %vm3151, %v3532, 0
  %3541 = vmatpush.bf16.xpose.msra.mxu0 0
  %3542 = vmatpush.bf16.xpose.msra.mxu0 0
  %3543 = vmatpush.bf16.xpose.msra.mxu0 0
  %3544 = vmatpush.bf16.xpose.msra.mxu0 0
  %3545 = vmatpush.bf16.xpose.msra.mxu0 0
  %3546 = vmatpush.bf16.xpose.msra.mxu0 0
  %3547 = vmatpush.bf16.xpose.msra.mxu0 %v3539
  %3548 = vmatpush.bf16.xpose.msra.mxu0 %v3536
  %3549 = vmatmul.bf16.gmra.mxu0 %v3533
  %v3550 = vpop.f32.mrf.mxu0
  %v3551 = vadd.f32 0.0, %v3550
  %v3552 = vpop.f32.mrf.mxu0
  %3553 = vdwg.mxu0
  %v3558 = vunpack.c.l.b16 %v2169
  %v3559 = vunpack.c.l.b16 %v2170
  %v3560 = vunpack.c.l.b16 %v2171
  %v3561 = vunpack.c.l.b16 %v2172
  %v3562 = vpack.c.b16 %v3559, %v3558
  %v3563 = vpack.c.b16 %v3561, %v3560
  %v3565 = vsel %vm3151, %v1390, 0
  %v3568 = vsel %vm3151, %v3562, 0
  %v3571 = vsel %vm3151, %v3563, 0
  %3573 = vmatpush.bf16.xpose.msra.mxu0 0
  %3574 = vmatpush.bf16.xpose.msra.mxu0 0
  %3575 = vmatpush.bf16.xpose.msra.mxu0 0
  %3576 = vmatpush.bf16.xpose.msra.mxu0 0
  %3577 = vmatpush.bf16.xpose.msra.mxu0 0
  %3578 = vmatpush.bf16.xpose.msra.mxu0 0
  %3579 = vmatpush.bf16.xpose.msra.mxu0 %v3571
  %3580 = vmatpush.bf16.xpose.msra.mxu0 %v3568
  %3581 = vmatmul.bf16.gmra.mxu0 %v3565
  %v3582 = vpop.f32.mrf.mxu0
  %v3583 = vadd.f32 0.0, %v3582
  %v3584 = vpop.f32.mrf.mxu0
  %3585 = vdwg.mxu0
  %v3590 = vunpack.c.l.b16 %v2173
  %v3591 = vunpack.c.l.b16 %v2174
  %v3592 = vunpack.c.l.b16 %v2175
  %v3593 = vunpack.c.l.b16 %v2176
  %v3594 = vpack.c.b16 %v3591, %v3590
  %v3595 = vpack.c.b16 %v3593, %v3592
  %v3597 = vsel %vm3151, %v1393, 0
  %v3600 = vsel %vm3151, %v3594, 0
  %v3603 = vsel %vm3151, %v3595, 0
  %3605 = vmatpush.bf16.xpose.msra.mxu0 0
  %3606 = vmatpush.bf16.xpose.msra.mxu0 0
  %3607 = vmatpush.bf16.xpose.msra.mxu0 0
  %3608 = vmatpush.bf16.xpose.msra.mxu0 0
  %3609 = vmatpush.bf16.xpose.msra.mxu0 0
  %3610 = vmatpush.bf16.xpose.msra.mxu0 0
  %3611 = vmatpush.bf16.xpose.msra.mxu0 %v3603
  %3612 = vmatpush.bf16.xpose.msra.mxu0 %v3600
  %3613 = vmatmul.bf16.gmra.mxu0 %v3597
  %v3614 = vpop.f32.mrf.mxu0
  %v3615 = vadd.f32 0.0, %v3614
  %v3616 = vpop.f32.mrf.mxu0
  %3617 = vdwg.mxu0
  %v3622 = vunpack.c.l.b16 %v2177
  %v3623 = vunpack.c.l.b16 %v2178
  %v3624 = vunpack.c.l.b16 %v2179
  %v3625 = vunpack.c.l.b16 %v2180
  %v3626 = vpack.c.b16 %v3623, %v3622
  %v3627 = vpack.c.b16 %v3625, %v3624
  %v3629 = vsel %vm3151, %v1396, 0
  %v3632 = vsel %vm3151, %v3626, 0
  %v3635 = vsel %vm3151, %v3627, 0
  %3637 = vmatpush.bf16.xpose.msra.mxu0 0
  %3638 = vmatpush.bf16.xpose.msra.mxu0 0
  %3639 = vmatpush.bf16.xpose.msra.mxu0 0
  %3640 = vmatpush.bf16.xpose.msra.mxu0 0
  %3641 = vmatpush.bf16.xpose.msra.mxu0 0
  %3642 = vmatpush.bf16.xpose.msra.mxu0 0
  %3643 = vmatpush.bf16.xpose.msra.mxu0 %v3635
  %3644 = vmatpush.bf16.xpose.msra.mxu0 %v3632
  %3645 = vmatmul.bf16.gmra.mxu0 %v3629
  %v3646 = vpop.f32.mrf.mxu0
  %v3647 = vadd.f32 0.0, %v3646
  %v3648 = vpop.f32.mrf.mxu0
  %3649 = vdwg.mxu0
  %v3654 = vunpack.c.l.b16 %v2181
  %v3655 = vunpack.c.l.b16 %v2182
  %v3656 = vunpack.c.l.b16 %v2183
  %v3657 = vunpack.c.l.b16 %v2184
  %v3658 = vpack.c.b16 %v3655, %v3654
  %v3659 = vpack.c.b16 %v3657, %v3656
  %v3660 = vsel %vm3151, %v1399, 0
  %v3663 = vsel %vm3151, %v3658, 0
  %v3666 = vsel %vm3151, %v3659, 0
  %3668 = vmatpush.bf16.xpose.msra.mxu0 0
  %3669 = vmatpush.bf16.xpose.msra.mxu0 0
  %3670 = vmatpush.bf16.xpose.msra.mxu0 0
  %3671 = vmatpush.bf16.xpose.msra.mxu0 0
  %3672 = vmatpush.bf16.xpose.msra.mxu0 0
  %3673 = vmatpush.bf16.xpose.msra.mxu0 0
  %3674 = vmatpush.bf16.xpose.msra.mxu0 %v3666
  %3675 = vmatpush.bf16.xpose.msra.mxu0 %v3663
  %3676 = vmatmul.bf16.gmra.mxu0 %v3660
  %v3677 = vpop.f32.mrf.mxu0
  %v3678 = vadd.f32 0.0, %v3677
  %v3679 = vpop.f32.mrf.mxu0
  %3680 = vdwg.mxu0
  %v3685 = vunpack.c.l.b16 %v2185
  %v3686 = vunpack.c.l.b16 %v2186
  %v3687 = vunpack.c.l.b16 %v2187
  %v3688 = vunpack.c.l.b16 %v2188
  %v3689 = vpack.c.b16 %v3686, %v3685
  %v3690 = vpack.c.b16 %v3688, %v3687
  %v3692 = vsel %vm3151, %v1402, 0
  %v3695 = vsel %vm3151, %v3689, 0
  %v3698 = vsel %vm3151, %v3690, 0
  %3700 = vmatpush.bf16.xpose.msra.mxu0 0
  %3701 = vmatpush.bf16.xpose.msra.mxu0 0
  %3702 = vmatpush.bf16.xpose.msra.mxu0 0
  %3703 = vmatpush.bf16.xpose.msra.mxu0 0
  %3704 = vmatpush.bf16.xpose.msra.mxu0 0
  %3705 = vmatpush.bf16.xpose.msra.mxu0 0
  %3706 = vmatpush.bf16.xpose.msra.mxu0 %v3698
  %3707 = vmatpush.bf16.xpose.msra.mxu0 %v3695
  %3708 = vmatmul.bf16.gmra.mxu0 %v3692
  %v3709 = vpop.f32.mrf.mxu0
  %v3710 = vadd.f32 0.0, %v3709
  %v3711 = vpop.f32.mrf.mxu0
  %3712 = vdwg.mxu0
  %v3717 = vunpack.c.l.b16 %v2189
  %v3718 = vunpack.c.l.b16 %v2190
  %v3719 = vunpack.c.l.b16 %v2191
  %v3720 = vunpack.c.l.b16 %v2192
  %v3721 = vpack.c.b16 %v3718, %v3717
  %v3722 = vpack.c.b16 %v3720, %v3719
  %v3724 = vsel %vm3151, %v1405, 0
  %v3727 = vsel %vm3151, %v3721, 0
  %v3730 = vsel %vm3151, %v3722, 0
  %3732 = vmatpush.bf16.xpose.msra.mxu0 0
  %3733 = vmatpush.bf16.xpose.msra.mxu0 0
  %3734 = vmatpush.bf16.xpose.msra.mxu0 0
  %3735 = vmatpush.bf16.xpose.msra.mxu0 0
  %3736 = vmatpush.bf16.xpose.msra.mxu0 0
  %3737 = vmatpush.bf16.xpose.msra.mxu0 0
  %3738 = vmatpush.bf16.xpose.msra.mxu0 %v3730
  %3739 = vmatpush.bf16.xpose.msra.mxu0 %v3727
  %3740 = vmatmul.bf16.gmra.mxu0 %v3724
  %v3741 = vpop.f32.mrf.mxu0
  %v3742 = vadd.f32 0.0, %v3741
  %v3743 = vpop.f32.mrf.mxu0
  %3744 = vdwg.mxu0
  %v3749 = vunpack.c.l.b16 %v2193
  %v3750 = vunpack.c.l.b16 %v2194
  %v3751 = vunpack.c.l.b16 %v2195
  %v3752 = vunpack.c.l.b16 %v2196
  %v3753 = vpack.c.b16 %v3750, %v3749
  %v3754 = vpack.c.b16 %v3752, %v3751
  %v3756 = vsel %vm3151, %v1408, 0
  %v3759 = vsel %vm3151, %v3753, 0
  %v3762 = vsel %vm3151, %v3754, 0
  %3764 = vmatpush.bf16.xpose.msra.mxu0 0
  %3765 = vmatpush.bf16.xpose.msra.mxu0 0
  %3766 = vmatpush.bf16.xpose.msra.mxu0 0
  %3767 = vmatpush.bf16.xpose.msra.mxu0 0
  %3768 = vmatpush.bf16.xpose.msra.mxu0 0
  %3769 = vmatpush.bf16.xpose.msra.mxu0 0
  %3770 = vmatpush.bf16.xpose.msra.mxu0 %v3762
  %3771 = vmatpush.bf16.xpose.msra.mxu0 %v3759
  %3772 = vmatmul.bf16.gmra.mxu0 %v3756
  %v3773 = vpop.f32.mrf.mxu0
  %v3774 = vadd.f32 0.0, %v3773
  %v3775 = vpop.f32.mrf.mxu0
  %3776 = vdwg.mxu0
  %v3781 = vunpack.c.l.b16 %v2197
  %v3782 = vunpack.c.l.b16 %v2198
  %v3783 = vunpack.c.l.b16 %v2199
  %v3784 = vunpack.c.l.b16 %v2200
  %v3785 = vpack.c.b16 %v3782, %v3781
  %v3786 = vpack.c.b16 %v3784, %v3783
  %v3787 = vsel %vm3151, %v1411, 0
  %v3790 = vsel %vm3151, %v3785, 0
  %v3793 = vsel %vm3151, %v3786, 0
  %3795 = vmatpush.bf16.xpose.msra.mxu0 0
  %3796 = vmatpush.bf16.xpose.msra.mxu0 0
  %3797 = vmatpush.bf16.xpose.msra.mxu0 0
  %3798 = vmatpush.bf16.xpose.msra.mxu0 0
  %3799 = vmatpush.bf16.xpose.msra.mxu0 0
  %3800 = vmatpush.bf16.xpose.msra.mxu0 0
  %3801 = vmatpush.bf16.xpose.msra.mxu0 %v3793
  %3802 = vmatpush.bf16.xpose.msra.mxu0 %v3790
  %3803 = vmatmul.bf16.gmra.mxu0 %v3787
  %v3804 = vpop.f32.mrf.mxu0
  %v3805 = vadd.f32 0.0, %v3804
  %v3806 = vpop.f32.mrf.mxu0
  %3807 = vdwg.mxu0
  %v3812 = vunpack.c.l.b16 %v2201
  %v3813 = vunpack.c.l.b16 %v2202
  %v3814 = vunpack.c.l.b16 %v2203
  %v3815 = vunpack.c.l.b16 %v2204
  %v3816 = vpack.c.b16 %v3813, %v3812
  %v3817 = vpack.c.b16 %v3815, %v3814
  %v3819 = vsel %vm3151, %v1414, 0
  %v3822 = vsel %vm3151, %v3816, 0
  %v3825 = vsel %vm3151, %v3817, 0
  %3827 = vmatpush.bf16.xpose.msra.mxu0 0
  %3828 = vmatpush.bf16.xpose.msra.mxu0 0
  %3829 = vmatpush.bf16.xpose.msra.mxu0 0
  %3830 = vmatpush.bf16.xpose.msra.mxu0 0
  %3831 = vmatpush.bf16.xpose.msra.mxu0 0
  %3832 = vmatpush.bf16.xpose.msra.mxu0 0
  %3833 = vmatpush.bf16.xpose.msra.mxu0 %v3825
  %3834 = vmatpush.bf16.xpose.msra.mxu0 %v3822
  %3835 = vmatmul.bf16.gmra.mxu0 %v3819
  %v3836 = vpop.f32.mrf.mxu0
  %v3837 = vadd.f32 0.0, %v3836
  %v3838 = vpop.f32.mrf.mxu0
  %3839 = vdwg.mxu0
  %v3844 = vunpack.c.l.b16 %v2205
  %v3845 = vunpack.c.l.b16 %v2206
  %v3846 = vunpack.c.l.b16 %v2207
  %v3847 = vunpack.c.l.b16 %v2208
  %v3848 = vpack.c.b16 %v3845, %v3844
  %v3849 = vpack.c.b16 %v3847, %v3846
  %v3851 = vsel %vm3151, %v1417, 0
  %v3854 = vsel %vm3151, %v3848, 0
  %v3857 = vsel %vm3151, %v3849, 0
  %3859 = vmatpush.bf16.xpose.msra.mxu0 0
  %3860 = vmatpush.bf16.xpose.msra.mxu0 0
  %3861 = vmatpush.bf16.xpose.msra.mxu0 0
  %3862 = vmatpush.bf16.xpose.msra.mxu0 0
  %3863 = vmatpush.bf16.xpose.msra.mxu0 0
  %3864 = vmatpush.bf16.xpose.msra.mxu0 0
  %3865 = vmatpush.bf16.xpose.msra.mxu0 %v3857
  %3866 = vmatpush.bf16.xpose.msra.mxu0 %v3854
  %3867 = vmatmul.bf16.gmra.mxu0 %v3851
  %v3868 = vpop.f32.mrf.mxu0
  %v3869 = vadd.f32 0.0, %v3868
  %v3870 = vpop.f32.mrf.mxu0
  %3871 = vdwg.mxu0
  %v3876 = vunpack.c.l.b16 %v2209
  %v3877 = vunpack.c.l.b16 %v2210
  %v3878 = vunpack.c.l.b16 %v2211
  %v3879 = vunpack.c.l.b16 %v2212
  %v3880 = vpack.c.b16 %v3877, %v3876
  %v3881 = vpack.c.b16 %v3879, %v3878
  %v3883 = vsel %vm3151, %v1420, 0
  %v3886 = vsel %vm3151, %v3880, 0
  %v3889 = vsel %vm3151, %v3881, 0
  %3891 = vmatpush.bf16.xpose.msra.mxu0 0
  %3892 = vmatpush.bf16.xpose.msra.mxu0 0
  %3893 = vmatpush.bf16.xpose.msra.mxu0 0
  %3894 = vmatpush.bf16.xpose.msra.mxu0 0
  %3895 = vmatpush.bf16.xpose.msra.mxu0 0
  %3896 = vmatpush.bf16.xpose.msra.mxu0 0
  %3897 = vmatpush.bf16.xpose.msra.mxu0 %v3889
  %3898 = vmatpush.bf16.xpose.msra.mxu0 %v3886
  %3899 = vmatmul.bf16.gmra.mxu0 %v3883
  %v3900 = vpop.f32.mrf.mxu0
  %v3901 = vadd.f32 0.0, %v3900
  %v3902 = vpop.f32.mrf.mxu0
  %3903 = vdwg.mxu0
  %v3908 = vunpack.c.l.b16 %v2213
  %v3909 = vunpack.c.l.b16 %v2214
  %v3910 = vunpack.c.l.b16 %v2215
  %v3911 = vunpack.c.l.b16 %v2216
  %v3912 = vpack.c.b16 %v3909, %v3908
  %v3913 = vpack.c.b16 %v3911, %v3910
  %v3914 = vsel %vm3151, %v1423, 0
  %v3917 = vsel %vm3151, %v3912, 0
  %v3920 = vsel %vm3151, %v3913, 0
  %3922 = vmatpush.bf16.xpose.msra.mxu0 0
  %3923 = vmatpush.bf16.xpose.msra.mxu0 0
  %3924 = vmatpush.bf16.xpose.msra.mxu0 0
  %3925 = vmatpush.bf16.xpose.msra.mxu0 0
  %3926 = vmatpush.bf16.xpose.msra.mxu0 0
  %3927 = vmatpush.bf16.xpose.msra.mxu0 0
  %3928 = vmatpush.bf16.xpose.msra.mxu0 %v3920
  %3929 = vmatpush.bf16.xpose.msra.mxu0 %v3917
  %3930 = vmatmul.bf16.gmra.mxu0 %v3914
  %v3931 = vpop.f32.mrf.mxu0
  %v3932 = vadd.f32 0.0, %v3931
  %v3933 = vpop.f32.mrf.mxu0
  %3934 = vdwg.mxu0
  %v3939 = vunpack.c.l.b16 %v2217
  %v3940 = vunpack.c.l.b16 %v2218
  %v3941 = vunpack.c.l.b16 %v2219
  %v3942 = vunpack.c.l.b16 %v2220
  %v3943 = vpack.c.b16 %v3940, %v3939
  %v3944 = vpack.c.b16 %v3942, %v3941
  %v3946 = vsel %vm3151, %v1426, 0
  %v3949 = vsel %vm3151, %v3943, 0
  %v3952 = vsel %vm3151, %v3944, 0
  %3954 = vmatpush.bf16.xpose.msra.mxu0 0
  %3955 = vmatpush.bf16.xpose.msra.mxu0 0
  %3956 = vmatpush.bf16.xpose.msra.mxu0 0
  %3957 = vmatpush.bf16.xpose.msra.mxu0 0
  %3958 = vmatpush.bf16.xpose.msra.mxu0 0
  %3959 = vmatpush.bf16.xpose.msra.mxu0 0
  %3960 = vmatpush.bf16.xpose.msra.mxu0 %v3952
  %3961 = vmatpush.bf16.xpose.msra.mxu0 %v3949
  %3962 = vmatmul.bf16.gmra.mxu0 %v3946
  %v3963 = vpop.f32.mrf.mxu0
  %v3964 = vadd.f32 0.0, %v3963
  %v3965 = vpop.f32.mrf.mxu0
  %3966 = vdwg.mxu0
  %v3971 = vunpack.c.l.b16 %v2221
  %v3972 = vunpack.c.l.b16 %v2222
  %v3973 = vunpack.c.l.b16 %v2223
  %v3974 = vunpack.c.l.b16 %v2224
  %v3975 = vpack.c.b16 %v3972, %v3971
  %v3976 = vpack.c.b16 %v3974, %v3973
  %v3978 = vsel %vm3151, %v1429, 0
  %v3981 = vsel %vm3151, %v3975, 0
  %v3984 = vsel %vm3151, %v3976, 0
  %3986 = vmatpush.bf16.xpose.msra.mxu0 0
  %3987 = vmatpush.bf16.xpose.msra.mxu0 0
  %3988 = vmatpush.bf16.xpose.msra.mxu0 0
  %3989 = vmatpush.bf16.xpose.msra.mxu0 0
  %3990 = vmatpush.bf16.xpose.msra.mxu0 0
  %3991 = vmatpush.bf16.xpose.msra.mxu0 0
  %3992 = vmatpush.bf16.xpose.msra.mxu0 %v3984
  %3993 = vmatpush.bf16.xpose.msra.mxu0 %v3981
  %3994 = vmatmul.bf16.gmra.mxu0 %v3978
  %v3995 = vpop.f32.mrf.mxu0
  %v3996 = vadd.f32 0.0, %v3995
  %v3997 = vpop.f32.mrf.mxu0
  %3998 = vdwg.mxu0
  %v4003 = vunpack.c.l.b16 %v2225
  %v4004 = vunpack.c.l.b16 %v2226
  %v4005 = vunpack.c.l.b16 %v2227
  %v4006 = vunpack.c.l.b16 %v2228
  %v4007 = vpack.c.b16 %v4004, %v4003
  %v4008 = vpack.c.b16 %v4006, %v4005
  %v4010 = vsel %vm3151, %v1432, 0
  %v4013 = vsel %vm3151, %v4007, 0
  %v4016 = vsel %vm3151, %v4008, 0
  %4018 = vmatpush.bf16.xpose.msra.mxu0 0
  %4019 = vmatpush.bf16.xpose.msra.mxu0 0
  %4020 = vmatpush.bf16.xpose.msra.mxu0 0
  %4021 = vmatpush.bf16.xpose.msra.mxu0 0
  %4022 = vmatpush.bf16.xpose.msra.mxu0 0
  %4023 = vmatpush.bf16.xpose.msra.mxu0 0
  %4024 = vmatpush.bf16.xpose.msra.mxu0 %v4016
  %4025 = vmatpush.bf16.xpose.msra.mxu0 %v4013
  %4026 = vmatmul.bf16.gmra.mxu0 %v4010
  %v4027 = vpop.f32.mrf.mxu0
  %v4028 = vadd.f32 0.0, %v4027
  %v4029 = vpop.f32.mrf.mxu0
  %4030 = vdwg.mxu0
  %v4035 = vunpack.c.l.b16 %v2229
  %v4036 = vunpack.c.l.b16 %v2230
  %v4037 = vunpack.c.l.b16 %v2231
  %v4038 = vunpack.c.l.b16 %v2232
  %v4039 = vpack.c.b16 %v4036, %v4035
  %v4040 = vpack.c.b16 %v4038, %v4037
  %v4041 = vsel %vm3151, %v1435, 0
  %v4044 = vsel %vm3151, %v4039, 0
  %v4047 = vsel %vm3151, %v4040, 0
  %4049 = vmatpush.bf16.xpose.msra.mxu0 0
  %4050 = vmatpush.bf16.xpose.msra.mxu0 0
  %4051 = vmatpush.bf16.xpose.msra.mxu0 0
  %4052 = vmatpush.bf16.xpose.msra.mxu0 0
  %4053 = vmatpush.bf16.xpose.msra.mxu0 0
  %4054 = vmatpush.bf16.xpose.msra.mxu0 0
  %4055 = vmatpush.bf16.xpose.msra.mxu0 %v4047
  %4056 = vmatpush.bf16.xpose.msra.mxu0 %v4044
  %4057 = vmatmul.bf16.gmra.mxu0 %v4041
  %v4058 = vpop.f32.mrf.mxu0
  %v4059 = vadd.f32 0.0, %v4058
  %v4060 = vpop.f32.mrf.mxu0
  %4061 = vdwg.mxu0
  %v4066 = vunpack.c.l.b16 %v2233
  %v4067 = vunpack.c.l.b16 %v2234
  %v4068 = vunpack.c.l.b16 %v2235
  %v4069 = vunpack.c.l.b16 %v2236
  %v4070 = vpack.c.b16 %v4067, %v4066
  %v4071 = vpack.c.b16 %v4069, %v4068
  %v4073 = vsel %vm3151, %v1438, 0
  %v4076 = vsel %vm3151, %v4070, 0
  %v4079 = vsel %vm3151, %v4071, 0
  %4081 = vmatpush.bf16.xpose.msra.mxu0 0
  %4082 = vmatpush.bf16.xpose.msra.mxu0 0
  %4083 = vmatpush.bf16.xpose.msra.mxu0 0
  %4084 = vmatpush.bf16.xpose.msra.mxu0 0
  %4085 = vmatpush.bf16.xpose.msra.mxu0 0
  %4086 = vmatpush.bf16.xpose.msra.mxu0 0
  %4087 = vmatpush.bf16.xpose.msra.mxu0 %v4079
  %4088 = vmatpush.bf16.xpose.msra.mxu0 %v4076
  %4089 = vmatmul.bf16.gmra.mxu0 %v4073
  %v4090 = vpop.f32.mrf.mxu0
  %v4091 = vadd.f32 0.0, %v4090
  %v4092 = vpop.f32.mrf.mxu0
  %4093 = vdwg.mxu0
  %v4098 = vunpack.c.l.b16 %v2237
  %v4099 = vunpack.c.l.b16 %v2238
  %v4100 = vunpack.c.l.b16 %v2239
  %v4101 = vunpack.c.l.b16 %v2240
  %v4102 = vpack.c.b16 %v4099, %v4098
  %v4103 = vpack.c.b16 %v4101, %v4100
  %v4105 = vsel %vm3151, %v1441, 0
  %v4108 = vsel %vm3151, %v4102, 0
  %v4111 = vsel %vm3151, %v4103, 0
  %4113 = vmatpush.bf16.xpose.msra.mxu0 0
  %4114 = vmatpush.bf16.xpose.msra.mxu0 0
  %4115 = vmatpush.bf16.xpose.msra.mxu0 0
  %4116 = vmatpush.bf16.xpose.msra.mxu0 0
  %4117 = vmatpush.bf16.xpose.msra.mxu0 0
  %4118 = vmatpush.bf16.xpose.msra.mxu0 0
  %4119 = vmatpush.bf16.xpose.msra.mxu0 %v4111
  %4120 = vmatpush.bf16.xpose.msra.mxu0 %v4108
  %4121 = vmatmul.bf16.gmra.mxu0 %v4105
  %v4122 = vpop.f32.mrf.mxu0
  %v4123 = vadd.f32 0.0, %v4122
  %v4124 = vpop.f32.mrf.mxu0
  %4125 = vdwg.mxu0
  %v4130 = vunpack.c.l.b16 %v2241
  %v4131 = vunpack.c.l.b16 %v2242
  %v4132 = vunpack.c.l.b16 %v2243
  %v4133 = vunpack.c.l.b16 %v2244
  %v4134 = vpack.c.b16 %v4131, %v4130
  %v4135 = vpack.c.b16 %v4133, %v4132
  %v4137 = vsel %vm3151, %v1444, 0
  %v4140 = vsel %vm3151, %v4134, 0
  %v4143 = vsel %vm3151, %v4135, 0
  %4145 = vmatpush.bf16.xpose.msra.mxu0 0
  %4146 = vmatpush.bf16.xpose.msra.mxu0 0
  %4147 = vmatpush.bf16.xpose.msra.mxu0 0
  %4148 = vmatpush.bf16.xpose.msra.mxu0 0
  %4149 = vmatpush.bf16.xpose.msra.mxu0 0
  %4150 = vmatpush.bf16.xpose.msra.mxu0 0
  %4151 = vmatpush.bf16.xpose.msra.mxu0 %v4143
  %4152 = vmatpush.bf16.xpose.msra.mxu0 %v4140
  %4153 = vmatmul.bf16.gmra.mxu0 %v4137
  %v4154 = vpop.f32.mrf.mxu0
  %v4155 = vadd.f32 0.0, %v4154
  %v4156 = vpop.f32.mrf.mxu0
  %4157 = vdwg.mxu0
  %v4162 = vunpack.c.l.b16 %v2245
  %v4163 = vunpack.c.l.b16 %v2246
  %v4164 = vunpack.c.l.b16 %v2247
  %v4165 = vunpack.c.l.b16 %v2248
  %v4166 = vpack.c.b16 %v4163, %v4162
  %v4167 = vpack.c.b16 %v4165, %v4164
  %v4168 = vsel %vm3151, %v1447, 0
  %v4171 = vsel %vm3151, %v4166, 0
  %v4174 = vsel %vm3151, %v4167, 0
  %4176 = vmatpush.bf16.xpose.msra.mxu0 0
  %4177 = vmatpush.bf16.xpose.msra.mxu0 0
  %4178 = vmatpush.bf16.xpose.msra.mxu0 0
  %4179 = vmatpush.bf16.xpose.msra.mxu0 0
  %4180 = vmatpush.bf16.xpose.msra.mxu0 0
  %4181 = vmatpush.bf16.xpose.msra.mxu0 0
  %4182 = vmatpush.bf16.xpose.msra.mxu0 %v4174
  %4183 = vmatpush.bf16.xpose.msra.mxu0 %v4171
  %4184 = vmatmul.bf16.gmra.mxu0 %v4168
  %v4185 = vpop.f32.mrf.mxu0
  %v4186 = vadd.f32 0.0, %v4185
  %v4187 = vpop.f32.mrf.mxu0
  %4188 = vdwg.mxu0
  %v4193 = vunpack.c.l.b16 %v2249
  %v4194 = vunpack.c.l.b16 %v2250
  %v4195 = vunpack.c.l.b16 %v2251
  %v4196 = vunpack.c.l.b16 %v2252
  %v4197 = vpack.c.b16 %v4194, %v4193
  %v4198 = vpack.c.b16 %v4196, %v4195
  %v4200 = vsel %vm3151, %v1450, 0
  %v4203 = vsel %vm3151, %v4197, 0
  %v4206 = vsel %vm3151, %v4198, 0
  %4208 = vmatpush.bf16.xpose.msra.mxu0 0
  %4209 = vmatpush.bf16.xpose.msra.mxu0 0
  %4210 = vmatpush.bf16.xpose.msra.mxu0 0
  %4211 = vmatpush.bf16.xpose.msra.mxu0 0
  %4212 = vmatpush.bf16.xpose.msra.mxu0 0
  %4213 = vmatpush.bf16.xpose.msra.mxu0 0
  %4214 = vmatpush.bf16.xpose.msra.mxu0 %v4206
  %4215 = vmatpush.bf16.xpose.msra.mxu0 %v4203
  %4216 = vmatmul.bf16.gmra.mxu0 %v4200
  %v4217 = vpop.f32.mrf.mxu0
  %v4218 = vadd.f32 0.0, %v4217
  %v4219 = vpop.f32.mrf.mxu0
  %4220 = vdwg.mxu0
  %v4225 = vunpack.c.l.b16 %v2253
  %v4226 = vunpack.c.l.b16 %v2254
  %v4227 = vunpack.c.l.b16 %v2255
  %v4228 = vunpack.c.l.b16 %v2256
  %v4229 = vpack.c.b16 %v4226, %v4225
  %v4230 = vpack.c.b16 %v4228, %v4227
  %v4232 = vsel %vm3151, %v1453, 0
  %v4235 = vsel %vm3151, %v4229, 0
  %v4238 = vsel %vm3151, %v4230, 0
  %4240 = vmatpush.bf16.xpose.msra.mxu0 0
  %4241 = vmatpush.bf16.xpose.msra.mxu0 0
  %4242 = vmatpush.bf16.xpose.msra.mxu0 0
  %4243 = vmatpush.bf16.xpose.msra.mxu0 0
  %4244 = vmatpush.bf16.xpose.msra.mxu0 0
  %4245 = vmatpush.bf16.xpose.msra.mxu0 0
  %4246 = vmatpush.bf16.xpose.msra.mxu0 %v4238
  %4247 = vmatpush.bf16.xpose.msra.mxu0 %v4235
  %4248 = vmatmul.bf16.gmra.mxu0 %v4232
  %v4249 = vpop.f32.mrf.mxu0
  %v4250 = vadd.f32 0.0, %v4249
  %v4251 = vpop.f32.mrf.mxu0
  %4252 = vdwg.mxu0
  %v4257 = vunpack.c.l.b16 %v2257
  %v4258 = vunpack.c.l.b16 %v2258
  %v4259 = vunpack.c.l.b16 %v2259
  %v4260 = vunpack.c.l.b16 %v2260
  %v4261 = vpack.c.b16 %v4258, %v4257
  %v4262 = vpack.c.b16 %v4260, %v4259
  %v4264 = vsel %vm3151, %v1456, 0
  %v4267 = vsel %vm3151, %v4261, 0
  %v4270 = vsel %vm3151, %v4262, 0
  %4272 = vmatpush.bf16.xpose.msra.mxu0 0
  %4273 = vmatpush.bf16.xpose.msra.mxu0 0
  %4274 = vmatpush.bf16.xpose.msra.mxu0 0
  %4275 = vmatpush.bf16.xpose.msra.mxu0 0
  %4276 = vmatpush.bf16.xpose.msra.mxu0 0
  %4277 = vmatpush.bf16.xpose.msra.mxu0 0
  %4278 = vmatpush.bf16.xpose.msra.mxu0 %v4270
  %4279 = vmatpush.bf16.xpose.msra.mxu0 %v4267
  %4280 = vmatmul.bf16.gmra.mxu0 %v4264
  %v4281 = vpop.f32.mrf.mxu0
  %v4282 = vadd.f32 0.0, %v4281
  %v4283 = vpop.f32.mrf.mxu0
  %4284 = vdwg.mxu0
  %v4289 = vunpack.c.l.b16 %v2261
  %v4290 = vunpack.c.l.b16 %v2262
  %v4291 = vunpack.c.l.b16 %v2263
  %v4292 = vunpack.c.l.b16 %v2264
  %v4293 = vpack.c.b16 %v4290, %v4289
  %v4294 = vpack.c.b16 %v4292, %v4291
  %v4295 = vsel %vm3151, %v1459, 0
  %v4298 = vsel %vm3151, %v4293, 0
  %v4301 = vsel %vm3151, %v4294, 0
  %4303 = vmatpush.bf16.xpose.msra.mxu0 0
  %4304 = vmatpush.bf16.xpose.msra.mxu0 0
  %4305 = vmatpush.bf16.xpose.msra.mxu0 0
  %4306 = vmatpush.bf16.xpose.msra.mxu0 0
  %4307 = vmatpush.bf16.xpose.msra.mxu0 0
  %4308 = vmatpush.bf16.xpose.msra.mxu0 0
  %4309 = vmatpush.bf16.xpose.msra.mxu0 %v4301
  %4310 = vmatpush.bf16.xpose.msra.mxu0 %v4298
  %4311 = vmatmul.bf16.gmra.mxu0 %v4295
  %v4312 = vpop.f32.mrf.mxu0
  %v4313 = vadd.f32 0.0, %v4312
  %v4314 = vpop.f32.mrf.mxu0
  %4315 = vdwg.mxu0
  %v4320 = vunpack.c.l.b16 %v2265
  %v4321 = vunpack.c.l.b16 %v2266
  %v4322 = vunpack.c.l.b16 %v2267
  %v4323 = vunpack.c.l.b16 %v2268
  %v4324 = vpack.c.b16 %v4321, %v4320
  %v4325 = vpack.c.b16 %v4323, %v4322
  %v4327 = vsel %vm3151, %v1462, 0
  %v4330 = vsel %vm3151, %v4324, 0
  %v4333 = vsel %vm3151, %v4325, 0
  %4335 = vmatpush.bf16.xpose.msra.mxu0 0
  %4336 = vmatpush.bf16.xpose.msra.mxu0 0
  %4337 = vmatpush.bf16.xpose.msra.mxu0 0
  %4338 = vmatpush.bf16.xpose.msra.mxu0 0
  %4339 = vmatpush.bf16.xpose.msra.mxu0 0
  %4340 = vmatpush.bf16.xpose.msra.mxu0 0
  %4341 = vmatpush.bf16.xpose.msra.mxu0 %v4333
  %4342 = vmatpush.bf16.xpose.msra.mxu0 %v4330
  %4343 = vmatmul.bf16.gmra.mxu0 %v4327
  %v4344 = vpop.f32.mrf.mxu0
  %v4345 = vadd.f32 0.0, %v4344
  %v4346 = vpop.f32.mrf.mxu0
  %4347 = vdwg.mxu0
  %v4352 = vunpack.c.l.b16 %v2269
  %v4353 = vunpack.c.l.b16 %v2270
  %v4354 = vunpack.c.l.b16 %v2271
  %v4355 = vunpack.c.l.b16 %v2272
  %v4356 = vpack.c.b16 %v4353, %v4352
  %v4357 = vpack.c.b16 %v4355, %v4354
  %v4359 = vsel %vm3151, %v1465, 0
  %v4362 = vsel %vm3151, %v4356, 0
  %v4365 = vsel %vm3151, %v4357, 0
  %4367 = vmatpush.bf16.xpose.msra.mxu0 0
  %4368 = vmatpush.bf16.xpose.msra.mxu0 0
  %4369 = vmatpush.bf16.xpose.msra.mxu0 0
  %4370 = vmatpush.bf16.xpose.msra.mxu0 0
  %4371 = vmatpush.bf16.xpose.msra.mxu0 0
  %4372 = vmatpush.bf16.xpose.msra.mxu0 0
  %4373 = vmatpush.bf16.xpose.msra.mxu0 %v4365
  %4374 = vmatpush.bf16.xpose.msra.mxu0 %v4362
  %4375 = vmatmul.bf16.gmra.mxu0 %v4359
  %v4376 = vpop.f32.mrf.mxu0
  %v4377 = vadd.f32 0.0, %v4376
  %v4378 = vpop.f32.mrf.mxu0
  %4379 = vdwg.mxu0
  %v4384 = vunpack.c.l.b16 %v2273
  %v4385 = vunpack.c.l.b16 %v2274
  %v4386 = vunpack.c.l.b16 %v2275
  %v4387 = vunpack.c.l.b16 %v2276
  %v4388 = vpack.c.b16 %v4385, %v4384
  %v4389 = vpack.c.b16 %v4387, %v4386
  %v4391 = vsel %vm3151, %v1468, 0
  %v4394 = vsel %vm3151, %v4388, 0
  %v4397 = vsel %vm3151, %v4389, 0
  %4399 = vmatpush.bf16.xpose.msra.mxu0 0
  %4400 = vmatpush.bf16.xpose.msra.mxu0 0
  %4401 = vmatpush.bf16.xpose.msra.mxu0 0
  %4402 = vmatpush.bf16.xpose.msra.mxu0 0
  %4403 = vmatpush.bf16.xpose.msra.mxu0 0
  %4404 = vmatpush.bf16.xpose.msra.mxu0 0
  %4405 = vmatpush.bf16.xpose.msra.mxu0 %v4397
  %4406 = vmatpush.bf16.xpose.msra.mxu0 %v4394
  %4407 = vmatmul.bf16.gmra.mxu0 %v4391
  %v4408 = vpop.f32.mrf.mxu0
  %v4409 = vadd.f32 0.0, %v4408
  %v4410 = vpop.f32.mrf.mxu0
  %4411 = vdwg.mxu0
  %v4416 = vunpack.c.l.b16 %v2277
  %v4417 = vunpack.c.l.b16 %v2278
  %v4418 = vunpack.c.l.b16 %v2279
  %v4419 = vunpack.c.l.b16 %v2280
  %v4420 = vpack.c.b16 %v4417, %v4416
  %v4421 = vpack.c.b16 %v4419, %v4418
  %v4422 = vsel %vm3151, %v1471, 0
  %v4425 = vsel %vm3151, %v4420, 0
  %v4428 = vsel %vm3151, %v4421, 0
  %4430 = vmatpush.bf16.xpose.msra.mxu0 0
  %4431 = vmatpush.bf16.xpose.msra.mxu0 0
  %4432 = vmatpush.bf16.xpose.msra.mxu0 0
  %4433 = vmatpush.bf16.xpose.msra.mxu0 0
  %4434 = vmatpush.bf16.xpose.msra.mxu0 0
  %4435 = vmatpush.bf16.xpose.msra.mxu0 0
  %4436 = vmatpush.bf16.xpose.msra.mxu0 %v4428
  %4437 = vmatpush.bf16.xpose.msra.mxu0 %v4425
  %4438 = vmatmul.bf16.gmra.mxu0 %v4422
  %v4439 = vpop.f32.mrf.mxu0
  %v4440 = vadd.f32 0.0, %v4439
  %v4441 = vpop.f32.mrf.mxu0
  %4442 = vdwg.mxu0
  %v4447 = vunpack.c.l.b16 %v2281
  %v4448 = vunpack.c.l.b16 %v2282
  %v4449 = vunpack.c.l.b16 %v2283
  %v4450 = vunpack.c.l.b16 %v2284
  %v4451 = vpack.c.b16 %v4448, %v4447
  %v4452 = vpack.c.b16 %v4450, %v4449
  %v4454 = vsel %vm3151, %v1474, 0
  %v4457 = vsel %vm3151, %v4451, 0
  %v4460 = vsel %vm3151, %v4452, 0
  %4462 = vmatpush.bf16.xpose.msra.mxu0 0
  %4463 = vmatpush.bf16.xpose.msra.mxu0 0
  %4464 = vmatpush.bf16.xpose.msra.mxu0 0
  %4465 = vmatpush.bf16.xpose.msra.mxu0 0
  %4466 = vmatpush.bf16.xpose.msra.mxu0 0
  %4467 = vmatpush.bf16.xpose.msra.mxu0 0
  %4468 = vmatpush.bf16.xpose.msra.mxu0 %v4460
  %4469 = vmatpush.bf16.xpose.msra.mxu0 %v4457
  %4470 = vmatmul.bf16.gmra.mxu0 %v4454
  %v4471 = vpop.f32.mrf.mxu0
  %v4472 = vadd.f32 0.0, %v4471
  %v4473 = vpop.f32.mrf.mxu0
  %4474 = vdwg.mxu0
  %v4479 = vunpack.c.l.b16 %v2285
  %v4480 = vunpack.c.l.b16 %v2286
  %v4481 = vunpack.c.l.b16 %v2287
  %v4482 = vunpack.c.l.b16 %v2288
  %v4483 = vpack.c.b16 %v4480, %v4479
  %v4484 = vpack.c.b16 %v4482, %v4481
  %v4486 = vsel %vm3151, %v1477, 0
  %v4489 = vsel %vm3151, %v4483, 0
  %v4492 = vsel %vm3151, %v4484, 0
  %4494 = vmatpush.bf16.xpose.msra.mxu0 0
  %4495 = vmatpush.bf16.xpose.msra.mxu0 0
  %4496 = vmatpush.bf16.xpose.msra.mxu0 0
  %4497 = vmatpush.bf16.xpose.msra.mxu0 0
  %4498 = vmatpush.bf16.xpose.msra.mxu0 0
  %4499 = vmatpush.bf16.xpose.msra.mxu0 0
  %4500 = vmatpush.bf16.xpose.msra.mxu0 %v4492
  %4501 = vmatpush.bf16.xpose.msra.mxu0 %v4489
  %4502 = vmatmul.bf16.gmra.mxu0 %v4486
  %v4503 = vpop.f32.mrf.mxu0
  %v4504 = vadd.f32 0.0, %v4503
  %v4505 = vpop.f32.mrf.mxu0
  %4506 = vdwg.mxu0
  %v4511 = vunpack.c.l.b16 %v2289
  %v4512 = vunpack.c.l.b16 %v2290
  %v4513 = vunpack.c.l.b16 %v2291
  %v4514 = vunpack.c.l.b16 %v2292
  %v4515 = vpack.c.b16 %v4512, %v4511
  %v4516 = vpack.c.b16 %v4514, %v4513
  %v4518 = vsel %vm3151, %v1480, 0
  %v4521 = vsel %vm3151, %v4515, 0
  %v4524 = vsel %vm3151, %v4516, 0
  %4526 = vmatpush.bf16.xpose.msra.mxu0 0
  %4527 = vmatpush.bf16.xpose.msra.mxu0 0
  %4528 = vmatpush.bf16.xpose.msra.mxu0 0
  %4529 = vmatpush.bf16.xpose.msra.mxu0 0
  %4530 = vmatpush.bf16.xpose.msra.mxu0 0
  %4531 = vmatpush.bf16.xpose.msra.mxu0 0
  %4532 = vmatpush.bf16.xpose.msra.mxu0 %v4524
  %4533 = vmatpush.bf16.xpose.msra.mxu0 %v4521
  %4534 = vmatmul.bf16.gmra.mxu0 %v4518
  %v4535 = vpop.f32.mrf.mxu0
  %v4536 = vadd.f32 0.0, %v4535
  %v4537 = vpop.f32.mrf.mxu0
  %4538 = vdwg.mxu0
  %v4543 = vunpack.c.l.b16 %v2293
  %v4544 = vunpack.c.l.b16 %v2294
  %v4545 = vunpack.c.l.b16 %v2295
  %v4546 = vunpack.c.l.b16 %v2296
  %v4547 = vpack.c.b16 %v4544, %v4543
  %v4548 = vpack.c.b16 %v4546, %v4545
  %v4549 = vsel %vm3151, %v1483, 0
  %v4552 = vsel %vm3151, %v4547, 0
  %v4555 = vsel %vm3151, %v4548, 0
  %4557 = vmatpush.bf16.xpose.msra.mxu0 0
  %4558 = vmatpush.bf16.xpose.msra.mxu0 0
  %4559 = vmatpush.bf16.xpose.msra.mxu0 0
  %4560 = vmatpush.bf16.xpose.msra.mxu0 0
  %4561 = vmatpush.bf16.xpose.msra.mxu0 0
  %4562 = vmatpush.bf16.xpose.msra.mxu0 0
  %4563 = vmatpush.bf16.xpose.msra.mxu0 %v4555
  %4564 = vmatpush.bf16.xpose.msra.mxu0 %v4552
  %4565 = vmatmul.bf16.gmra.mxu0 %v4549
  %v4566 = vpop.f32.mrf.mxu0
  %v4567 = vadd.f32 0.0, %v4566
  %v4568 = vpop.f32.mrf.mxu0
  %4569 = vdwg.mxu0
  %v4574 = vunpack.c.l.b16 %v2297
  %v4575 = vunpack.c.l.b16 %v2298
  %v4576 = vunpack.c.l.b16 %v2299
  %v4577 = vunpack.c.l.b16 %v2300
  %v4578 = vpack.c.b16 %v4575, %v4574
  %v4579 = vpack.c.b16 %v4577, %v4576
  %v4581 = vsel %vm3151, %v1486, 0
  %v4584 = vsel %vm3151, %v4578, 0
  %v4587 = vsel %vm3151, %v4579, 0
  %4589 = vmatpush.bf16.xpose.msra.mxu0 0
  %4590 = vmatpush.bf16.xpose.msra.mxu0 0
  %4591 = vmatpush.bf16.xpose.msra.mxu0 0
  %4592 = vmatpush.bf16.xpose.msra.mxu0 0
  %4593 = vmatpush.bf16.xpose.msra.mxu0 0
  %4594 = vmatpush.bf16.xpose.msra.mxu0 0
  %4595 = vmatpush.bf16.xpose.msra.mxu0 %v4587
  %4596 = vmatpush.bf16.xpose.msra.mxu0 %v4584
  %4597 = vmatmul.bf16.gmra.mxu0 %v4581
  %v4598 = vpop.f32.mrf.mxu0
  %v4599 = vadd.f32 0.0, %v4598
  %v4600 = vpop.f32.mrf.mxu0
  %4601 = vdwg.mxu0
  %v4606 = vunpack.c.l.b16 %v2301
  %v4607 = vunpack.c.l.b16 %v2302
  %v4608 = vunpack.c.l.b16 %v2303
  %v4609 = vunpack.c.l.b16 %v2304
  %v4610 = vpack.c.b16 %v4607, %v4606
  %v4611 = vpack.c.b16 %v4609, %v4608
  %v4613 = vsel %vm3151, %v1489, 0
  %v4616 = vsel %vm3151, %v4610, 0
  %v4619 = vsel %vm3151, %v4611, 0
  %4621 = vmatpush.bf16.xpose.msra.mxu0 0
  %4622 = vmatpush.bf16.xpose.msra.mxu0 0
  %4623 = vmatpush.bf16.xpose.msra.mxu0 0
  %4624 = vmatpush.bf16.xpose.msra.mxu0 0
  %4625 = vmatpush.bf16.xpose.msra.mxu0 0
  %4626 = vmatpush.bf16.xpose.msra.mxu0 0
  %4627 = vmatpush.bf16.xpose.msra.mxu0 %v4619
  %4628 = vmatpush.bf16.xpose.msra.mxu0 %v4616
  %4629 = vmatmul.bf16.gmra.mxu0 %v4613
  %v4630 = vpop.f32.mrf.mxu0
  %v4631 = vadd.f32 0.0, %v4630
  %v4632 = vpop.f32.mrf.mxu0
  %4633 = vdwg.mxu0
  %v4638 = vunpack.c.l.b16 %v2305
  %v4639 = vunpack.c.l.b16 %v2306
  %v4640 = vunpack.c.l.b16 %v2307
  %v4641 = vunpack.c.l.b16 %v2308
  %v4642 = vpack.c.b16 %v4639, %v4638
  %v4643 = vpack.c.b16 %v4641, %v4640
  %v4645 = vsel %vm3151, %v1492, 0
  %v4648 = vsel %vm3151, %v4642, 0
  %v4651 = vsel %vm3151, %v4643, 0
  %4653 = vmatpush.bf16.xpose.msra.mxu0 0
  %4654 = vmatpush.bf16.xpose.msra.mxu0 0
  %4655 = vmatpush.bf16.xpose.msra.mxu0 0
  %4656 = vmatpush.bf16.xpose.msra.mxu0 0
  %4657 = vmatpush.bf16.xpose.msra.mxu0 0
  %4658 = vmatpush.bf16.xpose.msra.mxu0 0
  %4659 = vmatpush.bf16.xpose.msra.mxu0 %v4651
  %4660 = vmatpush.bf16.xpose.msra.mxu0 %v4648
  %4661 = vmatmul.bf16.gmra.mxu0 %v4645
  %v4662 = vpop.f32.mrf.mxu0
  %v4663 = vadd.f32 0.0, %v4662
  %v4664 = vpop.f32.mrf.mxu0
  %4665 = vdwg.mxu0
  %v4670 = vunpack.c.l.b16 %v2309
  %v4671 = vunpack.c.l.b16 %v2310
  %v4672 = vunpack.c.l.b16 %v2311
  %v4673 = vunpack.c.l.b16 %v2312
  %v4674 = vpack.c.b16 %v4671, %v4670
  %v4675 = vpack.c.b16 %v4673, %v4672
  %v4676 = vsel %vm3151, %v1495, 0
  %v4679 = vsel %vm3151, %v4674, 0
  %v4682 = vsel %vm3151, %v4675, 0
  %4684 = vmatpush.bf16.xpose.msra.mxu0 0
  %4685 = vmatpush.bf16.xpose.msra.mxu0 0
  %4686 = vmatpush.bf16.xpose.msra.mxu0 0
  %4687 = vmatpush.bf16.xpose.msra.mxu0 0
  %4688 = vmatpush.bf16.xpose.msra.mxu0 0
  %4689 = vmatpush.bf16.xpose.msra.mxu0 0
  %4690 = vmatpush.bf16.xpose.msra.mxu0 %v4682
  %4691 = vmatpush.bf16.xpose.msra.mxu0 %v4679
  %4692 = vmatmul.bf16.gmra.mxu0 %v4676
  %v4693 = vpop.f32.mrf.mxu0
  %v4694 = vadd.f32 0.0, %v4693
  %v4695 = vpop.f32.mrf.mxu0
  %4696 = vdwg.mxu0
  %v4701 = vunpack.c.l.b16 %v2313
  %v4702 = vunpack.c.l.b16 %v2314
  %v4703 = vunpack.c.l.b16 %v2315
  %v4704 = vunpack.c.l.b16 %v2316
  %v4705 = vpack.c.b16 %v4702, %v4701
  %v4706 = vpack.c.b16 %v4704, %v4703
  %v4708 = vsel %vm3151, %v1498, 0
  %v4711 = vsel %vm3151, %v4705, 0
  %v4714 = vsel %vm3151, %v4706, 0
  %4716 = vmatpush.bf16.xpose.msra.mxu0 0
  %4717 = vmatpush.bf16.xpose.msra.mxu0 0
  %4718 = vmatpush.bf16.xpose.msra.mxu0 0
  %4719 = vmatpush.bf16.xpose.msra.mxu0 0
  %4720 = vmatpush.bf16.xpose.msra.mxu0 0
  %4721 = vmatpush.bf16.xpose.msra.mxu0 0
  %4722 = vmatpush.bf16.xpose.msra.mxu0 %v4714
  %4723 = vmatpush.bf16.xpose.msra.mxu0 %v4711
  %4724 = vmatmul.bf16.gmra.mxu0 %v4708
  %v4725 = vpop.f32.mrf.mxu0
  %v4726 = vadd.f32 0.0, %v4725
  %v4727 = vpop.f32.mrf.mxu0
  %4728 = vdwg.mxu0
  %v4733 = vunpack.c.l.b16 %v2317
  %v4734 = vunpack.c.l.b16 %v2318
  %v4735 = vunpack.c.l.b16 %v2319
  %v4736 = vunpack.c.l.b16 %v2320
  %v4737 = vpack.c.b16 %v4734, %v4733
  %v4738 = vpack.c.b16 %v4736, %v4735
  %v4740 = vsel %vm3151, %v1501, 0
  %v4743 = vsel %vm3151, %v4737, 0
  %v4746 = vsel %vm3151, %v4738, 0
  %4748 = vmatpush.bf16.xpose.msra.mxu0 0
  %4749 = vmatpush.bf16.xpose.msra.mxu0 0
  %4750 = vmatpush.bf16.xpose.msra.mxu0 0
  %4751 = vmatpush.bf16.xpose.msra.mxu0 0
  %4752 = vmatpush.bf16.xpose.msra.mxu0 0
  %4753 = vmatpush.bf16.xpose.msra.mxu0 0
  %4754 = vmatpush.bf16.xpose.msra.mxu0 %v4746
  %4755 = vmatpush.bf16.xpose.msra.mxu0 %v4743
  %4756 = vmatmul.bf16.gmra.mxu0 %v4740
  %v4757 = vpop.f32.mrf.mxu0
  %v4758 = vadd.f32 0.0, %v4757
  %v4759 = vpop.f32.mrf.mxu0
  %4760 = vdwg.mxu0
  %v4765 = vunpack.c.l.b16 %v2321
  %v4766 = vunpack.c.l.b16 %v2322
  %v4767 = vunpack.c.l.b16 %v2323
  %v4768 = vunpack.c.l.b16 %v2324
  %v4769 = vpack.c.b16 %v4766, %v4765
  %v4770 = vpack.c.b16 %v4768, %v4767
  %v4772 = vsel %vm3151, %v1504, 0
  %v4775 = vsel %vm3151, %v4769, 0
  %v4778 = vsel %vm3151, %v4770, 0
  %4780 = vmatpush.bf16.xpose.msra.mxu0 0
  %4781 = vmatpush.bf16.xpose.msra.mxu0 0
  %4782 = vmatpush.bf16.xpose.msra.mxu0 0
  %4783 = vmatpush.bf16.xpose.msra.mxu0 0
  %4784 = vmatpush.bf16.xpose.msra.mxu0 0
  %4785 = vmatpush.bf16.xpose.msra.mxu0 0
  %4786 = vmatpush.bf16.xpose.msra.mxu0 %v4778
  %4787 = vmatpush.bf16.xpose.msra.mxu0 %v4775
  %4788 = vmatmul.bf16.gmra.mxu0 %v4772
  %v4789 = vpop.f32.mrf.mxu0
  %v4790 = vadd.f32 0.0, %v4789
  %v4791 = vpop.f32.mrf.mxu0
  %4792 = vdwg.mxu0
  %v4797 = vunpack.c.l.b16 %v2325
  %v4798 = vunpack.c.l.b16 %v2326
  %v4799 = vunpack.c.l.b16 %v2327
  %v4800 = vunpack.c.l.b16 %v2328
  %v4801 = vpack.c.b16 %v4798, %v4797
  %v4802 = vpack.c.b16 %v4800, %v4799
  %v4803 = vsel %vm3151, %v1507, 0
  %v4806 = vsel %vm3151, %v4801, 0
  %v4809 = vsel %vm3151, %v4802, 0
  %4811 = vmatpush.bf16.xpose.msra.mxu0 0
  %4812 = vmatpush.bf16.xpose.msra.mxu0 0
  %4813 = vmatpush.bf16.xpose.msra.mxu0 0
  %4814 = vmatpush.bf16.xpose.msra.mxu0 0
  %4815 = vmatpush.bf16.xpose.msra.mxu0 0
  %4816 = vmatpush.bf16.xpose.msra.mxu0 0
  %4817 = vmatpush.bf16.xpose.msra.mxu0 %v4809
  %4818 = vmatpush.bf16.xpose.msra.mxu0 %v4806
  %4819 = vmatmul.bf16.gmra.mxu0 %v4803
  %v4820 = vpop.f32.mrf.mxu0
  %v4821 = vadd.f32 0.0, %v4820
  %v4822 = vpop.f32.mrf.mxu0
  %4823 = vdwg.mxu0
  %v4828 = vunpack.c.l.b16 %v2329
  %v4829 = vunpack.c.l.b16 %v2330
  %v4830 = vunpack.c.l.b16 %v2331
  %v4831 = vunpack.c.l.b16 %v2332
  %v4832 = vpack.c.b16 %v4829, %v4828
  %v4833 = vpack.c.b16 %v4831, %v4830
  %v4835 = vsel %vm3151, %v1510, 0
  %v4838 = vsel %vm3151, %v4832, 0
  %v4841 = vsel %vm3151, %v4833, 0
  %4843 = vmatpush.bf16.xpose.msra.mxu0 0
  %4844 = vmatpush.bf16.xpose.msra.mxu0 0
  %4845 = vmatpush.bf16.xpose.msra.mxu0 0
  %4846 = vmatpush.bf16.xpose.msra.mxu0 0
  %4847 = vmatpush.bf16.xpose.msra.mxu0 0
  %4848 = vmatpush.bf16.xpose.msra.mxu0 0
  %4849 = vmatpush.bf16.xpose.msra.mxu0 %v4841
  %4850 = vmatpush.bf16.xpose.msra.mxu0 %v4838
  %4851 = vmatmul.bf16.gmra.mxu0 %v4835
  %v4852 = vpop.f32.mrf.mxu0
  %v4853 = vadd.f32 0.0, %v4852
  %v4854 = vpop.f32.mrf.mxu0
  %4855 = vdwg.mxu0
  %v4860 = vunpack.c.l.b16 %v2333
  %v4861 = vunpack.c.l.b16 %v2334
  %v4862 = vunpack.c.l.b16 %v2335
  %v4863 = vunpack.c.l.b16 %v2336
  %v4864 = vpack.c.b16 %v4861, %v4860
  %v4865 = vpack.c.b16 %v4863, %v4862
  %v4867 = vsel %vm3151, %v1513, 0
  %v4870 = vsel %vm3151, %v4864, 0
  %v4873 = vsel %vm3151, %v4865, 0
  %4875 = vmatpush.bf16.xpose.msra.mxu0 0
  %4876 = vmatpush.bf16.xpose.msra.mxu0 0
  %4877 = vmatpush.bf16.xpose.msra.mxu0 0
  %4878 = vmatpush.bf16.xpose.msra.mxu0 0
  %4879 = vmatpush.bf16.xpose.msra.mxu0 0
  %4880 = vmatpush.bf16.xpose.msra.mxu0 0
  %4881 = vmatpush.bf16.xpose.msra.mxu0 %v4873
  %4882 = vmatpush.bf16.xpose.msra.mxu0 %v4870
  %4883 = vmatmul.bf16.gmra.mxu0 %v4867
  %v4884 = vpop.f32.mrf.mxu0
  %v4885 = vadd.f32 0.0, %v4884
  %v4886 = vpop.f32.mrf.mxu0
  %4887 = vdwg.mxu0
  %v4892 = vunpack.c.l.b16 %v2337
  %v4893 = vunpack.c.l.b16 %v2338
  %v4894 = vunpack.c.l.b16 %v2339
  %v4895 = vunpack.c.l.b16 %v2340
  %v4896 = vpack.c.b16 %v4893, %v4892
  %v4897 = vpack.c.b16 %v4895, %v4894
  %v4899 = vsel %vm3151, %v1516, 0
  %v4902 = vsel %vm3151, %v4896, 0
  %v4905 = vsel %vm3151, %v4897, 0
  %4907 = vmatpush.bf16.xpose.msra.mxu0 0
  %4908 = vmatpush.bf16.xpose.msra.mxu0 0
  %4909 = vmatpush.bf16.xpose.msra.mxu0 0
  %4910 = vmatpush.bf16.xpose.msra.mxu0 0
  %4911 = vmatpush.bf16.xpose.msra.mxu0 0
  %4912 = vmatpush.bf16.xpose.msra.mxu0 0
  %4913 = vmatpush.bf16.xpose.msra.mxu0 %v4905
  %4914 = vmatpush.bf16.xpose.msra.mxu0 %v4902
  %4915 = vmatmul.bf16.gmra.mxu0 %v4899
  %v4916 = vpop.f32.mrf.mxu0
  %v4917 = vadd.f32 0.0, %v4916
  %v4918 = vpop.f32.mrf.mxu0
  %4919 = vdwg.mxu0
  %v4924 = vunpack.c.l.b16 %v2341
  %v4925 = vunpack.c.l.b16 %v2342
  %v4926 = vunpack.c.l.b16 %v2343
  %v4927 = vunpack.c.l.b16 %v2344
  %v4928 = vpack.c.b16 %v4925, %v4924
  %v4929 = vpack.c.b16 %v4927, %v4926
  %v4930 = vsel %vm3151, %v1519, 0
  %v4933 = vsel %vm3151, %v4928, 0
  %v4936 = vsel %vm3151, %v4929, 0
  %4938 = vmatpush.bf16.xpose.msra.mxu0 0
  %4939 = vmatpush.bf16.xpose.msra.mxu0 0
  %4940 = vmatpush.bf16.xpose.msra.mxu0 0
  %4941 = vmatpush.bf16.xpose.msra.mxu0 0
  %4942 = vmatpush.bf16.xpose.msra.mxu0 0
  %4943 = vmatpush.bf16.xpose.msra.mxu0 0
  %4944 = vmatpush.bf16.xpose.msra.mxu0 %v4936
  %4945 = vmatpush.bf16.xpose.msra.mxu0 %v4933
  %4946 = vmatmul.bf16.gmra.mxu0 %v4930
  %v4947 = vpop.f32.mrf.mxu0
  %v4948 = vadd.f32 0.0, %v4947
  %v4949 = vpop.f32.mrf.mxu0
  %4950 = vdwg.mxu0
  %v4955 = vunpack.c.l.b16 %v2345
  %v4956 = vunpack.c.l.b16 %v2346
  %v4957 = vunpack.c.l.b16 %v2347
  %v4958 = vunpack.c.l.b16 %v2348
  %v4959 = vpack.c.b16 %v4956, %v4955
  %v4960 = vpack.c.b16 %v4958, %v4957
  %v4962 = vsel %vm3151, %v1522, 0
  %v4965 = vsel %vm3151, %v4959, 0
  %v4968 = vsel %vm3151, %v4960, 0
  %4970 = vmatpush.bf16.xpose.msra.mxu0 0
  %4971 = vmatpush.bf16.xpose.msra.mxu0 0
  %4972 = vmatpush.bf16.xpose.msra.mxu0 0
  %4973 = vmatpush.bf16.xpose.msra.mxu0 0
  %4974 = vmatpush.bf16.xpose.msra.mxu0 0
  %4975 = vmatpush.bf16.xpose.msra.mxu0 0
  %4976 = vmatpush.bf16.xpose.msra.mxu0 %v4968
  %4977 = vmatpush.bf16.xpose.msra.mxu0 %v4965
  %4978 = vmatmul.bf16.gmra.mxu0 %v4962
  %v4979 = vpop.f32.mrf.mxu0
  %v4980 = vadd.f32 0.0, %v4979
  %v4981 = vpop.f32.mrf.mxu0
  %4982 = vdwg.mxu0
  %v4987 = vunpack.c.l.b16 %v2349
  %v4988 = vunpack.c.l.b16 %v2350
  %v4989 = vunpack.c.l.b16 %v2351
  %v4990 = vunpack.c.l.b16 %v2352
  %v4991 = vpack.c.b16 %v4988, %v4987
  %v4992 = vpack.c.b16 %v4990, %v4989
  %v4994 = vsel %vm3151, %v1525, 0
  %v4997 = vsel %vm3151, %v4991, 0
  %v5000 = vsel %vm3151, %v4992, 0
  %5002 = vmatpush.bf16.xpose.msra.mxu0 0
  %5003 = vmatpush.bf16.xpose.msra.mxu0 0
  %5004 = vmatpush.bf16.xpose.msra.mxu0 0
  %5005 = vmatpush.bf16.xpose.msra.mxu0 0
  %5006 = vmatpush.bf16.xpose.msra.mxu0 0
  %5007 = vmatpush.bf16.xpose.msra.mxu0 0
  %5008 = vmatpush.bf16.xpose.msra.mxu0 %v5000
  %5009 = vmatpush.bf16.xpose.msra.mxu0 %v4997
  %5010 = vmatmul.bf16.gmra.mxu0 %v4994
  %v5011 = vpop.f32.mrf.mxu0
  %v5012 = vadd.f32 0.0, %v5011
  %v5013 = vpop.f32.mrf.mxu0
  %5014 = vdwg.mxu0
  %v5019 = vunpack.c.l.b16 %v2353
  %v5020 = vunpack.c.l.b16 %v2354
  %v5021 = vunpack.c.l.b16 %v2355
  %v5022 = vunpack.c.l.b16 %v2356
  %v5023 = vpack.c.b16 %v5020, %v5019
  %v5024 = vpack.c.b16 %v5022, %v5021
  %v5026 = vsel %vm3151, %v1528, 0
  %v5029 = vsel %vm3151, %v5023, 0
  %v5032 = vsel %vm3151, %v5024, 0
  %5034 = vmatpush.bf16.xpose.msra.mxu0 0
  %5035 = vmatpush.bf16.xpose.msra.mxu0 0
  %5036 = vmatpush.bf16.xpose.msra.mxu0 0
  %5037 = vmatpush.bf16.xpose.msra.mxu0 0
  %5038 = vmatpush.bf16.xpose.msra.mxu0 0
  %5039 = vmatpush.bf16.xpose.msra.mxu0 0
  %5040 = vmatpush.bf16.xpose.msra.mxu0 %v5032
  %5041 = vmatpush.bf16.xpose.msra.mxu0 %v5029
  %5042 = vmatmul.bf16.gmra.mxu0 %v5026
  %v5043 = vpop.f32.mrf.mxu0
  %v5044 = vadd.f32 0.0, %v5043
  %v5045 = vpop.f32.mrf.mxu0
  %5046 = vdwg.mxu0
  %v5051 = vunpack.c.l.b16 %v2357
  %v5052 = vunpack.c.l.b16 %v2358
  %v5053 = vunpack.c.l.b16 %v2359
  %v5054 = vunpack.c.l.b16 %v2360
  %v5055 = vpack.c.b16 %v5052, %v5051
  %v5056 = vpack.c.b16 %v5054, %v5053
  %v5057 = vsel %vm3151, %v1531, 0
  %v5060 = vsel %vm3151, %v5055, 0
  %v5063 = vsel %vm3151, %v5056, 0
  %5065 = vmatpush.bf16.xpose.msra.mxu0 0
  %5066 = vmatpush.bf16.xpose.msra.mxu0 0
  %5067 = vmatpush.bf16.xpose.msra.mxu0 0
  %5068 = vmatpush.bf16.xpose.msra.mxu0 0
  %5069 = vmatpush.bf16.xpose.msra.mxu0 0
  %5070 = vmatpush.bf16.xpose.msra.mxu0 0
  %5071 = vmatpush.bf16.xpose.msra.mxu0 %v5063
  %5072 = vmatpush.bf16.xpose.msra.mxu0 %v5060
  %5073 = vmatmul.bf16.gmra.mxu0 %v5057
  %v5074 = vpop.f32.mrf.mxu0
  %v5075 = vadd.f32 0.0, %v5074
  %v5076 = vpop.f32.mrf.mxu0
  %5077 = vdwg.mxu0
  %v5082 = vunpack.c.l.b16 %v2361
  %v5083 = vunpack.c.l.b16 %v2362
  %v5084 = vunpack.c.l.b16 %v2363
  %v5085 = vunpack.c.l.b16 %v2364
  %v5086 = vpack.c.b16 %v5083, %v5082
  %v5087 = vpack.c.b16 %v5085, %v5084
  %v5089 = vsel %vm3151, %v1534, 0
  %v5092 = vsel %vm3151, %v5086, 0
  %v5095 = vsel %vm3151, %v5087, 0
  %5097 = vmatpush.bf16.xpose.msra.mxu0 0
  %5098 = vmatpush.bf16.xpose.msra.mxu0 0
  %5099 = vmatpush.bf16.xpose.msra.mxu0 0
  %5100 = vmatpush.bf16.xpose.msra.mxu0 0
  %5101 = vmatpush.bf16.xpose.msra.mxu0 0
  %5102 = vmatpush.bf16.xpose.msra.mxu0 0
  %5103 = vmatpush.bf16.xpose.msra.mxu0 %v5095
  %5104 = vmatpush.bf16.xpose.msra.mxu0 %v5092
  %5105 = vmatmul.bf16.gmra.mxu0 %v5089
  %v5106 = vpop.f32.mrf.mxu0
  %v5107 = vadd.f32 0.0, %v5106
  %v5108 = vpop.f32.mrf.mxu0
  %5109 = vdwg.mxu0
  %v5114 = vunpack.c.l.b16 %v2365
  %v5115 = vunpack.c.l.b16 %v2366
  %v5116 = vunpack.c.l.b16 %v2367
  %v5117 = vunpack.c.l.b16 %v2368
  %v5118 = vpack.c.b16 %v5115, %v5114
  %v5119 = vpack.c.b16 %v5117, %v5116
  %v5121 = vsel %vm3151, %v1537, 0
  %v5124 = vsel %vm3151, %v5118, 0
  %v5127 = vsel %vm3151, %v5119, 0
  %5129 = vmatpush.bf16.xpose.msra.mxu0 0
  %5130 = vmatpush.bf16.xpose.msra.mxu0 0
  %5131 = vmatpush.bf16.xpose.msra.mxu0 0
  %5132 = vmatpush.bf16.xpose.msra.mxu0 0
  %5133 = vmatpush.bf16.xpose.msra.mxu0 0
  %5134 = vmatpush.bf16.xpose.msra.mxu0 0
  %5135 = vmatpush.bf16.xpose.msra.mxu0 %v5127
  %5136 = vmatpush.bf16.xpose.msra.mxu0 %v5124
  %5137 = vmatmul.bf16.gmra.mxu0 %v5121
  %v5138 = vpop.f32.mrf.mxu0
  %v5139 = vadd.f32 0.0, %v5138
  %v5140 = vpop.f32.mrf.mxu0
  %5141 = vdwg.mxu0
  %v5146 = vunpack.c.l.b16 %v2369
  %v5147 = vunpack.c.l.b16 %v2370
  %v5148 = vunpack.c.l.b16 %v2371
  %v5149 = vunpack.c.l.b16 %v2372
  %v5150 = vpack.c.b16 %v5147, %v5146
  %v5151 = vpack.c.b16 %v5149, %v5148
  %v5153 = vsel %vm3151, %v1540, 0
  %v5156 = vsel %vm3151, %v5150, 0
  %v5159 = vsel %vm3151, %v5151, 0
  %5161 = vmatpush.bf16.xpose.msra.mxu0 0
  %5162 = vmatpush.bf16.xpose.msra.mxu0 0
  %5163 = vmatpush.bf16.xpose.msra.mxu0 0
  %5164 = vmatpush.bf16.xpose.msra.mxu0 0
  %5165 = vmatpush.bf16.xpose.msra.mxu0 0
  %5166 = vmatpush.bf16.xpose.msra.mxu0 0
  %5167 = vmatpush.bf16.xpose.msra.mxu0 %v5159
  %5168 = vmatpush.bf16.xpose.msra.mxu0 %v5156
  %5169 = vmatmul.bf16.gmra.mxu0 %v5153
  %v5170 = vpop.f32.mrf.mxu0
  %v5171 = vadd.f32 0.0, %v5170
  %v5172 = vpop.f32.mrf.mxu0
  %5173 = vdwg.mxu0
  %v5178 = vunpack.c.l.b16 %v2373
  %v5179 = vunpack.c.l.b16 %v2374
  %v5180 = vunpack.c.l.b16 %v2375
  %v5181 = vunpack.c.l.b16 %v2376
  %v5182 = vpack.c.b16 %v5179, %v5178
  %v5183 = vpack.c.b16 %v5181, %v5180
  %v5184 = vsel %vm3151, %v1543, 0
  %v5187 = vsel %vm3151, %v5182, 0
  %v5190 = vsel %vm3151, %v5183, 0
  %5192 = vmatpush.bf16.xpose.msra.mxu0 0
  %5193 = vmatpush.bf16.xpose.msra.mxu0 0
  %5194 = vmatpush.bf16.xpose.msra.mxu0 0
  %5195 = vmatpush.bf16.xpose.msra.mxu0 0
  %5196 = vmatpush.bf16.xpose.msra.mxu0 0
  %5197 = vmatpush.bf16.xpose.msra.mxu0 0
  %5198 = vmatpush.bf16.xpose.msra.mxu0 %v5190
  %5199 = vmatpush.bf16.xpose.msra.mxu0 %v5187
  %5200 = vmatmul.bf16.gmra.mxu0 %v5184
  %v5201 = vpop.f32.mrf.mxu0
  %v5202 = vadd.f32 0.0, %v5201
  %v5203 = vpop.f32.mrf.mxu0
  %5204 = vdwg.mxu0
  %v5209 = vunpack.c.l.b16 %v2377
  %v5210 = vunpack.c.l.b16 %v2378
  %v5211 = vunpack.c.l.b16 %v2379
  %v5212 = vunpack.c.l.b16 %v2380
  %v5213 = vpack.c.b16 %v5210, %v5209
  %v5214 = vpack.c.b16 %v5212, %v5211
  %v5216 = vsel %vm3151, %v1546, 0
  %v5219 = vsel %vm3151, %v5213, 0
  %v5222 = vsel %vm3151, %v5214, 0
  %5224 = vmatpush.bf16.xpose.msra.mxu0 0
  %5225 = vmatpush.bf16.xpose.msra.mxu0 0
  %5226 = vmatpush.bf16.xpose.msra.mxu0 0
  %5227 = vmatpush.bf16.xpose.msra.mxu0 0
  %5228 = vmatpush.bf16.xpose.msra.mxu0 0
  %5229 = vmatpush.bf16.xpose.msra.mxu0 0
  %5230 = vmatpush.bf16.xpose.msra.mxu0 %v5222
  %5231 = vmatpush.bf16.xpose.msra.mxu0 %v5219
  %5232 = vmatmul.bf16.gmra.mxu0 %v5216
  %v5233 = vpop.f32.mrf.mxu0
  %v5234 = vadd.f32 0.0, %v5233
  %v5235 = vpop.f32.mrf.mxu0
  %5236 = vdwg.mxu0
  %v5241 = vunpack.c.l.b16 %v2381
  %v5242 = vunpack.c.l.b16 %v2382
  %v5243 = vunpack.c.l.b16 %v2383
  %v5244 = vunpack.c.l.b16 %v2384
  %v5245 = vpack.c.b16 %v5242, %v5241
  %v5246 = vpack.c.b16 %v5244, %v5243
  %v5248 = vsel %vm3151, %v1549, 0
  %v5251 = vsel %vm3151, %v5245, 0
  %v5254 = vsel %vm3151, %v5246, 0
  %5256 = vmatpush.bf16.xpose.msra.mxu0 0
  %5257 = vmatpush.bf16.xpose.msra.mxu0 0
  %5258 = vmatpush.bf16.xpose.msra.mxu0 0
  %5259 = vmatpush.bf16.xpose.msra.mxu0 0
  %5260 = vmatpush.bf16.xpose.msra.mxu0 0
  %5261 = vmatpush.bf16.xpose.msra.mxu0 0
  %5262 = vmatpush.bf16.xpose.msra.mxu0 %v5254
  %5263 = vmatpush.bf16.xpose.msra.mxu0 %v5251
  %5264 = vmatmul.bf16.gmra.mxu0 %v5248
  %v5265 = vpop.f32.mrf.mxu0
  %v5266 = vadd.f32 0.0, %v5265
  %v5267 = vpop.f32.mrf.mxu0
  %5268 = vdwg.mxu0
  %v5273 = vunpack.c.l.b16 %v2385
  %v5274 = vunpack.c.l.b16 %v2386
  %v5275 = vunpack.c.l.b16 %v2387
  %v5276 = vunpack.c.l.b16 %v2388
  %v5277 = vpack.c.b16 %v5274, %v5273
  %v5278 = vpack.c.b16 %v5276, %v5275
  %v5280 = vsel %vm3151, %v1552, 0
  %v5283 = vsel %vm3151, %v5277, 0
  %v5286 = vsel %vm3151, %v5278, 0
  %5288 = vmatpush.bf16.xpose.msra.mxu0 0
  %5289 = vmatpush.bf16.xpose.msra.mxu0 0
  %5290 = vmatpush.bf16.xpose.msra.mxu0 0
  %5291 = vmatpush.bf16.xpose.msra.mxu0 0
  %5292 = vmatpush.bf16.xpose.msra.mxu0 0
  %5293 = vmatpush.bf16.xpose.msra.mxu0 0
  %5294 = vmatpush.bf16.xpose.msra.mxu0 %v5286
  %5295 = vmatpush.bf16.xpose.msra.mxu0 %v5283
  %5296 = vmatmul.bf16.gmra.mxu0 %v5280
  %v5297 = vpop.f32.mrf.mxu0
  %v5298 = vadd.f32 0.0, %v5297
  %v5299 = vpop.f32.mrf.mxu0
  %5300 = vdwg.mxu0
  %v5305 = vunpack.c.l.b16 %v2389
  %v5306 = vunpack.c.l.b16 %v2390
  %v5307 = vunpack.c.l.b16 %v2391
  %v5308 = vunpack.c.l.b16 %v2392
  %v5309 = vpack.c.b16 %v5306, %v5305
  %v5310 = vpack.c.b16 %v5308, %v5307
  %v5311 = vsel %vm3151, %v1555, 0
  %v5314 = vsel %vm3151, %v5309, 0
  %v5317 = vsel %vm3151, %v5310, 0
  %5319 = vmatpush.bf16.xpose.msra.mxu0 0
  %5320 = vmatpush.bf16.xpose.msra.mxu0 0
  %5321 = vmatpush.bf16.xpose.msra.mxu0 0
  %5322 = vmatpush.bf16.xpose.msra.mxu0 0
  %5323 = vmatpush.bf16.xpose.msra.mxu0 0
  %5324 = vmatpush.bf16.xpose.msra.mxu0 0
  %5325 = vmatpush.bf16.xpose.msra.mxu0 %v5317
  %5326 = vmatpush.bf16.xpose.msra.mxu0 %v5314
  %5327 = vmatmul.bf16.gmra.mxu0 %v5311
  %v5328 = vpop.f32.mrf.mxu0
  %v5329 = vadd.f32 0.0, %v5328
  %v5330 = vpop.f32.mrf.mxu0
  %5331 = vdwg.mxu0
  %v5336 = vunpack.c.l.b16 %v2393
  %v5337 = vunpack.c.l.b16 %v2394
  %v5338 = vunpack.c.l.b16 %v2395
  %v5339 = vunpack.c.l.b16 %v2396
  %v5340 = vpack.c.b16 %v5337, %v5336
  %v5341 = vpack.c.b16 %v5339, %v5338
  %v5343 = vsel %vm3151, %v1558, 0
  %v5346 = vsel %vm3151, %v5340, 0
  %v5349 = vsel %vm3151, %v5341, 0
  %5351 = vmatpush.bf16.xpose.msra.mxu0 0
  %5352 = vmatpush.bf16.xpose.msra.mxu0 0
  %5353 = vmatpush.bf16.xpose.msra.mxu0 0
  %5354 = vmatpush.bf16.xpose.msra.mxu0 0
  %5355 = vmatpush.bf16.xpose.msra.mxu0 0
  %5356 = vmatpush.bf16.xpose.msra.mxu0 0
  %5357 = vmatpush.bf16.xpose.msra.mxu0 %v5349
  %5358 = vmatpush.bf16.xpose.msra.mxu0 %v5346
  %5359 = vmatmul.bf16.gmra.mxu0 %v5343
  %v5360 = vpop.f32.mrf.mxu0
  %v5361 = vadd.f32 0.0, %v5360
  %v5362 = vpop.f32.mrf.mxu0
  %5363 = vdwg.mxu0
  %v5368 = vunpack.c.l.b16 %v2397
  %v5369 = vunpack.c.l.b16 %v2398
  %v5370 = vunpack.c.l.b16 %v2399
  %v5371 = vunpack.c.l.b16 %v2400
  %v5372 = vpack.c.b16 %v5369, %v5368
  %v5373 = vpack.c.b16 %v5371, %v5370
  %v5375 = vsel %vm3151, %v1561, 0
  %v5378 = vsel %vm3151, %v5372, 0
  %v5381 = vsel %vm3151, %v5373, 0
  %5383 = vmatpush.bf16.xpose.msra.mxu0 0
  %5384 = vmatpush.bf16.xpose.msra.mxu0 0
  %5385 = vmatpush.bf16.xpose.msra.mxu0 0
  %5386 = vmatpush.bf16.xpose.msra.mxu0 0
  %5387 = vmatpush.bf16.xpose.msra.mxu0 0
  %5388 = vmatpush.bf16.xpose.msra.mxu0 0
  %5389 = vmatpush.bf16.xpose.msra.mxu0 %v5381
  %5390 = vmatpush.bf16.xpose.msra.mxu0 %v5378
  %5391 = vmatmul.bf16.gmra.mxu0 %v5375
  %v5392 = vpop.f32.mrf.mxu0
  %v5393 = vadd.f32 0.0, %v5392
  %v5394 = vpop.f32.mrf.mxu0
  %5395 = vdwg.mxu0
  %v5400 = vunpack.c.l.b16 %v2401
  %v5401 = vunpack.c.l.b16 %v2402
  %v5402 = vunpack.c.l.b16 %v2403
  %v5403 = vunpack.c.l.b16 %v2404
  %v5404 = vpack.c.b16 %v5401, %v5400
  %v5405 = vpack.c.b16 %v5403, %v5402
  %v5407 = vsel %vm3151, %v1564, 0
  %v5410 = vsel %vm3151, %v5404, 0
  %v5413 = vsel %vm3151, %v5405, 0
  %5415 = vmatpush.bf16.xpose.msra.mxu0 0
  %5416 = vmatpush.bf16.xpose.msra.mxu0 0
  %5417 = vmatpush.bf16.xpose.msra.mxu0 0
  %5418 = vmatpush.bf16.xpose.msra.mxu0 0
  %5419 = vmatpush.bf16.xpose.msra.mxu0 0
  %5420 = vmatpush.bf16.xpose.msra.mxu0 0
  %5421 = vmatpush.bf16.xpose.msra.mxu0 %v5413
  %5422 = vmatpush.bf16.xpose.msra.mxu0 %v5410
  %5423 = vmatmul.bf16.gmra.mxu0 %v5407
  %v5424 = vpop.f32.mrf.mxu0
  %v5425 = vadd.f32 0.0, %v5424
  %v5426 = vpop.f32.mrf.mxu0
  %5427 = vdwg.mxu0
  %v5432 = vunpack.c.l.b16 %v2405
  %v5433 = vunpack.c.l.b16 %v2406
  %v5434 = vunpack.c.l.b16 %v2407
  %v5435 = vunpack.c.l.b16 %v2408
  %v5436 = vpack.c.b16 %v5433, %v5432
  %v5437 = vpack.c.b16 %v5435, %v5434
  %v5438 = vsel %vm3151, %v1567, 0
  %v5441 = vsel %vm3151, %v5436, 0
  %v5444 = vsel %vm3151, %v5437, 0
  %5446 = vmatpush.bf16.xpose.msra.mxu0 0
  %5447 = vmatpush.bf16.xpose.msra.mxu0 0
  %5448 = vmatpush.bf16.xpose.msra.mxu0 0
  %5449 = vmatpush.bf16.xpose.msra.mxu0 0
  %5450 = vmatpush.bf16.xpose.msra.mxu0 0
  %5451 = vmatpush.bf16.xpose.msra.mxu0 0
  %5452 = vmatpush.bf16.xpose.msra.mxu0 %v5444
  %5453 = vmatpush.bf16.xpose.msra.mxu0 %v5441
  %5454 = vmatmul.bf16.gmra.mxu0 %v5438
  %v5455 = vpop.f32.mrf.mxu0
  %v5456 = vadd.f32 0.0, %v5455
  %v5457 = vpop.f32.mrf.mxu0
  %5458 = vdwg.mxu0
  %v5463 = vunpack.c.l.b16 %v2409
  %v5464 = vunpack.c.l.b16 %v2410
  %v5465 = vunpack.c.l.b16 %v2411
  %v5466 = vunpack.c.l.b16 %v2412
  %v5467 = vpack.c.b16 %v5464, %v5463
  %v5468 = vpack.c.b16 %v5466, %v5465
  %v5470 = vsel %vm3151, %v1570, 0
  %v5473 = vsel %vm3151, %v5467, 0
  %v5476 = vsel %vm3151, %v5468, 0
  %5478 = vmatpush.bf16.xpose.msra.mxu0 0
  %5479 = vmatpush.bf16.xpose.msra.mxu0 0
  %5480 = vmatpush.bf16.xpose.msra.mxu0 0
  %5481 = vmatpush.bf16.xpose.msra.mxu0 0
  %5482 = vmatpush.bf16.xpose.msra.mxu0 0
  %5483 = vmatpush.bf16.xpose.msra.mxu0 0
  %5484 = vmatpush.bf16.xpose.msra.mxu0 %v5476
  %5485 = vmatpush.bf16.xpose.msra.mxu0 %v5473
  %5486 = vmatmul.bf16.gmra.mxu0 %v5470
  %v5487 = vpop.f32.mrf.mxu0
  %v5488 = vadd.f32 0.0, %v5487
  %v5489 = vpop.f32.mrf.mxu0
  %5490 = vdwg.mxu0
  %v5495 = vunpack.c.l.b16 %v2413
  %v5496 = vunpack.c.l.b16 %v2414
  %v5497 = vunpack.c.l.b16 %v2415
  %v5498 = vunpack.c.l.b16 %v2416
  %v5499 = vpack.c.b16 %v5496, %v5495
  %v5500 = vpack.c.b16 %v5498, %v5497
  %v5502 = vsel %vm3151, %v1573, 0
  %v5505 = vsel %vm3151, %v5499, 0
  %v5508 = vsel %vm3151, %v5500, 0
  %5510 = vmatpush.bf16.xpose.msra.mxu0 0
  %5511 = vmatpush.bf16.xpose.msra.mxu0 0
  %5512 = vmatpush.bf16.xpose.msra.mxu0 0
  %5513 = vmatpush.bf16.xpose.msra.mxu0 0
  %5514 = vmatpush.bf16.xpose.msra.mxu0 0
  %5515 = vmatpush.bf16.xpose.msra.mxu0 0
  %5516 = vmatpush.bf16.xpose.msra.mxu0 %v5508
  %5517 = vmatpush.bf16.xpose.msra.mxu0 %v5505
  %5518 = vmatmul.bf16.gmra.mxu0 %v5502
  %v5519 = vpop.f32.mrf.mxu0
  %v5520 = vadd.f32 0.0, %v5519
  %v5521 = vpop.f32.mrf.mxu0
  %5522 = vdwg.mxu0
  %v5527 = vunpack.c.l.b16 %v2417
  %v5528 = vunpack.c.l.b16 %v2418
  %v5529 = vunpack.c.l.b16 %v2419
  %v5530 = vunpack.c.l.b16 %v2420
  %v5531 = vpack.c.b16 %v5528, %v5527
  %v5532 = vpack.c.b16 %v5530, %v5529
  %v5534 = vsel %vm3151, %v1576, 0
  %v5537 = vsel %vm3151, %v5531, 0
  %v5540 = vsel %vm3151, %v5532, 0
  %5542 = vmatpush.bf16.xpose.msra.mxu0 0
  %5543 = vmatpush.bf16.xpose.msra.mxu0 0
  %5544 = vmatpush.bf16.xpose.msra.mxu0 0
  %5545 = vmatpush.bf16.xpose.msra.mxu0 0
  %5546 = vmatpush.bf16.xpose.msra.mxu0 0
  %5547 = vmatpush.bf16.xpose.msra.mxu0 0
  %5548 = vmatpush.bf16.xpose.msra.mxu0 %v5540
  %5549 = vmatpush.bf16.xpose.msra.mxu0 %v5537
  %5550 = vmatmul.bf16.gmra.mxu0 %v5534
  %v5551 = vpop.f32.mrf.mxu0
  %v5552 = vadd.f32 0.0, %v5551
  %v5553 = vpop.f32.mrf.mxu0
  %5554 = vdwg.mxu0
  %v5559 = vunpack.c.l.b16 %v2421
  %v5560 = vunpack.c.l.b16 %v2422
  %v5561 = vunpack.c.l.b16 %v2423
  %v5562 = vunpack.c.l.b16 %v2424
  %v5563 = vpack.c.b16 %v5560, %v5559
  %v5564 = vpack.c.b16 %v5562, %v5561
  %v5565 = vsel %vm3151, %v1579, 0
  %v5568 = vsel %vm3151, %v5563, 0
  %v5571 = vsel %vm3151, %v5564, 0
  %5573 = vmatpush.bf16.xpose.msra.mxu0 0
  %5574 = vmatpush.bf16.xpose.msra.mxu0 0
  %5575 = vmatpush.bf16.xpose.msra.mxu0 0
  %5576 = vmatpush.bf16.xpose.msra.mxu0 0
  %5577 = vmatpush.bf16.xpose.msra.mxu0 0
  %5578 = vmatpush.bf16.xpose.msra.mxu0 0
  %5579 = vmatpush.bf16.xpose.msra.mxu0 %v5571
  %5580 = vmatpush.bf16.xpose.msra.mxu0 %v5568
  %5581 = vmatmul.bf16.gmra.mxu0 %v5565
  %v5582 = vpop.f32.mrf.mxu0
  %v5583 = vadd.f32 0.0, %v5582
  %v5584 = vpop.f32.mrf.mxu0
  %5585 = vdwg.mxu0
  %v5590 = vunpack.c.l.b16 %v2425
  %v5591 = vunpack.c.l.b16 %v2426
  %v5592 = vunpack.c.l.b16 %v2427
  %v5593 = vunpack.c.l.b16 %v2428
  %v5594 = vpack.c.b16 %v5591, %v5590
  %v5595 = vpack.c.b16 %v5593, %v5592
  %v5597 = vsel %vm3151, %v1582, 0
  %v5600 = vsel %vm3151, %v5594, 0
  %v5603 = vsel %vm3151, %v5595, 0
  %5605 = vmatpush.bf16.xpose.msra.mxu0 0
  %5606 = vmatpush.bf16.xpose.msra.mxu0 0
  %5607 = vmatpush.bf16.xpose.msra.mxu0 0
  %5608 = vmatpush.bf16.xpose.msra.mxu0 0
  %5609 = vmatpush.bf16.xpose.msra.mxu0 0
  %5610 = vmatpush.bf16.xpose.msra.mxu0 0
  %5611 = vmatpush.bf16.xpose.msra.mxu0 %v5603
  %5612 = vmatpush.bf16.xpose.msra.mxu0 %v5600
  %5613 = vmatmul.bf16.gmra.mxu0 %v5597
  %v5614 = vpop.f32.mrf.mxu0
  %v5615 = vadd.f32 0.0, %v5614
  %v5616 = vpop.f32.mrf.mxu0
  %5617 = vdwg.mxu0
  %v5622 = vunpack.c.l.b16 %v2429
  %v5623 = vunpack.c.l.b16 %v2430
  %v5624 = vunpack.c.l.b16 %v2431
  %v5625 = vunpack.c.l.b16 %v2432
  %v5626 = vpack.c.b16 %v5623, %v5622
  %v5627 = vpack.c.b16 %v5625, %v5624
  %v5629 = vsel %vm3151, %v1585, 0
  %v5632 = vsel %vm3151, %v5626, 0
  %v5635 = vsel %vm3151, %v5627, 0
  %5637 = vmatpush.bf16.xpose.msra.mxu0 0
  %5638 = vmatpush.bf16.xpose.msra.mxu0 0
  %5639 = vmatpush.bf16.xpose.msra.mxu0 0
  %5640 = vmatpush.bf16.xpose.msra.mxu0 0
  %5641 = vmatpush.bf16.xpose.msra.mxu0 0
  %5642 = vmatpush.bf16.xpose.msra.mxu0 0
  %5643 = vmatpush.bf16.xpose.msra.mxu0 %v5635
  %5644 = vmatpush.bf16.xpose.msra.mxu0 %v5632
  %5645 = vmatmul.bf16.gmra.mxu0 %v5629
  %v5646 = vpop.f32.mrf.mxu0
  %v5647 = vadd.f32 0.0, %v5646
  %v5648 = vpop.f32.mrf.mxu0
  %5649 = vdwg.mxu0
  %v5654 = vunpack.c.l.b16 %v2433
  %v5655 = vunpack.c.l.b16 %v2434
  %v5656 = vunpack.c.l.b16 %v2435
  %v5657 = vunpack.c.l.b16 %v2436
  %v5658 = vpack.c.b16 %v5655, %v5654
  %v5659 = vpack.c.b16 %v5657, %v5656
  %v5661 = vsel %vm3151, %v1588, 0
  %v5664 = vsel %vm3151, %v5658, 0
  %v5667 = vsel %vm3151, %v5659, 0
  %5669 = vmatpush.bf16.xpose.msra.mxu0 0
  %5670 = vmatpush.bf16.xpose.msra.mxu0 0
  %5671 = vmatpush.bf16.xpose.msra.mxu0 0
  %5672 = vmatpush.bf16.xpose.msra.mxu0 0
  %5673 = vmatpush.bf16.xpose.msra.mxu0 0
  %5674 = vmatpush.bf16.xpose.msra.mxu0 0
  %5675 = vmatpush.bf16.xpose.msra.mxu0 %v5667
  %5676 = vmatpush.bf16.xpose.msra.mxu0 %v5664
  %5677 = vmatmul.bf16.gmra.mxu0 %v5661
  %v5678 = vpop.f32.mrf.mxu0
  %v5679 = vadd.f32 0.0, %v5678
  %v5680 = vpop.f32.mrf.mxu0
  %5681 = vdwg.mxu0
  %v5686 = vunpack.c.l.b16 %v2437
  %v5687 = vunpack.c.l.b16 %v2438
  %v5688 = vunpack.c.l.b16 %v2439
  %v5689 = vunpack.c.l.b16 %v2440
  %v5690 = vpack.c.b16 %v5687, %v5686
  %v5691 = vpack.c.b16 %v5689, %v5688
  %v5692 = vsel %vm3151, %v1591, 0
  %v5695 = vsel %vm3151, %v5690, 0
  %v5698 = vsel %vm3151, %v5691, 0
  %5700 = vmatpush.bf16.xpose.msra.mxu0 0
  %5701 = vmatpush.bf16.xpose.msra.mxu0 0
  %5702 = vmatpush.bf16.xpose.msra.mxu0 0
  %5703 = vmatpush.bf16.xpose.msra.mxu0 0
  %5704 = vmatpush.bf16.xpose.msra.mxu0 0
  %5705 = vmatpush.bf16.xpose.msra.mxu0 0
  %5706 = vmatpush.bf16.xpose.msra.mxu0 %v5698
  %5707 = vmatpush.bf16.xpose.msra.mxu0 %v5695
  %5708 = vmatmul.bf16.gmra.mxu0 %v5692
  %v5709 = vpop.f32.mrf.mxu0
  %v5710 = vadd.f32 0.0, %v5709
  %v5711 = vpop.f32.mrf.mxu0
  %5712 = vdwg.mxu0
  %v5717 = vunpack.c.l.b16 %v2441
  %v5718 = vunpack.c.l.b16 %v2442
  %v5719 = vunpack.c.l.b16 %v2443
  %v5720 = vunpack.c.l.b16 %v2444
  %v5721 = vpack.c.b16 %v5718, %v5717
  %v5722 = vpack.c.b16 %v5720, %v5719
  %v5724 = vsel %vm3151, %v1594, 0
  %v5727 = vsel %vm3151, %v5721, 0
  %v5730 = vsel %vm3151, %v5722, 0
  %5732 = vmatpush.bf16.xpose.msra.mxu0 0
  %5733 = vmatpush.bf16.xpose.msra.mxu0 0
  %5734 = vmatpush.bf16.xpose.msra.mxu0 0
  %5735 = vmatpush.bf16.xpose.msra.mxu0 0
  %5736 = vmatpush.bf16.xpose.msra.mxu0 0
  %5737 = vmatpush.bf16.xpose.msra.mxu0 0
  %5738 = vmatpush.bf16.xpose.msra.mxu0 %v5730
  %5739 = vmatpush.bf16.xpose.msra.mxu0 %v5727
  %5740 = vmatmul.bf16.gmra.mxu0 %v5724
  %v5741 = vpop.f32.mrf.mxu0
  %v5742 = vadd.f32 0.0, %v5741
  %v5743 = vpop.f32.mrf.mxu0
  %5744 = vdwg.mxu0
  %v5749 = vunpack.c.l.b16 %v2445
  %v5750 = vunpack.c.l.b16 %v2446
  %v5751 = vunpack.c.l.b16 %v2447
  %v5752 = vunpack.c.l.b16 %v2448
  %v5753 = vpack.c.b16 %v5750, %v5749
  %v5754 = vpack.c.b16 %v5752, %v5751
  %v5756 = vsel %vm3151, %v1597, 0
  %v5759 = vsel %vm3151, %v5753, 0
  %v5762 = vsel %vm3151, %v5754, 0
  %5764 = vmatpush.bf16.xpose.msra.mxu0 0
  %5765 = vmatpush.bf16.xpose.msra.mxu0 0
  %5766 = vmatpush.bf16.xpose.msra.mxu0 0
  %5767 = vmatpush.bf16.xpose.msra.mxu0 0
  %5768 = vmatpush.bf16.xpose.msra.mxu0 0
  %5769 = vmatpush.bf16.xpose.msra.mxu0 0
  %5770 = vmatpush.bf16.xpose.msra.mxu0 %v5762
  %5771 = vmatpush.bf16.xpose.msra.mxu0 %v5759
  %5772 = vmatmul.bf16.gmra.mxu0 %v5756
  %v5773 = vpop.f32.mrf.mxu0
  %v5774 = vadd.f32 0.0, %v5773
  %v5775 = vpop.f32.mrf.mxu0
  %5776 = vdwg.mxu0
  %v5781 = vunpack.c.l.b16 %v2449
  %v5782 = vunpack.c.l.b16 %v2450
  %v5783 = vunpack.c.l.b16 %v2451
  %v5784 = vunpack.c.l.b16 %v2452
  %v5785 = vpack.c.b16 %v5782, %v5781
  %v5786 = vpack.c.b16 %v5784, %v5783
  %v5788 = vsel %vm3151, %v1600, 0
  %v5791 = vsel %vm3151, %v5785, 0
  %v5794 = vsel %vm3151, %v5786, 0
  %5796 = vmatpush.bf16.xpose.msra.mxu0 0
  %5797 = vmatpush.bf16.xpose.msra.mxu0 0
  %5798 = vmatpush.bf16.xpose.msra.mxu0 0
  %5799 = vmatpush.bf16.xpose.msra.mxu0 0
  %5800 = vmatpush.bf16.xpose.msra.mxu0 0
  %5801 = vmatpush.bf16.xpose.msra.mxu0 0
  %5802 = vmatpush.bf16.xpose.msra.mxu0 %v5794
  %5803 = vmatpush.bf16.xpose.msra.mxu0 %v5791
  %5804 = vmatmul.bf16.gmra.mxu0 %v5788
  %v5805 = vpop.f32.mrf.mxu0
  %v5806 = vadd.f32 0.0, %v5805
  %v5807 = vpop.f32.mrf.mxu0
  %5808 = vdwg.mxu0
  %v5813 = vunpack.c.l.b16 %v2453
  %v5814 = vunpack.c.l.b16 %v2454
  %v5815 = vunpack.c.l.b16 %v2455
  %v5816 = vunpack.c.l.b16 %v2456
  %v5817 = vpack.c.b16 %v5814, %v5813
  %v5818 = vpack.c.b16 %v5816, %v5815
  %v5819 = vsel %vm3151, %v1603, 0
  %v5822 = vsel %vm3151, %v5817, 0
  %v5825 = vsel %vm3151, %v5818, 0
  %5827 = vmatpush.bf16.xpose.msra.mxu0 0
  %5828 = vmatpush.bf16.xpose.msra.mxu0 0
  %5829 = vmatpush.bf16.xpose.msra.mxu0 0
  %5830 = vmatpush.bf16.xpose.msra.mxu0 0
  %5831 = vmatpush.bf16.xpose.msra.mxu0 0
  %5832 = vmatpush.bf16.xpose.msra.mxu0 0
  %5833 = vmatpush.bf16.xpose.msra.mxu0 %v5825
  %5834 = vmatpush.bf16.xpose.msra.mxu0 %v5822
  %5835 = vmatmul.bf16.gmra.mxu0 %v5819
  %v5836 = vpop.f32.mrf.mxu0
  %v5837 = vadd.f32 0.0, %v5836
  %v5838 = vpop.f32.mrf.mxu0
  %5839 = vdwg.mxu0
  %v5844 = vunpack.c.l.b16 %v2457
  %v5845 = vunpack.c.l.b16 %v2458
  %v5846 = vunpack.c.l.b16 %v2459
  %v5847 = vunpack.c.l.b16 %v2460
  %v5848 = vpack.c.b16 %v5845, %v5844
  %v5849 = vpack.c.b16 %v5847, %v5846
  %v5851 = vsel %vm3151, %v1606, 0
  %v5854 = vsel %vm3151, %v5848, 0
  %v5857 = vsel %vm3151, %v5849, 0
  %5859 = vmatpush.bf16.xpose.msra.mxu0 0
  %5860 = vmatpush.bf16.xpose.msra.mxu0 0
  %5861 = vmatpush.bf16.xpose.msra.mxu0 0
  %5862 = vmatpush.bf16.xpose.msra.mxu0 0
  %5863 = vmatpush.bf16.xpose.msra.mxu0 0
  %5864 = vmatpush.bf16.xpose.msra.mxu0 0
  %5865 = vmatpush.bf16.xpose.msra.mxu0 %v5857
  %5866 = vmatpush.bf16.xpose.msra.mxu0 %v5854
  %5867 = vmatmul.bf16.gmra.mxu0 %v5851
  %v5868 = vpop.f32.mrf.mxu0
  %v5869 = vadd.f32 0.0, %v5868
  %v5870 = vpop.f32.mrf.mxu0
  %5871 = vdwg.mxu0
  %v5876 = vunpack.c.l.b16 %v2461
  %v5877 = vunpack.c.l.b16 %v2462
  %v5878 = vunpack.c.l.b16 %v2463
  %v5879 = vunpack.c.l.b16 %v2464
  %v5880 = vpack.c.b16 %v5877, %v5876
  %v5881 = vpack.c.b16 %v5879, %v5878
  %v5883 = vsel %vm3151, %v1609, 0
  %v5886 = vsel %vm3151, %v5880, 0
  %v5889 = vsel %vm3151, %v5881, 0
  %5891 = vmatpush.bf16.xpose.msra.mxu0 0
  %5892 = vmatpush.bf16.xpose.msra.mxu0 0
  %5893 = vmatpush.bf16.xpose.msra.mxu0 0
  %5894 = vmatpush.bf16.xpose.msra.mxu0 0
  %5895 = vmatpush.bf16.xpose.msra.mxu0 0
  %5896 = vmatpush.bf16.xpose.msra.mxu0 0
  %5897 = vmatpush.bf16.xpose.msra.mxu0 %v5889
  %5898 = vmatpush.bf16.xpose.msra.mxu0 %v5886
  %5899 = vmatmul.bf16.gmra.mxu0 %v5883
  %v5900 = vpop.f32.mrf.mxu0
  %v5901 = vadd.f32 0.0, %v5900
  %v5902 = vpop.f32.mrf.mxu0
  %5903 = vdwg.mxu0
  %v5908 = vunpack.c.l.b16 %v2465
  %v5909 = vunpack.c.l.b16 %v2466
  %v5910 = vunpack.c.l.b16 %v2467
  %v5911 = vunpack.c.l.b16 %v2468
  %v5912 = vpack.c.b16 %v5909, %v5908
  %v5913 = vpack.c.b16 %v5911, %v5910
  %v5915 = vsel %vm3151, %v1612, 0
  %v5918 = vsel %vm3151, %v5912, 0
  %v5921 = vsel %vm3151, %v5913, 0
  %5923 = vmatpush.bf16.xpose.msra.mxu0 0
  %5924 = vmatpush.bf16.xpose.msra.mxu0 0
  %5925 = vmatpush.bf16.xpose.msra.mxu0 0
  %5926 = vmatpush.bf16.xpose.msra.mxu0 0
  %5927 = vmatpush.bf16.xpose.msra.mxu0 0
  %5928 = vmatpush.bf16.xpose.msra.mxu0 0
  %5929 = vmatpush.bf16.xpose.msra.mxu0 %v5921
  %5930 = vmatpush.bf16.xpose.msra.mxu0 %v5918
  %5931 = vmatmul.bf16.gmra.mxu0 %v5915
  %v5932 = vpop.f32.mrf.mxu0
  %v5933 = vadd.f32 0.0, %v5932
  %v5934 = vpop.f32.mrf.mxu0
  %5935 = vdwg.mxu0
  %v5940 = vunpack.c.l.b16 %v2469
  %v5941 = vunpack.c.l.b16 %v2470
  %v5942 = vunpack.c.l.b16 %v2471
  %v5943 = vunpack.c.l.b16 %v2472
  %v5944 = vpack.c.b16 %v5941, %v5940
  %v5945 = vpack.c.b16 %v5943, %v5942
  %v5946 = vsel %vm3151, %v1615, 0
  %v5949 = vsel %vm3151, %v5944, 0
  %v5952 = vsel %vm3151, %v5945, 0
  %5954 = vmatpush.bf16.xpose.msra.mxu0 0
  %5955 = vmatpush.bf16.xpose.msra.mxu0 0
  %5956 = vmatpush.bf16.xpose.msra.mxu0 0
  %5957 = vmatpush.bf16.xpose.msra.mxu0 0
  %5958 = vmatpush.bf16.xpose.msra.mxu0 0
  %5959 = vmatpush.bf16.xpose.msra.mxu0 0
  %5960 = vmatpush.bf16.xpose.msra.mxu0 %v5952
  %5961 = vmatpush.bf16.xpose.msra.mxu0 %v5949
  %5962 = vmatmul.bf16.gmra.mxu0 %v5946
  %v5963 = vpop.f32.mrf.mxu0
  %v5964 = vadd.f32 0.0, %v5963
  %v5965 = vpop.f32.mrf.mxu0
  %5966 = vdwg.mxu0
  %v5971 = vunpack.c.l.b16 %v2473
  %v5972 = vunpack.c.l.b16 %v2474
  %v5973 = vunpack.c.l.b16 %v2475
  %v5974 = vunpack.c.l.b16 %v2476
  %v5975 = vpack.c.b16 %v5972, %v5971
  %v5976 = vpack.c.b16 %v5974, %v5973
  %v5978 = vsel %vm3151, %v1618, 0
  %v5981 = vsel %vm3151, %v5975, 0
  %v5984 = vsel %vm3151, %v5976, 0
  %5986 = vmatpush.bf16.xpose.msra.mxu0 0
  %5987 = vmatpush.bf16.xpose.msra.mxu0 0
  %5988 = vmatpush.bf16.xpose.msra.mxu0 0
  %5989 = vmatpush.bf16.xpose.msra.mxu0 0
  %5990 = vmatpush.bf16.xpose.msra.mxu0 0
  %5991 = vmatpush.bf16.xpose.msra.mxu0 0
  %5992 = vmatpush.bf16.xpose.msra.mxu0 %v5984
  %5993 = vmatpush.bf16.xpose.msra.mxu0 %v5981
  %5994 = vmatmul.bf16.gmra.mxu0 %v5978
  %v5995 = vpop.f32.mrf.mxu0
  %v5996 = vadd.f32 0.0, %v5995
  %v5997 = vpop.f32.mrf.mxu0
  %5998 = vdwg.mxu0
  %v6003 = vunpack.c.l.b16 %v2477
  %v6004 = vunpack.c.l.b16 %v2478
  %v6005 = vunpack.c.l.b16 %v2479
  %v6006 = vunpack.c.l.b16 %v2480
  %v6007 = vpack.c.b16 %v6004, %v6003
  %v6008 = vpack.c.b16 %v6006, %v6005
  %v6010 = vsel %vm3151, %v1621, 0
  %v6013 = vsel %vm3151, %v6007, 0
  %v6016 = vsel %vm3151, %v6008, 0
  %6018 = vmatpush.bf16.xpose.msra.mxu0 0
  %6019 = vmatpush.bf16.xpose.msra.mxu0 0
  %6020 = vmatpush.bf16.xpose.msra.mxu0 0
  %6021 = vmatpush.bf16.xpose.msra.mxu0 0
  %6022 = vmatpush.bf16.xpose.msra.mxu0 0
  %6023 = vmatpush.bf16.xpose.msra.mxu0 0
  %6024 = vmatpush.bf16.xpose.msra.mxu0 %v6016
  %6025 = vmatpush.bf16.xpose.msra.mxu0 %v6013
  %6026 = vmatmul.bf16.gmra.mxu0 %v6010
  %v6027 = vpop.f32.mrf.mxu0
  %v6028 = vadd.f32 0.0, %v6027
  %v6029 = vpop.f32.mrf.mxu0
  %6030 = vdwg.mxu0
  %v6035 = vunpack.c.l.b16 %v2481
  %v6036 = vunpack.c.l.b16 %v2482
  %v6037 = vunpack.c.l.b16 %v2483
  %v6038 = vunpack.c.l.b16 %v2484
  %v6039 = vpack.c.b16 %v6036, %v6035
  %v6040 = vpack.c.b16 %v6038, %v6037
  %v6042 = vsel %vm3151, %v1624, 0
  %v6045 = vsel %vm3151, %v6039, 0
  %v6048 = vsel %vm3151, %v6040, 0
  %6050 = vmatpush.bf16.xpose.msra.mxu0 0
  %6051 = vmatpush.bf16.xpose.msra.mxu0 0
  %6052 = vmatpush.bf16.xpose.msra.mxu0 0
  %6053 = vmatpush.bf16.xpose.msra.mxu0 0
  %6054 = vmatpush.bf16.xpose.msra.mxu0 0
  %6055 = vmatpush.bf16.xpose.msra.mxu0 0
  %6056 = vmatpush.bf16.xpose.msra.mxu0 %v6048
  %6057 = vmatpush.bf16.xpose.msra.mxu0 %v6045
  %6058 = vmatmul.bf16.gmra.mxu0 %v6042
  %v6059 = vpop.f32.mrf.mxu0
  %v6060 = vadd.f32 0.0, %v6059
  %v6061 = vpop.f32.mrf.mxu0
  %6062 = vdwg.mxu0
  %v6067 = vunpack.c.l.b16 %v2485
  %v6068 = vunpack.c.l.b16 %v2486
  %v6069 = vunpack.c.l.b16 %v2487
  %v6070 = vunpack.c.l.b16 %v2488
  %v6071 = vpack.c.b16 %v6068, %v6067
  %v6072 = vpack.c.b16 %v6070, %v6069
  %v6073 = vsel %vm3151, %v1627, 0
  %v6076 = vsel %vm3151, %v6071, 0
  %v6079 = vsel %vm3151, %v6072, 0
  %6081 = vmatpush.bf16.xpose.msra.mxu0 0
  %6082 = vmatpush.bf16.xpose.msra.mxu0 0
  %6083 = vmatpush.bf16.xpose.msra.mxu0 0
  %6084 = vmatpush.bf16.xpose.msra.mxu0 0
  %6085 = vmatpush.bf16.xpose.msra.mxu0 0
  %6086 = vmatpush.bf16.xpose.msra.mxu0 0
  %6087 = vmatpush.bf16.xpose.msra.mxu0 %v6079
  %6088 = vmatpush.bf16.xpose.msra.mxu0 %v6076
  %6089 = vmatmul.bf16.gmra.mxu0 %v6073
  %v6090 = vpop.f32.mrf.mxu0
  %v6091 = vadd.f32 0.0, %v6090
  %v6092 = vpop.f32.mrf.mxu0
  %6093 = vdwg.mxu0
  %v6098 = vunpack.c.l.b16 %v2489
  %v6099 = vunpack.c.l.b16 %v2490
  %v6100 = vunpack.c.l.b16 %v2491
  %v6101 = vunpack.c.l.b16 %v2492
  %v6102 = vpack.c.b16 %v6099, %v6098
  %v6103 = vpack.c.b16 %v6101, %v6100
  %v6105 = vsel %vm3151, %v1630, 0
  %v6108 = vsel %vm3151, %v6102, 0
  %v6111 = vsel %vm3151, %v6103, 0
  %6113 = vmatpush.bf16.xpose.msra.mxu0 0
  %6114 = vmatpush.bf16.xpose.msra.mxu0 0
  %6115 = vmatpush.bf16.xpose.msra.mxu0 0
  %6116 = vmatpush.bf16.xpose.msra.mxu0 0
  %6117 = vmatpush.bf16.xpose.msra.mxu0 0
  %6118 = vmatpush.bf16.xpose.msra.mxu0 0
  %6119 = vmatpush.bf16.xpose.msra.mxu0 %v6111
  %6120 = vmatpush.bf16.xpose.msra.mxu0 %v6108
  %6121 = vmatmul.bf16.gmra.mxu0 %v6105
  %v6122 = vpop.f32.mrf.mxu0
  %v6123 = vadd.f32 0.0, %v6122
  %v6124 = vpop.f32.mrf.mxu0
  %6125 = vdwg.mxu0
  %v6130 = vunpack.c.l.b16 %v2493
  %v6131 = vunpack.c.l.b16 %v2494
  %v6132 = vunpack.c.l.b16 %v2495
  %v6133 = vunpack.c.l.b16 %v2496
  %v6134 = vpack.c.b16 %v6131, %v6130
  %v6135 = vpack.c.b16 %v6133, %v6132
  %v6137 = vsel %vm3151, %v1633, 0
  %v6140 = vsel %vm3151, %v6134, 0
  %v6143 = vsel %vm3151, %v6135, 0
  %6145 = vmatpush.bf16.xpose.msra.mxu0 0
  %6146 = vmatpush.bf16.xpose.msra.mxu0 0
  %6147 = vmatpush.bf16.xpose.msra.mxu0 0
  %6148 = vmatpush.bf16.xpose.msra.mxu0 0
  %6149 = vmatpush.bf16.xpose.msra.mxu0 0
  %6150 = vmatpush.bf16.xpose.msra.mxu0 0
  %6151 = vmatpush.bf16.xpose.msra.mxu0 %v6143
  %6152 = vmatpush.bf16.xpose.msra.mxu0 %v6140
  %6153 = vmatmul.bf16.gmra.mxu0 %v6137
  %v6154 = vpop.f32.mrf.mxu0
  %v6155 = vadd.f32 0.0, %v6154
  %v6156 = vpop.f32.mrf.mxu0
  %6157 = vdwg.mxu0
  %v6162 = vunpack.c.l.b16 %v2497
  %v6163 = vunpack.c.l.b16 %v2498
  %v6164 = vunpack.c.l.b16 %v2499
  %v6165 = vunpack.c.l.b16 %v2500
  %v6166 = vpack.c.b16 %v6163, %v6162
  %v6167 = vpack.c.b16 %v6165, %v6164
  %v6169 = vsel %vm3151, %v1636, 0
  %v6172 = vsel %vm3151, %v6166, 0
  %v6175 = vsel %vm3151, %v6167, 0
  %6177 = vmatpush.bf16.xpose.msra.mxu0 0
  %6178 = vmatpush.bf16.xpose.msra.mxu0 0
  %6179 = vmatpush.bf16.xpose.msra.mxu0 0
  %6180 = vmatpush.bf16.xpose.msra.mxu0 0
  %6181 = vmatpush.bf16.xpose.msra.mxu0 0
  %6182 = vmatpush.bf16.xpose.msra.mxu0 0
  %6183 = vmatpush.bf16.xpose.msra.mxu0 %v6175
  %6184 = vmatpush.bf16.xpose.msra.mxu0 %v6172
  %6185 = vmatmul.bf16.gmra.mxu0 %v6169
  %v6186 = vpop.f32.mrf.mxu0
  %v6187 = vadd.f32 0.0, %v6186
  %v6188 = vpop.f32.mrf.mxu0
  %6189 = vdwg.mxu0
  %v6194 = vunpack.c.l.b16 %v2501
  %v6195 = vunpack.c.l.b16 %v2502
  %v6196 = vunpack.c.l.b16 %v2503
  %v6197 = vunpack.c.l.b16 %v2504
  %v6198 = vpack.c.b16 %v6195, %v6194
  %v6199 = vpack.c.b16 %v6197, %v6196
  %v6200 = vsel %vm3151, %v1639, 0
  %v6203 = vsel %vm3151, %v6198, 0
  %v6206 = vsel %vm3151, %v6199, 0
  %6208 = vmatpush.bf16.xpose.msra.mxu0 0
  %6209 = vmatpush.bf16.xpose.msra.mxu0 0
  %6210 = vmatpush.bf16.xpose.msra.mxu0 0
  %6211 = vmatpush.bf16.xpose.msra.mxu0 0
  %6212 = vmatpush.bf16.xpose.msra.mxu0 0
  %6213 = vmatpush.bf16.xpose.msra.mxu0 0
  %6214 = vmatpush.bf16.xpose.msra.mxu0 %v6206
  %6215 = vmatpush.bf16.xpose.msra.mxu0 %v6203
  %6216 = vmatmul.bf16.gmra.mxu0 %v6200
  %v6217 = vpop.f32.mrf.mxu0
  %v6218 = vadd.f32 0.0, %v6217
  %v6219 = vpop.f32.mrf.mxu0
  %6220 = vdwg.mxu0
  %v6225 = vunpack.c.l.b16 %v2505
  %v6226 = vunpack.c.l.b16 %v2506
  %v6227 = vunpack.c.l.b16 %v2507
  %v6228 = vunpack.c.l.b16 %v2508
  %v6229 = vpack.c.b16 %v6226, %v6225
  %v6230 = vpack.c.b16 %v6228, %v6227
  %v6232 = vsel %vm3151, %v1642, 0
  %v6235 = vsel %vm3151, %v6229, 0
  %v6238 = vsel %vm3151, %v6230, 0
  %6240 = vmatpush.bf16.xpose.msra.mxu0 0
  %6241 = vmatpush.bf16.xpose.msra.mxu0 0
  %6242 = vmatpush.bf16.xpose.msra.mxu0 0
  %6243 = vmatpush.bf16.xpose.msra.mxu0 0
  %6244 = vmatpush.bf16.xpose.msra.mxu0 0
  %6245 = vmatpush.bf16.xpose.msra.mxu0 0
  %6246 = vmatpush.bf16.xpose.msra.mxu0 %v6238
  %6247 = vmatpush.bf16.xpose.msra.mxu0 %v6235
  %6248 = vmatmul.bf16.gmra.mxu0 %v6232
  %v6249 = vpop.f32.mrf.mxu0
  %v6250 = vadd.f32 0.0, %v6249
  %v6251 = vpop.f32.mrf.mxu0
  %6252 = vdwg.mxu0
  %v6257 = vunpack.c.l.b16 %v2509
  %v6258 = vunpack.c.l.b16 %v2510
  %v6259 = vunpack.c.l.b16 %v2511
  %v6260 = vunpack.c.l.b16 %v2512
  %v6261 = vpack.c.b16 %v6258, %v6257
  %v6262 = vpack.c.b16 %v6260, %v6259
  %v6264 = vsel %vm3151, %v1645, 0
  %v6267 = vsel %vm3151, %v6261, 0
  %v6270 = vsel %vm3151, %v6262, 0
  %6272 = vmatpush.bf16.xpose.msra.mxu0 0
  %6273 = vmatpush.bf16.xpose.msra.mxu0 0
  %6274 = vmatpush.bf16.xpose.msra.mxu0 0
  %6275 = vmatpush.bf16.xpose.msra.mxu0 0
  %6276 = vmatpush.bf16.xpose.msra.mxu0 0
  %6277 = vmatpush.bf16.xpose.msra.mxu0 0
  %6278 = vmatpush.bf16.xpose.msra.mxu0 %v6270
  %6279 = vmatpush.bf16.xpose.msra.mxu0 %v6267
  %6280 = vmatmul.bf16.gmra.mxu0 %v6264
  %v6281 = vpop.f32.mrf.mxu0
  %v6282 = vadd.f32 0.0, %v6281
  %v6283 = vpop.f32.mrf.mxu0
  %6284 = vdwg.mxu0
  %v6289 = vunpack.c.l.b16 %v2513
  %v6290 = vunpack.c.l.b16 %v2514
  %v6291 = vunpack.c.l.b16 %v2515
  %v6292 = vunpack.c.l.b16 %v2516
  %v6293 = vpack.c.b16 %v6290, %v6289
  %v6294 = vpack.c.b16 %v6292, %v6291
  %v6296 = vsel %vm3151, %v1648, 0
  %v6299 = vsel %vm3151, %v6293, 0
  %v6302 = vsel %vm3151, %v6294, 0
  %6304 = vmatpush.bf16.xpose.msra.mxu0 0
  %6305 = vmatpush.bf16.xpose.msra.mxu0 0
  %6306 = vmatpush.bf16.xpose.msra.mxu0 0
  %6307 = vmatpush.bf16.xpose.msra.mxu0 0
  %6308 = vmatpush.bf16.xpose.msra.mxu0 0
  %6309 = vmatpush.bf16.xpose.msra.mxu0 0
  %6310 = vmatpush.bf16.xpose.msra.mxu0 %v6302
  %6311 = vmatpush.bf16.xpose.msra.mxu0 %v6299
  %6312 = vmatmul.bf16.gmra.mxu0 %v6296
  %v6313 = vpop.f32.mrf.mxu0
  %v6314 = vadd.f32 0.0, %v6313
  %v6315 = vpop.f32.mrf.mxu0
  %6316 = vdwg.mxu0
  %v6321 = vunpack.c.l.b16 %v2517
  %v6322 = vunpack.c.l.b16 %v2518
  %v6323 = vunpack.c.l.b16 %v2519
  %v6324 = vunpack.c.l.b16 %v2520
  %v6325 = vpack.c.b16 %v6322, %v6321
  %v6326 = vpack.c.b16 %v6324, %v6323
  %v6327 = vsel %vm3151, %v1651, 0
  %v6330 = vsel %vm3151, %v6325, 0
  %v6333 = vsel %vm3151, %v6326, 0
  %6335 = vmatpush.bf16.xpose.msra.mxu0 0
  %6336 = vmatpush.bf16.xpose.msra.mxu0 0
  %6337 = vmatpush.bf16.xpose.msra.mxu0 0
  %6338 = vmatpush.bf16.xpose.msra.mxu0 0
  %6339 = vmatpush.bf16.xpose.msra.mxu0 0
  %6340 = vmatpush.bf16.xpose.msra.mxu0 0
  %6341 = vmatpush.bf16.xpose.msra.mxu0 %v6333
  %6342 = vmatpush.bf16.xpose.msra.mxu0 %v6330
  %6343 = vmatmul.bf16.gmra.mxu0 %v6327
  %v6344 = vpop.f32.mrf.mxu0
  %v6345 = vadd.f32 0.0, %v6344
  %v6346 = vpop.f32.mrf.mxu0
  %6347 = vdwg.mxu0
  %v6352 = vunpack.c.l.b16 %v2521
  %v6353 = vunpack.c.l.b16 %v2522
  %v6354 = vunpack.c.l.b16 %v2523
  %v6355 = vunpack.c.l.b16 %v2524
  %v6356 = vpack.c.b16 %v6353, %v6352
  %v6357 = vpack.c.b16 %v6355, %v6354
  %v6359 = vsel %vm3151, %v1654, 0
  %v6362 = vsel %vm3151, %v6356, 0
  %v6365 = vsel %vm3151, %v6357, 0
  %6367 = vmatpush.bf16.xpose.msra.mxu0 0
  %6368 = vmatpush.bf16.xpose.msra.mxu0 0
  %6369 = vmatpush.bf16.xpose.msra.mxu0 0
  %6370 = vmatpush.bf16.xpose.msra.mxu0 0
  %6371 = vmatpush.bf16.xpose.msra.mxu0 0
  %6372 = vmatpush.bf16.xpose.msra.mxu0 0
  %6373 = vmatpush.bf16.xpose.msra.mxu0 %v6365
  %6374 = vmatpush.bf16.xpose.msra.mxu0 %v6362
  %6375 = vmatmul.bf16.gmra.mxu0 %v6359
  %v6376 = vpop.f32.mrf.mxu0
  %v6377 = vadd.f32 0.0, %v6376
  %v6378 = vpop.f32.mrf.mxu0
  %6379 = vdwg.mxu0
  %v6384 = vunpack.c.l.b16 %v2525
  %v6385 = vunpack.c.l.b16 %v2526
  %v6386 = vunpack.c.l.b16 %v2527
  %v6387 = vunpack.c.l.b16 %v2528
  %v6388 = vpack.c.b16 %v6385, %v6384
  %v6389 = vpack.c.b16 %v6387, %v6386
  %v6391 = vsel %vm3151, %v1657, 0
  %v6394 = vsel %vm3151, %v6388, 0
  %v6397 = vsel %vm3151, %v6389, 0
  %6399 = vmatpush.bf16.xpose.msra.mxu0 0
  %6400 = vmatpush.bf16.xpose.msra.mxu0 0
  %6401 = vmatpush.bf16.xpose.msra.mxu0 0
  %6402 = vmatpush.bf16.xpose.msra.mxu0 0
  %6403 = vmatpush.bf16.xpose.msra.mxu0 0
  %6404 = vmatpush.bf16.xpose.msra.mxu0 0
  %6405 = vmatpush.bf16.xpose.msra.mxu0 %v6397
  %6406 = vmatpush.bf16.xpose.msra.mxu0 %v6394
  %6407 = vmatmul.bf16.gmra.mxu0 %v6391
  %v6408 = vpop.f32.mrf.mxu0
  %v6409 = vadd.f32 0.0, %v6408
  %v6410 = vpop.f32.mrf.mxu0
  %6411 = vdwg.mxu0
  %v6416 = vunpack.c.l.b16 %v2529
  %v6417 = vunpack.c.l.b16 %v2530
  %v6418 = vunpack.c.l.b16 %v2531
  %v6419 = vunpack.c.l.b16 %v2532
  %v6420 = vpack.c.b16 %v6417, %v6416
  %v6421 = vpack.c.b16 %v6419, %v6418
  %v6423 = vsel %vm3151, %v1660, 0
  %v6426 = vsel %vm3151, %v6420, 0
  %v6429 = vsel %vm3151, %v6421, 0
  %6431 = vmatpush.bf16.xpose.msra.mxu0 0
  %6432 = vmatpush.bf16.xpose.msra.mxu0 0
  %6433 = vmatpush.bf16.xpose.msra.mxu0 0
  %6434 = vmatpush.bf16.xpose.msra.mxu0 0
  %6435 = vmatpush.bf16.xpose.msra.mxu0 0
  %6436 = vmatpush.bf16.xpose.msra.mxu0 0
  %6437 = vmatpush.bf16.xpose.msra.mxu0 %v6429
  %6438 = vmatpush.bf16.xpose.msra.mxu0 %v6426
  %6439 = vmatmul.bf16.gmra.mxu0 %v6423
  %v6440 = vpop.f32.mrf.mxu0
  %v6441 = vadd.f32 0.0, %v6440
  %v6442 = vpop.f32.mrf.mxu0
  %6443 = vdwg.mxu0
  %v6448 = vunpack.c.l.b16 %v2533
  %v6449 = vunpack.c.l.b16 %v2534
  %v6450 = vunpack.c.l.b16 %v2535
  %v6451 = vunpack.c.l.b16 %v2536
  %v6452 = vpack.c.b16 %v6449, %v6448
  %v6453 = vpack.c.b16 %v6451, %v6450
  %v6454 = vsel %vm3151, %v1663, 0
  %v6457 = vsel %vm3151, %v6452, 0
  %v6460 = vsel %vm3151, %v6453, 0
  %6462 = vmatpush.bf16.xpose.msra.mxu0 0
  %6463 = vmatpush.bf16.xpose.msra.mxu0 0
  %6464 = vmatpush.bf16.xpose.msra.mxu0 0
  %6465 = vmatpush.bf16.xpose.msra.mxu0 0
  %6466 = vmatpush.bf16.xpose.msra.mxu0 0
  %6467 = vmatpush.bf16.xpose.msra.mxu0 0
  %6468 = vmatpush.bf16.xpose.msra.mxu0 %v6460
  %6469 = vmatpush.bf16.xpose.msra.mxu0 %v6457
  %6470 = vmatmul.bf16.gmra.mxu0 %v6454
  %v6471 = vpop.f32.mrf.mxu0
  %v6472 = vadd.f32 0.0, %v6471
  %v6473 = vpop.f32.mrf.mxu0
  %6474 = vdwg.mxu0
  %v6479 = vunpack.c.l.b16 %v2537
  %v6480 = vunpack.c.l.b16 %v2538
  %v6481 = vunpack.c.l.b16 %v2539
  %v6482 = vunpack.c.l.b16 %v2540
  %v6483 = vpack.c.b16 %v6480, %v6479
  %v6484 = vpack.c.b16 %v6482, %v6481
  %v6486 = vsel %vm3151, %v1666, 0
  %v6489 = vsel %vm3151, %v6483, 0
  %v6492 = vsel %vm3151, %v6484, 0
  %6494 = vmatpush.bf16.xpose.msra.mxu0 0
  %6495 = vmatpush.bf16.xpose.msra.mxu0 0
  %6496 = vmatpush.bf16.xpose.msra.mxu0 0
  %6497 = vmatpush.bf16.xpose.msra.mxu0 0
  %6498 = vmatpush.bf16.xpose.msra.mxu0 0
  %6499 = vmatpush.bf16.xpose.msra.mxu0 0
  %6500 = vmatpush.bf16.xpose.msra.mxu0 %v6492
  %6501 = vmatpush.bf16.xpose.msra.mxu0 %v6489
  %6502 = vmatmul.bf16.gmra.mxu0 %v6486
  %v6503 = vpop.f32.mrf.mxu0
  %v6504 = vadd.f32 0.0, %v6503
  %v6505 = vpop.f32.mrf.mxu0
  %6506 = vdwg.mxu0
  %v6511 = vunpack.c.l.b16 %v2541
  %v6512 = vunpack.c.l.b16 %v2542
  %v6513 = vunpack.c.l.b16 %v2543
  %v6514 = vunpack.c.l.b16 %v2544
  %v6515 = vpack.c.b16 %v6512, %v6511
  %v6516 = vpack.c.b16 %v6514, %v6513
  %v6518 = vsel %vm3151, %v1669, 0
  %v6521 = vsel %vm3151, %v6515, 0
  %v6524 = vsel %vm3151, %v6516, 0
  %6526 = vmatpush.bf16.xpose.msra.mxu0 0
  %6527 = vmatpush.bf16.xpose.msra.mxu0 0
  %6528 = vmatpush.bf16.xpose.msra.mxu0 0
  %6529 = vmatpush.bf16.xpose.msra.mxu0 0
  %6530 = vmatpush.bf16.xpose.msra.mxu0 0
  %6531 = vmatpush.bf16.xpose.msra.mxu0 0
  %6532 = vmatpush.bf16.xpose.msra.mxu0 %v6524
  %6533 = vmatpush.bf16.xpose.msra.mxu0 %v6521
  %6534 = vmatmul.bf16.gmra.mxu0 %v6518
  %v6535 = vpop.f32.mrf.mxu0
  %v6536 = vadd.f32 0.0, %v6535
  %v6537 = vpop.f32.mrf.mxu0
  %6538 = vdwg.mxu0
  %v6543 = vunpack.c.l.b16 %v2545
  %v6544 = vunpack.c.l.b16 %v2546
  %v6545 = vunpack.c.l.b16 %v2547
  %v6546 = vunpack.c.l.b16 %v2548
  %v6547 = vpack.c.b16 %v6544, %v6543
  %v6548 = vpack.c.b16 %v6546, %v6545
  %v6550 = vsel %vm3151, %v1672, 0
  %v6553 = vsel %vm3151, %v6547, 0
  %v6556 = vsel %vm3151, %v6548, 0
  %6558 = vmatpush.bf16.xpose.msra.mxu0 0
  %6559 = vmatpush.bf16.xpose.msra.mxu0 0
  %6560 = vmatpush.bf16.xpose.msra.mxu0 0
  %6561 = vmatpush.bf16.xpose.msra.mxu0 0
  %6562 = vmatpush.bf16.xpose.msra.mxu0 0
  %6563 = vmatpush.bf16.xpose.msra.mxu0 0
  %6564 = vmatpush.bf16.xpose.msra.mxu0 %v6556
  %6565 = vmatpush.bf16.xpose.msra.mxu0 %v6553
  %6566 = vmatmul.bf16.gmra.mxu0 %v6550
  %v6567 = vpop.f32.mrf.mxu0
  %v6568 = vadd.f32 0.0, %v6567
  %v6569 = vpop.f32.mrf.mxu0
  %6570 = vdwg.mxu0
  %v6575 = vunpack.c.l.b16 %v2549
  %v6576 = vunpack.c.l.b16 %v2550
  %v6577 = vunpack.c.l.b16 %v2551
  %v6578 = vunpack.c.l.b16 %v2552
  %v6579 = vpack.c.b16 %v6576, %v6575
  %v6580 = vpack.c.b16 %v6578, %v6577
  %v6581 = vsel %vm3151, %v1675, 0
  %v6584 = vsel %vm3151, %v6579, 0
  %v6587 = vsel %vm3151, %v6580, 0
  %6589 = vmatpush.bf16.xpose.msra.mxu0 0
  %6590 = vmatpush.bf16.xpose.msra.mxu0 0
  %6591 = vmatpush.bf16.xpose.msra.mxu0 0
  %6592 = vmatpush.bf16.xpose.msra.mxu0 0
  %6593 = vmatpush.bf16.xpose.msra.mxu0 0
  %6594 = vmatpush.bf16.xpose.msra.mxu0 0
  %6595 = vmatpush.bf16.xpose.msra.mxu0 %v6587
  %6596 = vmatpush.bf16.xpose.msra.mxu0 %v6584
  %6597 = vmatmul.bf16.gmra.mxu0 %v6581
  %v6598 = vpop.f32.mrf.mxu0
  %v6599 = vadd.f32 0.0, %v6598
  %v6600 = vpop.f32.mrf.mxu0
  %6601 = vdwg.mxu0
  %v6606 = vunpack.c.l.b16 %v2553
  %v6607 = vunpack.c.l.b16 %v2554
  %v6608 = vunpack.c.l.b16 %v2555
  %v6609 = vunpack.c.l.b16 %v2556
  %v6610 = vpack.c.b16 %v6607, %v6606
  %v6611 = vpack.c.b16 %v6609, %v6608
  %v6613 = vsel %vm3151, %v1678, 0
  %v6616 = vsel %vm3151, %v6610, 0
  %v6619 = vsel %vm3151, %v6611, 0
  %6621 = vmatpush.bf16.xpose.msra.mxu0 0
  %6622 = vmatpush.bf16.xpose.msra.mxu0 0
  %6623 = vmatpush.bf16.xpose.msra.mxu0 0
  %6624 = vmatpush.bf16.xpose.msra.mxu0 0
  %6625 = vmatpush.bf16.xpose.msra.mxu0 0
  %6626 = vmatpush.bf16.xpose.msra.mxu0 0
  %6627 = vmatpush.bf16.xpose.msra.mxu0 %v6619
  %6628 = vmatpush.bf16.xpose.msra.mxu0 %v6616
  %6629 = vmatmul.bf16.gmra.mxu0 %v6613
  %v6630 = vpop.f32.mrf.mxu0
  %v6631 = vadd.f32 0.0, %v6630
  %v6632 = vpop.f32.mrf.mxu0
  %6633 = vdwg.mxu0
  %v6638 = vunpack.c.l.b16 %v2557
  %v6639 = vunpack.c.l.b16 %v2558
  %v6640 = vunpack.c.l.b16 %v2559
  %v6641 = vunpack.c.l.b16 %v2560
  %v6642 = vpack.c.b16 %v6639, %v6638
  %v6643 = vpack.c.b16 %v6641, %v6640
  %v6645 = vsel %vm3151, %v1681, 0
  %v6648 = vsel %vm3151, %v6642, 0
  %v6651 = vsel %vm3151, %v6643, 0
  %6653 = vmatpush.bf16.xpose.msra.mxu0 0
  %6654 = vmatpush.bf16.xpose.msra.mxu0 0
  %6655 = vmatpush.bf16.xpose.msra.mxu0 0
  %6656 = vmatpush.bf16.xpose.msra.mxu0 0
  %6657 = vmatpush.bf16.xpose.msra.mxu0 0
  %6658 = vmatpush.bf16.xpose.msra.mxu0 0
  %6659 = vmatpush.bf16.xpose.msra.mxu0 %v6651
  %6660 = vmatpush.bf16.xpose.msra.mxu0 %v6648
  %6661 = vmatmul.bf16.gmra.mxu0 %v6645
  %v6662 = vpop.f32.mrf.mxu0
  %v6663 = vadd.f32 0.0, %v6662
  %v6664 = vpop.f32.mrf.mxu0
  %6665 = vdwg.mxu0
  %v6670 = vunpack.c.l.b16 %v2561
  %v6671 = vunpack.c.l.b16 %v2562
  %v6672 = vunpack.c.l.b16 %v2563
  %v6673 = vunpack.c.l.b16 %v2564
  %v6674 = vpack.c.b16 %v6671, %v6670
  %v6675 = vpack.c.b16 %v6673, %v6672
  %v6677 = vsel %vm3151, %v1684, 0
  %v6680 = vsel %vm3151, %v6674, 0
  %v6683 = vsel %vm3151, %v6675, 0
  %6685 = vmatpush.bf16.xpose.msra.mxu0 0
  %6686 = vmatpush.bf16.xpose.msra.mxu0 0
  %6687 = vmatpush.bf16.xpose.msra.mxu0 0
  %6688 = vmatpush.bf16.xpose.msra.mxu0 0
  %6689 = vmatpush.bf16.xpose.msra.mxu0 0
  %6690 = vmatpush.bf16.xpose.msra.mxu0 0
  %6691 = vmatpush.bf16.xpose.msra.mxu0 %v6683
  %6692 = vmatpush.bf16.xpose.msra.mxu0 %v6680
  %6693 = vmatmul.bf16.gmra.mxu0 %v6677
  %v6694 = vpop.f32.mrf.mxu0
  %v6695 = vadd.f32 0.0, %v6694
  %v6696 = vpop.f32.mrf.mxu0
  %6697 = vdwg.mxu0
  %v6702 = vunpack.c.l.b16 %v2565
  %v6703 = vunpack.c.l.b16 %v2566
  %v6704 = vunpack.c.l.b16 %v2567
  %v6705 = vunpack.c.l.b16 %v2568
  %v6706 = vpack.c.b16 %v6703, %v6702
  %v6707 = vpack.c.b16 %v6705, %v6704
  %v6708 = vsel %vm3151, %v1687, 0
  %v6711 = vsel %vm3151, %v6706, 0
  %v6714 = vsel %vm3151, %v6707, 0
  %6716 = vmatpush.bf16.xpose.msra.mxu0 0
  %6717 = vmatpush.bf16.xpose.msra.mxu0 0
  %6718 = vmatpush.bf16.xpose.msra.mxu0 0
  %6719 = vmatpush.bf16.xpose.msra.mxu0 0
  %6720 = vmatpush.bf16.xpose.msra.mxu0 0
  %6721 = vmatpush.bf16.xpose.msra.mxu0 0
  %6722 = vmatpush.bf16.xpose.msra.mxu0 %v6714
  %6723 = vmatpush.bf16.xpose.msra.mxu0 %v6711
  %6724 = vmatmul.bf16.gmra.mxu0 %v6708
  %v6725 = vpop.f32.mrf.mxu0
  %v6726 = vadd.f32 0.0, %v6725
  %v6727 = vpop.f32.mrf.mxu0
  %6728 = vdwg.mxu0
  %v6733 = vunpack.c.l.b16 %v2569
  %v6734 = vunpack.c.l.b16 %v2570
  %v6735 = vunpack.c.l.b16 %v2571
  %v6736 = vunpack.c.l.b16 %v2572
  %v6737 = vpack.c.b16 %v6734, %v6733
  %v6738 = vpack.c.b16 %v6736, %v6735
  %v6740 = vsel %vm3151, %v1690, 0
  %v6743 = vsel %vm3151, %v6737, 0
  %v6746 = vsel %vm3151, %v6738, 0
  %6748 = vmatpush.bf16.xpose.msra.mxu0 0
  %6749 = vmatpush.bf16.xpose.msra.mxu0 0
  %6750 = vmatpush.bf16.xpose.msra.mxu0 0
  %6751 = vmatpush.bf16.xpose.msra.mxu0 0
  %6752 = vmatpush.bf16.xpose.msra.mxu0 0
  %6753 = vmatpush.bf16.xpose.msra.mxu0 0
  %6754 = vmatpush.bf16.xpose.msra.mxu0 %v6746
  %6755 = vmatpush.bf16.xpose.msra.mxu0 %v6743
  %6756 = vmatmul.bf16.gmra.mxu0 %v6740
  %v6757 = vpop.f32.mrf.mxu0
  %v6758 = vadd.f32 0.0, %v6757
  %v6759 = vpop.f32.mrf.mxu0
  %6760 = vdwg.mxu0
  %v6765 = vunpack.c.l.b16 %v2573
  %v6766 = vunpack.c.l.b16 %v2574
  %v6767 = vunpack.c.l.b16 %v2575
  %v6768 = vunpack.c.l.b16 %v2576
  %v6769 = vpack.c.b16 %v6766, %v6765
  %v6770 = vpack.c.b16 %v6768, %v6767
  %v6772 = vsel %vm3151, %v1693, 0
  %v6775 = vsel %vm3151, %v6769, 0
  %v6778 = vsel %vm3151, %v6770, 0
  %6780 = vmatpush.bf16.xpose.msra.mxu0 0
  %6781 = vmatpush.bf16.xpose.msra.mxu0 0
  %6782 = vmatpush.bf16.xpose.msra.mxu0 0
  %6783 = vmatpush.bf16.xpose.msra.mxu0 0
  %6784 = vmatpush.bf16.xpose.msra.mxu0 0
  %6785 = vmatpush.bf16.xpose.msra.mxu0 0
  %6786 = vmatpush.bf16.xpose.msra.mxu0 %v6778
  %6787 = vmatpush.bf16.xpose.msra.mxu0 %v6775
  %6788 = vmatmul.bf16.gmra.mxu0 %v6772
  %v6789 = vpop.f32.mrf.mxu0
  %v6790 = vadd.f32 0.0, %v6789
  %v6791 = vpop.f32.mrf.mxu0
  %6792 = vdwg.mxu0
  %v6797 = vunpack.c.l.b16 %v2577
  %v6798 = vunpack.c.l.b16 %v2578
  %v6799 = vunpack.c.l.b16 %v2579
  %v6800 = vunpack.c.l.b16 %v2580
  %v6801 = vpack.c.b16 %v6798, %v6797
  %v6802 = vpack.c.b16 %v6800, %v6799
  %v6804 = vsel %vm3151, %v1696, 0
  %v6807 = vsel %vm3151, %v6801, 0
  %v6810 = vsel %vm3151, %v6802, 0
  %6812 = vmatpush.bf16.xpose.msra.mxu0 0
  %6813 = vmatpush.bf16.xpose.msra.mxu0 0
  %6814 = vmatpush.bf16.xpose.msra.mxu0 0
  %6815 = vmatpush.bf16.xpose.msra.mxu0 0
  %6816 = vmatpush.bf16.xpose.msra.mxu0 0
  %6817 = vmatpush.bf16.xpose.msra.mxu0 0
  %6818 = vmatpush.bf16.xpose.msra.mxu0 %v6810
  %6819 = vmatpush.bf16.xpose.msra.mxu0 %v6807
  %6820 = vmatmul.bf16.gmra.mxu0 %v6804
  %v6821 = vpop.f32.mrf.mxu0
  %v6822 = vadd.f32 0.0, %v6821
  %v6823 = vpop.f32.mrf.mxu0
  %6824 = vdwg.mxu0
  %v6829 = vunpack.c.l.b16 %v2581
  %v6830 = vunpack.c.l.b16 %v2582
  %v6831 = vunpack.c.l.b16 %v2583
  %v6832 = vunpack.c.l.b16 %v2584
  %v6833 = vpack.c.b16 %v6830, %v6829
  %v6834 = vpack.c.b16 %v6832, %v6831
  %v6835 = vsel %vm3151, %v1699, 0
  %v6838 = vsel %vm3151, %v6833, 0
  %v6841 = vsel %vm3151, %v6834, 0
  %6843 = vmatpush.bf16.xpose.msra.mxu0 0
  %6844 = vmatpush.bf16.xpose.msra.mxu0 0
  %6845 = vmatpush.bf16.xpose.msra.mxu0 0
  %6846 = vmatpush.bf16.xpose.msra.mxu0 0
  %6847 = vmatpush.bf16.xpose.msra.mxu0 0
  %6848 = vmatpush.bf16.xpose.msra.mxu0 0
  %6849 = vmatpush.bf16.xpose.msra.mxu0 %v6841
  %6850 = vmatpush.bf16.xpose.msra.mxu0 %v6838
  %6851 = vmatmul.bf16.gmra.mxu0 %v6835
  %v6852 = vpop.f32.mrf.mxu0
  %v6853 = vadd.f32 0.0, %v6852
  %v6854 = vpop.f32.mrf.mxu0
  %6855 = vdwg.mxu0
  %v6860 = vunpack.c.l.b16 %v2585
  %v6861 = vunpack.c.l.b16 %v2586
  %v6862 = vunpack.c.l.b16 %v2587
  %v6863 = vunpack.c.l.b16 %v2588
  %v6864 = vpack.c.b16 %v6861, %v6860
  %v6865 = vpack.c.b16 %v6863, %v6862
  %v6867 = vsel %vm3151, %v1702, 0
  %v6870 = vsel %vm3151, %v6864, 0
  %v6873 = vsel %vm3151, %v6865, 0
  %6875 = vmatpush.bf16.xpose.msra.mxu0 0
  %6876 = vmatpush.bf16.xpose.msra.mxu0 0
  %6877 = vmatpush.bf16.xpose.msra.mxu0 0
  %6878 = vmatpush.bf16.xpose.msra.mxu0 0
  %6879 = vmatpush.bf16.xpose.msra.mxu0 0
  %6880 = vmatpush.bf16.xpose.msra.mxu0 0
  %6881 = vmatpush.bf16.xpose.msra.mxu0 %v6873
  %6882 = vmatpush.bf16.xpose.msra.mxu0 %v6870
  %6883 = vmatmul.bf16.gmra.mxu0 %v6867
  %v6884 = vpop.f32.mrf.mxu0
  %v6885 = vadd.f32 0.0, %v6884
  %v6886 = vpop.f32.mrf.mxu0
  %6887 = vdwg.mxu0
  %v6892 = vunpack.c.l.b16 %v2589
  %v6893 = vunpack.c.l.b16 %v2590
  %v6894 = vunpack.c.l.b16 %v2591
  %v6895 = vunpack.c.l.b16 %v2592
  %v6896 = vpack.c.b16 %v6893, %v6892
  %v6897 = vpack.c.b16 %v6895, %v6894
  %v6899 = vsel %vm3151, %v1705, 0
  %v6902 = vsel %vm3151, %v6896, 0
  %v6905 = vsel %vm3151, %v6897, 0
  %6907 = vmatpush.bf16.xpose.msra.mxu0 0
  %6908 = vmatpush.bf16.xpose.msra.mxu0 0
  %6909 = vmatpush.bf16.xpose.msra.mxu0 0
  %6910 = vmatpush.bf16.xpose.msra.mxu0 0
  %6911 = vmatpush.bf16.xpose.msra.mxu0 0
  %6912 = vmatpush.bf16.xpose.msra.mxu0 0
  %6913 = vmatpush.bf16.xpose.msra.mxu0 %v6905
  %6914 = vmatpush.bf16.xpose.msra.mxu0 %v6902
  %6915 = vmatmul.bf16.gmra.mxu0 %v6899
  %v6916 = vpop.f32.mrf.mxu0
  %v6917 = vadd.f32 0.0, %v6916
  %v6918 = vpop.f32.mrf.mxu0
  %6919 = vdwg.mxu0
  %v6924 = vunpack.c.l.b16 %v2593
  %v6925 = vunpack.c.l.b16 %v2594
  %v6926 = vunpack.c.l.b16 %v2595
  %v6927 = vunpack.c.l.b16 %v2596
  %v6928 = vpack.c.b16 %v6925, %v6924
  %v6929 = vpack.c.b16 %v6927, %v6926
  %v6931 = vsel %vm3151, %v1708, 0
  %v6934 = vsel %vm3151, %v6928, 0
  %v6937 = vsel %vm3151, %v6929, 0
  %6939 = vmatpush.bf16.xpose.msra.mxu0 0
  %6940 = vmatpush.bf16.xpose.msra.mxu0 0
  %6941 = vmatpush.bf16.xpose.msra.mxu0 0
  %6942 = vmatpush.bf16.xpose.msra.mxu0 0
  %6943 = vmatpush.bf16.xpose.msra.mxu0 0
  %6944 = vmatpush.bf16.xpose.msra.mxu0 0
  %6945 = vmatpush.bf16.xpose.msra.mxu0 %v6937
  %6946 = vmatpush.bf16.xpose.msra.mxu0 %v6934
  %6947 = vmatmul.bf16.gmra.mxu0 %v6931
  %v6948 = vpop.f32.mrf.mxu0
  %v6949 = vadd.f32 0.0, %v6948
  %v6950 = vpop.f32.mrf.mxu0
  %6951 = vdwg.mxu0
  %v6956 = vunpack.c.l.b16 %v2597
  %v6957 = vunpack.c.l.b16 %v2598
  %v6958 = vunpack.c.l.b16 %v2599
  %v6959 = vunpack.c.l.b16 %v2600
  %v6960 = vpack.c.b16 %v6957, %v6956
  %v6961 = vpack.c.b16 %v6959, %v6958
  %v6962 = vsel %vm3151, %v1711, 0
  %v6965 = vsel %vm3151, %v6960, 0
  %v6968 = vsel %vm3151, %v6961, 0
  %6970 = vmatpush.bf16.xpose.msra.mxu0 0
  %6971 = vmatpush.bf16.xpose.msra.mxu0 0
  %6972 = vmatpush.bf16.xpose.msra.mxu0 0
  %6973 = vmatpush.bf16.xpose.msra.mxu0 0
  %6974 = vmatpush.bf16.xpose.msra.mxu0 0
  %6975 = vmatpush.bf16.xpose.msra.mxu0 0
  %6976 = vmatpush.bf16.xpose.msra.mxu0 %v6968
  %6977 = vmatpush.bf16.xpose.msra.mxu0 %v6965
  %6978 = vmatmul.bf16.gmra.mxu0 %v6962
  %v6979 = vpop.f32.mrf.mxu0
  %v6980 = vadd.f32 0.0, %v6979
  %v6981 = vpop.f32.mrf.mxu0
  %6982 = vdwg.mxu0
  %v6987 = vunpack.c.l.b16 %v2601
  %v6988 = vunpack.c.l.b16 %v2602
  %v6989 = vunpack.c.l.b16 %v2603
  %v6990 = vunpack.c.l.b16 %v2604
  %v6991 = vpack.c.b16 %v6988, %v6987
  %v6992 = vpack.c.b16 %v6990, %v6989
  %v6994 = vsel %vm3151, %v1714, 0
  %v6997 = vsel %vm3151, %v6991, 0
  %v7000 = vsel %vm3151, %v6992, 0
  %7002 = vmatpush.bf16.xpose.msra.mxu0 0
  %7003 = vmatpush.bf16.xpose.msra.mxu0 0
  %7004 = vmatpush.bf16.xpose.msra.mxu0 0
  %7005 = vmatpush.bf16.xpose.msra.mxu0 0
  %7006 = vmatpush.bf16.xpose.msra.mxu0 0
  %7007 = vmatpush.bf16.xpose.msra.mxu0 0
  %7008 = vmatpush.bf16.xpose.msra.mxu0 %v7000
  %7009 = vmatpush.bf16.xpose.msra.mxu0 %v6997
  %7010 = vmatmul.bf16.gmra.mxu0 %v6994
  %v7011 = vpop.f32.mrf.mxu0
  %v7012 = vadd.f32 0.0, %v7011
  %v7013 = vpop.f32.mrf.mxu0
  %7014 = vdwg.mxu0
  %v7019 = vunpack.c.l.b16 %v2605
  %v7020 = vunpack.c.l.b16 %v2606
  %v7021 = vunpack.c.l.b16 %v2607
  %v7022 = vunpack.c.l.b16 %v2608
  %v7023 = vpack.c.b16 %v7020, %v7019
  %v7024 = vpack.c.b16 %v7022, %v7021
  %v7026 = vsel %vm3151, %v1717, 0
  %v7029 = vsel %vm3151, %v7023, 0
  %v7032 = vsel %vm3151, %v7024, 0
  %7034 = vmatpush.bf16.xpose.msra.mxu0 0
  %7035 = vmatpush.bf16.xpose.msra.mxu0 0
  %7036 = vmatpush.bf16.xpose.msra.mxu0 0
  %7037 = vmatpush.bf16.xpose.msra.mxu0 0
  %7038 = vmatpush.bf16.xpose.msra.mxu0 0
  %7039 = vmatpush.bf16.xpose.msra.mxu0 0
  %7040 = vmatpush.bf16.xpose.msra.mxu0 %v7032
  %7041 = vmatpush.bf16.xpose.msra.mxu0 %v7029
  %7042 = vmatmul.bf16.gmra.mxu0 %v7026
  %v7043 = vpop.f32.mrf.mxu0
  %v7044 = vadd.f32 0.0, %v7043
  %v7045 = vpop.f32.mrf.mxu0
  %7046 = vdwg.mxu0
  %v7051 = vunpack.c.l.b16 %v2609
  %v7052 = vunpack.c.l.b16 %v2610
  %v7053 = vunpack.c.l.b16 %v2611
  %v7054 = vunpack.c.l.b16 %v2612
  %v7055 = vpack.c.b16 %v7052, %v7051
  %v7056 = vpack.c.b16 %v7054, %v7053
  %v7058 = vsel %vm3151, %v1720, 0
  %v7061 = vsel %vm3151, %v7055, 0
  %v7064 = vsel %vm3151, %v7056, 0
  %7066 = vmatpush.bf16.xpose.msra.mxu0 0
  %7067 = vmatpush.bf16.xpose.msra.mxu0 0
  %7068 = vmatpush.bf16.xpose.msra.mxu0 0
  %7069 = vmatpush.bf16.xpose.msra.mxu0 0
  %7070 = vmatpush.bf16.xpose.msra.mxu0 0
  %7071 = vmatpush.bf16.xpose.msra.mxu0 0
  %7072 = vmatpush.bf16.xpose.msra.mxu0 %v7064
  %7073 = vmatpush.bf16.xpose.msra.mxu0 %v7061
  %7074 = vmatmul.bf16.gmra.mxu0 %v7058
  %v7075 = vpop.f32.mrf.mxu0
  %v7076 = vadd.f32 0.0, %v7075
  %v7077 = vpop.f32.mrf.mxu0
  %7078 = vdwg.mxu0
  %v7083 = vunpack.c.l.b16 %v2613
  %v7084 = vunpack.c.l.b16 %v2614
  %v7085 = vunpack.c.l.b16 %v2615
  %v7086 = vunpack.c.l.b16 %v2616
  %v7087 = vpack.c.b16 %v7084, %v7083
  %v7088 = vpack.c.b16 %v7086, %v7085
  %v7089 = vsel %vm3151, %v1723, 0
  %v7092 = vsel %vm3151, %v7087, 0
  %v7095 = vsel %vm3151, %v7088, 0
  %7097 = vmatpush.bf16.xpose.msra.mxu0 0
  %7098 = vmatpush.bf16.xpose.msra.mxu0 0
  %7099 = vmatpush.bf16.xpose.msra.mxu0 0
  %7100 = vmatpush.bf16.xpose.msra.mxu0 0
  %7101 = vmatpush.bf16.xpose.msra.mxu0 0
  %7102 = vmatpush.bf16.xpose.msra.mxu0 0
  %7103 = vmatpush.bf16.xpose.msra.mxu0 %v7095
  %7104 = vmatpush.bf16.xpose.msra.mxu0 %v7092
  %7105 = vmatmul.bf16.gmra.mxu0 %v7089
  %v7106 = vpop.f32.mrf.mxu0
  %v7107 = vadd.f32 0.0, %v7106
  %v7108 = vpop.f32.mrf.mxu0
  %7109 = vdwg.mxu0
  %v7114 = vunpack.c.l.b16 %v2617
  %v7115 = vunpack.c.l.b16 %v2618
  %v7116 = vunpack.c.l.b16 %v2619
  %v7117 = vunpack.c.l.b16 %v2620
  %v7118 = vpack.c.b16 %v7115, %v7114
  %v7119 = vpack.c.b16 %v7117, %v7116
  %v7121 = vsel %vm3151, %v1726, 0
  %v7124 = vsel %vm3151, %v7118, 0
  %v7127 = vsel %vm3151, %v7119, 0
  %7129 = vmatpush.bf16.xpose.msra.mxu0 0
  %7130 = vmatpush.bf16.xpose.msra.mxu0 0
  %7131 = vmatpush.bf16.xpose.msra.mxu0 0
  %7132 = vmatpush.bf16.xpose.msra.mxu0 0
  %7133 = vmatpush.bf16.xpose.msra.mxu0 0
  %7134 = vmatpush.bf16.xpose.msra.mxu0 0
  %7135 = vmatpush.bf16.xpose.msra.mxu0 %v7127
  %7136 = vmatpush.bf16.xpose.msra.mxu0 %v7124
  %7137 = vmatmul.bf16.gmra.mxu0 %v7121
  %v7138 = vpop.f32.mrf.mxu0
  %v7139 = vadd.f32 0.0, %v7138
  %v7140 = vpop.f32.mrf.mxu0
  %7141 = vdwg.mxu0
  %v7146 = vunpack.c.l.b16 %v2621
  %v7147 = vunpack.c.l.b16 %v2622
  %v7148 = vunpack.c.l.b16 %v2623
  %v7149 = vunpack.c.l.b16 %v2624
  %v7150 = vpack.c.b16 %v7147, %v7146
  %v7151 = vpack.c.b16 %v7149, %v7148
  %v7153 = vsel %vm3151, %v1729, 0
  %v7156 = vsel %vm3151, %v7150, 0
  %v7159 = vsel %vm3151, %v7151, 0
  %7161 = vmatpush.bf16.xpose.msra.mxu0 0
  %7162 = vmatpush.bf16.xpose.msra.mxu0 0
  %7163 = vmatpush.bf16.xpose.msra.mxu0 0
  %7164 = vmatpush.bf16.xpose.msra.mxu0 0
  %7165 = vmatpush.bf16.xpose.msra.mxu0 0
  %7166 = vmatpush.bf16.xpose.msra.mxu0 0
  %7167 = vmatpush.bf16.xpose.msra.mxu0 %v7159
  %7168 = vmatpush.bf16.xpose.msra.mxu0 %v7156
  %7169 = vmatmul.bf16.gmra.mxu0 %v7153
  %v7170 = vpop.f32.mrf.mxu0
  %v7171 = vadd.f32 0.0, %v7170
  %v7172 = vpop.f32.mrf.mxu0
  %7173 = vdwg.mxu0
  %v7178 = vunpack.c.l.b16 %v2625
  %v7179 = vunpack.c.l.b16 %v2626
  %v7180 = vunpack.c.l.b16 %v2627
  %v7181 = vunpack.c.l.b16 %v2628
  %v7182 = vpack.c.b16 %v7179, %v7178
  %v7183 = vpack.c.b16 %v7181, %v7180
  %v7185 = vsel %vm3151, %v1732, 0
  %v7188 = vsel %vm3151, %v7182, 0
  %v7191 = vsel %vm3151, %v7183, 0
  %7193 = vmatpush.bf16.xpose.msra.mxu0 0
  %7194 = vmatpush.bf16.xpose.msra.mxu0 0
  %7195 = vmatpush.bf16.xpose.msra.mxu0 0
  %7196 = vmatpush.bf16.xpose.msra.mxu0 0
  %7197 = vmatpush.bf16.xpose.msra.mxu0 0
  %7198 = vmatpush.bf16.xpose.msra.mxu0 0
  %7199 = vmatpush.bf16.xpose.msra.mxu0 %v7191
  %7200 = vmatpush.bf16.xpose.msra.mxu0 %v7188
  %7201 = vmatmul.bf16.gmra.mxu0 %v7185
  %v7202 = vpop.f32.mrf.mxu0
  %v7203 = vadd.f32 0.0, %v7202
  %v7204 = vpop.f32.mrf.mxu0
  %7205 = vdwg.mxu0
  %v7210 = vunpack.c.l.b16 %v2629
  %v7211 = vunpack.c.l.b16 %v2630
  %v7212 = vunpack.c.l.b16 %v2631
  %v7213 = vunpack.c.l.b16 %v2632
  %v7214 = vpack.c.b16 %v7211, %v7210
  %v7215 = vpack.c.b16 %v7213, %v7212
  %v7216 = vsel %vm3151, %v1735, 0
  %v7219 = vsel %vm3151, %v7214, 0
  %v7222 = vsel %vm3151, %v7215, 0
  %7224 = vmatpush.bf16.xpose.msra.mxu0 0
  %7225 = vmatpush.bf16.xpose.msra.mxu0 0
  %7226 = vmatpush.bf16.xpose.msra.mxu0 0
  %7227 = vmatpush.bf16.xpose.msra.mxu0 0
  %7228 = vmatpush.bf16.xpose.msra.mxu0 0
  %7229 = vmatpush.bf16.xpose.msra.mxu0 0
  %7230 = vmatpush.bf16.xpose.msra.mxu0 %v7222
  %7231 = vmatpush.bf16.xpose.msra.mxu0 %v7219
  %7232 = vmatmul.bf16.gmra.mxu0 %v7216
  %v7233 = vpop.f32.mrf.mxu0
  %v7234 = vadd.f32 0.0, %v7233
  %v7235 = vpop.f32.mrf.mxu0
  %7236 = vdwg.mxu0
  %v7241 = vunpack.c.l.b16 %v2633
  %v7242 = vunpack.c.l.b16 %v2634
  %v7243 = vunpack.c.l.b16 %v2635
  %v7244 = vunpack.c.l.b16 %v2636
  %v7245 = vpack.c.b16 %v7242, %v7241
  %v7246 = vpack.c.b16 %v7244, %v7243
  %v7248 = vsel %vm3151, %v1738, 0
  %v7251 = vsel %vm3151, %v7245, 0
  %v7254 = vsel %vm3151, %v7246, 0
  %7256 = vmatpush.bf16.xpose.msra.mxu0 0
  %7257 = vmatpush.bf16.xpose.msra.mxu0 0
  %7258 = vmatpush.bf16.xpose.msra.mxu0 0
  %7259 = vmatpush.bf16.xpose.msra.mxu0 0
  %7260 = vmatpush.bf16.xpose.msra.mxu0 0
  %7261 = vmatpush.bf16.xpose.msra.mxu0 0
  %7262 = vmatpush.bf16.xpose.msra.mxu0 %v7254
  %7263 = vmatpush.bf16.xpose.msra.mxu0 %v7251
  %7264 = vmatmul.bf16.gmra.mxu0 %v7248
  %v7265 = vpop.f32.mrf.mxu0
  %v7266 = vadd.f32 0.0, %v7265
  %v7267 = vpop.f32.mrf.mxu0
  %7268 = vdwg.mxu0
  %v7273 = vunpack.c.l.b16 %v2637
  %v7274 = vunpack.c.l.b16 %v2638
  %v7275 = vunpack.c.l.b16 %v2639
  %v7276 = vunpack.c.l.b16 %v2640
  %v7277 = vpack.c.b16 %v7274, %v7273
  %v7278 = vpack.c.b16 %v7276, %v7275
  %v7280 = vsel %vm3151, %v1741, 0
  %v7283 = vsel %vm3151, %v7277, 0
  %v7286 = vsel %vm3151, %v7278, 0
  %7288 = vmatpush.bf16.xpose.msra.mxu0 0
  %7289 = vmatpush.bf16.xpose.msra.mxu0 0
  %7290 = vmatpush.bf16.xpose.msra.mxu0 0
  %7291 = vmatpush.bf16.xpose.msra.mxu0 0
  %7292 = vmatpush.bf16.xpose.msra.mxu0 0
  %7293 = vmatpush.bf16.xpose.msra.mxu0 0
  %7294 = vmatpush.bf16.xpose.msra.mxu0 %v7286
  %7295 = vmatpush.bf16.xpose.msra.mxu0 %v7283
  %7296 = vmatmul.bf16.gmra.mxu0 %v7280
  %v7297 = vpop.f32.mrf.mxu0
  %v7298 = vadd.f32 0.0, %v7297
  %v7299 = vpop.f32.mrf.mxu0
  %7300 = vdwg.mxu0
  %v7305 = vunpack.c.l.b16 %v2641
  %v7306 = vunpack.c.l.b16 %v2642
  %v7307 = vunpack.c.l.b16 %v2643
  %v7308 = vunpack.c.l.b16 %v2644
  %v7309 = vpack.c.b16 %v7306, %v7305
  %v7310 = vpack.c.b16 %v7308, %v7307
  %v7312 = vsel %vm3151, %v1744, 0
  %v7315 = vsel %vm3151, %v7309, 0
  %v7318 = vsel %vm3151, %v7310, 0
  %7320 = vmatpush.bf16.xpose.msra.mxu0 0
  %7321 = vmatpush.bf16.xpose.msra.mxu0 0
  %7322 = vmatpush.bf16.xpose.msra.mxu0 0
  %7323 = vmatpush.bf16.xpose.msra.mxu0 0
  %7324 = vmatpush.bf16.xpose.msra.mxu0 0
  %7325 = vmatpush.bf16.xpose.msra.mxu0 0
  %7326 = vmatpush.bf16.xpose.msra.mxu0 %v7318
  %7327 = vmatpush.bf16.xpose.msra.mxu0 %v7315
  %7328 = vmatmul.bf16.gmra.mxu0 %v7312
  %v7329 = vpop.f32.mrf.mxu0
  %v7330 = vadd.f32 0.0, %v7329
  %v7331 = vpop.f32.mrf.mxu0
  %7332 = vdwg.mxu0
  %v7337 = vunpack.c.l.b16 %v2645
  %v7338 = vunpack.c.l.b16 %v2646
  %v7339 = vunpack.c.l.b16 %v2647
  %v7340 = vunpack.c.l.b16 %v2648
  %v7341 = vpack.c.b16 %v7338, %v7337
  %v7342 = vpack.c.b16 %v7340, %v7339
  %v7343 = vsel %vm3151, %v1747, 0
  %v7346 = vsel %vm3151, %v7341, 0
  %v7349 = vsel %vm3151, %v7342, 0
  %7351 = vmatpush.bf16.xpose.msra.mxu0 0
  %7352 = vmatpush.bf16.xpose.msra.mxu0 0
  %7353 = vmatpush.bf16.xpose.msra.mxu0 0
  %7354 = vmatpush.bf16.xpose.msra.mxu0 0
  %7355 = vmatpush.bf16.xpose.msra.mxu0 0
  %7356 = vmatpush.bf16.xpose.msra.mxu0 0
  %7357 = vmatpush.bf16.xpose.msra.mxu0 %v7349
  %7358 = vmatpush.bf16.xpose.msra.mxu0 %v7346
  %7359 = vmatmul.bf16.gmra.mxu0 %v7343
  %v7360 = vpop.f32.mrf.mxu0
  %v7361 = vadd.f32 0.0, %v7360
  %v7362 = vpop.f32.mrf.mxu0
  %7363 = vdwg.mxu0
  %v7368 = vunpack.c.l.b16 %v2649
  %v7369 = vunpack.c.l.b16 %v2650
  %v7370 = vunpack.c.l.b16 %v2651
  %v7371 = vunpack.c.l.b16 %v2652
  %v7372 = vpack.c.b16 %v7369, %v7368
  %v7373 = vpack.c.b16 %v7371, %v7370
  %v7375 = vsel %vm3151, %v1750, 0
  %v7378 = vsel %vm3151, %v7372, 0
  %v7381 = vsel %vm3151, %v7373, 0
  %7383 = vmatpush.bf16.xpose.msra.mxu0 0
  %7384 = vmatpush.bf16.xpose.msra.mxu0 0
  %7385 = vmatpush.bf16.xpose.msra.mxu0 0
  %7386 = vmatpush.bf16.xpose.msra.mxu0 0
  %7387 = vmatpush.bf16.xpose.msra.mxu0 0
  %7388 = vmatpush.bf16.xpose.msra.mxu0 0
  %7389 = vmatpush.bf16.xpose.msra.mxu0 %v7381
  %7390 = vmatpush.bf16.xpose.msra.mxu0 %v7378
  %7391 = vmatmul.bf16.gmra.mxu0 %v7375
  %v7392 = vpop.f32.mrf.mxu0
  %v7393 = vadd.f32 0.0, %v7392
  %v7394 = vpop.f32.mrf.mxu0
  %7395 = vdwg.mxu0
  %v7400 = vunpack.c.l.b16 %v2653
  %v7401 = vunpack.c.l.b16 %v2654
  %v7402 = vunpack.c.l.b16 %v2655
  %v7403 = vunpack.c.l.b16 %v2656
  %v7404 = vpack.c.b16 %v7401, %v7400
  %v7405 = vpack.c.b16 %v7403, %v7402
  %v7407 = vsel %vm3151, %v1753, 0
  %v7410 = vsel %vm3151, %v7404, 0
  %v7413 = vsel %vm3151, %v7405, 0
  %7415 = vmatpush.bf16.xpose.msra.mxu0 0
  %7416 = vmatpush.bf16.xpose.msra.mxu0 0
  %7417 = vmatpush.bf16.xpose.msra.mxu0 0
  %7418 = vmatpush.bf16.xpose.msra.mxu0 0
  %7419 = vmatpush.bf16.xpose.msra.mxu0 0
  %7420 = vmatpush.bf16.xpose.msra.mxu0 0
  %7421 = vmatpush.bf16.xpose.msra.mxu0 %v7413
  %7422 = vmatpush.bf16.xpose.msra.mxu0 %v7410
  %7423 = vmatmul.bf16.gmra.mxu0 %v7407
  %v7424 = vpop.f32.mrf.mxu0
  %v7425 = vadd.f32 0.0, %v7424
  %v7426 = vpop.f32.mrf.mxu0
  %7427 = vdwg.mxu0
  %v7432 = vunpack.c.l.b16 %v2657
  %v7433 = vunpack.c.l.b16 %v2658
  %v7434 = vunpack.c.l.b16 %v2659
  %v7435 = vunpack.c.l.b16 %v2660
  %v7436 = vpack.c.b16 %v7433, %v7432
  %v7437 = vpack.c.b16 %v7435, %v7434
  %v7439 = vsel %vm3151, %v1756, 0
  %v7442 = vsel %vm3151, %v7436, 0
  %v7445 = vsel %vm3151, %v7437, 0
  %7447 = vmatpush.bf16.xpose.msra.mxu0 0
  %7448 = vmatpush.bf16.xpose.msra.mxu0 0
  %7449 = vmatpush.bf16.xpose.msra.mxu0 0
  %7450 = vmatpush.bf16.xpose.msra.mxu0 0
  %7451 = vmatpush.bf16.xpose.msra.mxu0 0
  %7452 = vmatpush.bf16.xpose.msra.mxu0 0
  %7453 = vmatpush.bf16.xpose.msra.mxu0 %v7445
  %7454 = vmatpush.bf16.xpose.msra.mxu0 %v7442
  %7455 = vmatmul.bf16.gmra.mxu0 %v7439
  %v7456 = vpop.f32.mrf.mxu0
  %v7457 = vadd.f32 0.0, %v7456
  %v7458 = vpop.f32.mrf.mxu0
  %7459 = vdwg.mxu0
  %v7464 = vunpack.c.l.b16 %v2661
  %v7465 = vunpack.c.l.b16 %v2662
  %v7466 = vunpack.c.l.b16 %v2663
  %v7467 = vunpack.c.l.b16 %v2664
  %v7468 = vpack.c.b16 %v7465, %v7464
  %v7469 = vpack.c.b16 %v7467, %v7466
  %v7470 = vsel %vm3151, %v1759, 0
  %v7473 = vsel %vm3151, %v7468, 0
  %v7476 = vsel %vm3151, %v7469, 0
  %7478 = vmatpush.bf16.xpose.msra.mxu0 0
  %7479 = vmatpush.bf16.xpose.msra.mxu0 0
  %7480 = vmatpush.bf16.xpose.msra.mxu0 0
  %7481 = vmatpush.bf16.xpose.msra.mxu0 0
  %7482 = vmatpush.bf16.xpose.msra.mxu0 0
  %7483 = vmatpush.bf16.xpose.msra.mxu0 0
  %7484 = vmatpush.bf16.xpose.msra.mxu0 %v7476
  %7485 = vmatpush.bf16.xpose.msra.mxu0 %v7473
  %7486 = vmatmul.bf16.gmra.mxu0 %v7470
  %v7487 = vpop.f32.mrf.mxu0
  %v7488 = vadd.f32 0.0, %v7487
  %v7489 = vpop.f32.mrf.mxu0
  %7490 = vdwg.mxu0
  %v7495 = vunpack.c.l.b16 %v2665
  %v7496 = vunpack.c.l.b16 %v2666
  %v7497 = vunpack.c.l.b16 %v2667
  %v7498 = vunpack.c.l.b16 %v2668
  %v7499 = vpack.c.b16 %v7496, %v7495
  %v7500 = vpack.c.b16 %v7498, %v7497
  %v7502 = vsel %vm3151, %v1762, 0
  %v7505 = vsel %vm3151, %v7499, 0
  %v7508 = vsel %vm3151, %v7500, 0
  %7510 = vmatpush.bf16.xpose.msra.mxu0 0
  %7511 = vmatpush.bf16.xpose.msra.mxu0 0
  %7512 = vmatpush.bf16.xpose.msra.mxu0 0
  %7513 = vmatpush.bf16.xpose.msra.mxu0 0
  %7514 = vmatpush.bf16.xpose.msra.mxu0 0
  %7515 = vmatpush.bf16.xpose.msra.mxu0 0
  %7516 = vmatpush.bf16.xpose.msra.mxu0 %v7508
  %7517 = vmatpush.bf16.xpose.msra.mxu0 %v7505
  %7518 = vmatmul.bf16.gmra.mxu0 %v7502
  %v7519 = vpop.f32.mrf.mxu0
  %v7520 = vadd.f32 0.0, %v7519
  %v7521 = vpop.f32.mrf.mxu0
  %7522 = vdwg.mxu0
  %v7527 = vunpack.c.l.b16 %v2669
  %v7528 = vunpack.c.l.b16 %v2670
  %v7529 = vunpack.c.l.b16 %v2671
  %v7530 = vunpack.c.l.b16 %v2672
  %v7531 = vpack.c.b16 %v7528, %v7527
  %v7532 = vpack.c.b16 %v7530, %v7529
  %v7534 = vsel %vm3151, %v1765, 0
  %v7537 = vsel %vm3151, %v7531, 0
  %v7540 = vsel %vm3151, %v7532, 0
  %7542 = vmatpush.bf16.xpose.msra.mxu0 0
  %7543 = vmatpush.bf16.xpose.msra.mxu0 0
  %7544 = vmatpush.bf16.xpose.msra.mxu0 0
  %7545 = vmatpush.bf16.xpose.msra.mxu0 0
  %7546 = vmatpush.bf16.xpose.msra.mxu0 0
  %7547 = vmatpush.bf16.xpose.msra.mxu0 0
  %7548 = vmatpush.bf16.xpose.msra.mxu0 %v7540
  %7549 = vmatpush.bf16.xpose.msra.mxu0 %v7537
  %7550 = vmatmul.bf16.gmra.mxu0 %v7534
  %v7551 = vpop.f32.mrf.mxu0
  %v7552 = vadd.f32 0.0, %v7551
  %v7553 = vpop.f32.mrf.mxu0
  %7554 = vdwg.mxu0
  %v7559 = vunpack.c.l.b16 %v2673
  %v7560 = vunpack.c.l.b16 %v2674
  %v7561 = vunpack.c.l.b16 %v2675
  %v7562 = vunpack.c.l.b16 %v2676
  %v7563 = vpack.c.b16 %v7560, %v7559
  %v7564 = vpack.c.b16 %v7562, %v7561
  %v7566 = vsel %vm3151, %v1768, 0
  %v7569 = vsel %vm3151, %v7563, 0
  %v7572 = vsel %vm3151, %v7564, 0
  %7574 = vmatpush.bf16.xpose.msra.mxu0 0
  %7575 = vmatpush.bf16.xpose.msra.mxu0 0
  %7576 = vmatpush.bf16.xpose.msra.mxu0 0
  %7577 = vmatpush.bf16.xpose.msra.mxu0 0
  %7578 = vmatpush.bf16.xpose.msra.mxu0 0
  %7579 = vmatpush.bf16.xpose.msra.mxu0 0
  %7580 = vmatpush.bf16.xpose.msra.mxu0 %v7572
  %7581 = vmatpush.bf16.xpose.msra.mxu0 %v7569
  %7582 = vmatmul.bf16.gmra.mxu0 %v7566
  %v7583 = vpop.f32.mrf.mxu0
  %v7584 = vadd.f32 0.0, %v7583
  %v7585 = vpop.f32.mrf.mxu0
  %7586 = vdwg.mxu0
  %v7591 = vunpack.c.l.b16 %v2677
  %v7592 = vunpack.c.l.b16 %v2678
  %v7593 = vunpack.c.l.b16 %v2679
  %v7594 = vunpack.c.l.b16 %v2680
  %v7595 = vpack.c.b16 %v7592, %v7591
  %v7596 = vpack.c.b16 %v7594, %v7593
  %v7597 = vsel %vm3151, %v1771, 0
  %v7600 = vsel %vm3151, %v7595, 0
  %v7603 = vsel %vm3151, %v7596, 0
  %7605 = vmatpush.bf16.xpose.msra.mxu0 0
  %7606 = vmatpush.bf16.xpose.msra.mxu0 0
  %7607 = vmatpush.bf16.xpose.msra.mxu0 0
  %7608 = vmatpush.bf16.xpose.msra.mxu0 0
  %7609 = vmatpush.bf16.xpose.msra.mxu0 0
  %7610 = vmatpush.bf16.xpose.msra.mxu0 0
  %7611 = vmatpush.bf16.xpose.msra.mxu0 %v7603
  %7612 = vmatpush.bf16.xpose.msra.mxu0 %v7600
  %7613 = vmatmul.bf16.gmra.mxu0 %v7597
  %v7614 = vpop.f32.mrf.mxu0
  %v7615 = vadd.f32 0.0, %v7614
  %v7616 = vpop.f32.mrf.mxu0
  %7617 = vdwg.mxu0
  %v7622 = vunpack.c.l.b16 %v2681
  %v7623 = vunpack.c.l.b16 %v2682
  %v7624 = vunpack.c.l.b16 %v2683
  %v7625 = vunpack.c.l.b16 %v2684
  %v7626 = vpack.c.b16 %v7623, %v7622
  %v7627 = vpack.c.b16 %v7625, %v7624
  %v7629 = vsel %vm3151, %v1774, 0
  %v7632 = vsel %vm3151, %v7626, 0
  %v7635 = vsel %vm3151, %v7627, 0
  %7637 = vmatpush.bf16.xpose.msra.mxu0 0
  %7638 = vmatpush.bf16.xpose.msra.mxu0 0
  %7639 = vmatpush.bf16.xpose.msra.mxu0 0
  %7640 = vmatpush.bf16.xpose.msra.mxu0 0
  %7641 = vmatpush.bf16.xpose.msra.mxu0 0
  %7642 = vmatpush.bf16.xpose.msra.mxu0 0
  %7643 = vmatpush.bf16.xpose.msra.mxu0 %v7635
  %7644 = vmatpush.bf16.xpose.msra.mxu0 %v7632
  %7645 = vmatmul.bf16.gmra.mxu0 %v7629
  %v7646 = vpop.f32.mrf.mxu0
  %v7647 = vadd.f32 0.0, %v7646
  %v7648 = vpop.f32.mrf.mxu0
  %7649 = vdwg.mxu0
  %v7654 = vunpack.c.l.b16 %v2685
  %v7655 = vunpack.c.l.b16 %v2686
  %v7656 = vunpack.c.l.b16 %v2687
  %v7657 = vunpack.c.l.b16 %v2688
  %v7658 = vpack.c.b16 %v7655, %v7654
  %v7659 = vpack.c.b16 %v7657, %v7656
  %v7661 = vsel %vm3151, %v1777, 0
  %v7664 = vsel %vm3151, %v7658, 0
  %v7667 = vsel %vm3151, %v7659, 0
  %7669 = vmatpush.bf16.xpose.msra.mxu0 0
  %7670 = vmatpush.bf16.xpose.msra.mxu0 0
  %7671 = vmatpush.bf16.xpose.msra.mxu0 0
  %7672 = vmatpush.bf16.xpose.msra.mxu0 0
  %7673 = vmatpush.bf16.xpose.msra.mxu0 0
  %7674 = vmatpush.bf16.xpose.msra.mxu0 0
  %7675 = vmatpush.bf16.xpose.msra.mxu0 %v7667
  %7676 = vmatpush.bf16.xpose.msra.mxu0 %v7664
  %7677 = vmatmul.bf16.gmra.mxu0 %v7661
  %v7678 = vpop.f32.mrf.mxu0
  %v7679 = vadd.f32 0.0, %v7678
  %v7680 = vpop.f32.mrf.mxu0
  %7681 = vdwg.mxu0
  %v7686 = vunpack.c.l.b16 %v2689
  %v7687 = vunpack.c.l.b16 %v2690
  %v7688 = vunpack.c.l.b16 %v2691
  %v7689 = vunpack.c.l.b16 %v2692
  %v7690 = vpack.c.b16 %v7687, %v7686
  %v7691 = vpack.c.b16 %v7689, %v7688
  %v7693 = vsel %vm3151, %v1780, 0
  %v7696 = vsel %vm3151, %v7690, 0
  %v7699 = vsel %vm3151, %v7691, 0
  %7701 = vmatpush.bf16.xpose.msra.mxu0 0
  %7702 = vmatpush.bf16.xpose.msra.mxu0 0
  %7703 = vmatpush.bf16.xpose.msra.mxu0 0
  %7704 = vmatpush.bf16.xpose.msra.mxu0 0
  %7705 = vmatpush.bf16.xpose.msra.mxu0 0
  %7706 = vmatpush.bf16.xpose.msra.mxu0 0
  %7707 = vmatpush.bf16.xpose.msra.mxu0 %v7699
  %7708 = vmatpush.bf16.xpose.msra.mxu0 %v7696
  %7709 = vmatmul.bf16.gmra.mxu0 %v7693
  %v7710 = vpop.f32.mrf.mxu0
  %v7711 = vadd.f32 0.0, %v7710
  %v7712 = vpop.f32.mrf.mxu0
  %7713 = vdwg.mxu0
  %v7718 = vunpack.c.l.b16 %v2693
  %v7719 = vunpack.c.l.b16 %v2694
  %v7720 = vunpack.c.l.b16 %v2695
  %v7721 = vunpack.c.l.b16 %v2696
  %v7722 = vpack.c.b16 %v7719, %v7718
  %v7723 = vpack.c.b16 %v7721, %v7720
  %v7724 = vsel %vm3151, %v1783, 0
  %v7727 = vsel %vm3151, %v7722, 0
  %v7730 = vsel %vm3151, %v7723, 0
  %7732 = vmatpush.bf16.xpose.msra.mxu0 0
  %7733 = vmatpush.bf16.xpose.msra.mxu0 0
  %7734 = vmatpush.bf16.xpose.msra.mxu0 0
  %7735 = vmatpush.bf16.xpose.msra.mxu0 0
  %7736 = vmatpush.bf16.xpose.msra.mxu0 0
  %7737 = vmatpush.bf16.xpose.msra.mxu0 0
  %7738 = vmatpush.bf16.xpose.msra.mxu0 %v7730
  %7739 = vmatpush.bf16.xpose.msra.mxu0 %v7727
  %7740 = vmatmul.bf16.gmra.mxu0 %v7724
  %v7741 = vpop.f32.mrf.mxu0
  %v7742 = vadd.f32 0.0, %v7741
  %v7743 = vpop.f32.mrf.mxu0
  %7744 = vdwg.mxu0
  %v7749 = vunpack.c.l.b16 %v2697
  %v7750 = vunpack.c.l.b16 %v2698
  %v7751 = vunpack.c.l.b16 %v2699
  %v7752 = vunpack.c.l.b16 %v2700
  %v7753 = vpack.c.b16 %v7750, %v7749
  %v7754 = vpack.c.b16 %v7752, %v7751
  %v7756 = vsel %vm3151, %v1786, 0
  %v7759 = vsel %vm3151, %v7753, 0
  %v7762 = vsel %vm3151, %v7754, 0
  %7764 = vmatpush.bf16.xpose.msra.mxu0 0
  %7765 = vmatpush.bf16.xpose.msra.mxu0 0
  %7766 = vmatpush.bf16.xpose.msra.mxu0 0
  %7767 = vmatpush.bf16.xpose.msra.mxu0 0
  %7768 = vmatpush.bf16.xpose.msra.mxu0 0
  %7769 = vmatpush.bf16.xpose.msra.mxu0 0
  %7770 = vmatpush.bf16.xpose.msra.mxu0 %v7762
  %7771 = vmatpush.bf16.xpose.msra.mxu0 %v7759
  %7772 = vmatmul.bf16.gmra.mxu0 %v7756
  %v7773 = vpop.f32.mrf.mxu0
  %v7774 = vadd.f32 0.0, %v7773
  %v7775 = vpop.f32.mrf.mxu0
  %7776 = vdwg.mxu0
  %v7781 = vunpack.c.l.b16 %v2701
  %v7782 = vunpack.c.l.b16 %v2702
  %v7783 = vunpack.c.l.b16 %v2703
  %v7784 = vunpack.c.l.b16 %v2704
  %v7785 = vpack.c.b16 %v7782, %v7781
  %v7786 = vpack.c.b16 %v7784, %v7783
  %v7788 = vsel %vm3151, %v1789, 0
  %v7791 = vsel %vm3151, %v7785, 0
  %v7794 = vsel %vm3151, %v7786, 0
  %7796 = vmatpush.bf16.xpose.msra.mxu0 0
  %7797 = vmatpush.bf16.xpose.msra.mxu0 0
  %7798 = vmatpush.bf16.xpose.msra.mxu0 0
  %7799 = vmatpush.bf16.xpose.msra.mxu0 0
  %7800 = vmatpush.bf16.xpose.msra.mxu0 0
  %7801 = vmatpush.bf16.xpose.msra.mxu0 0
  %7802 = vmatpush.bf16.xpose.msra.mxu0 %v7794
  %7803 = vmatpush.bf16.xpose.msra.mxu0 %v7791
  %7804 = vmatmul.bf16.gmra.mxu0 %v7788
  %v7805 = vpop.f32.mrf.mxu0
  %v7806 = vadd.f32 0.0, %v7805
  %v7807 = vpop.f32.mrf.mxu0
  %7808 = vdwg.mxu0
  %v7813 = vunpack.c.l.b16 %v2705
  %v7814 = vunpack.c.l.b16 %v2706
  %v7815 = vunpack.c.l.b16 %v2707
  %v7816 = vunpack.c.l.b16 %v2708
  %v7817 = vpack.c.b16 %v7814, %v7813
  %v7818 = vpack.c.b16 %v7816, %v7815
  %v7820 = vsel %vm3151, %v1792, 0
  %v7823 = vsel %vm3151, %v7817, 0
  %v7826 = vsel %vm3151, %v7818, 0
  %7828 = vmatpush.bf16.xpose.msra.mxu0 0
  %7829 = vmatpush.bf16.xpose.msra.mxu0 0
  %7830 = vmatpush.bf16.xpose.msra.mxu0 0
  %7831 = vmatpush.bf16.xpose.msra.mxu0 0
  %7832 = vmatpush.bf16.xpose.msra.mxu0 0
  %7833 = vmatpush.bf16.xpose.msra.mxu0 0
  %7834 = vmatpush.bf16.xpose.msra.mxu0 %v7826
  %7835 = vmatpush.bf16.xpose.msra.mxu0 %v7823
  %7836 = vmatmul.bf16.gmra.mxu0 %v7820
  %v7837 = vpop.f32.mrf.mxu0
  %v7838 = vadd.f32 0.0, %v7837
  %v7839 = vpop.f32.mrf.mxu0
  %7840 = vdwg.mxu0
  %v7845 = vunpack.c.l.b16 %v2709
  %v7846 = vunpack.c.l.b16 %v2710
  %v7847 = vunpack.c.l.b16 %v2711
  %v7848 = vunpack.c.l.b16 %v2712
  %v7849 = vpack.c.b16 %v7846, %v7845
  %v7850 = vpack.c.b16 %v7848, %v7847
  %v7851 = vsel %vm3151, %v1795, 0
  %v7854 = vsel %vm3151, %v7849, 0
  %v7857 = vsel %vm3151, %v7850, 0
  %7859 = vmatpush.bf16.xpose.msra.mxu0 0
  %7860 = vmatpush.bf16.xpose.msra.mxu0 0
  %7861 = vmatpush.bf16.xpose.msra.mxu0 0
  %7862 = vmatpush.bf16.xpose.msra.mxu0 0
  %7863 = vmatpush.bf16.xpose.msra.mxu0 0
  %7864 = vmatpush.bf16.xpose.msra.mxu0 0
  %7865 = vmatpush.bf16.xpose.msra.mxu0 %v7857
  %7866 = vmatpush.bf16.xpose.msra.mxu0 %v7854
  %7867 = vmatmul.bf16.gmra.mxu0 %v7851
  %v7868 = vpop.f32.mrf.mxu0
  %v7869 = vadd.f32 0.0, %v7868
  %v7870 = vpop.f32.mrf.mxu0
  %7871 = vdwg.mxu0
  %v7876 = vunpack.c.l.b16 %v2713
  %v7877 = vunpack.c.l.b16 %v2714
  %v7878 = vunpack.c.l.b16 %v2715
  %v7879 = vunpack.c.l.b16 %v2716
  %v7880 = vpack.c.b16 %v7877, %v7876
  %v7881 = vpack.c.b16 %v7879, %v7878
  %v7883 = vsel %vm3151, %v1798, 0
  %v7886 = vsel %vm3151, %v7880, 0
  %v7889 = vsel %vm3151, %v7881, 0
  %7891 = vmatpush.bf16.xpose.msra.mxu0 0
  %7892 = vmatpush.bf16.xpose.msra.mxu0 0
  %7893 = vmatpush.bf16.xpose.msra.mxu0 0
  %7894 = vmatpush.bf16.xpose.msra.mxu0 0
  %7895 = vmatpush.bf16.xpose.msra.mxu0 0
  %7896 = vmatpush.bf16.xpose.msra.mxu0 0
  %7897 = vmatpush.bf16.xpose.msra.mxu0 %v7889
  %7898 = vmatpush.bf16.xpose.msra.mxu0 %v7886
  %7899 = vmatmul.bf16.gmra.mxu0 %v7883
  %v7900 = vpop.f32.mrf.mxu0
  %v7901 = vadd.f32 0.0, %v7900
  %v7902 = vpop.f32.mrf.mxu0
  %7903 = vdwg.mxu0
  %v7908 = vunpack.c.l.b16 %v2717
  %v7909 = vunpack.c.l.b16 %v2718
  %v7910 = vunpack.c.l.b16 %v2719
  %v7911 = vunpack.c.l.b16 %v2720
  %v7912 = vpack.c.b16 %v7909, %v7908
  %v7913 = vpack.c.b16 %v7911, %v7910
  %v7915 = vsel %vm3151, %v1801, 0
  %v7918 = vsel %vm3151, %v7912, 0
  %v7921 = vsel %vm3151, %v7913, 0
  %7923 = vmatpush.bf16.xpose.msra.mxu0 0
  %7924 = vmatpush.bf16.xpose.msra.mxu0 0
  %7925 = vmatpush.bf16.xpose.msra.mxu0 0
  %7926 = vmatpush.bf16.xpose.msra.mxu0 0
  %7927 = vmatpush.bf16.xpose.msra.mxu0 0
  %7928 = vmatpush.bf16.xpose.msra.mxu0 0
  %7929 = vmatpush.bf16.xpose.msra.mxu0 %v7921
  %7930 = vmatpush.bf16.xpose.msra.mxu0 %v7918
  %7931 = vmatmul.bf16.gmra.mxu0 %v7915
  %v7932 = vpop.f32.mrf.mxu0
  %v7933 = vadd.f32 0.0, %v7932
  %v7934 = vpop.f32.mrf.mxu0
  %7935 = vdwg.mxu0
  %v7940 = vunpack.c.l.b16 %v2721
  %v7941 = vunpack.c.l.b16 %v2722
  %v7942 = vunpack.c.l.b16 %v2723
  %v7943 = vunpack.c.l.b16 %v2724
  %v7944 = vpack.c.b16 %v7941, %v7940
  %v7945 = vpack.c.b16 %v7943, %v7942
  %v7947 = vsel %vm3151, %v1804, 0
  %v7950 = vsel %vm3151, %v7944, 0
  %v7953 = vsel %vm3151, %v7945, 0
  %7955 = vmatpush.bf16.xpose.msra.mxu0 0
  %7956 = vmatpush.bf16.xpose.msra.mxu0 0
  %7957 = vmatpush.bf16.xpose.msra.mxu0 0
  %7958 = vmatpush.bf16.xpose.msra.mxu0 0
  %7959 = vmatpush.bf16.xpose.msra.mxu0 0
  %7960 = vmatpush.bf16.xpose.msra.mxu0 0
  %7961 = vmatpush.bf16.xpose.msra.mxu0 %v7953
  %7962 = vmatpush.bf16.xpose.msra.mxu0 %v7950
  %7963 = vmatmul.bf16.gmra.mxu0 %v7947
  %v7964 = vpop.f32.mrf.mxu0
  %v7965 = vadd.f32 0.0, %v7964
  %v7966 = vpop.f32.mrf.mxu0
  %7967 = vdwg.mxu0
  %v7972 = vunpack.c.l.b16 %v2725
  %v7973 = vunpack.c.l.b16 %v2726
  %v7974 = vunpack.c.l.b16 %v2727
  %v7975 = vunpack.c.l.b16 %v2728
  %v7976 = vpack.c.b16 %v7973, %v7972
  %v7977 = vpack.c.b16 %v7975, %v7974
  %v7978 = vsel %vm3151, %v1807, 0
  %v7981 = vsel %vm3151, %v7976, 0
  %v7984 = vsel %vm3151, %v7977, 0
  %7986 = vmatpush.bf16.xpose.msra.mxu0 0
  %7987 = vmatpush.bf16.xpose.msra.mxu0 0
  %7988 = vmatpush.bf16.xpose.msra.mxu0 0
  %7989 = vmatpush.bf16.xpose.msra.mxu0 0
  %7990 = vmatpush.bf16.xpose.msra.mxu0 0
  %7991 = vmatpush.bf16.xpose.msra.mxu0 0
  %7992 = vmatpush.bf16.xpose.msra.mxu0 %v7984
  %7993 = vmatpush.bf16.xpose.msra.mxu0 %v7981
  %7994 = vmatmul.bf16.gmra.mxu0 %v7978
  %v7995 = vpop.f32.mrf.mxu0
  %v7996 = vadd.f32 0.0, %v7995
  %v7997 = vpop.f32.mrf.mxu0
  %7998 = vdwg.mxu0
  %v8003 = vunpack.c.l.b16 %v2729
  %v8004 = vunpack.c.l.b16 %v2730
  %v8005 = vunpack.c.l.b16 %v2731
  %v8006 = vunpack.c.l.b16 %v2732
  %v8007 = vpack.c.b16 %v8004, %v8003
  %v8008 = vpack.c.b16 %v8006, %v8005
  %v8010 = vsel %vm3151, %v1810, 0
  %v8013 = vsel %vm3151, %v8007, 0
  %v8016 = vsel %vm3151, %v8008, 0
  %8018 = vmatpush.bf16.xpose.msra.mxu0 0
  %8019 = vmatpush.bf16.xpose.msra.mxu0 0
  %8020 = vmatpush.bf16.xpose.msra.mxu0 0
  %8021 = vmatpush.bf16.xpose.msra.mxu0 0
  %8022 = vmatpush.bf16.xpose.msra.mxu0 0
  %8023 = vmatpush.bf16.xpose.msra.mxu0 0
  %8024 = vmatpush.bf16.xpose.msra.mxu0 %v8016
  %8025 = vmatpush.bf16.xpose.msra.mxu0 %v8013
  %8026 = vmatmul.bf16.gmra.mxu0 %v8010
  %v8027 = vpop.f32.mrf.mxu0
  %v8028 = vadd.f32 0.0, %v8027
  %v8029 = vpop.f32.mrf.mxu0
  %8030 = vdwg.mxu0
  %v8035 = vunpack.c.l.b16 %v2733
  %v8036 = vunpack.c.l.b16 %v2734
  %v8037 = vunpack.c.l.b16 %v2735
  %v8038 = vunpack.c.l.b16 %v2736
  %v8039 = vpack.c.b16 %v8036, %v8035
  %v8040 = vpack.c.b16 %v8038, %v8037
  %v8042 = vsel %vm3151, %v1813, 0
  %v8045 = vsel %vm3151, %v8039, 0
  %v8048 = vsel %vm3151, %v8040, 0
  %8050 = vmatpush.bf16.xpose.msra.mxu0 0
  %8051 = vmatpush.bf16.xpose.msra.mxu0 0
  %8052 = vmatpush.bf16.xpose.msra.mxu0 0
  %8053 = vmatpush.bf16.xpose.msra.mxu0 0
  %8054 = vmatpush.bf16.xpose.msra.mxu0 0
  %8055 = vmatpush.bf16.xpose.msra.mxu0 0
  %8056 = vmatpush.bf16.xpose.msra.mxu0 %v8048
  %8057 = vmatpush.bf16.xpose.msra.mxu0 %v8045
  %8058 = vmatmul.bf16.gmra.mxu0 %v8042
  %v8059 = vpop.f32.mrf.mxu0
  %v8060 = vadd.f32 0.0, %v8059
  %v8061 = vpop.f32.mrf.mxu0
  %8062 = vdwg.mxu0
  %v8067 = vunpack.c.l.b16 %v2737
  %v8068 = vunpack.c.l.b16 %v2738
  %v8069 = vunpack.c.l.b16 %v2739
  %v8070 = vunpack.c.l.b16 %v2740
  %v8071 = vpack.c.b16 %v8068, %v8067
  %v8072 = vpack.c.b16 %v8070, %v8069
  %v8074 = vsel %vm3151, %v1816, 0
  %v8077 = vsel %vm3151, %v8071, 0
  %v8080 = vsel %vm3151, %v8072, 0
  %8082 = vmatpush.bf16.xpose.msra.mxu0 0
  %8083 = vmatpush.bf16.xpose.msra.mxu0 0
  %8084 = vmatpush.bf16.xpose.msra.mxu0 0
  %8085 = vmatpush.bf16.xpose.msra.mxu0 0
  %8086 = vmatpush.bf16.xpose.msra.mxu0 0
  %8087 = vmatpush.bf16.xpose.msra.mxu0 0
  %8088 = vmatpush.bf16.xpose.msra.mxu0 %v8080
  %8089 = vmatpush.bf16.xpose.msra.mxu0 %v8077
  %8090 = vmatmul.bf16.gmra.mxu0 %v8074
  %v8091 = vpop.f32.mrf.mxu0
  %v8092 = vadd.f32 0.0, %v8091
  %v8093 = vpop.f32.mrf.mxu0
  %8094 = vdwg.mxu0
  %v8099 = vunpack.c.l.b16 %v2741
  %v8100 = vunpack.c.l.b16 %v2742
  %v8101 = vunpack.c.l.b16 %v2743
  %v8102 = vunpack.c.l.b16 %v2744
  %v8103 = vpack.c.b16 %v8100, %v8099
  %v8104 = vpack.c.b16 %v8102, %v8101
  %v8105 = vsel %vm3151, %v1819, 0
  %v8108 = vsel %vm3151, %v8103, 0
  %v8111 = vsel %vm3151, %v8104, 0
  %8113 = vmatpush.bf16.xpose.msra.mxu0 0
  %8114 = vmatpush.bf16.xpose.msra.mxu0 0
  %8115 = vmatpush.bf16.xpose.msra.mxu0 0
  %8116 = vmatpush.bf16.xpose.msra.mxu0 0
  %8117 = vmatpush.bf16.xpose.msra.mxu0 0
  %8118 = vmatpush.bf16.xpose.msra.mxu0 0
  %8119 = vmatpush.bf16.xpose.msra.mxu0 %v8111
  %8120 = vmatpush.bf16.xpose.msra.mxu0 %v8108
  %8121 = vmatmul.bf16.gmra.mxu0 %v8105
  %v8122 = vpop.f32.mrf.mxu0
  %v8123 = vadd.f32 0.0, %v8122
  %v8124 = vpop.f32.mrf.mxu0
  %8125 = vdwg.mxu0
  %v8130 = vunpack.c.l.b16 %v2745
  %v8131 = vunpack.c.l.b16 %v2746
  %v8132 = vunpack.c.l.b16 %v2747
  %v8133 = vunpack.c.l.b16 %v2748
  %v8134 = vpack.c.b16 %v8131, %v8130
  %v8135 = vpack.c.b16 %v8133, %v8132
  %v8137 = vsel %vm3151, %v1822, 0
  %v8140 = vsel %vm3151, %v8134, 0
  %v8143 = vsel %vm3151, %v8135, 0
  %8145 = vmatpush.bf16.xpose.msra.mxu0 0
  %8146 = vmatpush.bf16.xpose.msra.mxu0 0
  %8147 = vmatpush.bf16.xpose.msra.mxu0 0
  %8148 = vmatpush.bf16.xpose.msra.mxu0 0
  %8149 = vmatpush.bf16.xpose.msra.mxu0 0
  %8150 = vmatpush.bf16.xpose.msra.mxu0 0
  %8151 = vmatpush.bf16.xpose.msra.mxu0 %v8143
  %8152 = vmatpush.bf16.xpose.msra.mxu0 %v8140
  %8153 = vmatmul.bf16.gmra.mxu0 %v8137
  %v8154 = vpop.f32.mrf.mxu0
  %v8155 = vadd.f32 0.0, %v8154
  %v8156 = vpop.f32.mrf.mxu0
  %8157 = vdwg.mxu0
  %v8162 = vunpack.c.l.b16 %v2749
  %v8163 = vunpack.c.l.b16 %v2750
  %v8164 = vunpack.c.l.b16 %v2751
  %v8165 = vunpack.c.l.b16 %v2752
  %v8166 = vpack.c.b16 %v8163, %v8162
  %v8167 = vpack.c.b16 %v8165, %v8164
  %v8169 = vsel %vm3151, %v1825, 0
  %v8172 = vsel %vm3151, %v8166, 0
  %v8175 = vsel %vm3151, %v8167, 0
  %8177 = vmatpush.bf16.xpose.msra.mxu0 0
  %8178 = vmatpush.bf16.xpose.msra.mxu0 0
  %8179 = vmatpush.bf16.xpose.msra.mxu0 0
  %8180 = vmatpush.bf16.xpose.msra.mxu0 0
  %8181 = vmatpush.bf16.xpose.msra.mxu0 0
  %8182 = vmatpush.bf16.xpose.msra.mxu0 0
  %8183 = vmatpush.bf16.xpose.msra.mxu0 %v8175
  %8184 = vmatpush.bf16.xpose.msra.mxu0 %v8172
  %8185 = vmatmul.bf16.gmra.mxu0 %v8169
  %v8186 = vpop.f32.mrf.mxu0
  %v8187 = vadd.f32 0.0, %v8186
  %v8188 = vpop.f32.mrf.mxu0
  %8189 = vdwg.mxu0
  %v8194 = vunpack.c.l.b16 %v2753
  %v8195 = vunpack.c.l.b16 %v2754
  %v8196 = vunpack.c.l.b16 %v2755
  %v8197 = vunpack.c.l.b16 %v2756
  %v8198 = vpack.c.b16 %v8195, %v8194
  %v8199 = vpack.c.b16 %v8197, %v8196
  %v8201 = vsel %vm3151, %v1828, 0
  %v8204 = vsel %vm3151, %v8198, 0
  %v8207 = vsel %vm3151, %v8199, 0
  %8209 = vmatpush.bf16.xpose.msra.mxu0 0
  %8210 = vmatpush.bf16.xpose.msra.mxu0 0
  %8211 = vmatpush.bf16.xpose.msra.mxu0 0
  %8212 = vmatpush.bf16.xpose.msra.mxu0 0
  %8213 = vmatpush.bf16.xpose.msra.mxu0 0
  %8214 = vmatpush.bf16.xpose.msra.mxu0 0
  %8215 = vmatpush.bf16.xpose.msra.mxu0 %v8207
  %8216 = vmatpush.bf16.xpose.msra.mxu0 %v8204
  %8217 = vmatmul.bf16.gmra.mxu0 %v8201
  %v8218 = vpop.f32.mrf.mxu0
  %v8219 = vadd.f32 0.0, %v8218
  %v8220 = vpop.f32.mrf.mxu0
  %8221 = vdwg.mxu0
  %v8226 = vunpack.c.l.b16 %v2757
  %v8227 = vunpack.c.l.b16 %v2758
  %v8228 = vunpack.c.l.b16 %v2759
  %v8229 = vunpack.c.l.b16 %v2760
  %v8230 = vpack.c.b16 %v8227, %v8226
  %v8231 = vpack.c.b16 %v8229, %v8228
  %v8232 = vsel %vm3151, %v1831, 0
  %v8235 = vsel %vm3151, %v8230, 0
  %v8238 = vsel %vm3151, %v8231, 0
  %8240 = vmatpush.bf16.xpose.msra.mxu0 0
  %8241 = vmatpush.bf16.xpose.msra.mxu0 0
  %8242 = vmatpush.bf16.xpose.msra.mxu0 0
  %8243 = vmatpush.bf16.xpose.msra.mxu0 0
  %8244 = vmatpush.bf16.xpose.msra.mxu0 0
  %8245 = vmatpush.bf16.xpose.msra.mxu0 0
  %8246 = vmatpush.bf16.xpose.msra.mxu0 %v8238
  %8247 = vmatpush.bf16.xpose.msra.mxu0 %v8235
  %8248 = vmatmul.bf16.gmra.mxu0 %v8232
  %v8249 = vpop.f32.mrf.mxu0
  %v8250 = vadd.f32 0.0, %v8249
  %v8251 = vpop.f32.mrf.mxu0
  %8252 = vdwg.mxu0
  %v8257 = vunpack.c.l.b16 %v2761
  %v8258 = vunpack.c.l.b16 %v2762
  %v8259 = vunpack.c.l.b16 %v2763
  %v8260 = vunpack.c.l.b16 %v2764
  %v8261 = vpack.c.b16 %v8258, %v8257
  %v8262 = vpack.c.b16 %v8260, %v8259
  %v8264 = vsel %vm3151, %v1834, 0
  %v8267 = vsel %vm3151, %v8261, 0
  %v8270 = vsel %vm3151, %v8262, 0
  %8272 = vmatpush.bf16.xpose.msra.mxu0 0
  %8273 = vmatpush.bf16.xpose.msra.mxu0 0
  %8274 = vmatpush.bf16.xpose.msra.mxu0 0
  %8275 = vmatpush.bf16.xpose.msra.mxu0 0
  %8276 = vmatpush.bf16.xpose.msra.mxu0 0
  %8277 = vmatpush.bf16.xpose.msra.mxu0 0
  %8278 = vmatpush.bf16.xpose.msra.mxu0 %v8270
  %8279 = vmatpush.bf16.xpose.msra.mxu0 %v8267
  %8280 = vmatmul.bf16.gmra.mxu0 %v8264
  %v8281 = vpop.f32.mrf.mxu0
  %v8282 = vadd.f32 0.0, %v8281
  %v8283 = vpop.f32.mrf.mxu0
  %8284 = vdwg.mxu0
  %v8289 = vunpack.c.l.b16 %v2765
  %v8290 = vunpack.c.l.b16 %v2766
  %v8291 = vunpack.c.l.b16 %v2767
  %v8292 = vunpack.c.l.b16 %v2768
  %v8293 = vpack.c.b16 %v8290, %v8289
  %v8294 = vpack.c.b16 %v8292, %v8291
  %v8296 = vsel %vm3151, %v1837, 0
  %v8299 = vsel %vm3151, %v8293, 0
  %v8302 = vsel %vm3151, %v8294, 0
  %8304 = vmatpush.bf16.xpose.msra.mxu0 0
  %8305 = vmatpush.bf16.xpose.msra.mxu0 0
  %8306 = vmatpush.bf16.xpose.msra.mxu0 0
  %8307 = vmatpush.bf16.xpose.msra.mxu0 0
  %8308 = vmatpush.bf16.xpose.msra.mxu0 0
  %8309 = vmatpush.bf16.xpose.msra.mxu0 0
  %8310 = vmatpush.bf16.xpose.msra.mxu0 %v8302
  %8311 = vmatpush.bf16.xpose.msra.mxu0 %v8299
  %8312 = vmatmul.bf16.gmra.mxu0 %v8296
  %v8313 = vpop.f32.mrf.mxu0
  %v8314 = vadd.f32 0.0, %v8313
  %v8315 = vpop.f32.mrf.mxu0
  %8316 = vdwg.mxu0
  %v8321 = vunpack.c.l.b16 %v2769
  %v8322 = vunpack.c.l.b16 %v2770
  %v8323 = vunpack.c.l.b16 %v2771
  %v8324 = vunpack.c.l.b16 %v2772
  %v8325 = vpack.c.b16 %v8322, %v8321
  %v8326 = vpack.c.b16 %v8324, %v8323
  %v8328 = vsel %vm3151, %v1840, 0
  %v8331 = vsel %vm3151, %v8325, 0
  %v8334 = vsel %vm3151, %v8326, 0
  %8336 = vmatpush.bf16.xpose.msra.mxu0 0
  %8337 = vmatpush.bf16.xpose.msra.mxu0 0
  %8338 = vmatpush.bf16.xpose.msra.mxu0 0
  %8339 = vmatpush.bf16.xpose.msra.mxu0 0
  %8340 = vmatpush.bf16.xpose.msra.mxu0 0
  %8341 = vmatpush.bf16.xpose.msra.mxu0 0
  %8342 = vmatpush.bf16.xpose.msra.mxu0 %v8334
  %8343 = vmatpush.bf16.xpose.msra.mxu0 %v8331
  %8344 = vmatmul.bf16.gmra.mxu0 %v8328
  %v8345 = vpop.f32.mrf.mxu0
  %v8346 = vadd.f32 0.0, %v8345
  %v8347 = vpop.f32.mrf.mxu0
  %8348 = vdwg.mxu0
  %v8353 = vunpack.c.l.b16 %v2773
  %v8354 = vunpack.c.l.b16 %v2774
  %v8355 = vunpack.c.l.b16 %v2775
  %v8356 = vunpack.c.l.b16 %v2776
  %v8357 = vpack.c.b16 %v8354, %v8353
  %v8358 = vpack.c.b16 %v8356, %v8355
  %v8359 = vsel %vm3151, %v1843, 0
  %v8362 = vsel %vm3151, %v8357, 0
  %v8365 = vsel %vm3151, %v8358, 0
  %8367 = vmatpush.bf16.xpose.msra.mxu0 0
  %8368 = vmatpush.bf16.xpose.msra.mxu0 0
  %8369 = vmatpush.bf16.xpose.msra.mxu0 0
  %8370 = vmatpush.bf16.xpose.msra.mxu0 0
  %8371 = vmatpush.bf16.xpose.msra.mxu0 0
  %8372 = vmatpush.bf16.xpose.msra.mxu0 0
  %8373 = vmatpush.bf16.xpose.msra.mxu0 %v8365
  %8374 = vmatpush.bf16.xpose.msra.mxu0 %v8362
  %8375 = vmatmul.bf16.gmra.mxu0 %v8359
  %v8376 = vpop.f32.mrf.mxu0
  %v8377 = vadd.f32 0.0, %v8376
  %v8378 = vpop.f32.mrf.mxu0
  %8379 = vdwg.mxu0
  %v8384 = vunpack.c.l.b16 %v2777
  %v8385 = vunpack.c.l.b16 %v2778
  %v8386 = vunpack.c.l.b16 %v2779
  %v8387 = vunpack.c.l.b16 %v2780
  %v8388 = vpack.c.b16 %v8385, %v8384
  %v8389 = vpack.c.b16 %v8387, %v8386
  %v8391 = vsel %vm3151, %v1846, 0
  %v8394 = vsel %vm3151, %v8388, 0
  %v8397 = vsel %vm3151, %v8389, 0
  %8399 = vmatpush.bf16.xpose.msra.mxu0 0
  %8400 = vmatpush.bf16.xpose.msra.mxu0 0
  %8401 = vmatpush.bf16.xpose.msra.mxu0 0
  %8402 = vmatpush.bf16.xpose.msra.mxu0 0
  %8403 = vmatpush.bf16.xpose.msra.mxu0 0
  %8404 = vmatpush.bf16.xpose.msra.mxu0 0
  %8405 = vmatpush.bf16.xpose.msra.mxu0 %v8397
  %8406 = vmatpush.bf16.xpose.msra.mxu0 %v8394
  %8407 = vmatmul.bf16.gmra.mxu0 %v8391
  %v8408 = vpop.f32.mrf.mxu0
  %v8409 = vadd.f32 0.0, %v8408
  %v8410 = vpop.f32.mrf.mxu0
  %8411 = vdwg.mxu0
  %v8416 = vunpack.c.l.b16 %v2781
  %v8417 = vunpack.c.l.b16 %v2782
  %v8418 = vunpack.c.l.b16 %v2783
  %v8419 = vunpack.c.l.b16 %v2784
  %v8420 = vpack.c.b16 %v8417, %v8416
  %v8421 = vpack.c.b16 %v8419, %v8418
  %v8423 = vsel %vm3151, %v1849, 0
  %v8426 = vsel %vm3151, %v8420, 0
  %v8429 = vsel %vm3151, %v8421, 0
  %8431 = vmatpush.bf16.xpose.msra.mxu0 0
  %8432 = vmatpush.bf16.xpose.msra.mxu0 0
  %8433 = vmatpush.bf16.xpose.msra.mxu0 0
  %8434 = vmatpush.bf16.xpose.msra.mxu0 0
  %8435 = vmatpush.bf16.xpose.msra.mxu0 0
  %8436 = vmatpush.bf16.xpose.msra.mxu0 0
  %8437 = vmatpush.bf16.xpose.msra.mxu0 %v8429
  %8438 = vmatpush.bf16.xpose.msra.mxu0 %v8426
  %8439 = vmatmul.bf16.gmra.mxu0 %v8423
  %v8440 = vpop.f32.mrf.mxu0
  %v8441 = vadd.f32 0.0, %v8440
  %v8442 = vpop.f32.mrf.mxu0
  %8443 = vdwg.mxu0
  %v8448 = vunpack.c.l.b16 %v2785
  %v8449 = vunpack.c.l.b16 %v2786
  %v8450 = vunpack.c.l.b16 %v2787
  %v8451 = vunpack.c.l.b16 %v2788
  %v8452 = vpack.c.b16 %v8449, %v8448
  %v8453 = vpack.c.b16 %v8451, %v8450
  %v8455 = vsel %vm3151, %v1852, 0
  %v8458 = vsel %vm3151, %v8452, 0
  %v8461 = vsel %vm3151, %v8453, 0
  %8463 = vmatpush.bf16.xpose.msra.mxu0 0
  %8464 = vmatpush.bf16.xpose.msra.mxu0 0
  %8465 = vmatpush.bf16.xpose.msra.mxu0 0
  %8466 = vmatpush.bf16.xpose.msra.mxu0 0
  %8467 = vmatpush.bf16.xpose.msra.mxu0 0
  %8468 = vmatpush.bf16.xpose.msra.mxu0 0
  %8469 = vmatpush.bf16.xpose.msra.mxu0 %v8461
  %8470 = vmatpush.bf16.xpose.msra.mxu0 %v8458
  %8471 = vmatmul.bf16.gmra.mxu0 %v8455
  %v8472 = vpop.f32.mrf.mxu0
  %v8473 = vadd.f32 0.0, %v8472
  %v8474 = vpop.f32.mrf.mxu0
  %8475 = vdwg.mxu0
  %v8480 = vunpack.c.l.b16 %v2789
  %v8481 = vunpack.c.l.b16 %v2790
  %v8482 = vunpack.c.l.b16 %v2791
  %v8483 = vunpack.c.l.b16 %v2792
  %v8484 = vpack.c.b16 %v8481, %v8480
  %v8485 = vpack.c.b16 %v8483, %v8482
  %v8486 = vsel %vm3151, %v1855, 0
  %v8489 = vsel %vm3151, %v8484, 0
  %v8492 = vsel %vm3151, %v8485, 0
  %8494 = vmatpush.bf16.xpose.msra.mxu0 0
  %8495 = vmatpush.bf16.xpose.msra.mxu0 0
  %8496 = vmatpush.bf16.xpose.msra.mxu0 0
  %8497 = vmatpush.bf16.xpose.msra.mxu0 0
  %8498 = vmatpush.bf16.xpose.msra.mxu0 0
  %8499 = vmatpush.bf16.xpose.msra.mxu0 0
  %8500 = vmatpush.bf16.xpose.msra.mxu0 %v8492
  %8501 = vmatpush.bf16.xpose.msra.mxu0 %v8489
  %8502 = vmatmul.bf16.gmra.mxu0 %v8486
  %v8503 = vpop.f32.mrf.mxu0
  %v8504 = vadd.f32 0.0, %v8503
  %v8505 = vpop.f32.mrf.mxu0
  %8506 = vdwg.mxu0
  %v8511 = vunpack.c.l.b16 %v2793
  %v8512 = vunpack.c.l.b16 %v2794
  %v8513 = vunpack.c.l.b16 %v2795
  %v8514 = vunpack.c.l.b16 %v2796
  %v8515 = vpack.c.b16 %v8512, %v8511
  %v8516 = vpack.c.b16 %v8514, %v8513
  %v8518 = vsel %vm3151, %v1858, 0
  %v8521 = vsel %vm3151, %v8515, 0
  %v8524 = vsel %vm3151, %v8516, 0
  %8526 = vmatpush.bf16.xpose.msra.mxu0 0
  %8527 = vmatpush.bf16.xpose.msra.mxu0 0
  %8528 = vmatpush.bf16.xpose.msra.mxu0 0
  %8529 = vmatpush.bf16.xpose.msra.mxu0 0
  %8530 = vmatpush.bf16.xpose.msra.mxu0 0
  %8531 = vmatpush.bf16.xpose.msra.mxu0 0
  %8532 = vmatpush.bf16.xpose.msra.mxu0 %v8524
  %8533 = vmatpush.bf16.xpose.msra.mxu0 %v8521
  %8534 = vmatmul.bf16.gmra.mxu0 %v8518
  %v8535 = vpop.f32.mrf.mxu0
  %v8536 = vadd.f32 0.0, %v8535
  %v8537 = vpop.f32.mrf.mxu0
  %8538 = vdwg.mxu0
  %v8543 = vunpack.c.l.b16 %v2797
  %v8544 = vunpack.c.l.b16 %v2798
  %v8545 = vunpack.c.l.b16 %v2799
  %v8546 = vunpack.c.l.b16 %v2800
  %v8547 = vpack.c.b16 %v8544, %v8543
  %v8548 = vpack.c.b16 %v8546, %v8545
  %v8550 = vsel %vm3151, %v1861, 0
  %v8553 = vsel %vm3151, %v8547, 0
  %v8556 = vsel %vm3151, %v8548, 0
  %8558 = vmatpush.bf16.xpose.msra.mxu0 0
  %8559 = vmatpush.bf16.xpose.msra.mxu0 0
  %8560 = vmatpush.bf16.xpose.msra.mxu0 0
  %8561 = vmatpush.bf16.xpose.msra.mxu0 0
  %8562 = vmatpush.bf16.xpose.msra.mxu0 0
  %8563 = vmatpush.bf16.xpose.msra.mxu0 0
  %8564 = vmatpush.bf16.xpose.msra.mxu0 %v8556
  %8565 = vmatpush.bf16.xpose.msra.mxu0 %v8553
  %8566 = vmatmul.bf16.gmra.mxu0 %v8550
  %v8567 = vpop.f32.mrf.mxu0
  %v8568 = vadd.f32 0.0, %v8567
  %v8569 = vpop.f32.mrf.mxu0
  %8570 = vdwg.mxu0
  %v8575 = vunpack.c.l.b16 %v2801
  %v8576 = vunpack.c.l.b16 %v2802
  %v8577 = vunpack.c.l.b16 %v2803
  %v8578 = vunpack.c.l.b16 %v2804
  %v8579 = vpack.c.b16 %v8576, %v8575
  %v8580 = vpack.c.b16 %v8578, %v8577
  %v8582 = vsel %vm3151, %v1864, 0
  %v8585 = vsel %vm3151, %v8579, 0
  %v8588 = vsel %vm3151, %v8580, 0
  %8590 = vmatpush.bf16.xpose.msra.mxu0 0
  %8591 = vmatpush.bf16.xpose.msra.mxu0 0
  %8592 = vmatpush.bf16.xpose.msra.mxu0 0
  %8593 = vmatpush.bf16.xpose.msra.mxu0 0
  %8594 = vmatpush.bf16.xpose.msra.mxu0 0
  %8595 = vmatpush.bf16.xpose.msra.mxu0 0
  %8596 = vmatpush.bf16.xpose.msra.mxu0 %v8588
  %8597 = vmatpush.bf16.xpose.msra.mxu0 %v8585
  %8598 = vmatmul.bf16.gmra.mxu0 %v8582
  %v8599 = vpop.f32.mrf.mxu0
  %v8600 = vadd.f32 0.0, %v8599
  %v8601 = vpop.f32.mrf.mxu0
  %8602 = vdwg.mxu0
  %v8607 = vunpack.c.l.b16 %v2805
  %v8608 = vunpack.c.l.b16 %v2806
  %v8609 = vunpack.c.l.b16 %v2807
  %v8610 = vunpack.c.l.b16 %v2808
  %v8611 = vpack.c.b16 %v8608, %v8607
  %v8612 = vpack.c.b16 %v8610, %v8609
  %v8613 = vsel %vm3151, %v1867, 0
  %v8616 = vsel %vm3151, %v8611, 0
  %v8619 = vsel %vm3151, %v8612, 0
  %8621 = vmatpush.bf16.xpose.msra.mxu0 0
  %8622 = vmatpush.bf16.xpose.msra.mxu0 0
  %8623 = vmatpush.bf16.xpose.msra.mxu0 0
  %8624 = vmatpush.bf16.xpose.msra.mxu0 0
  %8625 = vmatpush.bf16.xpose.msra.mxu0 0
  %8626 = vmatpush.bf16.xpose.msra.mxu0 0
  %8627 = vmatpush.bf16.xpose.msra.mxu0 %v8619
  %8628 = vmatpush.bf16.xpose.msra.mxu0 %v8616
  %8629 = vmatmul.bf16.gmra.mxu0 %v8613
  %v8630 = vpop.f32.mrf.mxu0
  %v8631 = vadd.f32 0.0, %v8630
  %v8632 = vpop.f32.mrf.mxu0
  %8633 = vdwg.mxu0
  %v8638 = vunpack.c.l.b16 %v2809
  %v8639 = vunpack.c.l.b16 %v2810
  %v8640 = vunpack.c.l.b16 %v2811
  %v8641 = vunpack.c.l.b16 %v2812
  %v8642 = vpack.c.b16 %v8639, %v8638
  %v8643 = vpack.c.b16 %v8641, %v8640
  %v8645 = vsel %vm3151, %v1870, 0
  %v8648 = vsel %vm3151, %v8642, 0
  %v8651 = vsel %vm3151, %v8643, 0
  %8653 = vmatpush.bf16.xpose.msra.mxu0 0
  %8654 = vmatpush.bf16.xpose.msra.mxu0 0
  %8655 = vmatpush.bf16.xpose.msra.mxu0 0
  %8656 = vmatpush.bf16.xpose.msra.mxu0 0
  %8657 = vmatpush.bf16.xpose.msra.mxu0 0
  %8658 = vmatpush.bf16.xpose.msra.mxu0 0
  %8659 = vmatpush.bf16.xpose.msra.mxu0 %v8651
  %8660 = vmatpush.bf16.xpose.msra.mxu0 %v8648
  %8661 = vmatmul.bf16.gmra.mxu0 %v8645
  %v8662 = vpop.f32.mrf.mxu0
  %v8663 = vadd.f32 0.0, %v8662
  %v8664 = vpop.f32.mrf.mxu0
  %8665 = vdwg.mxu0
  %v8670 = vunpack.c.l.b16 %v2813
  %v8671 = vunpack.c.l.b16 %v2814
  %v8672 = vunpack.c.l.b16 %v2815
  %v8673 = vunpack.c.l.b16 %v2816
  %v8674 = vpack.c.b16 %v8671, %v8670
  %v8675 = vpack.c.b16 %v8673, %v8672
  %v8677 = vsel %vm3151, %v1873, 0
  %v8680 = vsel %vm3151, %v8674, 0
  %v8683 = vsel %vm3151, %v8675, 0
  %8685 = vmatpush.bf16.xpose.msra.mxu0 0
  %8686 = vmatpush.bf16.xpose.msra.mxu0 0
  %8687 = vmatpush.bf16.xpose.msra.mxu0 0
  %8688 = vmatpush.bf16.xpose.msra.mxu0 0
  %8689 = vmatpush.bf16.xpose.msra.mxu0 0
  %8690 = vmatpush.bf16.xpose.msra.mxu0 0
  %8691 = vmatpush.bf16.xpose.msra.mxu0 %v8683
  %8692 = vmatpush.bf16.xpose.msra.mxu0 %v8680
  %8693 = vmatmul.bf16.gmra.mxu0 %v8677
  %v8694 = vpop.f32.mrf.mxu0
  %v8695 = vadd.f32 0.0, %v8694
  %v8696 = vpop.f32.mrf.mxu0
  %8697 = vdwg.mxu0
  %v8702 = vunpack.c.l.b16 %v2817
  %v8703 = vunpack.c.l.b16 %v2818
  %v8704 = vunpack.c.l.b16 %v2819
  %v8705 = vunpack.c.l.b16 %v2820
  %v8706 = vpack.c.b16 %v8703, %v8702
  %v8707 = vpack.c.b16 %v8705, %v8704
  %v8709 = vsel %vm3151, %v1876, 0
  %v8712 = vsel %vm3151, %v8706, 0
  %v8715 = vsel %vm3151, %v8707, 0
  %8717 = vmatpush.bf16.xpose.msra.mxu0 0
  %8718 = vmatpush.bf16.xpose.msra.mxu0 0
  %8719 = vmatpush.bf16.xpose.msra.mxu0 0
  %8720 = vmatpush.bf16.xpose.msra.mxu0 0
  %8721 = vmatpush.bf16.xpose.msra.mxu0 0
  %8722 = vmatpush.bf16.xpose.msra.mxu0 0
  %8723 = vmatpush.bf16.xpose.msra.mxu0 %v8715
  %8724 = vmatpush.bf16.xpose.msra.mxu0 %v8712
  %8725 = vmatmul.bf16.gmra.mxu0 %v8709
  %v8726 = vpop.f32.mrf.mxu0
  %v8727 = vadd.f32 0.0, %v8726
  %v8728 = vpop.f32.mrf.mxu0
  %8729 = vdwg.mxu0
  %v8734 = vunpack.c.l.b16 %v2821
  %v8735 = vunpack.c.l.b16 %v2822
  %v8736 = vunpack.c.l.b16 %v2823
  %v8737 = vunpack.c.l.b16 %v2824
  %v8738 = vpack.c.b16 %v8735, %v8734
  %v8739 = vpack.c.b16 %v8737, %v8736
  %v8740 = vsel %vm3151, %v1879, 0
  %v8743 = vsel %vm3151, %v8738, 0
  %v8746 = vsel %vm3151, %v8739, 0
  %8748 = vmatpush.bf16.xpose.msra.mxu0 0
  %8749 = vmatpush.bf16.xpose.msra.mxu0 0
  %8750 = vmatpush.bf16.xpose.msra.mxu0 0
  %8751 = vmatpush.bf16.xpose.msra.mxu0 0
  %8752 = vmatpush.bf16.xpose.msra.mxu0 0
  %8753 = vmatpush.bf16.xpose.msra.mxu0 0
  %8754 = vmatpush.bf16.xpose.msra.mxu0 %v8746
  %8755 = vmatpush.bf16.xpose.msra.mxu0 %v8743
  %8756 = vmatmul.bf16.gmra.mxu0 %v8740
  %v8757 = vpop.f32.mrf.mxu0
  %v8758 = vadd.f32 0.0, %v8757
  %v8759 = vpop.f32.mrf.mxu0
  %8760 = vdwg.mxu0
  %v8765 = vunpack.c.l.b16 %v2825
  %v8766 = vunpack.c.l.b16 %v2826
  %v8767 = vunpack.c.l.b16 %v2827
  %v8768 = vunpack.c.l.b16 %v2828
  %v8769 = vpack.c.b16 %v8766, %v8765
  %v8770 = vpack.c.b16 %v8768, %v8767
  %v8772 = vsel %vm3151, %v1882, 0
  %v8775 = vsel %vm3151, %v8769, 0
  %v8778 = vsel %vm3151, %v8770, 0
  %8780 = vmatpush.bf16.xpose.msra.mxu0 0
  %8781 = vmatpush.bf16.xpose.msra.mxu0 0
  %8782 = vmatpush.bf16.xpose.msra.mxu0 0
  %8783 = vmatpush.bf16.xpose.msra.mxu0 0
  %8784 = vmatpush.bf16.xpose.msra.mxu0 0
  %8785 = vmatpush.bf16.xpose.msra.mxu0 0
  %8786 = vmatpush.bf16.xpose.msra.mxu0 %v8778
  %8787 = vmatpush.bf16.xpose.msra.mxu0 %v8775
  %8788 = vmatmul.bf16.gmra.mxu0 %v8772
  %v8789 = vpop.f32.mrf.mxu0
  %v8790 = vadd.f32 0.0, %v8789
  %v8791 = vpop.f32.mrf.mxu0
  %8792 = vdwg.mxu0
  %v8797 = vunpack.c.l.b16 %v2829
  %v8798 = vunpack.c.l.b16 %v2830
  %v8799 = vunpack.c.l.b16 %v2831
  %v8800 = vunpack.c.l.b16 %v2832
  %v8801 = vpack.c.b16 %v8798, %v8797
  %v8802 = vpack.c.b16 %v8800, %v8799
  %v8804 = vsel %vm3151, %v1885, 0
  %v8807 = vsel %vm3151, %v8801, 0
  %v8810 = vsel %vm3151, %v8802, 0
  %8812 = vmatpush.bf16.xpose.msra.mxu0 0
  %8813 = vmatpush.bf16.xpose.msra.mxu0 0
  %8814 = vmatpush.bf16.xpose.msra.mxu0 0
  %8815 = vmatpush.bf16.xpose.msra.mxu0 0
  %8816 = vmatpush.bf16.xpose.msra.mxu0 0
  %8817 = vmatpush.bf16.xpose.msra.mxu0 0
  %8818 = vmatpush.bf16.xpose.msra.mxu0 %v8810
  %8819 = vmatpush.bf16.xpose.msra.mxu0 %v8807
  %8820 = vmatmul.bf16.gmra.mxu0 %v8804
  %v8821 = vpop.f32.mrf.mxu0
  %v8822 = vadd.f32 0.0, %v8821
  %v8823 = vpop.f32.mrf.mxu0
  %8824 = vdwg.mxu0
  %v8829 = vunpack.c.l.b16 %v2833
  %v8830 = vunpack.c.l.b16 %v2834
  %v8831 = vunpack.c.l.b16 %v2835
  %v8832 = vunpack.c.l.b16 %v2836
  %v8833 = vpack.c.b16 %v8830, %v8829
  %v8834 = vpack.c.b16 %v8832, %v8831
  %v8836 = vsel %vm3151, %v1888, 0
  %v8839 = vsel %vm3151, %v8833, 0
  %v8842 = vsel %vm3151, %v8834, 0
  %8844 = vmatpush.bf16.xpose.msra.mxu0 0
  %8845 = vmatpush.bf16.xpose.msra.mxu0 0
  %8846 = vmatpush.bf16.xpose.msra.mxu0 0
  %8847 = vmatpush.bf16.xpose.msra.mxu0 0
  %8848 = vmatpush.bf16.xpose.msra.mxu0 0
  %8849 = vmatpush.bf16.xpose.msra.mxu0 0
  %8850 = vmatpush.bf16.xpose.msra.mxu0 %v8842
  %8851 = vmatpush.bf16.xpose.msra.mxu0 %v8839
  %8852 = vmatmul.bf16.gmra.mxu0 %v8836
  %v8853 = vpop.f32.mrf.mxu0
  %v8854 = vadd.f32 0.0, %v8853
  %v8855 = vpop.f32.mrf.mxu0
  %8856 = vdwg.mxu0
  %v8861 = vunpack.c.l.b16 %v2837
  %v8862 = vunpack.c.l.b16 %v2838
  %v8863 = vunpack.c.l.b16 %v2839
  %v8864 = vunpack.c.l.b16 %v2840
  %v8865 = vpack.c.b16 %v8862, %v8861
  %v8866 = vpack.c.b16 %v8864, %v8863
  %v8867 = vsel %vm3151, %v1891, 0
  %v8870 = vsel %vm3151, %v8865, 0
  %v8873 = vsel %vm3151, %v8866, 0
  %8875 = vmatpush.bf16.xpose.msra.mxu0 0
  %8876 = vmatpush.bf16.xpose.msra.mxu0 0
  %8877 = vmatpush.bf16.xpose.msra.mxu0 0
  %8878 = vmatpush.bf16.xpose.msra.mxu0 0
  %8879 = vmatpush.bf16.xpose.msra.mxu0 0
  %8880 = vmatpush.bf16.xpose.msra.mxu0 0
  %8881 = vmatpush.bf16.xpose.msra.mxu0 %v8873
  %8882 = vmatpush.bf16.xpose.msra.mxu0 %v8870
  %8883 = vmatmul.bf16.gmra.mxu0 %v8867
  %v8884 = vpop.f32.mrf.mxu0
  %v8885 = vadd.f32 0.0, %v8884
  %v8886 = vpop.f32.mrf.mxu0
  %8887 = vdwg.mxu0
  %v8892 = vunpack.c.l.b16 %v2841
  %v8893 = vunpack.c.l.b16 %v2842
  %v8894 = vunpack.c.l.b16 %v2843
  %v8895 = vunpack.c.l.b16 %v2844
  %v8896 = vpack.c.b16 %v8893, %v8892
  %v8897 = vpack.c.b16 %v8895, %v8894
  %v8899 = vsel %vm3151, %v1894, 0
  %v8902 = vsel %vm3151, %v8896, 0
  %v8905 = vsel %vm3151, %v8897, 0
  %8907 = vmatpush.bf16.xpose.msra.mxu0 0
  %8908 = vmatpush.bf16.xpose.msra.mxu0 0
  %8909 = vmatpush.bf16.xpose.msra.mxu0 0
  %8910 = vmatpush.bf16.xpose.msra.mxu0 0
  %8911 = vmatpush.bf16.xpose.msra.mxu0 0
  %8912 = vmatpush.bf16.xpose.msra.mxu0 0
  %8913 = vmatpush.bf16.xpose.msra.mxu0 %v8905
  %8914 = vmatpush.bf16.xpose.msra.mxu0 %v8902
  %8915 = vmatmul.bf16.gmra.mxu0 %v8899
  %v8916 = vpop.f32.mrf.mxu0
  %v8917 = vadd.f32 0.0, %v8916
  %v8918 = vpop.f32.mrf.mxu0
  %8919 = vdwg.mxu0
  %v8924 = vunpack.c.l.b16 %v2845
  %v8925 = vunpack.c.l.b16 %v2846
  %v8926 = vunpack.c.l.b16 %v2847
  %v8927 = vunpack.c.l.b16 %v2848
  %v8928 = vpack.c.b16 %v8925, %v8924
  %v8929 = vpack.c.b16 %v8927, %v8926
  %v8931 = vsel %vm3151, %v1897, 0
  %v8934 = vsel %vm3151, %v8928, 0
  %v8937 = vsel %vm3151, %v8929, 0
  %8939 = vmatpush.bf16.xpose.msra.mxu0 0
  %8940 = vmatpush.bf16.xpose.msra.mxu0 0
  %8941 = vmatpush.bf16.xpose.msra.mxu0 0
  %8942 = vmatpush.bf16.xpose.msra.mxu0 0
  %8943 = vmatpush.bf16.xpose.msra.mxu0 0
  %8944 = vmatpush.bf16.xpose.msra.mxu0 0
  %8945 = vmatpush.bf16.xpose.msra.mxu0 %v8937
  %8946 = vmatpush.bf16.xpose.msra.mxu0 %v8934
  %8947 = vmatmul.bf16.gmra.mxu0 %v8931
  %v8948 = vpop.f32.mrf.mxu0
  %v8949 = vadd.f32 0.0, %v8948
  %v8950 = vpop.f32.mrf.mxu0
  %8951 = vdwg.mxu0
  %v8956 = vunpack.c.l.b16 %v2849
  %v8957 = vunpack.c.l.b16 %v2850
  %v8958 = vunpack.c.l.b16 %v2851
  %v8959 = vunpack.c.l.b16 %v2852
  %v8960 = vpack.c.b16 %v8957, %v8956
  %v8961 = vpack.c.b16 %v8959, %v8958
  %v8963 = vsel %vm3151, %v1900, 0
  %v8966 = vsel %vm3151, %v8960, 0
  %v8969 = vsel %vm3151, %v8961, 0
  %8971 = vmatpush.bf16.xpose.msra.mxu0 0
  %8972 = vmatpush.bf16.xpose.msra.mxu0 0
  %8973 = vmatpush.bf16.xpose.msra.mxu0 0
  %8974 = vmatpush.bf16.xpose.msra.mxu0 0
  %8975 = vmatpush.bf16.xpose.msra.mxu0 0
  %8976 = vmatpush.bf16.xpose.msra.mxu0 0
  %8977 = vmatpush.bf16.xpose.msra.mxu0 %v8969
  %8978 = vmatpush.bf16.xpose.msra.mxu0 %v8966
  %8979 = vmatmul.bf16.gmra.mxu0 %v8963
  %v8980 = vpop.f32.mrf.mxu0
  %v8981 = vadd.f32 0.0, %v8980
  %v8982 = vpop.f32.mrf.mxu0
  %8983 = vdwg.mxu0
  %v8988 = vunpack.c.l.b16 %v2853
  %v8989 = vunpack.c.l.b16 %v2854
  %v8990 = vunpack.c.l.b16 %v2855
  %v8991 = vunpack.c.l.b16 %v2856
  %v8992 = vpack.c.b16 %v8989, %v8988
  %v8993 = vpack.c.b16 %v8991, %v8990
  %v8994 = vsel %vm3151, %v1903, 0
  %v8997 = vsel %vm3151, %v8992, 0
  %v9000 = vsel %vm3151, %v8993, 0
  %9002 = vmatpush.bf16.xpose.msra.mxu0 0
  %9003 = vmatpush.bf16.xpose.msra.mxu0 0
  %9004 = vmatpush.bf16.xpose.msra.mxu0 0
  %9005 = vmatpush.bf16.xpose.msra.mxu0 0
  %9006 = vmatpush.bf16.xpose.msra.mxu0 0
  %9007 = vmatpush.bf16.xpose.msra.mxu0 0
  %9008 = vmatpush.bf16.xpose.msra.mxu0 %v9000
  %9009 = vmatpush.bf16.xpose.msra.mxu0 %v8997
  %9010 = vmatmul.bf16.gmra.mxu0 %v8994
  %v9011 = vpop.f32.mrf.mxu0
  %v9012 = vadd.f32 0.0, %v9011
  %v9013 = vpop.f32.mrf.mxu0
  %9014 = vdwg.mxu0
  %v9019 = vunpack.c.l.b16 %v2857
  %v9020 = vunpack.c.l.b16 %v2858
  %v9021 = vunpack.c.l.b16 %v2859
  %v9022 = vunpack.c.l.b16 %v2860
  %v9023 = vpack.c.b16 %v9020, %v9019
  %v9024 = vpack.c.b16 %v9022, %v9021
  %v9026 = vsel %vm3151, %v1906, 0
  %v9029 = vsel %vm3151, %v9023, 0
  %v9032 = vsel %vm3151, %v9024, 0
  %9034 = vmatpush.bf16.xpose.msra.mxu0 0
  %9035 = vmatpush.bf16.xpose.msra.mxu0 0
  %9036 = vmatpush.bf16.xpose.msra.mxu0 0
  %9037 = vmatpush.bf16.xpose.msra.mxu0 0
  %9038 = vmatpush.bf16.xpose.msra.mxu0 0
  %9039 = vmatpush.bf16.xpose.msra.mxu0 0
  %9040 = vmatpush.bf16.xpose.msra.mxu0 %v9032
  %9041 = vmatpush.bf16.xpose.msra.mxu0 %v9029
  %9042 = vmatmul.bf16.gmra.mxu0 %v9026
  %v9043 = vpop.f32.mrf.mxu0
  %v9044 = vadd.f32 0.0, %v9043
  %v9045 = vpop.f32.mrf.mxu0
  %9046 = vdwg.mxu0
  %v9051 = vunpack.c.l.b16 %v2861
  %v9052 = vunpack.c.l.b16 %v2862
  %v9053 = vunpack.c.l.b16 %v2863
  %v9054 = vunpack.c.l.b16 %v2864
  %v9055 = vpack.c.b16 %v9052, %v9051
  %v9056 = vpack.c.b16 %v9054, %v9053
  %v9058 = vsel %vm3151, %v1909, 0
  %v9061 = vsel %vm3151, %v9055, 0
  %v9064 = vsel %vm3151, %v9056, 0
  %9066 = vmatpush.bf16.xpose.msra.mxu0 0
  %9067 = vmatpush.bf16.xpose.msra.mxu0 0
  %9068 = vmatpush.bf16.xpose.msra.mxu0 0
  %9069 = vmatpush.bf16.xpose.msra.mxu0 0
  %9070 = vmatpush.bf16.xpose.msra.mxu0 0
  %9071 = vmatpush.bf16.xpose.msra.mxu0 0
  %9072 = vmatpush.bf16.xpose.msra.mxu0 %v9064
  %9073 = vmatpush.bf16.xpose.msra.mxu0 %v9061
  %9074 = vmatmul.bf16.gmra.mxu0 %v9058
  %v9075 = vpop.f32.mrf.mxu0
  %v9076 = vadd.f32 0.0, %v9075
  %v9077 = vpop.f32.mrf.mxu0
  %9078 = vdwg.mxu0
  %v9083 = vunpack.c.l.b16 %v2865
  %v9084 = vunpack.c.l.b16 %v2866
  %v9085 = vunpack.c.l.b16 %v2867
  %v9086 = vunpack.c.l.b16 %v2868
  %v9087 = vpack.c.b16 %v9084, %v9083
  %v9088 = vpack.c.b16 %v9086, %v9085
  %v9090 = vsel %vm3151, %v1912, 0
  %v9093 = vsel %vm3151, %v9087, 0
  %v9096 = vsel %vm3151, %v9088, 0
  %9098 = vmatpush.bf16.xpose.msra.mxu0 0
  %9099 = vmatpush.bf16.xpose.msra.mxu0 0
  %9100 = vmatpush.bf16.xpose.msra.mxu0 0
  %9101 = vmatpush.bf16.xpose.msra.mxu0 0
  %9102 = vmatpush.bf16.xpose.msra.mxu0 0
  %9103 = vmatpush.bf16.xpose.msra.mxu0 0
  %9104 = vmatpush.bf16.xpose.msra.mxu0 %v9096
  %9105 = vmatpush.bf16.xpose.msra.mxu0 %v9093
  %9106 = vmatmul.bf16.gmra.mxu0 %v9090
  %v9107 = vpop.f32.mrf.mxu0
  %v9108 = vadd.f32 0.0, %v9107
  %v9109 = vpop.f32.mrf.mxu0
  %9110 = vdwg.mxu0
  %v9115 = vunpack.c.l.b16 %v2869
  %v9116 = vunpack.c.l.b16 %v2870
  %v9117 = vunpack.c.l.b16 %v2871
  %v9118 = vunpack.c.l.b16 %v2872
  %v9119 = vpack.c.b16 %v9116, %v9115
  %v9120 = vpack.c.b16 %v9118, %v9117
  %v9121 = vsel %vm3151, %v1915, 0
  %v9124 = vsel %vm3151, %v9119, 0
  %v9127 = vsel %vm3151, %v9120, 0
  %9129 = vmatpush.bf16.xpose.msra.mxu0 0
  %9130 = vmatpush.bf16.xpose.msra.mxu0 0
  %9131 = vmatpush.bf16.xpose.msra.mxu0 0
  %9132 = vmatpush.bf16.xpose.msra.mxu0 0
  %9133 = vmatpush.bf16.xpose.msra.mxu0 0
  %9134 = vmatpush.bf16.xpose.msra.mxu0 0
  %9135 = vmatpush.bf16.xpose.msra.mxu0 %v9127
  %9136 = vmatpush.bf16.xpose.msra.mxu0 %v9124
  %9137 = vmatmul.bf16.gmra.mxu0 %v9121
  %v9138 = vpop.f32.mrf.mxu0
  %v9139 = vadd.f32 0.0, %v9138
  %v9140 = vpop.f32.mrf.mxu0
  %9141 = vdwg.mxu0
  %v9146 = vunpack.c.l.b16 %v2873
  %v9147 = vunpack.c.l.b16 %v2874
  %v9148 = vunpack.c.l.b16 %v2875
  %v9149 = vunpack.c.l.b16 %v2876
  %v9150 = vpack.c.b16 %v9147, %v9146
  %v9151 = vpack.c.b16 %v9149, %v9148
  %v9153 = vsel %vm3151, %v1918, 0
  %v9156 = vsel %vm3151, %v9150, 0
  %v9159 = vsel %vm3151, %v9151, 0
  %9161 = vmatpush.bf16.xpose.msra.mxu0 0
  %9162 = vmatpush.bf16.xpose.msra.mxu0 0
  %9163 = vmatpush.bf16.xpose.msra.mxu0 0
  %9164 = vmatpush.bf16.xpose.msra.mxu0 0
  %9165 = vmatpush.bf16.xpose.msra.mxu0 0
  %9166 = vmatpush.bf16.xpose.msra.mxu0 0
  %9167 = vmatpush.bf16.xpose.msra.mxu0 %v9159
  %9168 = vmatpush.bf16.xpose.msra.mxu0 %v9156
  %9169 = vmatmul.bf16.gmra.mxu0 %v9153
  %v9170 = vpop.f32.mrf.mxu0
  %v9171 = vadd.f32 0.0, %v9170
  %v9172 = vpop.f32.mrf.mxu0
  %9173 = vdwg.mxu0
  %v9178 = vunpack.c.l.b16 %v2877
  %v9179 = vunpack.c.l.b16 %v2878
  %v9180 = vunpack.c.l.b16 %v2879
  %v9181 = vunpack.c.l.b16 %v2880
  %v9182 = vpack.c.b16 %v9179, %v9178
  %v9183 = vpack.c.b16 %v9181, %v9180
  %v9185 = vsel %vm3151, %v1921, 0
  %v9188 = vsel %vm3151, %v9182, 0
  %v9191 = vsel %vm3151, %v9183, 0
  %9193 = vmatpush.bf16.xpose.msra.mxu0 0
  %9194 = vmatpush.bf16.xpose.msra.mxu0 0
  %9195 = vmatpush.bf16.xpose.msra.mxu0 0
  %9196 = vmatpush.bf16.xpose.msra.mxu0 0
  %9197 = vmatpush.bf16.xpose.msra.mxu0 0
  %9198 = vmatpush.bf16.xpose.msra.mxu0 0
  %9199 = vmatpush.bf16.xpose.msra.mxu0 %v9191
  %9200 = vmatpush.bf16.xpose.msra.mxu0 %v9188
  %9201 = vmatmul.bf16.gmra.mxu0 %v9185
  %v9202 = vpop.f32.mrf.mxu0
  %v9203 = vadd.f32 0.0, %v9202
  %v9204 = vpop.f32.mrf.mxu0
  %9205 = vdwg.mxu0
  %v9210 = vunpack.c.l.b16 %v2881
  %v9211 = vunpack.c.l.b16 %v2882
  %v9212 = vunpack.c.l.b16 %v2883
  %v9213 = vunpack.c.l.b16 %v2884
  %v9214 = vpack.c.b16 %v9211, %v9210
  %v9215 = vpack.c.b16 %v9213, %v9212
  %v9217 = vsel %vm3151, %v1924, 0
  %v9220 = vsel %vm3151, %v9214, 0
  %v9223 = vsel %vm3151, %v9215, 0
  %9225 = vmatpush.bf16.xpose.msra.mxu0 0
  %9226 = vmatpush.bf16.xpose.msra.mxu0 0
  %9227 = vmatpush.bf16.xpose.msra.mxu0 0
  %9228 = vmatpush.bf16.xpose.msra.mxu0 0
  %9229 = vmatpush.bf16.xpose.msra.mxu0 0
  %9230 = vmatpush.bf16.xpose.msra.mxu0 0
  %9231 = vmatpush.bf16.xpose.msra.mxu0 %v9223
  %9232 = vmatpush.bf16.xpose.msra.mxu0 %v9220
  %9233 = vmatmul.bf16.gmra.mxu0 %v9217
  %v9234 = vpop.f32.mrf.mxu0
  %v9235 = vadd.f32 0.0, %v9234
  %v9236 = vpop.f32.mrf.mxu0
  %9237 = vdwg.mxu0
  %v9242 = vunpack.c.l.b16 %v2885
  %v9243 = vunpack.c.l.b16 %v2886
  %v9244 = vunpack.c.l.b16 %v2887
  %v9245 = vunpack.c.l.b16 %v2888
  %v9246 = vpack.c.b16 %v9243, %v9242
  %v9247 = vpack.c.b16 %v9245, %v9244
  %v9248 = vsel %vm3151, %v1927, 0
  %v9251 = vsel %vm3151, %v9246, 0
  %v9254 = vsel %vm3151, %v9247, 0
  %9256 = vmatpush.bf16.xpose.msra.mxu0 0
  %9257 = vmatpush.bf16.xpose.msra.mxu0 0
  %9258 = vmatpush.bf16.xpose.msra.mxu0 0
  %9259 = vmatpush.bf16.xpose.msra.mxu0 0
  %9260 = vmatpush.bf16.xpose.msra.mxu0 0
  %9261 = vmatpush.bf16.xpose.msra.mxu0 0
  %9262 = vmatpush.bf16.xpose.msra.mxu0 %v9254
  %9263 = vmatpush.bf16.xpose.msra.mxu0 %v9251
  %9264 = vmatmul.bf16.gmra.mxu0 %v9248
  %v9265 = vpop.f32.mrf.mxu0
  %v9266 = vadd.f32 0.0, %v9265
  %v9267 = vpop.f32.mrf.mxu0
  %9268 = vdwg.mxu0
  %v9273 = vunpack.c.l.b16 %v2889
  %v9274 = vunpack.c.l.b16 %v2890
  %v9275 = vunpack.c.l.b16 %v2891
  %v9276 = vunpack.c.l.b16 %v2892
  %v9277 = vpack.c.b16 %v9274, %v9273
  %v9278 = vpack.c.b16 %v9276, %v9275
  %v9280 = vsel %vm3151, %v1930, 0
  %v9283 = vsel %vm3151, %v9277, 0
  %v9286 = vsel %vm3151, %v9278, 0
  %9288 = vmatpush.bf16.xpose.msra.mxu0 0
  %9289 = vmatpush.bf16.xpose.msra.mxu0 0
  %9290 = vmatpush.bf16.xpose.msra.mxu0 0
  %9291 = vmatpush.bf16.xpose.msra.mxu0 0
  %9292 = vmatpush.bf16.xpose.msra.mxu0 0
  %9293 = vmatpush.bf16.xpose.msra.mxu0 0
  %9294 = vmatpush.bf16.xpose.msra.mxu0 %v9286
  %9295 = vmatpush.bf16.xpose.msra.mxu0 %v9283
  %9296 = vmatmul.bf16.gmra.mxu0 %v9280
  %v9297 = vpop.f32.mrf.mxu0
  %v9298 = vadd.f32 0.0, %v9297
  %v9299 = vpop.f32.mrf.mxu0
  %9300 = vdwg.mxu0
  %v9305 = vunpack.c.l.b16 %v2893
  %v9306 = vunpack.c.l.b16 %v2894
  %v9307 = vunpack.c.l.b16 %v2895
  %v9308 = vunpack.c.l.b16 %v2896
  %v9309 = vpack.c.b16 %v9306, %v9305
  %v9310 = vpack.c.b16 %v9308, %v9307
  %v9312 = vsel %vm3151, %v1933, 0
  %v9315 = vsel %vm3151, %v9309, 0
  %v9318 = vsel %vm3151, %v9310, 0
  %9320 = vmatpush.bf16.xpose.msra.mxu0 0
  %9321 = vmatpush.bf16.xpose.msra.mxu0 0
  %9322 = vmatpush.bf16.xpose.msra.mxu0 0
  %9323 = vmatpush.bf16.xpose.msra.mxu0 0
  %9324 = vmatpush.bf16.xpose.msra.mxu0 0
  %9325 = vmatpush.bf16.xpose.msra.mxu0 0
  %9326 = vmatpush.bf16.xpose.msra.mxu0 %v9318
  %9327 = vmatpush.bf16.xpose.msra.mxu0 %v9315
  %9328 = vmatmul.bf16.gmra.mxu0 %v9312
  %v9329 = vpop.f32.mrf.mxu0
  %v9330 = vadd.f32 0.0, %v9329
  %v9331 = vpop.f32.mrf.mxu0
  %9332 = vdwg.mxu0
  %v9337 = vunpack.c.l.b16 %v2897
  %v9338 = vunpack.c.l.b16 %v2898
  %v9339 = vunpack.c.l.b16 %v2899
  %v9340 = vunpack.c.l.b16 %v2900
  %v9341 = vpack.c.b16 %v9338, %v9337
  %v9342 = vpack.c.b16 %v9340, %v9339
  %v9344 = vsel %vm3151, %v1936, 0
  %v9347 = vsel %vm3151, %v9341, 0
  %v9350 = vsel %vm3151, %v9342, 0
  %9352 = vmatpush.bf16.xpose.msra.mxu0 0
  %9353 = vmatpush.bf16.xpose.msra.mxu0 0
  %9354 = vmatpush.bf16.xpose.msra.mxu0 0
  %9355 = vmatpush.bf16.xpose.msra.mxu0 0
  %9356 = vmatpush.bf16.xpose.msra.mxu0 0
  %9357 = vmatpush.bf16.xpose.msra.mxu0 0
  %9358 = vmatpush.bf16.xpose.msra.mxu0 %v9350
  %9359 = vmatpush.bf16.xpose.msra.mxu0 %v9347
  %9360 = vmatmul.bf16.gmra.mxu0 %v9344
  %v9361 = vpop.f32.mrf.mxu0
  %v9362 = vadd.f32 0.0, %v9361
  %v9363 = vpop.f32.mrf.mxu0
  %9364 = vdwg.mxu0
  %v9369 = vunpack.c.l.b16 %v2901
  %v9370 = vunpack.c.l.b16 %v2902
  %v9371 = vunpack.c.l.b16 %v2903
  %v9372 = vunpack.c.l.b16 %v2904
  %v9373 = vpack.c.b16 %v9370, %v9369
  %v9374 = vpack.c.b16 %v9372, %v9371
  %v9375 = vsel %vm3151, %v1939, 0
  %v9378 = vsel %vm3151, %v9373, 0
  %v9381 = vsel %vm3151, %v9374, 0
  %9383 = vmatpush.bf16.xpose.msra.mxu0 0
  %9384 = vmatpush.bf16.xpose.msra.mxu0 0
  %9385 = vmatpush.bf16.xpose.msra.mxu0 0
  %9386 = vmatpush.bf16.xpose.msra.mxu0 0
  %9387 = vmatpush.bf16.xpose.msra.mxu0 0
  %9388 = vmatpush.bf16.xpose.msra.mxu0 0
  %9389 = vmatpush.bf16.xpose.msra.mxu0 %v9381
  %9390 = vmatpush.bf16.xpose.msra.mxu0 %v9378
  %9391 = vmatmul.bf16.gmra.mxu0 %v9375
  %v9392 = vpop.f32.mrf.mxu0
  %v9393 = vadd.f32 0.0, %v9392
  %v9394 = vpop.f32.mrf.mxu0
  %9395 = vdwg.mxu0
  %v9400 = vunpack.c.l.b16 %v2905
  %v9401 = vunpack.c.l.b16 %v2906
  %v9402 = vunpack.c.l.b16 %v2907
  %v9403 = vunpack.c.l.b16 %v2908
  %v9404 = vpack.c.b16 %v9401, %v9400
  %v9405 = vpack.c.b16 %v9403, %v9402
  %v9407 = vsel %vm3151, %v1942, 0
  %v9410 = vsel %vm3151, %v9404, 0
  %v9413 = vsel %vm3151, %v9405, 0
  %9415 = vmatpush.bf16.xpose.msra.mxu0 0
  %9416 = vmatpush.bf16.xpose.msra.mxu0 0
  %9417 = vmatpush.bf16.xpose.msra.mxu0 0
  %9418 = vmatpush.bf16.xpose.msra.mxu0 0
  %9419 = vmatpush.bf16.xpose.msra.mxu0 0
  %9420 = vmatpush.bf16.xpose.msra.mxu0 0
  %9421 = vmatpush.bf16.xpose.msra.mxu0 %v9413
  %9422 = vmatpush.bf16.xpose.msra.mxu0 %v9410
  %9423 = vmatmul.bf16.gmra.mxu0 %v9407
  %v9424 = vpop.f32.mrf.mxu0
  %v9425 = vadd.f32 0.0, %v9424
  %v9426 = vpop.f32.mrf.mxu0
  %9427 = vdwg.mxu0
  %v9432 = vunpack.c.l.b16 %v2909
  %v9433 = vunpack.c.l.b16 %v2910
  %v9434 = vunpack.c.l.b16 %v2911
  %v9435 = vunpack.c.l.b16 %v2912
  %v9436 = vpack.c.b16 %v9433, %v9432
  %v9437 = vpack.c.b16 %v9435, %v9434
  %v9439 = vsel %vm3151, %v1945, 0
  %v9442 = vsel %vm3151, %v9436, 0
  %v9445 = vsel %vm3151, %v9437, 0
  %9447 = vmatpush.bf16.xpose.msra.mxu0 0
  %9448 = vmatpush.bf16.xpose.msra.mxu0 0
  %9449 = vmatpush.bf16.xpose.msra.mxu0 0
  %9450 = vmatpush.bf16.xpose.msra.mxu0 0
  %9451 = vmatpush.bf16.xpose.msra.mxu0 0
  %9452 = vmatpush.bf16.xpose.msra.mxu0 0
  %9453 = vmatpush.bf16.xpose.msra.mxu0 %v9445
  %9454 = vmatpush.bf16.xpose.msra.mxu0 %v9442
  %9455 = vmatmul.bf16.gmra.mxu0 %v9439
  %v9456 = vpop.f32.mrf.mxu0
  %v9457 = vadd.f32 0.0, %v9456
  %v9458 = vpop.f32.mrf.mxu0
  %9459 = vdwg.mxu0
  %v9464 = vunpack.c.l.b16 %v2913
  %v9465 = vunpack.c.l.b16 %v2914
  %v9466 = vunpack.c.l.b16 %v2915
  %v9467 = vunpack.c.l.b16 %v2916
  %v9468 = vpack.c.b16 %v9465, %v9464
  %v9469 = vpack.c.b16 %v9467, %v9466
  %v9471 = vsel %vm3151, %v1948, 0
  %v9474 = vsel %vm3151, %v9468, 0
  %v9477 = vsel %vm3151, %v9469, 0
  %9479 = vmatpush.bf16.xpose.msra.mxu0 0
  %9480 = vmatpush.bf16.xpose.msra.mxu0 0
  %9481 = vmatpush.bf16.xpose.msra.mxu0 0
  %9482 = vmatpush.bf16.xpose.msra.mxu0 0
  %9483 = vmatpush.bf16.xpose.msra.mxu0 0
  %9484 = vmatpush.bf16.xpose.msra.mxu0 0
  %9485 = vmatpush.bf16.xpose.msra.mxu0 %v9477
  %9486 = vmatpush.bf16.xpose.msra.mxu0 %v9474
  %9487 = vmatmul.bf16.gmra.mxu0 %v9471
  %v9488 = vpop.f32.mrf.mxu0
  %v9489 = vadd.f32 0.0, %v9488
  %v9490 = vpop.f32.mrf.mxu0
  %9491 = vdwg.mxu0
  %v9496 = vunpack.c.l.b16 %v2917
  %v9497 = vunpack.c.l.b16 %v2918
  %v9498 = vunpack.c.l.b16 %v2919
  %v9499 = vunpack.c.l.b16 %v2920
  %v9500 = vpack.c.b16 %v9497, %v9496
  %v9501 = vpack.c.b16 %v9499, %v9498
  %v9502 = vsel %vm3151, %v1951, 0
  %v9505 = vsel %vm3151, %v9500, 0
  %v9508 = vsel %vm3151, %v9501, 0
  %9510 = vmatpush.bf16.xpose.msra.mxu0 0
  %9511 = vmatpush.bf16.xpose.msra.mxu0 0
  %9512 = vmatpush.bf16.xpose.msra.mxu0 0
  %9513 = vmatpush.bf16.xpose.msra.mxu0 0
  %9514 = vmatpush.bf16.xpose.msra.mxu0 0
  %9515 = vmatpush.bf16.xpose.msra.mxu0 0
  %9516 = vmatpush.bf16.xpose.msra.mxu0 %v9508
  %9517 = vmatpush.bf16.xpose.msra.mxu0 %v9505
  %9518 = vmatmul.bf16.gmra.mxu0 %v9502
  %v9519 = vpop.f32.mrf.mxu0
  %v9520 = vadd.f32 0.0, %v9519
  %v9521 = vpop.f32.mrf.mxu0
  %9522 = vdwg.mxu0
  %v9527 = vunpack.c.l.b16 %v2921
  %v9528 = vunpack.c.l.b16 %v2922
  %v9529 = vunpack.c.l.b16 %v2923
  %v9530 = vunpack.c.l.b16 %v2924
  %v9531 = vpack.c.b16 %v9528, %v9527
  %v9532 = vpack.c.b16 %v9530, %v9529
  %v9534 = vsel %vm3151, %v1954, 0
  %v9537 = vsel %vm3151, %v9531, 0
  %v9540 = vsel %vm3151, %v9532, 0
  %9542 = vmatpush.bf16.xpose.msra.mxu0 0
  %9543 = vmatpush.bf16.xpose.msra.mxu0 0
  %9544 = vmatpush.bf16.xpose.msra.mxu0 0
  %9545 = vmatpush.bf16.xpose.msra.mxu0 0
  %9546 = vmatpush.bf16.xpose.msra.mxu0 0
  %9547 = vmatpush.bf16.xpose.msra.mxu0 0
  %9548 = vmatpush.bf16.xpose.msra.mxu0 %v9540
  %9549 = vmatpush.bf16.xpose.msra.mxu0 %v9537
  %9550 = vmatmul.bf16.gmra.mxu0 %v9534
  %v9551 = vpop.f32.mrf.mxu0
  %v9552 = vadd.f32 0.0, %v9551
  %v9553 = vpop.f32.mrf.mxu0
  %9554 = vdwg.mxu0
  %v9559 = vunpack.c.l.b16 %v2925
  %v9560 = vunpack.c.l.b16 %v2926
  %v9561 = vunpack.c.l.b16 %v2927
  %v9562 = vunpack.c.l.b16 %v2928
  %v9563 = vpack.c.b16 %v9560, %v9559
  %v9564 = vpack.c.b16 %v9562, %v9561
  %v9566 = vsel %vm3151, %v1957, 0
  %v9569 = vsel %vm3151, %v9563, 0
  %v9572 = vsel %vm3151, %v9564, 0
  %9574 = vmatpush.bf16.xpose.msra.mxu0 0
  %9575 = vmatpush.bf16.xpose.msra.mxu0 0
  %9576 = vmatpush.bf16.xpose.msra.mxu0 0
  %9577 = vmatpush.bf16.xpose.msra.mxu0 0
  %9578 = vmatpush.bf16.xpose.msra.mxu0 0
  %9579 = vmatpush.bf16.xpose.msra.mxu0 0
  %9580 = vmatpush.bf16.xpose.msra.mxu0 %v9572
  %9581 = vmatpush.bf16.xpose.msra.mxu0 %v9569
  %9582 = vmatmul.bf16.gmra.mxu0 %v9566
  %v9583 = vpop.f32.mrf.mxu0
  %v9584 = vadd.f32 0.0, %v9583
  %v9585 = vpop.f32.mrf.mxu0
  %9586 = vdwg.mxu0
  %v9591 = vunpack.c.l.b16 %v2929
  %v9592 = vunpack.c.l.b16 %v2930
  %v9593 = vunpack.c.l.b16 %v2931
  %v9594 = vunpack.c.l.b16 %v2932
  %v9595 = vpack.c.b16 %v9592, %v9591
  %v9596 = vpack.c.b16 %v9594, %v9593
  %v9598 = vsel %vm3151, %v1960, 0
  %v9601 = vsel %vm3151, %v9595, 0
  %v9604 = vsel %vm3151, %v9596, 0
  %9606 = vmatpush.bf16.xpose.msra.mxu0 0
  %9607 = vmatpush.bf16.xpose.msra.mxu0 0
  %9608 = vmatpush.bf16.xpose.msra.mxu0 0
  %9609 = vmatpush.bf16.xpose.msra.mxu0 0
  %9610 = vmatpush.bf16.xpose.msra.mxu0 0
  %9611 = vmatpush.bf16.xpose.msra.mxu0 0
  %9612 = vmatpush.bf16.xpose.msra.mxu0 %v9604
  %9613 = vmatpush.bf16.xpose.msra.mxu0 %v9601
  %9614 = vmatmul.bf16.gmra.mxu0 %v9598
  %v9615 = vpop.f32.mrf.mxu0
  %v9616 = vadd.f32 0.0, %v9615
  %v9617 = vpop.f32.mrf.mxu0
  %9618 = vdwg.mxu0
  %v9623 = vunpack.c.l.b16 %v2933
  %v9624 = vunpack.c.l.b16 %v2934
  %v9625 = vunpack.c.l.b16 %v2935
  %v9626 = vunpack.c.l.b16 %v2936
  %v9627 = vpack.c.b16 %v9624, %v9623
  %v9628 = vpack.c.b16 %v9626, %v9625
  %v9629 = vsel %vm3151, %v1963, 0
  %v9632 = vsel %vm3151, %v9627, 0
  %v9635 = vsel %vm3151, %v9628, 0
  %9637 = vmatpush.bf16.xpose.msra.mxu0 0
  %9638 = vmatpush.bf16.xpose.msra.mxu0 0
  %9639 = vmatpush.bf16.xpose.msra.mxu0 0
  %9640 = vmatpush.bf16.xpose.msra.mxu0 0
  %9641 = vmatpush.bf16.xpose.msra.mxu0 0
  %9642 = vmatpush.bf16.xpose.msra.mxu0 0
  %9643 = vmatpush.bf16.xpose.msra.mxu0 %v9635
  %9644 = vmatpush.bf16.xpose.msra.mxu0 %v9632
  %9645 = vmatmul.bf16.gmra.mxu0 %v9629
  %v9646 = vpop.f32.mrf.mxu0
  %v9647 = vadd.f32 0.0, %v9646
  %v9648 = vpop.f32.mrf.mxu0
  %9649 = vdwg.mxu0
  %v9654 = vunpack.c.l.b16 %v2937
  %v9655 = vunpack.c.l.b16 %v2938
  %v9656 = vunpack.c.l.b16 %v2939
  %v9657 = vunpack.c.l.b16 %v2940
  %v9658 = vpack.c.b16 %v9655, %v9654
  %v9659 = vpack.c.b16 %v9657, %v9656
  %v9661 = vsel %vm3151, %v1966, 0
  %v9664 = vsel %vm3151, %v9658, 0
  %v9667 = vsel %vm3151, %v9659, 0
  %9669 = vmatpush.bf16.xpose.msra.mxu0 0
  %9670 = vmatpush.bf16.xpose.msra.mxu0 0
  %9671 = vmatpush.bf16.xpose.msra.mxu0 0
  %9672 = vmatpush.bf16.xpose.msra.mxu0 0
  %9673 = vmatpush.bf16.xpose.msra.mxu0 0
  %9674 = vmatpush.bf16.xpose.msra.mxu0 0
  %9675 = vmatpush.bf16.xpose.msra.mxu0 %v9667
  %9676 = vmatpush.bf16.xpose.msra.mxu0 %v9664
  %9677 = vmatmul.bf16.gmra.mxu0 %v9661
  %v9678 = vpop.f32.mrf.mxu0
  %v9679 = vadd.f32 0.0, %v9678
  %v9680 = vpop.f32.mrf.mxu0
  %9681 = vdwg.mxu0
  %v9686 = vunpack.c.l.b16 %v2941
  %v9687 = vunpack.c.l.b16 %v2942
  %v9688 = vunpack.c.l.b16 %v2943
  %v9689 = vunpack.c.l.b16 %v2944
  %v9690 = vpack.c.b16 %v9687, %v9686
  %v9691 = vpack.c.b16 %v9689, %v9688
  %v9693 = vsel %vm3151, %v1969, 0
  %v9696 = vsel %vm3151, %v9690, 0
  %v9699 = vsel %vm3151, %v9691, 0
  %9701 = vmatpush.bf16.xpose.msra.mxu0 0
  %9702 = vmatpush.bf16.xpose.msra.mxu0 0
  %9703 = vmatpush.bf16.xpose.msra.mxu0 0
  %9704 = vmatpush.bf16.xpose.msra.mxu0 0
  %9705 = vmatpush.bf16.xpose.msra.mxu0 0
  %9706 = vmatpush.bf16.xpose.msra.mxu0 0
  %9707 = vmatpush.bf16.xpose.msra.mxu0 %v9699
  %9708 = vmatpush.bf16.xpose.msra.mxu0 %v9696
  %9709 = vmatmul.bf16.gmra.mxu0 %v9693
  %v9710 = vpop.f32.mrf.mxu0
  %v9711 = vadd.f32 0.0, %v9710
  %v9712 = vpop.f32.mrf.mxu0
  %9713 = vdwg.mxu0
  %v9718 = vunpack.c.l.b16 %v2945
  %v9719 = vunpack.c.l.b16 %v2946
  %v9720 = vunpack.c.l.b16 %v2947
  %v9721 = vunpack.c.l.b16 %v2948
  %v9722 = vpack.c.b16 %v9719, %v9718
  %v9723 = vpack.c.b16 %v9721, %v9720
  %v9725 = vsel %vm3151, %v1972, 0
  %v9728 = vsel %vm3151, %v9722, 0
  %v9731 = vsel %vm3151, %v9723, 0
  %9733 = vmatpush.bf16.xpose.msra.mxu0 0
  %9734 = vmatpush.bf16.xpose.msra.mxu0 0
  %9735 = vmatpush.bf16.xpose.msra.mxu0 0
  %9736 = vmatpush.bf16.xpose.msra.mxu0 0
  %9737 = vmatpush.bf16.xpose.msra.mxu0 0
  %9738 = vmatpush.bf16.xpose.msra.mxu0 0
  %9739 = vmatpush.bf16.xpose.msra.mxu0 %v9731
  %9740 = vmatpush.bf16.xpose.msra.mxu0 %v9728
  %9741 = vmatmul.bf16.gmra.mxu0 %v9725
  %v9742 = vpop.f32.mrf.mxu0
  %v9743 = vadd.f32 0.0, %v9742
  %v9744 = vpop.f32.mrf.mxu0
  %9745 = vdwg.mxu0
  %v9750 = vunpack.c.l.b16 %v2949
  %v9751 = vunpack.c.l.b16 %v2950
  %v9752 = vunpack.c.l.b16 %v2951
  %v9753 = vunpack.c.l.b16 %v2952
  %v9754 = vpack.c.b16 %v9751, %v9750
  %v9755 = vpack.c.b16 %v9753, %v9752
  %v9756 = vsel %vm3151, %v1975, 0
  %v9759 = vsel %vm3151, %v9754, 0
  %v9762 = vsel %vm3151, %v9755, 0
  %9764 = vmatpush.bf16.xpose.msra.mxu0 0
  %9765 = vmatpush.bf16.xpose.msra.mxu0 0
  %9766 = vmatpush.bf16.xpose.msra.mxu0 0
  %9767 = vmatpush.bf16.xpose.msra.mxu0 0
  %9768 = vmatpush.bf16.xpose.msra.mxu0 0
  %9769 = vmatpush.bf16.xpose.msra.mxu0 0
  %9770 = vmatpush.bf16.xpose.msra.mxu0 %v9762
  %9771 = vmatpush.bf16.xpose.msra.mxu0 %v9759
  %9772 = vmatmul.bf16.gmra.mxu0 %v9756
  %v9773 = vpop.f32.mrf.mxu0
  %v9774 = vadd.f32 0.0, %v9773
  %v9775 = vpop.f32.mrf.mxu0
  %9776 = vdwg.mxu0
  %v9781 = vunpack.c.l.b16 %v2953
  %v9782 = vunpack.c.l.b16 %v2954
  %v9783 = vunpack.c.l.b16 %v2955
  %v9784 = vunpack.c.l.b16 %v2956
  %v9785 = vpack.c.b16 %v9782, %v9781
  %v9786 = vpack.c.b16 %v9784, %v9783
  %v9788 = vsel %vm3151, %v1978, 0
  %v9791 = vsel %vm3151, %v9785, 0
  %v9794 = vsel %vm3151, %v9786, 0
  %9796 = vmatpush.bf16.xpose.msra.mxu0 0
  %9797 = vmatpush.bf16.xpose.msra.mxu0 0
  %9798 = vmatpush.bf16.xpose.msra.mxu0 0
  %9799 = vmatpush.bf16.xpose.msra.mxu0 0
  %9800 = vmatpush.bf16.xpose.msra.mxu0 0
  %9801 = vmatpush.bf16.xpose.msra.mxu0 0
  %9802 = vmatpush.bf16.xpose.msra.mxu0 %v9794
  %9803 = vmatpush.bf16.xpose.msra.mxu0 %v9791
  %9804 = vmatmul.bf16.gmra.mxu0 %v9788
  %v9805 = vpop.f32.mrf.mxu0
  %v9806 = vadd.f32 0.0, %v9805
  %v9807 = vpop.f32.mrf.mxu0
  %9808 = vdwg.mxu0
  %v9813 = vunpack.c.l.b16 %v2957
  %v9814 = vunpack.c.l.b16 %v2958
  %v9815 = vunpack.c.l.b16 %v2959
  %v9816 = vunpack.c.l.b16 %v2960
  %v9817 = vpack.c.b16 %v9814, %v9813
  %v9818 = vpack.c.b16 %v9816, %v9815
  %v9820 = vsel %vm3151, %v1981, 0
  %v9823 = vsel %vm3151, %v9817, 0
  %v9826 = vsel %vm3151, %v9818, 0
  %9828 = vmatpush.bf16.xpose.msra.mxu0 0
  %9829 = vmatpush.bf16.xpose.msra.mxu0 0
  %9830 = vmatpush.bf16.xpose.msra.mxu0 0
  %9831 = vmatpush.bf16.xpose.msra.mxu0 0
  %9832 = vmatpush.bf16.xpose.msra.mxu0 0
  %9833 = vmatpush.bf16.xpose.msra.mxu0 0
  %9834 = vmatpush.bf16.xpose.msra.mxu0 %v9826
  %9835 = vmatpush.bf16.xpose.msra.mxu0 %v9823
  %9836 = vmatmul.bf16.gmra.mxu0 %v9820
  %v9837 = vpop.f32.mrf.mxu0
  %v9838 = vadd.f32 0.0, %v9837
  %v9839 = vpop.f32.mrf.mxu0
  %9840 = vdwg.mxu0
  %v9845 = vunpack.c.l.b16 %v2961
  %v9846 = vunpack.c.l.b16 %v2962
  %v9847 = vunpack.c.l.b16 %v2963
  %v9848 = vunpack.c.l.b16 %v2964
  %v9849 = vpack.c.b16 %v9846, %v9845
  %v9850 = vpack.c.b16 %v9848, %v9847
  %v9852 = vsel %vm3151, %v1984, 0
  %v9855 = vsel %vm3151, %v9849, 0
  %v9858 = vsel %vm3151, %v9850, 0
  %9860 = vmatpush.bf16.xpose.msra.mxu0 0
  %9861 = vmatpush.bf16.xpose.msra.mxu0 0
  %9862 = vmatpush.bf16.xpose.msra.mxu0 0
  %9863 = vmatpush.bf16.xpose.msra.mxu0 0
  %9864 = vmatpush.bf16.xpose.msra.mxu0 0
  %9865 = vmatpush.bf16.xpose.msra.mxu0 0
  %9866 = vmatpush.bf16.xpose.msra.mxu0 %v9858
  %9867 = vmatpush.bf16.xpose.msra.mxu0 %v9855
  %9868 = vmatmul.bf16.gmra.mxu0 %v9852
  %v9869 = vpop.f32.mrf.mxu0
  %v9870 = vadd.f32 0.0, %v9869
  %v9871 = vpop.f32.mrf.mxu0
  %9872 = vdwg.mxu0
  %v9877 = vunpack.c.l.b16 %v2965
  %v9878 = vunpack.c.l.b16 %v2966
  %v9879 = vunpack.c.l.b16 %v2967
  %v9880 = vunpack.c.l.b16 %v2968
  %v9881 = vpack.c.b16 %v9878, %v9877
  %v9882 = vpack.c.b16 %v9880, %v9879
  %v9883 = vsel %vm3151, %v1987, 0
  %v9886 = vsel %vm3151, %v9881, 0
  %v9889 = vsel %vm3151, %v9882, 0
  %9891 = vmatpush.bf16.xpose.msra.mxu0 0
  %9892 = vmatpush.bf16.xpose.msra.mxu0 0
  %9893 = vmatpush.bf16.xpose.msra.mxu0 0
  %9894 = vmatpush.bf16.xpose.msra.mxu0 0
  %9895 = vmatpush.bf16.xpose.msra.mxu0 0
  %9896 = vmatpush.bf16.xpose.msra.mxu0 0
  %9897 = vmatpush.bf16.xpose.msra.mxu0 %v9889
  %9898 = vmatpush.bf16.xpose.msra.mxu0 %v9886
  %9899 = vmatmul.bf16.gmra.mxu0 %v9883
  %v9900 = vpop.f32.mrf.mxu0
  %v9901 = vadd.f32 0.0, %v9900
  %v9902 = vpop.f32.mrf.mxu0
  %9903 = vdwg.mxu0
  %v9908 = vunpack.c.l.b16 %v2969
  %v9909 = vunpack.c.l.b16 %v2970
  %v9910 = vunpack.c.l.b16 %v2971
  %v9911 = vunpack.c.l.b16 %v2972
  %v9912 = vpack.c.b16 %v9909, %v9908
  %v9913 = vpack.c.b16 %v9911, %v9910
  %v9915 = vsel %vm3151, %v1990, 0
  %v9918 = vsel %vm3151, %v9912, 0
  %v9921 = vsel %vm3151, %v9913, 0
  %9923 = vmatpush.bf16.xpose.msra.mxu0 0
  %9924 = vmatpush.bf16.xpose.msra.mxu0 0
  %9925 = vmatpush.bf16.xpose.msra.mxu0 0
  %9926 = vmatpush.bf16.xpose.msra.mxu0 0
  %9927 = vmatpush.bf16.xpose.msra.mxu0 0
  %9928 = vmatpush.bf16.xpose.msra.mxu0 0
  %9929 = vmatpush.bf16.xpose.msra.mxu0 %v9921
  %9930 = vmatpush.bf16.xpose.msra.mxu0 %v9918
  %9931 = vmatmul.bf16.gmra.mxu0 %v9915
  %v9932 = vpop.f32.mrf.mxu0
  %v9933 = vadd.f32 0.0, %v9932
  %v9934 = vpop.f32.mrf.mxu0
  %9935 = vdwg.mxu0
  %v9940 = vunpack.c.l.b16 %v2973
  %v9941 = vunpack.c.l.b16 %v2974
  %v9942 = vunpack.c.l.b16 %v2975
  %v9943 = vunpack.c.l.b16 %v2976
  %v9944 = vpack.c.b16 %v9941, %v9940
  %v9945 = vpack.c.b16 %v9943, %v9942
  %v9947 = vsel %vm3151, %v1993, 0
  %v9950 = vsel %vm3151, %v9944, 0
  %v9953 = vsel %vm3151, %v9945, 0
  %9955 = vmatpush.bf16.xpose.msra.mxu0 0
  %9956 = vmatpush.bf16.xpose.msra.mxu0 0
  %9957 = vmatpush.bf16.xpose.msra.mxu0 0
  %9958 = vmatpush.bf16.xpose.msra.mxu0 0
  %9959 = vmatpush.bf16.xpose.msra.mxu0 0
  %9960 = vmatpush.bf16.xpose.msra.mxu0 0
  %9961 = vmatpush.bf16.xpose.msra.mxu0 %v9953
  %9962 = vmatpush.bf16.xpose.msra.mxu0 %v9950
  %9963 = vmatmul.bf16.gmra.mxu0 %v9947
  %v9964 = vpop.f32.mrf.mxu0
  %v9965 = vadd.f32 0.0, %v9964
  %v9966 = vpop.f32.mrf.mxu0
  %9967 = vdwg.mxu0
  %v9972 = vunpack.c.l.b16 %v2977
  %v9973 = vunpack.c.l.b16 %v2978
  %v9974 = vunpack.c.l.b16 %v2979
  %v9975 = vunpack.c.l.b16 %v2980
  %v9976 = vpack.c.b16 %v9973, %v9972
  %v9977 = vpack.c.b16 %v9975, %v9974
  %v9979 = vsel %vm3151, %v1996, 0
  %v9982 = vsel %vm3151, %v9976, 0
  %v9985 = vsel %vm3151, %v9977, 0
  %9987 = vmatpush.bf16.xpose.msra.mxu0 0
  %9988 = vmatpush.bf16.xpose.msra.mxu0 0
  %9989 = vmatpush.bf16.xpose.msra.mxu0 0
  %9990 = vmatpush.bf16.xpose.msra.mxu0 0
  %9991 = vmatpush.bf16.xpose.msra.mxu0 0
  %9992 = vmatpush.bf16.xpose.msra.mxu0 0
  %9993 = vmatpush.bf16.xpose.msra.mxu0 %v9985
  %9994 = vmatpush.bf16.xpose.msra.mxu0 %v9982
  %9995 = vmatmul.bf16.gmra.mxu0 %v9979
  %v9996 = vpop.f32.mrf.mxu0
  %v9997 = vadd.f32 0.0, %v9996
  %v9998 = vpop.f32.mrf.mxu0
  %9999 = vdwg.mxu0
  %v10004 = vunpack.c.l.b16 %v2981
  %v10005 = vunpack.c.l.b16 %v2982
  %v10006 = vunpack.c.l.b16 %v2983
  %v10007 = vunpack.c.l.b16 %v2984
  %v10008 = vpack.c.b16 %v10005, %v10004
  %v10009 = vpack.c.b16 %v10007, %v10006
  %v10010 = vsel %vm3151, %v1999, 0
  %v10013 = vsel %vm3151, %v10008, 0
  %v10016 = vsel %vm3151, %v10009, 0
  %10018 = vmatpush.bf16.xpose.msra.mxu0 0
  %10019 = vmatpush.bf16.xpose.msra.mxu0 0
  %10020 = vmatpush.bf16.xpose.msra.mxu0 0
  %10021 = vmatpush.bf16.xpose.msra.mxu0 0
  %10022 = vmatpush.bf16.xpose.msra.mxu0 0
  %10023 = vmatpush.bf16.xpose.msra.mxu0 0
  %10024 = vmatpush.bf16.xpose.msra.mxu0 %v10016
  %10025 = vmatpush.bf16.xpose.msra.mxu0 %v10013
  %10026 = vmatmul.bf16.gmra.mxu0 %v10010
  %v10027 = vpop.f32.mrf.mxu0
  %v10028 = vadd.f32 0.0, %v10027
  %v10029 = vpop.f32.mrf.mxu0
  %10030 = vdwg.mxu0
  %v10035 = vunpack.c.l.b16 %v2985
  %v10036 = vunpack.c.l.b16 %v2986
  %v10037 = vunpack.c.l.b16 %v2987
  %v10038 = vunpack.c.l.b16 %v2988
  %v10039 = vpack.c.b16 %v10036, %v10035
  %v10040 = vpack.c.b16 %v10038, %v10037
  %v10042 = vsel %vm3151, %v2002, 0
  %v10045 = vsel %vm3151, %v10039, 0
  %v10048 = vsel %vm3151, %v10040, 0
  %10050 = vmatpush.bf16.xpose.msra.mxu0 0
  %10051 = vmatpush.bf16.xpose.msra.mxu0 0
  %10052 = vmatpush.bf16.xpose.msra.mxu0 0
  %10053 = vmatpush.bf16.xpose.msra.mxu0 0
  %10054 = vmatpush.bf16.xpose.msra.mxu0 0
  %10055 = vmatpush.bf16.xpose.msra.mxu0 0
  %10056 = vmatpush.bf16.xpose.msra.mxu0 %v10048
  %10057 = vmatpush.bf16.xpose.msra.mxu0 %v10045
  %10058 = vmatmul.bf16.gmra.mxu0 %v10042
  %v10059 = vpop.f32.mrf.mxu0
  %v10060 = vadd.f32 0.0, %v10059
  %v10061 = vpop.f32.mrf.mxu0
  %10062 = vdwg.mxu0
  %v10067 = vunpack.c.l.b16 %v2989
  %v10068 = vunpack.c.l.b16 %v2990
  %v10069 = vunpack.c.l.b16 %v2991
  %v10070 = vunpack.c.l.b16 %v2992
  %v10071 = vpack.c.b16 %v10068, %v10067
  %v10072 = vpack.c.b16 %v10070, %v10069
  %v10074 = vsel %vm3151, %v2005, 0
  %v10077 = vsel %vm3151, %v10071, 0
  %v10080 = vsel %vm3151, %v10072, 0
  %10082 = vmatpush.bf16.xpose.msra.mxu0 0
  %10083 = vmatpush.bf16.xpose.msra.mxu0 0
  %10084 = vmatpush.bf16.xpose.msra.mxu0 0
  %10085 = vmatpush.bf16.xpose.msra.mxu0 0
  %10086 = vmatpush.bf16.xpose.msra.mxu0 0
  %10087 = vmatpush.bf16.xpose.msra.mxu0 0
  %10088 = vmatpush.bf16.xpose.msra.mxu0 %v10080
  %10089 = vmatpush.bf16.xpose.msra.mxu0 %v10077
  %10090 = vmatmul.bf16.gmra.mxu0 %v10074
  %v10091 = vpop.f32.mrf.mxu0
  %v10092 = vadd.f32 0.0, %v10091
  %v10093 = vpop.f32.mrf.mxu0
  %10094 = vdwg.mxu0
  %v10099 = vunpack.c.l.b16 %v2993
  %v10100 = vunpack.c.l.b16 %v2994
  %v10101 = vunpack.c.l.b16 %v2995
  %v10102 = vunpack.c.l.b16 %v2996
  %v10103 = vpack.c.b16 %v10100, %v10099
  %v10104 = vpack.c.b16 %v10102, %v10101
  %v10106 = vsel %vm3151, %v2008, 0
  %v10109 = vsel %vm3151, %v10103, 0
  %v10112 = vsel %vm3151, %v10104, 0
  %10114 = vmatpush.bf16.xpose.msra.mxu0 0
  %10115 = vmatpush.bf16.xpose.msra.mxu0 0
  %10116 = vmatpush.bf16.xpose.msra.mxu0 0
  %10117 = vmatpush.bf16.xpose.msra.mxu0 0
  %10118 = vmatpush.bf16.xpose.msra.mxu0 0
  %10119 = vmatpush.bf16.xpose.msra.mxu0 0
  %10120 = vmatpush.bf16.xpose.msra.mxu0 %v10112
  %10121 = vmatpush.bf16.xpose.msra.mxu0 %v10109
  %10122 = vmatmul.bf16.gmra.mxu0 %v10106
  %v10123 = vpop.f32.mrf.mxu0
  %v10124 = vadd.f32 0.0, %v10123
  %v10125 = vpop.f32.mrf.mxu0
  %10126 = vdwg.mxu0
  %v10131 = vunpack.c.l.b16 %v2997
  %v10132 = vunpack.c.l.b16 %v2998
  %v10133 = vunpack.c.l.b16 %v2999
  %v10134 = vunpack.c.l.b16 %v3000
  %v10135 = vpack.c.b16 %v10132, %v10131
  %v10136 = vpack.c.b16 %v10134, %v10133
  %v10137 = vsel %vm3151, %v2011, 0
  %v10140 = vsel %vm3151, %v10135, 0
  %v10143 = vsel %vm3151, %v10136, 0
  %10145 = vmatpush.bf16.xpose.msra.mxu0 0
  %10146 = vmatpush.bf16.xpose.msra.mxu0 0
  %10147 = vmatpush.bf16.xpose.msra.mxu0 0
  %10148 = vmatpush.bf16.xpose.msra.mxu0 0
  %10149 = vmatpush.bf16.xpose.msra.mxu0 0
  %10150 = vmatpush.bf16.xpose.msra.mxu0 0
  %10151 = vmatpush.bf16.xpose.msra.mxu0 %v10143
  %10152 = vmatpush.bf16.xpose.msra.mxu0 %v10140
  %10153 = vmatmul.bf16.gmra.mxu0 %v10137
  %v10154 = vpop.f32.mrf.mxu0
  %v10155 = vadd.f32 0.0, %v10154
  %v10156 = vpop.f32.mrf.mxu0
  %10157 = vdwg.mxu0
  %v10162 = vunpack.c.l.b16 %v3001
  %v10163 = vunpack.c.l.b16 %v3002
  %v10164 = vunpack.c.l.b16 %v3003
  %v10165 = vunpack.c.l.b16 %v3004
  %v10166 = vpack.c.b16 %v10163, %v10162
  %v10167 = vpack.c.b16 %v10165, %v10164
  %v10169 = vsel %vm3151, %v2014, 0
  %v10172 = vsel %vm3151, %v10166, 0
  %v10175 = vsel %vm3151, %v10167, 0
  %10177 = vmatpush.bf16.xpose.msra.mxu0 0
  %10178 = vmatpush.bf16.xpose.msra.mxu0 0
  %10179 = vmatpush.bf16.xpose.msra.mxu0 0
  %10180 = vmatpush.bf16.xpose.msra.mxu0 0
  %10181 = vmatpush.bf16.xpose.msra.mxu0 0
  %10182 = vmatpush.bf16.xpose.msra.mxu0 0
  %10183 = vmatpush.bf16.xpose.msra.mxu0 %v10175
  %10184 = vmatpush.bf16.xpose.msra.mxu0 %v10172
  %10185 = vmatmul.bf16.gmra.mxu0 %v10169
  %v10186 = vpop.f32.mrf.mxu0
  %v10187 = vadd.f32 0.0, %v10186
  %v10188 = vpop.f32.mrf.mxu0
  %10189 = vdwg.mxu0
  %v10194 = vunpack.c.l.b16 %v3005
  %v10195 = vunpack.c.l.b16 %v3006
  %v10196 = vunpack.c.l.b16 %v3007
  %v10197 = vunpack.c.l.b16 %v3008
  %v10198 = vpack.c.b16 %v10195, %v10194
  %v10199 = vpack.c.b16 %v10197, %v10196
  %v10201 = vsel %vm3151, %v2017, 0
  %v10204 = vsel %vm3151, %v10198, 0
  %v10207 = vsel %vm3151, %v10199, 0
  %10209 = vmatpush.bf16.xpose.msra.mxu0 0
  %10210 = vmatpush.bf16.xpose.msra.mxu0 0
  %10211 = vmatpush.bf16.xpose.msra.mxu0 0
  %10212 = vmatpush.bf16.xpose.msra.mxu0 0
  %10213 = vmatpush.bf16.xpose.msra.mxu0 0
  %10214 = vmatpush.bf16.xpose.msra.mxu0 0
  %10215 = vmatpush.bf16.xpose.msra.mxu0 %v10207
  %10216 = vmatpush.bf16.xpose.msra.mxu0 %v10204
  %10217 = vmatmul.bf16.gmra.mxu0 %v10201
  %v10218 = vpop.f32.mrf.mxu0
  %v10219 = vadd.f32 0.0, %v10218
  %v10220 = vpop.f32.mrf.mxu0
  %10221 = vdwg.mxu0
  %v10226 = vunpack.c.l.b16 %v3009
  %v10227 = vunpack.c.l.b16 %v3010
  %v10228 = vunpack.c.l.b16 %v3011
  %v10229 = vunpack.c.l.b16 %v3012
  %v10230 = vpack.c.b16 %v10227, %v10226
  %v10231 = vpack.c.b16 %v10229, %v10228
  %v10233 = vsel %vm3151, %v2020, 0
  %v10236 = vsel %vm3151, %v10230, 0
  %v10239 = vsel %vm3151, %v10231, 0
  %10241 = vmatpush.bf16.xpose.msra.mxu0 0
  %10242 = vmatpush.bf16.xpose.msra.mxu0 0
  %10243 = vmatpush.bf16.xpose.msra.mxu0 0
  %10244 = vmatpush.bf16.xpose.msra.mxu0 0
  %10245 = vmatpush.bf16.xpose.msra.mxu0 0
  %10246 = vmatpush.bf16.xpose.msra.mxu0 0
  %10247 = vmatpush.bf16.xpose.msra.mxu0 %v10239
  %10248 = vmatpush.bf16.xpose.msra.mxu0 %v10236
  %10249 = vmatmul.bf16.gmra.mxu0 %v10233
  %v10250 = vpop.f32.mrf.mxu0
  %v10251 = vadd.f32 0.0, %v10250
  %v10252 = vpop.f32.mrf.mxu0
  %10253 = vdwg.mxu0
  %v10258 = vunpack.c.l.b16 %v3013
  %v10259 = vunpack.c.l.b16 %v3014
  %v10260 = vunpack.c.l.b16 %v3015
  %v10261 = vunpack.c.l.b16 %v3016
  %v10262 = vpack.c.b16 %v10259, %v10258
  %v10263 = vpack.c.b16 %v10261, %v10260
  %v10264 = vsel %vm3151, %v2023, 0
  %v10267 = vsel %vm3151, %v10262, 0
  %v10270 = vsel %vm3151, %v10263, 0
  %10272 = vmatpush.bf16.xpose.msra.mxu0 0
  %10273 = vmatpush.bf16.xpose.msra.mxu0 0
  %10274 = vmatpush.bf16.xpose.msra.mxu0 0
  %10275 = vmatpush.bf16.xpose.msra.mxu0 0
  %10276 = vmatpush.bf16.xpose.msra.mxu0 0
  %10277 = vmatpush.bf16.xpose.msra.mxu0 0
  %10278 = vmatpush.bf16.xpose.msra.mxu0 %v10270
  %10279 = vmatpush.bf16.xpose.msra.mxu0 %v10267
  %10280 = vmatmul.bf16.gmra.mxu0 %v10264
  %v10281 = vpop.f32.mrf.mxu0
  %v10282 = vadd.f32 0.0, %v10281
  %v10283 = vpop.f32.mrf.mxu0
  %10284 = vdwg.mxu0
  %v10289 = vunpack.c.l.b16 %v3017
  %v10290 = vunpack.c.l.b16 %v3018
  %v10291 = vunpack.c.l.b16 %v3019
  %v10292 = vunpack.c.l.b16 %v3020
  %v10293 = vpack.c.b16 %v10290, %v10289
  %v10294 = vpack.c.b16 %v10292, %v10291
  %v10296 = vsel %vm3151, %v2026, 0
  %v10299 = vsel %vm3151, %v10293, 0
  %v10302 = vsel %vm3151, %v10294, 0
  %10304 = vmatpush.bf16.xpose.msra.mxu0 0
  %10305 = vmatpush.bf16.xpose.msra.mxu0 0
  %10306 = vmatpush.bf16.xpose.msra.mxu0 0
  %10307 = vmatpush.bf16.xpose.msra.mxu0 0
  %10308 = vmatpush.bf16.xpose.msra.mxu0 0
  %10309 = vmatpush.bf16.xpose.msra.mxu0 0
  %10310 = vmatpush.bf16.xpose.msra.mxu0 %v10302
  %10311 = vmatpush.bf16.xpose.msra.mxu0 %v10299
  %10312 = vmatmul.bf16.gmra.mxu0 %v10296
  %v10313 = vpop.f32.mrf.mxu0
  %v10314 = vadd.f32 0.0, %v10313
  %v10315 = vpop.f32.mrf.mxu0
  %10316 = vdwg.mxu0
  %v10321 = vunpack.c.l.b16 %v3021
  %v10322 = vunpack.c.l.b16 %v3022
  %v10323 = vunpack.c.l.b16 %v3023
  %v10324 = vunpack.c.l.b16 %v3024
  %v10325 = vpack.c.b16 %v10322, %v10321
  %v10326 = vpack.c.b16 %v10324, %v10323
  %v10328 = vsel %vm3151, %v2029, 0
  %v10331 = vsel %vm3151, %v10325, 0
  %v10334 = vsel %vm3151, %v10326, 0
  %10336 = vmatpush.bf16.xpose.msra.mxu0 0
  %10337 = vmatpush.bf16.xpose.msra.mxu0 0
  %10338 = vmatpush.bf16.xpose.msra.mxu0 0
  %10339 = vmatpush.bf16.xpose.msra.mxu0 0
  %10340 = vmatpush.bf16.xpose.msra.mxu0 0
  %10341 = vmatpush.bf16.xpose.msra.mxu0 0
  %10342 = vmatpush.bf16.xpose.msra.mxu0 %v10334
  %10343 = vmatpush.bf16.xpose.msra.mxu0 %v10331
  %10344 = vmatmul.bf16.gmra.mxu0 %v10328
  %v10345 = vpop.f32.mrf.mxu0
  %v10346 = vadd.f32 0.0, %v10345
  %v10347 = vpop.f32.mrf.mxu0
  %10348 = vdwg.mxu0
  %v10353 = vunpack.c.l.b16 %v3025
  %v10354 = vunpack.c.l.b16 %v3026
  %v10355 = vunpack.c.l.b16 %v3027
  %v10356 = vunpack.c.l.b16 %v3028
  %v10357 = vpack.c.b16 %v10354, %v10353
  %v10358 = vpack.c.b16 %v10356, %v10355
  %v10360 = vsel %vm3151, %v2032, 0
  %v10363 = vsel %vm3151, %v10357, 0
  %v10366 = vsel %vm3151, %v10358, 0
  %10368 = vmatpush.bf16.xpose.msra.mxu0 0
  %10369 = vmatpush.bf16.xpose.msra.mxu0 0
  %10370 = vmatpush.bf16.xpose.msra.mxu0 0
  %10371 = vmatpush.bf16.xpose.msra.mxu0 0
  %10372 = vmatpush.bf16.xpose.msra.mxu0 0
  %10373 = vmatpush.bf16.xpose.msra.mxu0 0
  %10374 = vmatpush.bf16.xpose.msra.mxu0 %v10366
  %10375 = vmatpush.bf16.xpose.msra.mxu0 %v10363
  %10376 = vmatmul.bf16.gmra.mxu0 %v10360
  %v10377 = vpop.f32.mrf.mxu0
  %v10378 = vadd.f32 0.0, %v10377
  %v10379 = vpop.f32.mrf.mxu0
  %10380 = vdwg.mxu0
  %v10385 = vunpack.c.l.b16 %v3029
  %v10386 = vunpack.c.l.b16 %v3030
  %v10387 = vunpack.c.l.b16 %v3031
  %v10388 = vunpack.c.l.b16 %v3032
  %v10389 = vpack.c.b16 %v10386, %v10385
  %v10390 = vpack.c.b16 %v10388, %v10387
  %v10391 = vsel %vm3151, %v2035, 0
  %v10394 = vsel %vm3151, %v10389, 0
  %v10397 = vsel %vm3151, %v10390, 0
  %10399 = vmatpush.bf16.xpose.msra.mxu0 0
  %10400 = vmatpush.bf16.xpose.msra.mxu0 0
  %10401 = vmatpush.bf16.xpose.msra.mxu0 0
  %10402 = vmatpush.bf16.xpose.msra.mxu0 0
  %10403 = vmatpush.bf16.xpose.msra.mxu0 0
  %10404 = vmatpush.bf16.xpose.msra.mxu0 0
  %10405 = vmatpush.bf16.xpose.msra.mxu0 %v10397
  %10406 = vmatpush.bf16.xpose.msra.mxu0 %v10394
  %10407 = vmatmul.bf16.gmra.mxu0 %v10391
  %v10408 = vpop.f32.mrf.mxu0
  %v10409 = vadd.f32 0.0, %v10408
  %v10410 = vpop.f32.mrf.mxu0
  %10411 = vdwg.mxu0
  %v10416 = vunpack.c.l.b16 %v3033
  %v10417 = vunpack.c.l.b16 %v3034
  %v10418 = vunpack.c.l.b16 %v3035
  %v10419 = vunpack.c.l.b16 %v3036
  %v10420 = vpack.c.b16 %v10417, %v10416
  %v10421 = vpack.c.b16 %v10419, %v10418
  %v10423 = vsel %vm3151, %v2038, 0
  %v10426 = vsel %vm3151, %v10420, 0
  %v10429 = vsel %vm3151, %v10421, 0
  %10431 = vmatpush.bf16.xpose.msra.mxu0 0
  %10432 = vmatpush.bf16.xpose.msra.mxu0 0
  %10433 = vmatpush.bf16.xpose.msra.mxu0 0
  %10434 = vmatpush.bf16.xpose.msra.mxu0 0
  %10435 = vmatpush.bf16.xpose.msra.mxu0 0
  %10436 = vmatpush.bf16.xpose.msra.mxu0 0
  %10437 = vmatpush.bf16.xpose.msra.mxu0 %v10429
  %10438 = vmatpush.bf16.xpose.msra.mxu0 %v10426
  %10439 = vmatmul.bf16.gmra.mxu0 %v10423
  %v10440 = vpop.f32.mrf.mxu0
  %v10441 = vadd.f32 0.0, %v10440
  %v10442 = vpop.f32.mrf.mxu0
  %10443 = vdwg.mxu0
  %v10448 = vunpack.c.l.b16 %v3037
  %v10449 = vunpack.c.l.b16 %v3038
  %v10450 = vunpack.c.l.b16 %v3039
  %v10451 = vunpack.c.l.b16 %v3040
  %v10452 = vpack.c.b16 %v10449, %v10448
  %v10453 = vpack.c.b16 %v10451, %v10450
  %v10455 = vsel %vm3151, %v2041, 0
  %v10458 = vsel %vm3151, %v10452, 0
  %v10461 = vsel %vm3151, %v10453, 0
  %10463 = vmatpush.bf16.xpose.msra.mxu0 0
  %10464 = vmatpush.bf16.xpose.msra.mxu0 0
  %10465 = vmatpush.bf16.xpose.msra.mxu0 0
  %10466 = vmatpush.bf16.xpose.msra.mxu0 0
  %10467 = vmatpush.bf16.xpose.msra.mxu0 0
  %10468 = vmatpush.bf16.xpose.msra.mxu0 0
  %10469 = vmatpush.bf16.xpose.msra.mxu0 %v10461
  %10470 = vmatpush.bf16.xpose.msra.mxu0 %v10458
  %10471 = vmatmul.bf16.gmra.mxu0 %v10455
  %v10472 = vpop.f32.mrf.mxu0
  %v10473 = vadd.f32 0.0, %v10472
  %v10474 = vpop.f32.mrf.mxu0
  %10475 = vdwg.mxu0
  %v10480 = vunpack.c.l.b16 %v3041
  %v10481 = vunpack.c.l.b16 %v3042
  %v10482 = vunpack.c.l.b16 %v3043
  %v10483 = vunpack.c.l.b16 %v3044
  %v10484 = vpack.c.b16 %v10481, %v10480
  %v10485 = vpack.c.b16 %v10483, %v10482
  %v10487 = vsel %vm3151, %v2044, 0
  %v10490 = vsel %vm3151, %v10484, 0
  %v10493 = vsel %vm3151, %v10485, 0
  %10495 = vmatpush.bf16.xpose.msra.mxu0 0
  %10496 = vmatpush.bf16.xpose.msra.mxu0 0
  %10497 = vmatpush.bf16.xpose.msra.mxu0 0
  %10498 = vmatpush.bf16.xpose.msra.mxu0 0
  %10499 = vmatpush.bf16.xpose.msra.mxu0 0
  %10500 = vmatpush.bf16.xpose.msra.mxu0 0
  %10501 = vmatpush.bf16.xpose.msra.mxu0 %v10493
  %10502 = vmatpush.bf16.xpose.msra.mxu0 %v10490
  %10503 = vmatmul.bf16.gmra.mxu0 %v10487
  %v10504 = vpop.f32.mrf.mxu0
  %v10505 = vadd.f32 0.0, %v10504
  %v10506 = vpop.f32.mrf.mxu0
  %10507 = vdwg.mxu0
  %v10512 = vunpack.c.l.b16 %v3045
  %v10513 = vunpack.c.l.b16 %v3046
  %v10514 = vunpack.c.l.b16 %v3047
  %v10515 = vunpack.c.l.b16 %v3048
  %v10516 = vpack.c.b16 %v10513, %v10512
  %v10517 = vpack.c.b16 %v10515, %v10514
  %v10518 = vsel %vm3151, %v2047, 0
  %v10521 = vsel %vm3151, %v10516, 0
  %v10524 = vsel %vm3151, %v10517, 0
  %10526 = vmatpush.bf16.xpose.msra.mxu0 0
  %10527 = vmatpush.bf16.xpose.msra.mxu0 0
  %10528 = vmatpush.bf16.xpose.msra.mxu0 0
  %10529 = vmatpush.bf16.xpose.msra.mxu0 0
  %10530 = vmatpush.bf16.xpose.msra.mxu0 0
  %10531 = vmatpush.bf16.xpose.msra.mxu0 0
  %10532 = vmatpush.bf16.xpose.msra.mxu0 %v10524
  %10533 = vmatpush.bf16.xpose.msra.mxu0 %v10521
  %10534 = vmatmul.bf16.gmra.mxu0 %v10518
  %v10535 = vpop.f32.mrf.mxu0
  %v10536 = vadd.f32 0.0, %v10535
  %v10537 = vpop.f32.mrf.mxu0
  %10538 = vdwg.mxu0
  %v10543 = vunpack.c.l.b16 %v3049
  %v10544 = vunpack.c.l.b16 %v3050
  %v10545 = vunpack.c.l.b16 %v3051
  %v10546 = vunpack.c.l.b16 %v3052
  %v10547 = vpack.c.b16 %v10544, %v10543
  %v10548 = vpack.c.b16 %v10546, %v10545
  %v10550 = vsel %vm3151, %v2050, 0
  %v10553 = vsel %vm3151, %v10547, 0
  %v10556 = vsel %vm3151, %v10548, 0
  %10558 = vmatpush.bf16.xpose.msra.mxu0 0
  %10559 = vmatpush.bf16.xpose.msra.mxu0 0
  %10560 = vmatpush.bf16.xpose.msra.mxu0 0
  %10561 = vmatpush.bf16.xpose.msra.mxu0 0
  %10562 = vmatpush.bf16.xpose.msra.mxu0 0
  %10563 = vmatpush.bf16.xpose.msra.mxu0 0
  %10564 = vmatpush.bf16.xpose.msra.mxu0 %v10556
  %10565 = vmatpush.bf16.xpose.msra.mxu0 %v10553
  %10566 = vmatmul.bf16.gmra.mxu0 %v10550
  %v10567 = vpop.f32.mrf.mxu0
  %v10568 = vadd.f32 0.0, %v10567
  %v10569 = vpop.f32.mrf.mxu0
  %10570 = vdwg.mxu0
  %v10575 = vunpack.c.l.b16 %v3053
  %v10576 = vunpack.c.l.b16 %v3054
  %v10577 = vunpack.c.l.b16 %v3055
  %v10578 = vunpack.c.l.b16 %v3056
  %v10579 = vpack.c.b16 %v10576, %v10575
  %v10580 = vpack.c.b16 %v10578, %v10577
  %v10582 = vsel %vm3151, %v2053, 0
  %v10585 = vsel %vm3151, %v10579, 0
  %v10588 = vsel %vm3151, %v10580, 0
  %10590 = vmatpush.bf16.xpose.msra.mxu0 0
  %10591 = vmatpush.bf16.xpose.msra.mxu0 0
  %10592 = vmatpush.bf16.xpose.msra.mxu0 0
  %10593 = vmatpush.bf16.xpose.msra.mxu0 0
  %10594 = vmatpush.bf16.xpose.msra.mxu0 0
  %10595 = vmatpush.bf16.xpose.msra.mxu0 0
  %10596 = vmatpush.bf16.xpose.msra.mxu0 %v10588
  %10597 = vmatpush.bf16.xpose.msra.mxu0 %v10585
  %10598 = vmatmul.bf16.gmra.mxu0 %v10582
  %v10599 = vpop.f32.mrf.mxu0
  %v10600 = vadd.f32 0.0, %v10599
  %v10601 = vpop.f32.mrf.mxu0
  %10602 = vdwg.mxu0
  %v10607 = vunpack.c.l.b16 %v3057
  %v10608 = vunpack.c.l.b16 %v3058
  %v10609 = vunpack.c.l.b16 %v3059
  %v10610 = vunpack.c.l.b16 %v3060
  %v10611 = vpack.c.b16 %v10608, %v10607
  %v10612 = vpack.c.b16 %v10610, %v10609
  %v10614 = vsel %vm3151, %v2056, 0
  %v10617 = vsel %vm3151, %v10611, 0
  %v10620 = vsel %vm3151, %v10612, 0
  %10622 = vmatpush.bf16.xpose.msra.mxu0 0
  %10623 = vmatpush.bf16.xpose.msra.mxu0 0
  %10624 = vmatpush.bf16.xpose.msra.mxu0 0
  %10625 = vmatpush.bf16.xpose.msra.mxu0 0
  %10626 = vmatpush.bf16.xpose.msra.mxu0 0
  %10627 = vmatpush.bf16.xpose.msra.mxu0 0
  %10628 = vmatpush.bf16.xpose.msra.mxu0 %v10620
  %10629 = vmatpush.bf16.xpose.msra.mxu0 %v10617
  %10630 = vmatmul.bf16.gmra.mxu0 %v10614
  %v10631 = vpop.f32.mrf.mxu0
  %v10632 = vadd.f32 0.0, %v10631
  %v10633 = vpop.f32.mrf.mxu0
  %10634 = vdwg.mxu0
  %v10639 = vunpack.c.l.b16 %v3061
  %v10640 = vunpack.c.l.b16 %v3062
  %v10641 = vunpack.c.l.b16 %v3063
  %v10642 = vunpack.c.l.b16 %v3064
  %v10643 = vpack.c.b16 %v10640, %v10639
  %v10644 = vpack.c.b16 %v10642, %v10641
  %v10645 = vsel %vm3151, %v2059, 0
  %v10648 = vsel %vm3151, %v10643, 0
  %v10651 = vsel %vm3151, %v10644, 0
  %10653 = vmatpush.bf16.xpose.msra.mxu0 0
  %10654 = vmatpush.bf16.xpose.msra.mxu0 0
  %10655 = vmatpush.bf16.xpose.msra.mxu0 0
  %10656 = vmatpush.bf16.xpose.msra.mxu0 0
  %10657 = vmatpush.bf16.xpose.msra.mxu0 0
  %10658 = vmatpush.bf16.xpose.msra.mxu0 0
  %10659 = vmatpush.bf16.xpose.msra.mxu0 %v10651
  %10660 = vmatpush.bf16.xpose.msra.mxu0 %v10648
  %10661 = vmatmul.bf16.gmra.mxu0 %v10645
  %v10662 = vpop.f32.mrf.mxu0
  %v10663 = vadd.f32 0.0, %v10662
  %v10664 = vpop.f32.mrf.mxu0
  %10665 = vdwg.mxu0
  %v10670 = vunpack.c.l.b16 %v3065
  %v10671 = vunpack.c.l.b16 %v3066
  %v10672 = vunpack.c.l.b16 %v3067
  %v10673 = vunpack.c.l.b16 %v3068
  %v10674 = vpack.c.b16 %v10671, %v10670
  %v10675 = vpack.c.b16 %v10673, %v10672
  %v10677 = vsel %vm3151, %v2062, 0
  %v10680 = vsel %vm3151, %v10674, 0
  %v10683 = vsel %vm3151, %v10675, 0
  %10685 = vmatpush.bf16.xpose.msra.mxu0 0
  %10686 = vmatpush.bf16.xpose.msra.mxu0 0
  %10687 = vmatpush.bf16.xpose.msra.mxu0 0
  %10688 = vmatpush.bf16.xpose.msra.mxu0 0
  %10689 = vmatpush.bf16.xpose.msra.mxu0 0
  %10690 = vmatpush.bf16.xpose.msra.mxu0 0
  %10691 = vmatpush.bf16.xpose.msra.mxu0 %v10683
  %10692 = vmatpush.bf16.xpose.msra.mxu0 %v10680
  %10693 = vmatmul.bf16.gmra.mxu0 %v10677
  %v10694 = vpop.f32.mrf.mxu0
  %v10695 = vadd.f32 0.0, %v10694
  %v10696 = vpop.f32.mrf.mxu0
  %10697 = vdwg.mxu0
  %v10702 = vunpack.c.l.b16 %v3069
  %v10703 = vunpack.c.l.b16 %v3070
  %v10704 = vunpack.c.l.b16 %v3071
  %v10705 = vunpack.c.l.b16 %v3072
  %v10706 = vpack.c.b16 %v10703, %v10702
  %v10707 = vpack.c.b16 %v10705, %v10704
  %v10709 = vsel %vm3151, %v2065, 0
  %v10712 = vsel %vm3151, %v10706, 0
  %v10715 = vsel %vm3151, %v10707, 0
  %10717 = vmatpush.bf16.xpose.msra.mxu0 0
  %10718 = vmatpush.bf16.xpose.msra.mxu0 0
  %10719 = vmatpush.bf16.xpose.msra.mxu0 0
  %10720 = vmatpush.bf16.xpose.msra.mxu0 0
  %10721 = vmatpush.bf16.xpose.msra.mxu0 0
  %10722 = vmatpush.bf16.xpose.msra.mxu0 0
  %10723 = vmatpush.bf16.xpose.msra.mxu0 %v10715
  %10724 = vmatpush.bf16.xpose.msra.mxu0 %v10712
  %10725 = vmatmul.bf16.gmra.mxu0 %v10709
  %v10726 = vpop.f32.mrf.mxu0
  %v10727 = vadd.f32 0.0, %v10726
  %v10728 = vpop.f32.mrf.mxu0
  %10729 = vdwg.mxu0
  %v10734 = vunpack.c.l.b16 %v3073
  %v10735 = vunpack.c.l.b16 %v3074
  %v10736 = vunpack.c.l.b16 %v3075
  %v10737 = vunpack.c.l.b16 %v3076
  %v10738 = vpack.c.b16 %v10735, %v10734
  %v10739 = vpack.c.b16 %v10737, %v10736
  %v10741 = vsel %vm3151, %v2068, 0
  %v10744 = vsel %vm3151, %v10738, 0
  %v10747 = vsel %vm3151, %v10739, 0
  %10749 = vmatpush.bf16.xpose.msra.mxu0 0
  %10750 = vmatpush.bf16.xpose.msra.mxu0 0
  %10751 = vmatpush.bf16.xpose.msra.mxu0 0
  %10752 = vmatpush.bf16.xpose.msra.mxu0 0
  %10753 = vmatpush.bf16.xpose.msra.mxu0 0
  %10754 = vmatpush.bf16.xpose.msra.mxu0 0
  %10755 = vmatpush.bf16.xpose.msra.mxu0 %v10747
  %10756 = vmatpush.bf16.xpose.msra.mxu0 %v10744
  %10757 = vmatmul.bf16.gmra.mxu0 %v10741
  %v10758 = vpop.f32.mrf.mxu0
  %v10759 = vadd.f32 0.0, %v10758
  %v10760 = vpop.f32.mrf.mxu0
  %10761 = vdwg.mxu0
  %v10766 = vunpack.c.l.b16 %v3077
  %v10767 = vunpack.c.l.b16 %v3078
  %v10768 = vunpack.c.l.b16 %v3079
  %v10769 = vunpack.c.l.b16 %v3080
  %v10770 = vpack.c.b16 %v10767, %v10766
  %v10771 = vpack.c.b16 %v10769, %v10768
  %v10772 = vsel %vm3151, %v2071, 0
  %v10775 = vsel %vm3151, %v10770, 0
  %v10778 = vsel %vm3151, %v10771, 0
  %10780 = vmatpush.bf16.xpose.msra.mxu0 0
  %10781 = vmatpush.bf16.xpose.msra.mxu0 0
  %10782 = vmatpush.bf16.xpose.msra.mxu0 0
  %10783 = vmatpush.bf16.xpose.msra.mxu0 0
  %10784 = vmatpush.bf16.xpose.msra.mxu0 0
  %10785 = vmatpush.bf16.xpose.msra.mxu0 0
  %10786 = vmatpush.bf16.xpose.msra.mxu0 %v10778
  %10787 = vmatpush.bf16.xpose.msra.mxu0 %v10775
  %10788 = vmatmul.bf16.gmra.mxu0 %v10772
  %v10789 = vpop.f32.mrf.mxu0
  %v10790 = vadd.f32 0.0, %v10789
  %v10791 = vpop.f32.mrf.mxu0
  %10792 = vdwg.mxu0
  %v10797 = vunpack.c.l.b16 %v3081
  %v10798 = vunpack.c.l.b16 %v3082
  %v10799 = vunpack.c.l.b16 %v3083
  %v10800 = vunpack.c.l.b16 %v3084
  %v10801 = vpack.c.b16 %v10798, %v10797
  %v10802 = vpack.c.b16 %v10800, %v10799
  %v10804 = vsel %vm3151, %v2074, 0
  %v10807 = vsel %vm3151, %v10801, 0
  %v10810 = vsel %vm3151, %v10802, 0
  %10812 = vmatpush.bf16.xpose.msra.mxu0 0
  %10813 = vmatpush.bf16.xpose.msra.mxu0 0
  %10814 = vmatpush.bf16.xpose.msra.mxu0 0
  %10815 = vmatpush.bf16.xpose.msra.mxu0 0
  %10816 = vmatpush.bf16.xpose.msra.mxu0 0
  %10817 = vmatpush.bf16.xpose.msra.mxu0 0
  %10818 = vmatpush.bf16.xpose.msra.mxu0 %v10810
  %10819 = vmatpush.bf16.xpose.msra.mxu0 %v10807
  %10820 = vmatmul.bf16.gmra.mxu0 %v10804
  %v10821 = vpop.f32.mrf.mxu0
  %v10822 = vadd.f32 0.0, %v10821
  %v10823 = vpop.f32.mrf.mxu0
  %10824 = vdwg.mxu0
  %v10829 = vunpack.c.l.b16 %v3085
  %v10830 = vunpack.c.l.b16 %v3086
  %v10831 = vunpack.c.l.b16 %v3087
  %v10832 = vunpack.c.l.b16 %v3088
  %v10833 = vpack.c.b16 %v10830, %v10829
  %v10834 = vpack.c.b16 %v10832, %v10831
  %v10836 = vsel %vm3151, %v2077, 0
  %v10839 = vsel %vm3151, %v10833, 0
  %v10842 = vsel %vm3151, %v10834, 0
  %10844 = vmatpush.bf16.xpose.msra.mxu0 0
  %10845 = vmatpush.bf16.xpose.msra.mxu0 0
  %10846 = vmatpush.bf16.xpose.msra.mxu0 0
  %10847 = vmatpush.bf16.xpose.msra.mxu0 0
  %10848 = vmatpush.bf16.xpose.msra.mxu0 0
  %10849 = vmatpush.bf16.xpose.msra.mxu0 0
  %10850 = vmatpush.bf16.xpose.msra.mxu0 %v10842
  %10851 = vmatpush.bf16.xpose.msra.mxu0 %v10839
  %10852 = vmatmul.bf16.gmra.mxu0 %v10836
  %v10853 = vpop.f32.mrf.mxu0
  %v10854 = vadd.f32 0.0, %v10853
  %v10855 = vpop.f32.mrf.mxu0
  %10856 = vdwg.mxu0
  %v10861 = vunpack.c.l.b16 %v3089
  %v10862 = vunpack.c.l.b16 %v3090
  %v10863 = vunpack.c.l.b16 %v3091
  %v10864 = vunpack.c.l.b16 %v3092
  %v10865 = vpack.c.b16 %v10862, %v10861
  %v10866 = vpack.c.b16 %v10864, %v10863
  %v10868 = vsel %vm3151, %v2080, 0
  %v10871 = vsel %vm3151, %v10865, 0
  %v10874 = vsel %vm3151, %v10866, 0
  %10876 = vmatpush.bf16.xpose.msra.mxu0 0
  %10877 = vmatpush.bf16.xpose.msra.mxu0 0
  %10878 = vmatpush.bf16.xpose.msra.mxu0 0
  %10879 = vmatpush.bf16.xpose.msra.mxu0 0
  %10880 = vmatpush.bf16.xpose.msra.mxu0 0
  %10881 = vmatpush.bf16.xpose.msra.mxu0 0
  %10882 = vmatpush.bf16.xpose.msra.mxu0 %v10874
  %10883 = vmatpush.bf16.xpose.msra.mxu0 %v10871
  %10884 = vmatmul.bf16.gmra.mxu0 %v10868
  %v10885 = vpop.f32.mrf.mxu0
  %v10886 = vadd.f32 0.0, %v10885
  %v10887 = vpop.f32.mrf.mxu0
  %10888 = vdwg.mxu0
  %v10893 = vunpack.c.l.b16 %v3093
  %v10894 = vunpack.c.l.b16 %v3094
  %v10895 = vunpack.c.l.b16 %v3095
  %v10896 = vunpack.c.l.b16 %v3096
  %v10897 = vpack.c.b16 %v10894, %v10893
  %v10898 = vpack.c.b16 %v10896, %v10895
  %v10899 = vsel %vm3151, %v2083, 0
  %v10902 = vsel %vm3151, %v10897, 0
  %v10905 = vsel %vm3151, %v10898, 0
  %10907 = vmatpush.bf16.xpose.msra.mxu0 0
  %10908 = vmatpush.bf16.xpose.msra.mxu0 0
  %10909 = vmatpush.bf16.xpose.msra.mxu0 0
  %10910 = vmatpush.bf16.xpose.msra.mxu0 0
  %10911 = vmatpush.bf16.xpose.msra.mxu0 0
  %10912 = vmatpush.bf16.xpose.msra.mxu0 0
  %10913 = vmatpush.bf16.xpose.msra.mxu0 %v10905
  %10914 = vmatpush.bf16.xpose.msra.mxu0 %v10902
  %10915 = vmatmul.bf16.gmra.mxu0 %v10899
  %v10916 = vpop.f32.mrf.mxu0
  %v10917 = vadd.f32 0.0, %v10916
  %v10918 = vpop.f32.mrf.mxu0
  %10919 = vdwg.mxu0
  %v10924 = vunpack.c.l.b16 %v3097
  %v10925 = vunpack.c.l.b16 %v3098
  %v10926 = vunpack.c.l.b16 %v3099
  %v10927 = vunpack.c.l.b16 %v3100
  %v10928 = vpack.c.b16 %v10925, %v10924
  %v10929 = vpack.c.b16 %v10927, %v10926
  %v10931 = vsel %vm3151, %v2086, 0
  %v10934 = vsel %vm3151, %v10928, 0
  %v10937 = vsel %vm3151, %v10929, 0
  %10939 = vmatpush.bf16.xpose.msra.mxu0 0
  %10940 = vmatpush.bf16.xpose.msra.mxu0 0
  %10941 = vmatpush.bf16.xpose.msra.mxu0 0
  %10942 = vmatpush.bf16.xpose.msra.mxu0 0
  %10943 = vmatpush.bf16.xpose.msra.mxu0 0
  %10944 = vmatpush.bf16.xpose.msra.mxu0 0
  %10945 = vmatpush.bf16.xpose.msra.mxu0 %v10937
  %10946 = vmatpush.bf16.xpose.msra.mxu0 %v10934
  %10947 = vmatmul.bf16.gmra.mxu0 %v10931
  %v10948 = vpop.f32.mrf.mxu0
  %v10949 = vadd.f32 0.0, %v10948
  %v10950 = vpop.f32.mrf.mxu0
  %10951 = vdwg.mxu0
  %v10956 = vunpack.c.l.b16 %v3101
  %v10957 = vunpack.c.l.b16 %v3102
  %v10958 = vunpack.c.l.b16 %v3103
  %v10959 = vunpack.c.l.b16 %v3104
  %v10960 = vpack.c.b16 %v10957, %v10956
  %v10961 = vpack.c.b16 %v10959, %v10958
  %v10963 = vsel %vm3151, %v2089, 0
  %v10966 = vsel %vm3151, %v10960, 0
  %v10969 = vsel %vm3151, %v10961, 0
  %10971 = vmatpush.bf16.xpose.msra.mxu0 0
  %10972 = vmatpush.bf16.xpose.msra.mxu0 0
  %10973 = vmatpush.bf16.xpose.msra.mxu0 0
  %10974 = vmatpush.bf16.xpose.msra.mxu0 0
  %10975 = vmatpush.bf16.xpose.msra.mxu0 0
  %10976 = vmatpush.bf16.xpose.msra.mxu0 0
  %10977 = vmatpush.bf16.xpose.msra.mxu0 %v10969
  %10978 = vmatpush.bf16.xpose.msra.mxu0 %v10966
  %10979 = vmatmul.bf16.gmra.mxu0 %v10963
  %v10980 = vpop.f32.mrf.mxu0
  %v10981 = vadd.f32 0.0, %v10980
  %v10982 = vpop.f32.mrf.mxu0
  %10983 = vdwg.mxu0
  %v10988 = vunpack.c.l.b16 %v3105
  %v10989 = vunpack.c.l.b16 %v3106
  %v10990 = vunpack.c.l.b16 %v3107
  %v10991 = vunpack.c.l.b16 %v3108
  %v10992 = vpack.c.b16 %v10989, %v10988
  %v10993 = vpack.c.b16 %v10991, %v10990
  %v10995 = vsel %vm3151, %v2092, 0
  %v10998 = vsel %vm3151, %v10992, 0
  %v11001 = vsel %vm3151, %v10993, 0
  %11003 = vmatpush.bf16.xpose.msra.mxu0 0
  %11004 = vmatpush.bf16.xpose.msra.mxu0 0
  %11005 = vmatpush.bf16.xpose.msra.mxu0 0
  %11006 = vmatpush.bf16.xpose.msra.mxu0 0
  %11007 = vmatpush.bf16.xpose.msra.mxu0 0
  %11008 = vmatpush.bf16.xpose.msra.mxu0 0
  %11009 = vmatpush.bf16.xpose.msra.mxu0 %v11001
  %11010 = vmatpush.bf16.xpose.msra.mxu0 %v10998
  %11011 = vmatmul.bf16.gmra.mxu0 %v10995
  %v11012 = vpop.f32.mrf.mxu0
  %v11013 = vadd.f32 0.0, %v11012
  %v11014 = vpop.f32.mrf.mxu0
  %11015 = vdwg.mxu0
  %v11020 = vunpack.c.l.b16 %v3109
  %v11021 = vunpack.c.l.b16 %v3110
  %v11022 = vunpack.c.l.b16 %v3111
  %v11023 = vunpack.c.l.b16 %v3112
  %v11024 = vpack.c.b16 %v11021, %v11020
  %v11025 = vpack.c.b16 %v11023, %v11022
  %v11026 = vsel %vm3151, %v2095, 0
  %v11029 = vsel %vm3151, %v11024, 0
  %v11032 = vsel %vm3151, %v11025, 0
  %11034 = vmatpush.bf16.xpose.msra.mxu0 0
  %11035 = vmatpush.bf16.xpose.msra.mxu0 0
  %11036 = vmatpush.bf16.xpose.msra.mxu0 0
  %11037 = vmatpush.bf16.xpose.msra.mxu0 0
  %11038 = vmatpush.bf16.xpose.msra.mxu0 0
  %11039 = vmatpush.bf16.xpose.msra.mxu0 0
  %11040 = vmatpush.bf16.xpose.msra.mxu0 %v11032
  %11041 = vmatpush.bf16.xpose.msra.mxu0 %v11029
  %11042 = vmatmul.bf16.gmra.mxu0 %v11026
  %v11043 = vpop.f32.mrf.mxu0
  %v11044 = vadd.f32 0.0, %v11043
  %v11045 = vpop.f32.mrf.mxu0
  %11046 = vdwg.mxu0
  %v11051 = vunpack.c.l.b16 %v3113
  %v11052 = vunpack.c.l.b16 %v3114
  %v11053 = vunpack.c.l.b16 %v3115
  %v11054 = vunpack.c.l.b16 %v3116
  %v11055 = vpack.c.b16 %v11052, %v11051
  %v11056 = vpack.c.b16 %v11054, %v11053
  %v11058 = vsel %vm3151, %v2098, 0
  %v11061 = vsel %vm3151, %v11055, 0
  %v11064 = vsel %vm3151, %v11056, 0
  %11066 = vmatpush.bf16.xpose.msra.mxu0 0
  %11067 = vmatpush.bf16.xpose.msra.mxu0 0
  %11068 = vmatpush.bf16.xpose.msra.mxu0 0
  %11069 = vmatpush.bf16.xpose.msra.mxu0 0
  %11070 = vmatpush.bf16.xpose.msra.mxu0 0
  %11071 = vmatpush.bf16.xpose.msra.mxu0 0
  %11072 = vmatpush.bf16.xpose.msra.mxu0 %v11064
  %11073 = vmatpush.bf16.xpose.msra.mxu0 %v11061
  %11074 = vmatmul.bf16.gmra.mxu0 %v11058
  %v11075 = vpop.f32.mrf.mxu0
  %v11076 = vadd.f32 0.0, %v11075
  %v11077 = vpop.f32.mrf.mxu0
  %11078 = vdwg.mxu0
  %v11083 = vunpack.c.l.b16 %v3117
  %v11084 = vunpack.c.l.b16 %v3118
  %v11085 = vunpack.c.l.b16 %v3119
  %v11086 = vunpack.c.l.b16 %v3120
  %v11087 = vpack.c.b16 %v11084, %v11083
  %v11088 = vpack.c.b16 %v11086, %v11085
  %v11090 = vsel %vm3151, %v2101, 0
  %v11093 = vsel %vm3151, %v11087, 0
  %v11096 = vsel %vm3151, %v11088, 0
  %11098 = vmatpush.bf16.xpose.msra.mxu0 0
  %11099 = vmatpush.bf16.xpose.msra.mxu0 0
  %11100 = vmatpush.bf16.xpose.msra.mxu0 0
  %11101 = vmatpush.bf16.xpose.msra.mxu0 0
  %11102 = vmatpush.bf16.xpose.msra.mxu0 0
  %11103 = vmatpush.bf16.xpose.msra.mxu0 0
  %11104 = vmatpush.bf16.xpose.msra.mxu0 %v11096
  %11105 = vmatpush.bf16.xpose.msra.mxu0 %v11093
  %11106 = vmatmul.bf16.gmra.mxu0 %v11090
  %v11107 = vpop.f32.mrf.mxu0
  %v11108 = vadd.f32 0.0, %v11107
  %v11109 = vpop.f32.mrf.mxu0
  %11110 = vdwg.mxu0
  %v11115 = vunpack.c.l.b16 %v3121
  %v11116 = vunpack.c.l.b16 %v3122
  %v11117 = vunpack.c.l.b16 %v3123
  %v11118 = vunpack.c.l.b16 %v3124
  %v11119 = vpack.c.b16 %v11116, %v11115
  %v11120 = vpack.c.b16 %v11118, %v11117
  %v11122 = vsel %vm3151, %v2104, 0
  %v11125 = vsel %vm3151, %v11119, 0
  %v11128 = vsel %vm3151, %v11120, 0
  %11130 = vmatpush.bf16.xpose.msra.mxu0 0
  %11131 = vmatpush.bf16.xpose.msra.mxu0 0
  %11132 = vmatpush.bf16.xpose.msra.mxu0 0
  %11133 = vmatpush.bf16.xpose.msra.mxu0 0
  %11134 = vmatpush.bf16.xpose.msra.mxu0 0
  %11135 = vmatpush.bf16.xpose.msra.mxu0 0
  %11136 = vmatpush.bf16.xpose.msra.mxu0 %v11128
  %11137 = vmatpush.bf16.xpose.msra.mxu0 %v11125
  %11138 = vmatmul.bf16.gmra.mxu0 %v11122
  %v11139 = vpop.f32.mrf.mxu0
  %v11140 = vadd.f32 0.0, %v11139
  %v11141 = vpop.f32.mrf.mxu0
  %11142 = vdwg.mxu0
  %v11147 = vunpack.c.l.b16 %v3125
  %v11148 = vunpack.c.l.b16 %v3126
  %v11149 = vunpack.c.l.b16 %v3127
  %v11150 = vunpack.c.l.b16 %v3128
  %v11151 = vpack.c.b16 %v11148, %v11147
  %v11152 = vpack.c.b16 %v11150, %v11149
  %v11153 = vsel %vm3151, %v2107, 0
  %v11156 = vsel %vm3151, %v11151, 0
  %v11159 = vsel %vm3151, %v11152, 0
  %11161 = vmatpush.bf16.xpose.msra.mxu0 0
  %11162 = vmatpush.bf16.xpose.msra.mxu0 0
  %11163 = vmatpush.bf16.xpose.msra.mxu0 0
  %11164 = vmatpush.bf16.xpose.msra.mxu0 0
  %11165 = vmatpush.bf16.xpose.msra.mxu0 0
  %11166 = vmatpush.bf16.xpose.msra.mxu0 0
  %11167 = vmatpush.bf16.xpose.msra.mxu0 %v11159
  %11168 = vmatpush.bf16.xpose.msra.mxu0 %v11156
  %11169 = vmatmul.bf16.gmra.mxu0 %v11153
  %v11170 = vpop.f32.mrf.mxu0
  %v11171 = vadd.f32 0.0, %v11170
  %v11172 = vpop.f32.mrf.mxu0
  %11173 = vdwg.mxu0
  %v11178 = vunpack.c.l.b16 %v3129
  %v11179 = vunpack.c.l.b16 %v3130
  %v11180 = vunpack.c.l.b16 %v3131
  %v11181 = vunpack.c.l.b16 %v3132
  %v11182 = vpack.c.b16 %v11179, %v11178
  %v11183 = vpack.c.b16 %v11181, %v11180
  %v11185 = vsel %vm3151, %v2110, 0
  %v11188 = vsel %vm3151, %v11182, 0
  %v11191 = vsel %vm3151, %v11183, 0
  %11193 = vmatpush.bf16.xpose.msra.mxu0 0
  %11194 = vmatpush.bf16.xpose.msra.mxu0 0
  %11195 = vmatpush.bf16.xpose.msra.mxu0 0
  %11196 = vmatpush.bf16.xpose.msra.mxu0 0
  %11197 = vmatpush.bf16.xpose.msra.mxu0 0
  %11198 = vmatpush.bf16.xpose.msra.mxu0 0
  %11199 = vmatpush.bf16.xpose.msra.mxu0 %v11191
  %11200 = vmatpush.bf16.xpose.msra.mxu0 %v11188
  %11201 = vmatmul.bf16.gmra.mxu0 %v11185
  %v11202 = vpop.f32.mrf.mxu0
  %v11203 = vadd.f32 0.0, %v11202
  %v11204 = vpop.f32.mrf.mxu0
  %11205 = vdwg.mxu0
  %v11210 = vunpack.c.l.b16 %v3133
  %v11211 = vunpack.c.l.b16 %v3134
  %v11212 = vunpack.c.l.b16 %v3135
  %v11213 = vunpack.c.l.b16 %v3136
  %v11214 = vpack.c.b16 %v11211, %v11210
  %v11215 = vpack.c.b16 %v11213, %v11212
  %v11217 = vsel %vm3151, %v2113, 0
  %v11220 = vsel %vm3151, %v11214, 0
  %v11223 = vsel %vm3151, %v11215, 0
  %11225 = vmatpush.bf16.xpose.msra.mxu0 0
  %11226 = vmatpush.bf16.xpose.msra.mxu0 0
  %11227 = vmatpush.bf16.xpose.msra.mxu0 0
  %11228 = vmatpush.bf16.xpose.msra.mxu0 0
  %11229 = vmatpush.bf16.xpose.msra.mxu0 0
  %11230 = vmatpush.bf16.xpose.msra.mxu0 0
  %11231 = vmatpush.bf16.xpose.msra.mxu0 %v11223
  %11232 = vmatpush.bf16.xpose.msra.mxu0 %v11220
  %11233 = vmatmul.bf16.gmra.mxu0 %v11217
  %v11234 = vpop.f32.mrf.mxu0
  %v11235 = vadd.f32 0.0, %v11234
  %v11236 = vpop.f32.mrf.mxu0
  %11237 = vdwg.mxu0
  %v11242 = vunpack.c.l.b16 %v3137
  %v11243 = vunpack.c.l.b16 %v3138
  %v11244 = vunpack.c.l.b16 %v3139
  %v11245 = vunpack.c.l.b16 %v3140
  %v11246 = vpack.c.b16 %v11243, %v11242
  %v11247 = vpack.c.b16 %v11245, %v11244
  %v11249 = vsel %vm3151, %v2116, 0
  %v11252 = vsel %vm3151, %v11246, 0
  %v11255 = vsel %vm3151, %v11247, 0
  %11257 = vmatpush.bf16.xpose.msra.mxu0 0
  %11258 = vmatpush.bf16.xpose.msra.mxu0 0
  %11259 = vmatpush.bf16.xpose.msra.mxu0 0
  %11260 = vmatpush.bf16.xpose.msra.mxu0 0
  %11261 = vmatpush.bf16.xpose.msra.mxu0 0
  %11262 = vmatpush.bf16.xpose.msra.mxu0 0
  %11263 = vmatpush.bf16.xpose.msra.mxu0 %v11255
  %11264 = vmatpush.bf16.xpose.msra.mxu0 %v11252
  %11265 = vmatmul.bf16.gmra.mxu0 %v11249
  %v11266 = vpop.f32.mrf.mxu0
  %v11267 = vadd.f32 0.0, %v11266
  %v11268 = vpop.f32.mrf.mxu0
  %11269 = vdwg.mxu0
  %vm11270 = vcmask 254976
  %v11271 = vsel %vm11270, %v3170, 0.0
  %v11272 = vsel %vm11270, %v3202, 0.0
  %v11273 = vadd.f32 %v11271, %v11272
  %v11274 = vsel %vm11270, %v3234, 0.0
  %v11275 = vadd.f32 %v11273, %v11274
  %v11276 = vsel %vm11270, %v3266, 0.0
  %v11277 = vadd.f32 %v11275, %v11276
  %v11278 = vsel %vm11270, %v3297, 0.0
  %v11279 = vadd.f32 %v11277, %v11278
  %v11280 = vsel %vm11270, %v3329, 0.0
  %v11281 = vadd.f32 %v11279, %v11280
  %v11282 = vsel %vm11270, %v3361, 0.0
  %v11283 = vadd.f32 %v11281, %v11282
  %v11284 = vsel %vm11270, %v3393, 0.0
  %v11285 = vadd.f32 %v11283, %v11284
  %v11286 = vsel %vm11270, %v3424, 0.0
  %v11287 = vadd.f32 %v11285, %v11286
  %v11288 = vsel %vm11270, %v3456, 0.0
  %v11289 = vadd.f32 %v11287, %v11288
  %v11290 = vsel %vm11270, %v3488, 0.0
  %v11291 = vadd.f32 %v11289, %v11290
  %v11292 = vsel %vm11270, %v3520, 0.0
  %v11293 = vadd.f32 %v11291, %v11292
  %v11294 = vsel %vm11270, %v3551, 0.0
  %v11295 = vadd.f32 %v11293, %v11294
  %v11296 = vsel %vm11270, %v3583, 0.0
  %v11297 = vadd.f32 %v11295, %v11296
  %v11298 = vsel %vm11270, %v3615, 0.0
  %v11299 = vadd.f32 %v11297, %v11298
  %v11300 = vsel %vm11270, %v3647, 0.0
  %v11301 = vadd.f32 %v11299, %v11300
  %v11302 = vsel %vm11270, %v3678, 0.0
  %v11303 = vadd.f32 %v11301, %v11302
  %v11304 = vsel %vm11270, %v3710, 0.0
  %v11305 = vadd.f32 %v11303, %v11304
  %v11306 = vsel %vm11270, %v3742, 0.0
  %v11307 = vadd.f32 %v11305, %v11306
  %v11308 = vsel %vm11270, %v3774, 0.0
  %v11309 = vadd.f32 %v11307, %v11308
  %v11310 = vsel %vm11270, %v3805, 0.0
  %v11311 = vadd.f32 %v11309, %v11310
  %v11312 = vsel %vm11270, %v3837, 0.0
  %v11313 = vadd.f32 %v11311, %v11312
  %v11314 = vsel %vm11270, %v3869, 0.0
  %v11315 = vadd.f32 %v11313, %v11314
  %v11316 = vsel %vm11270, %v3901, 0.0
  %v11317 = vadd.f32 %v11315, %v11316
  %v11318 = vsel %vm11270, %v3932, 0.0
  %v11319 = vadd.f32 %v11317, %v11318
  %v11320 = vsel %vm11270, %v3964, 0.0
  %v11321 = vadd.f32 %v11319, %v11320
  %v11322 = vsel %vm11270, %v3996, 0.0
  %v11323 = vadd.f32 %v11321, %v11322
  %v11324 = vsel %vm11270, %v4028, 0.0
  %v11325 = vadd.f32 %v11323, %v11324
  %v11326 = vsel %vm11270, %v4059, 0.0
  %v11327 = vadd.f32 %v11325, %v11326
  %v11328 = vsel %vm11270, %v4091, 0.0
  %v11329 = vadd.f32 %v11327, %v11328
  %v11330 = vsel %vm11270, %v4123, 0.0
  %v11331 = vadd.f32 %v11329, %v11330
  %v11332 = vsel %vm11270, %v4155, 0.0
  %v11333 = vadd.f32 %v11331, %v11332
  %v11334 = vsel %vm11270, %v4186, 0.0
  %v11335 = vadd.f32 %v11333, %v11334
  %v11336 = vsel %vm11270, %v4218, 0.0
  %v11337 = vadd.f32 %v11335, %v11336
  %v11338 = vsel %vm11270, %v4250, 0.0
  %v11339 = vadd.f32 %v11337, %v11338
  %v11340 = vsel %vm11270, %v4282, 0.0
  %v11341 = vadd.f32 %v11339, %v11340
  %v11342 = vsel %vm11270, %v4313, 0.0
  %v11343 = vadd.f32 %v11341, %v11342
  %v11344 = vsel %vm11270, %v4345, 0.0
  %v11345 = vadd.f32 %v11343, %v11344
  %v11346 = vsel %vm11270, %v4377, 0.0
  %v11347 = vadd.f32 %v11345, %v11346
  %v11348 = vsel %vm11270, %v4409, 0.0
  %v11349 = vadd.f32 %v11347, %v11348
  %v11350 = vsel %vm11270, %v4440, 0.0
  %v11351 = vadd.f32 %v11349, %v11350
  %v11352 = vsel %vm11270, %v4472, 0.0
  %v11353 = vadd.f32 %v11351, %v11352
  %v11354 = vsel %vm11270, %v4504, 0.0
  %v11355 = vadd.f32 %v11353, %v11354
  %v11356 = vsel %vm11270, %v4536, 0.0
  %v11357 = vadd.f32 %v11355, %v11356
  %v11358 = vsel %vm11270, %v4567, 0.0
  %v11359 = vadd.f32 %v11357, %v11358
  %v11360 = vsel %vm11270, %v4599, 0.0
  %v11361 = vadd.f32 %v11359, %v11360
  %v11362 = vsel %vm11270, %v4631, 0.0
  %v11363 = vadd.f32 %v11361, %v11362
  %v11364 = vsel %vm11270, %v4663, 0.0
  %v11365 = vadd.f32 %v11363, %v11364
  %v11366 = vsel %vm11270, %v4694, 0.0
  %v11367 = vadd.f32 %v11365, %v11366
  %v11368 = vsel %vm11270, %v4726, 0.0
  %v11369 = vadd.f32 %v11367, %v11368
  %v11370 = vsel %vm11270, %v4758, 0.0
  %v11371 = vadd.f32 %v11369, %v11370
  %v11372 = vsel %vm11270, %v4790, 0.0
  %v11373 = vadd.f32 %v11371, %v11372
  %v11374 = vsel %vm11270, %v4821, 0.0
  %v11375 = vadd.f32 %v11373, %v11374
  %v11376 = vsel %vm11270, %v4853, 0.0
  %v11377 = vadd.f32 %v11375, %v11376
  %v11378 = vsel %vm11270, %v4885, 0.0
  %v11379 = vadd.f32 %v11377, %v11378
  %v11380 = vsel %vm11270, %v4917, 0.0
  %v11381 = vadd.f32 %v11379, %v11380
  %v11382 = vsel %vm11270, %v4948, 0.0
  %v11383 = vadd.f32 %v11381, %v11382
  %v11384 = vsel %vm11270, %v4980, 0.0
  %v11385 = vadd.f32 %v11383, %v11384
  %v11386 = vsel %vm11270, %v5012, 0.0
  %v11387 = vadd.f32 %v11385, %v11386
  %v11388 = vsel %vm11270, %v5044, 0.0
  %v11389 = vadd.f32 %v11387, %v11388
  %v11390 = vsel %vm11270, %v5075, 0.0
  %v11391 = vadd.f32 %v11389, %v11390
  %v11392 = vsel %vm11270, %v5107, 0.0
  %v11393 = vadd.f32 %v11391, %v11392
  %v11394 = vsel %vm11270, %v5139, 0.0
  %v11395 = vadd.f32 %v11393, %v11394
  %v11396 = vsel %vm11270, %v5171, 0.0
  %v11397 = vadd.f32 %v11395, %v11396
  %v11398 = vsel %vm11270, %v5202, 0.0
  %v11399 = vadd.f32 %v11397, %v11398
  %v11400 = vsel %vm11270, %v5234, 0.0
  %v11401 = vadd.f32 %v11399, %v11400
  %v11402 = vsel %vm11270, %v5266, 0.0
  %v11403 = vadd.f32 %v11401, %v11402
  %v11404 = vsel %vm11270, %v5298, 0.0
  %v11405 = vadd.f32 %v11403, %v11404
  %v11406 = vsel %vm11270, %v5329, 0.0
  %v11407 = vadd.f32 %v11405, %v11406
  %v11408 = vsel %vm11270, %v5361, 0.0
  %v11409 = vadd.f32 %v11407, %v11408
  %v11410 = vsel %vm11270, %v5393, 0.0
  %v11411 = vadd.f32 %v11409, %v11410
  %v11412 = vsel %vm11270, %v5425, 0.0
  %v11413 = vadd.f32 %v11411, %v11412
  %v11414 = vsel %vm11270, %v5456, 0.0
  %v11415 = vadd.f32 %v11413, %v11414
  %v11416 = vsel %vm11270, %v5488, 0.0
  %v11417 = vadd.f32 %v11415, %v11416
  %v11418 = vsel %vm11270, %v5520, 0.0
  %v11419 = vadd.f32 %v11417, %v11418
  %v11420 = vsel %vm11270, %v5552, 0.0
  %v11421 = vadd.f32 %v11419, %v11420
  %v11422 = vsel %vm11270, %v5583, 0.0
  %v11423 = vadd.f32 %v11421, %v11422
  %v11424 = vsel %vm11270, %v5615, 0.0
  %v11425 = vadd.f32 %v11423, %v11424
  %v11426 = vsel %vm11270, %v5647, 0.0
  %v11427 = vadd.f32 %v11425, %v11426
  %v11428 = vsel %vm11270, %v5679, 0.0
  %v11429 = vadd.f32 %v11427, %v11428
  %v11430 = vsel %vm11270, %v5710, 0.0
  %v11431 = vadd.f32 %v11429, %v11430
  %v11432 = vsel %vm11270, %v5742, 0.0
  %v11433 = vadd.f32 %v11431, %v11432
  %v11434 = vsel %vm11270, %v5774, 0.0
  %v11435 = vadd.f32 %v11433, %v11434
  %v11436 = vsel %vm11270, %v5806, 0.0
  %v11437 = vadd.f32 %v11435, %v11436
  %v11438 = vsel %vm11270, %v5837, 0.0
  %v11439 = vadd.f32 %v11437, %v11438
  %v11440 = vsel %vm11270, %v5869, 0.0
  %v11441 = vadd.f32 %v11439, %v11440
  %v11442 = vsel %vm11270, %v5901, 0.0
  %v11443 = vadd.f32 %v11441, %v11442
  %v11444 = vsel %vm11270, %v5933, 0.0
  %v11445 = vadd.f32 %v11443, %v11444
  %v11446 = vsel %vm11270, %v5964, 0.0
  %v11447 = vadd.f32 %v11445, %v11446
  %v11448 = vsel %vm11270, %v5996, 0.0
  %v11449 = vadd.f32 %v11447, %v11448
  %v11450 = vsel %vm11270, %v6028, 0.0
  %v11451 = vadd.f32 %v11449, %v11450
  %v11452 = vsel %vm11270, %v6060, 0.0
  %v11453 = vadd.f32 %v11451, %v11452
  %v11454 = vsel %vm11270, %v6091, 0.0
  %v11455 = vadd.f32 %v11453, %v11454
  %v11456 = vsel %vm11270, %v6123, 0.0
  %v11457 = vadd.f32 %v11455, %v11456
  %v11458 = vsel %vm11270, %v6155, 0.0
  %v11459 = vadd.f32 %v11457, %v11458
  %v11460 = vsel %vm11270, %v6187, 0.0
  %v11461 = vadd.f32 %v11459, %v11460
  %v11462 = vsel %vm11270, %v6218, 0.0
  %v11463 = vadd.f32 %v11461, %v11462
  %v11464 = vsel %vm11270, %v6250, 0.0
  %v11465 = vadd.f32 %v11463, %v11464
  %v11466 = vsel %vm11270, %v6282, 0.0
  %v11467 = vadd.f32 %v11465, %v11466
  %v11468 = vsel %vm11270, %v6314, 0.0
  %v11469 = vadd.f32 %v11467, %v11468
  %v11470 = vsel %vm11270, %v6345, 0.0
  %v11471 = vadd.f32 %v11469, %v11470
  %v11472 = vsel %vm11270, %v6377, 0.0
  %v11473 = vadd.f32 %v11471, %v11472
  %v11474 = vsel %vm11270, %v6409, 0.0
  %v11475 = vadd.f32 %v11473, %v11474
  %v11476 = vsel %vm11270, %v6441, 0.0
  %v11477 = vadd.f32 %v11475, %v11476
  %v11478 = vsel %vm11270, %v6472, 0.0
  %v11479 = vadd.f32 %v11477, %v11478
  %v11480 = vsel %vm11270, %v6504, 0.0
  %v11481 = vadd.f32 %v11479, %v11480
  %v11482 = vsel %vm11270, %v6536, 0.0
  %v11483 = vadd.f32 %v11481, %v11482
  %v11484 = vsel %vm11270, %v6568, 0.0
  %v11485 = vadd.f32 %v11483, %v11484
  %v11486 = vsel %vm11270, %v6599, 0.0
  %v11487 = vadd.f32 %v11485, %v11486
  %v11488 = vsel %vm11270, %v6631, 0.0
  %v11489 = vadd.f32 %v11487, %v11488
  %v11490 = vsel %vm11270, %v6663, 0.0
  %v11491 = vadd.f32 %v11489, %v11490
  %v11492 = vsel %vm11270, %v6695, 0.0
  %v11493 = vadd.f32 %v11491, %v11492
  %v11494 = vsel %vm11270, %v6726, 0.0
  %v11495 = vadd.f32 %v11493, %v11494
  %v11496 = vsel %vm11270, %v6758, 0.0
  %v11497 = vadd.f32 %v11495, %v11496
  %v11498 = vsel %vm11270, %v6790, 0.0
  %v11499 = vadd.f32 %v11497, %v11498
  %v11500 = vsel %vm11270, %v6822, 0.0
  %v11501 = vadd.f32 %v11499, %v11500
  %v11502 = vsel %vm11270, %v6853, 0.0
  %v11503 = vadd.f32 %v11501, %v11502
  %v11504 = vsel %vm11270, %v6885, 0.0
  %v11505 = vadd.f32 %v11503, %v11504
  %v11506 = vsel %vm11270, %v6917, 0.0
  %v11507 = vadd.f32 %v11505, %v11506
  %v11508 = vsel %vm11270, %v6949, 0.0
  %v11509 = vadd.f32 %v11507, %v11508
  %v11510 = vsel %vm11270, %v6980, 0.0
  %v11511 = vadd.f32 %v11509, %v11510
  %v11512 = vsel %vm11270, %v7012, 0.0
  %v11513 = vadd.f32 %v11511, %v11512
  %v11514 = vsel %vm11270, %v7044, 0.0
  %v11515 = vadd.f32 %v11513, %v11514
  %v11516 = vsel %vm11270, %v7076, 0.0
  %v11517 = vadd.f32 %v11515, %v11516
  %v11518 = vsel %vm11270, %v7107, 0.0
  %v11519 = vadd.f32 %v11517, %v11518
  %v11520 = vsel %vm11270, %v7139, 0.0
  %v11521 = vadd.f32 %v11519, %v11520
  %v11522 = vsel %vm11270, %v7171, 0.0
  %v11523 = vadd.f32 %v11521, %v11522
  %v11524 = vsel %vm11270, %v7203, 0.0
  %v11525 = vadd.f32 %v11523, %v11524
  %v11526 = vsel %vm11270, %v7234, 0.0
  %v11527 = vadd.f32 %v11525, %v11526
  %v11528 = vsel %vm11270, %v7266, 0.0
  %v11529 = vadd.f32 %v11527, %v11528
  %v11530 = vsel %vm11270, %v7298, 0.0
  %v11531 = vadd.f32 %v11529, %v11530
  %v11532 = vsel %vm11270, %v7330, 0.0
  %v11533 = vadd.f32 %v11531, %v11532
  %v11534 = vsel %vm11270, %v7361, 0.0
  %v11535 = vadd.f32 %v11533, %v11534
  %v11536 = vsel %vm11270, %v7393, 0.0
  %v11537 = vadd.f32 %v11535, %v11536
  %v11538 = vsel %vm11270, %v7425, 0.0
  %v11539 = vadd.f32 %v11537, %v11538
  %v11540 = vsel %vm11270, %v7457, 0.0
  %v11541 = vadd.f32 %v11539, %v11540
  %v11542 = vsel %vm11270, %v7488, 0.0
  %v11543 = vadd.f32 %v11541, %v11542
  %v11544 = vsel %vm11270, %v7520, 0.0
  %v11545 = vadd.f32 %v11543, %v11544
  %v11546 = vsel %vm11270, %v7552, 0.0
  %v11547 = vadd.f32 %v11545, %v11546
  %v11548 = vsel %vm11270, %v7584, 0.0
  %v11549 = vadd.f32 %v11547, %v11548
  %v11550 = vsel %vm11270, %v7615, 0.0
  %v11551 = vadd.f32 %v11549, %v11550
  %v11552 = vsel %vm11270, %v7647, 0.0
  %v11553 = vadd.f32 %v11551, %v11552
  %v11554 = vsel %vm11270, %v7679, 0.0
  %v11555 = vadd.f32 %v11553, %v11554
  %v11556 = vsel %vm11270, %v7711, 0.0
  %v11557 = vadd.f32 %v11555, %v11556
  %v11558 = vsel %vm11270, %v7742, 0.0
  %v11559 = vadd.f32 %v11557, %v11558
  %v11560 = vsel %vm11270, %v7774, 0.0
  %v11561 = vadd.f32 %v11559, %v11560
  %v11562 = vsel %vm11270, %v7806, 0.0
  %v11563 = vadd.f32 %v11561, %v11562
  %v11564 = vsel %vm11270, %v7838, 0.0
  %v11565 = vadd.f32 %v11563, %v11564
  %v11566 = vsel %vm11270, %v7869, 0.0
  %v11567 = vadd.f32 %v11565, %v11566
  %v11568 = vsel %vm11270, %v7901, 0.0
  %v11569 = vadd.f32 %v11567, %v11568
  %v11570 = vsel %vm11270, %v7933, 0.0
  %v11571 = vadd.f32 %v11569, %v11570
  %v11572 = vsel %vm11270, %v7965, 0.0
  %v11573 = vadd.f32 %v11571, %v11572
  %v11574 = vsel %vm11270, %v7996, 0.0
  %v11575 = vadd.f32 %v11573, %v11574
  %v11576 = vsel %vm11270, %v8028, 0.0
  %v11577 = vadd.f32 %v11575, %v11576
  %v11578 = vsel %vm11270, %v8060, 0.0
  %v11579 = vadd.f32 %v11577, %v11578
  %v11580 = vsel %vm11270, %v8092, 0.0
  %v11581 = vadd.f32 %v11579, %v11580
  %v11582 = vsel %vm11270, %v8123, 0.0
  %v11583 = vadd.f32 %v11581, %v11582
  %v11584 = vsel %vm11270, %v8155, 0.0
  %v11585 = vadd.f32 %v11583, %v11584
  %v11586 = vsel %vm11270, %v8187, 0.0
  %v11587 = vadd.f32 %v11585, %v11586
  %v11588 = vsel %vm11270, %v8219, 0.0
  %v11589 = vadd.f32 %v11587, %v11588
  %v11590 = vsel %vm11270, %v8250, 0.0
  %v11591 = vadd.f32 %v11589, %v11590
  %v11592 = vsel %vm11270, %v8282, 0.0
  %v11593 = vadd.f32 %v11591, %v11592
  %v11594 = vsel %vm11270, %v8314, 0.0
  %v11595 = vadd.f32 %v11593, %v11594
  %v11596 = vsel %vm11270, %v8346, 0.0
  %v11597 = vadd.f32 %v11595, %v11596
  %v11598 = vsel %vm11270, %v8377, 0.0
  %v11599 = vadd.f32 %v11597, %v11598
  %v11600 = vsel %vm11270, %v8409, 0.0
  %v11601 = vadd.f32 %v11599, %v11600
  %v11602 = vsel %vm11270, %v8441, 0.0
  %v11603 = vadd.f32 %v11601, %v11602
  %v11604 = vsel %vm11270, %v8473, 0.0
  %v11605 = vadd.f32 %v11603, %v11604
  %v11606 = vsel %vm11270, %v8504, 0.0
  %v11607 = vadd.f32 %v11605, %v11606
  %v11608 = vsel %vm11270, %v8536, 0.0
  %v11609 = vadd.f32 %v11607, %v11608
  %v11610 = vsel %vm11270, %v8568, 0.0
  %v11611 = vadd.f32 %v11609, %v11610
  %v11612 = vsel %vm11270, %v8600, 0.0
  %v11613 = vadd.f32 %v11611, %v11612
  %v11614 = vsel %vm11270, %v8631, 0.0
  %v11615 = vadd.f32 %v11613, %v11614
  %v11616 = vsel %vm11270, %v8663, 0.0
  %v11617 = vadd.f32 %v11615, %v11616
  %v11618 = vsel %vm11270, %v8695, 0.0
  %v11619 = vadd.f32 %v11617, %v11618
  %v11620 = vsel %vm11270, %v8727, 0.0
  %v11621 = vadd.f32 %v11619, %v11620
  %v11622 = vsel %vm11270, %v8758, 0.0
  %v11623 = vadd.f32 %v11621, %v11622
  %v11624 = vsel %vm11270, %v8790, 0.0
  %v11625 = vadd.f32 %v11623, %v11624
  %v11626 = vsel %vm11270, %v8822, 0.0
  %v11627 = vadd.f32 %v11625, %v11626
  %v11628 = vsel %vm11270, %v8854, 0.0
  %v11629 = vadd.f32 %v11627, %v11628
  %v11630 = vsel %vm11270, %v8885, 0.0
  %v11631 = vadd.f32 %v11629, %v11630
  %v11632 = vsel %vm11270, %v8917, 0.0
  %v11633 = vadd.f32 %v11631, %v11632
  %v11634 = vsel %vm11270, %v8949, 0.0
  %v11635 = vadd.f32 %v11633, %v11634
  %v11636 = vsel %vm11270, %v8981, 0.0
  %v11637 = vadd.f32 %v11635, %v11636
  %v11638 = vsel %vm11270, %v9012, 0.0
  %v11639 = vadd.f32 %v11637, %v11638
  %v11640 = vsel %vm11270, %v9044, 0.0
  %v11641 = vadd.f32 %v11639, %v11640
  %v11642 = vsel %vm11270, %v9076, 0.0
  %v11643 = vadd.f32 %v11641, %v11642
  %v11644 = vsel %vm11270, %v9108, 0.0
  %v11645 = vadd.f32 %v11643, %v11644
  %v11646 = vsel %vm11270, %v9139, 0.0
  %v11647 = vadd.f32 %v11645, %v11646
  %v11648 = vsel %vm11270, %v9171, 0.0
  %v11649 = vadd.f32 %v11647, %v11648
  %v11650 = vsel %vm11270, %v9203, 0.0
  %v11651 = vadd.f32 %v11649, %v11650
  %v11652 = vsel %vm11270, %v9235, 0.0
  %v11653 = vadd.f32 %v11651, %v11652
  %v11654 = vsel %vm11270, %v9266, 0.0
  %v11655 = vadd.f32 %v11653, %v11654
  %v11656 = vsel %vm11270, %v9298, 0.0
  %v11657 = vadd.f32 %v11655, %v11656
  %v11658 = vsel %vm11270, %v9330, 0.0
  %v11659 = vadd.f32 %v11657, %v11658
  %v11660 = vsel %vm11270, %v9362, 0.0
  %v11661 = vadd.f32 %v11659, %v11660
  %v11662 = vsel %vm11270, %v9393, 0.0
  %v11663 = vadd.f32 %v11661, %v11662
  %v11664 = vsel %vm11270, %v9425, 0.0
  %v11665 = vadd.f32 %v11663, %v11664
  %v11666 = vsel %vm11270, %v9457, 0.0
  %v11667 = vadd.f32 %v11665, %v11666
  %v11668 = vsel %vm11270, %v9489, 0.0
  %v11669 = vadd.f32 %v11667, %v11668
  %v11670 = vsel %vm11270, %v9520, 0.0
  %v11671 = vadd.f32 %v11669, %v11670
  %v11672 = vsel %vm11270, %v9552, 0.0
  %v11673 = vadd.f32 %v11671, %v11672
  %v11674 = vsel %vm11270, %v9584, 0.0
  %v11675 = vadd.f32 %v11673, %v11674
  %v11676 = vsel %vm11270, %v9616, 0.0
  %v11677 = vadd.f32 %v11675, %v11676
  %v11678 = vsel %vm11270, %v9647, 0.0
  %v11679 = vadd.f32 %v11677, %v11678
  %v11680 = vsel %vm11270, %v9679, 0.0
  %v11681 = vadd.f32 %v11679, %v11680
  %v11682 = vsel %vm11270, %v9711, 0.0
  %v11683 = vadd.f32 %v11681, %v11682
  %v11684 = vsel %vm11270, %v9743, 0.0
  %v11685 = vadd.f32 %v11683, %v11684
  %v11686 = vsel %vm11270, %v9774, 0.0
  %v11687 = vadd.f32 %v11685, %v11686
  %v11688 = vsel %vm11270, %v9806, 0.0
  %v11689 = vadd.f32 %v11687, %v11688
  %v11690 = vsel %vm11270, %v9838, 0.0
  %v11691 = vadd.f32 %v11689, %v11690
  %v11692 = vsel %vm11270, %v9870, 0.0
  %v11693 = vadd.f32 %v11691, %v11692
  %v11694 = vsel %vm11270, %v9901, 0.0
  %v11695 = vadd.f32 %v11693, %v11694
  %v11696 = vsel %vm11270, %v9933, 0.0
  %v11697 = vadd.f32 %v11695, %v11696
  %v11698 = vsel %vm11270, %v9965, 0.0
  %v11699 = vadd.f32 %v11697, %v11698
  %v11700 = vsel %vm11270, %v9997, 0.0
  %v11701 = vadd.f32 %v11699, %v11700
  %v11702 = vsel %vm11270, %v10028, 0.0
  %v11703 = vadd.f32 %v11701, %v11702
  %v11704 = vsel %vm11270, %v10060, 0.0
  %v11705 = vadd.f32 %v11703, %v11704
  %v11706 = vsel %vm11270, %v10092, 0.0
  %v11707 = vadd.f32 %v11705, %v11706
  %v11708 = vsel %vm11270, %v10124, 0.0
  %v11709 = vadd.f32 %v11707, %v11708
  %v11710 = vsel %vm11270, %v10155, 0.0
  %v11711 = vadd.f32 %v11709, %v11710
  %v11712 = vsel %vm11270, %v10187, 0.0
  %v11713 = vadd.f32 %v11711, %v11712
  %v11714 = vsel %vm11270, %v10219, 0.0
  %v11715 = vadd.f32 %v11713, %v11714
  %v11716 = vsel %vm11270, %v10251, 0.0
  %v11717 = vadd.f32 %v11715, %v11716
  %v11718 = vsel %vm11270, %v10282, 0.0
  %v11719 = vadd.f32 %v11717, %v11718
  %v11720 = vsel %vm11270, %v10314, 0.0
  %v11721 = vadd.f32 %v11719, %v11720
  %v11722 = vsel %vm11270, %v10346, 0.0
  %v11723 = vadd.f32 %v11721, %v11722
  %v11724 = vsel %vm11270, %v10378, 0.0
  %v11725 = vadd.f32 %v11723, %v11724
  %v11726 = vsel %vm11270, %v10409, 0.0
  %v11727 = vadd.f32 %v11725, %v11726
  %v11728 = vsel %vm11270, %v10441, 0.0
  %v11729 = vadd.f32 %v11727, %v11728
  %v11730 = vsel %vm11270, %v10473, 0.0
  %v11731 = vadd.f32 %v11729, %v11730
  %v11732 = vsel %vm11270, %v10505, 0.0
  %v11733 = vadd.f32 %v11731, %v11732
  %v11734 = vsel %vm11270, %v10536, 0.0
  %v11735 = vadd.f32 %v11733, %v11734
  %v11736 = vsel %vm11270, %v10568, 0.0
  %v11737 = vadd.f32 %v11735, %v11736
  %v11738 = vsel %vm11270, %v10600, 0.0
  %v11739 = vadd.f32 %v11737, %v11738
  %v11740 = vsel %vm11270, %v10632, 0.0
  %v11741 = vadd.f32 %v11739, %v11740
  %v11742 = vsel %vm11270, %v10663, 0.0
  %v11743 = vadd.f32 %v11741, %v11742
  %v11744 = vsel %vm11270, %v10695, 0.0
  %v11745 = vadd.f32 %v11743, %v11744
  %v11746 = vsel %vm11270, %v10727, 0.0
  %v11747 = vadd.f32 %v11745, %v11746
  %v11748 = vsel %vm11270, %v10759, 0.0
  %v11749 = vadd.f32 %v11747, %v11748
  %v11750 = vsel %vm11270, %v10790, 0.0
  %v11751 = vadd.f32 %v11749, %v11750
  %v11752 = vsel %vm11270, %v10822, 0.0
  %v11753 = vadd.f32 %v11751, %v11752
  %v11754 = vsel %vm11270, %v10854, 0.0
  %v11755 = vadd.f32 %v11753, %v11754
  %v11756 = vsel %vm11270, %v10886, 0.0
  %v11757 = vadd.f32 %v11755, %v11756
  %v11758 = vsel %vm11270, %v10917, 0.0
  %v11759 = vadd.f32 %v11757, %v11758
  %v11760 = vsel %vm11270, %v10949, 0.0
  %v11761 = vadd.f32 %v11759, %v11760
  %v11762 = vsel %vm11270, %v10981, 0.0
  %v11763 = vadd.f32 %v11761, %v11762
  %v11764 = vsel %vm11270, %v11013, 0.0
  %v11765 = vadd.f32 %v11763, %v11764
  %v11766 = vsel %vm11270, %v11044, 0.0
  %v11767 = vadd.f32 %v11765, %v11766
  %v11768 = vsel %vm11270, %v11076, 0.0
  %v11769 = vadd.f32 %v11767, %v11768
  %v11770 = vsel %vm11270, %v11108, 0.0
  %v11771 = vadd.f32 %v11769, %v11770
  %v11772 = vsel %vm11270, %v11140, 0.0
  %v11773 = vadd.f32 %v11771, %v11772
  %v11774 = vsel %vm11270, %v11171, 0.0
  %v11775 = vadd.f32 %v11773, %v11774
  %v11776 = vsel %vm11270, %v11203, 0.0
  %v11777 = vadd.f32 %v11775, %v11776
  %v11778 = vsel %vm11270, %v11235, 0.0
  %v11779 = vadd.f32 %v11777, %v11778
  %v11780 = vsel %vm11270, %v11267, 0.0
  %v11781 = vadd.f32 %v11779, %v11780
  %v11782 = vld [vmem:[%s5] sm:$0x1]
  %v11784 = vperm.slane %v11782, 0
  %v11786 = vadd.f32 %v11781, %v11784
  %v11787 = vmax.f32 %v11786, 0.0
  %v11788 = vld [vmem:[%s0] sm:$0x3]
  %v11789 = vlaneseq
  %v11790 = vand.u32 %v11789, 127
  %11791 = vset.pattern.permute.xlu0 0
  %11792 = vperm.xlu0 %11791, %v11788
  %v11793 = vpop.permute.xlu0 %11792
  %vm11794 = vcmp.eq.s32.totalorder %v11790, %v11793
  %v11795 = vsel %vm11794, 1.0, 0.0
  %v11796 = vpack.c.bf16 %v11795, %v11795
  %v11797 = vld [vmem:[%s8] sm:$0xff]
  %v11798 = vld [vmem:[%s8 + $0x8] sm:$0xff]
  %v11799 = vld [vmem:[%s8 + $0x10] sm:$0xff]
  %v11800 = vld [vmem:[%s8 + $0x18] sm:$0xff]
  %v11801 = vld [vmem:[%s8 + $0x20] sm:$0xff]
  %v11802 = vld [vmem:[%s8 + $0x28] sm:$0xff]
  %v11803 = vld [vmem:[%s8 + $0x30] sm:$0xff]
  %v11804 = vld [vmem:[%s8 + $0x38] sm:$0xff]
  %v11805 = vld [vmem:[%s8 + $0x40] sm:$0xff]
  %v11806 = vld [vmem:[%s8 + $0x48] sm:$0xff]
  %v11807 = vld [vmem:[%s8 + $0x50] sm:$0xff]
  %v11808 = vld [vmem:[%s8 + $0x58] sm:$0xff]
  %v11809 = vld [vmem:[%s8 + $0x60] sm:$0xff]
  %v11810 = vld [vmem:[%s8 + $0x68] sm:$0xff]
  %v11811 = vld [vmem:[%s8 + $0x70] sm:$0xff]
  %v11812 = vld [vmem:[%s8 + $0x78] sm:$0xff]
  %v11813 = vld [vmem:[%s8 + $0x80] sm:$0xff]
  %v11814 = vld [vmem:[%s8 + $0x88] sm:$0xff]
  %v11815 = vld [vmem:[%s8 + $0x90] sm:$0xff]
  %v11816 = vld [vmem:[%s8 + $0x98] sm:$0xff]
  %v11817 = vld [vmem:[%s8 + $0xa0] sm:$0xff]
  %v11818 = vld [vmem:[%s8 + $0xa8] sm:$0xff]
  %v11819 = vld [vmem:[%s8 + $0xb0] sm:$0xff]
  %v11820 = vld [vmem:[%s8 + $0xb8] sm:$0xff]
  %v11821 = vld [vmem:[%s8 + $0xc0] sm:$0xff]
  %v11822 = vld [vmem:[%s8 + $0xc8] sm:$0xff]
  %v11823 = vld [vmem:[%s8 + $0xd0] sm:$0xff]
  %v11824 = vld [vmem:[%s8 + $0xd8] sm:$0xff]
  %v11825 = vld [vmem:[%s8 + $0xe0] sm:$0xff]
  %v11826 = vld [vmem:[%s8 + $0xe8] sm:$0xff]
  %v11827 = vld [vmem:[%s8 + $0xf0] sm:$0xff]
  %v11828 = vld [vmem:[%s8 + $0xf8] sm:$0xff]
  %v11829 = vld [vmem:[%s8 + $0x100] sm:$0xff]
  %v11830 = vld [vmem:[%s8 + $0x108] sm:$0xff]
  %v11831 = vld [vmem:[%s8 + $0x110] sm:$0xff]
  %v11832 = vld [vmem:[%s8 + $0x118] sm:$0xff]
  %v11833 = vld [vmem:[%s8 + $0x120] sm:$0x33]
  %v11834 = vld [vmem:[%s8 + $0x128] sm:$0x33]
  %v11835 = vld [vmem:[%s8 + $0x130] sm:$0x33]
  %v11875 = vunpack.c.l.b16 %v11797
  %v11876 = vunpack.c.h.b16 %v11797
  %v11877 = vunpack.c.l.b16 %v11798
  %v11878 = vunpack.c.h.b16 %v11798
  %v11879 = vunpack.c.l.b16 %v11799
  %v11880 = vunpack.c.h.b16 %v11799
  %v11881 = vunpack.c.l.b16 %v11800
  %v11882 = vunpack.c.h.b16 %v11800
  %v11883 = vunpack.c.l.b16 %v11801
  %v11884 = vunpack.c.h.b16 %v11801
  %v11885 = vunpack.c.l.b16 %v11802
  %v11886 = vunpack.c.h.b16 %v11802
  %v11887 = vunpack.c.l.b16 %v11803
  %v11888 = vunpack.c.h.b16 %v11803
  %v11889 = vunpack.c.l.b16 %v11804
  %v11890 = vunpack.c.h.b16 %v11804
  %v11891 = vunpack.c.l.b16 %v11805
  %v11892 = vunpack.c.h.b16 %v11805
  %v11893 = vunpack.c.l.b16 %v11806
  %v11894 = vunpack.c.h.b16 %v11806
  %v11895 = vunpack.c.l.b16 %v11807
  %v11896 = vunpack.c.h.b16 %v11807
  %v11897 = vunpack.c.l.b16 %v11808
  %v11898 = vunpack.c.h.b16 %v11808
  %v11899 = vunpack.c.l.b16 %v11809
  %v11900 = vunpack.c.h.b16 %v11809
  %v11901 = vunpack.c.l.b16 %v11810
  %v11902 = vunpack.c.h.b16 %v11810
  %v11903 = vunpack.c.l.b16 %v11811
  %v11904 = vunpack.c.h.b16 %v11811
  %v11905 = vunpack.c.l.b16 %v11812
  %v11906 = vunpack.c.h.b16 %v11812
  %v11907 = vunpack.c.l.b16 %v11813
  %v11908 = vunpack.c.h.b16 %v11813
  %v11909 = vunpack.c.l.b16 %v11814
  %v11910 = vunpack.c.h.b16 %v11814
  %v11911 = vunpack.c.l.b16 %v11815
  %v11912 = vunpack.c.h.b16 %v11815
  %v11913 = vunpack.c.l.b16 %v11816
  %v11914 = vunpack.c.h.b16 %v11816
  %v11915 = vunpack.c.l.b16 %v11817
  %v11916 = vunpack.c.h.b16 %v11817
  %v11917 = vunpack.c.l.b16 %v11818
  %v11918 = vunpack.c.h.b16 %v11818
  %v11919 = vunpack.c.l.b16 %v11819
  %v11920 = vunpack.c.h.b16 %v11819
  %v11921 = vunpack.c.l.b16 %v11820
  %v11922 = vunpack.c.h.b16 %v11820
  %v11923 = vunpack.c.l.b16 %v11821
  %v11924 = vunpack.c.h.b16 %v11821
  %v11925 = vunpack.c.l.b16 %v11822
  %v11926 = vunpack.c.h.b16 %v11822
  %v11927 = vunpack.c.l.b16 %v11823
  %v11928 = vunpack.c.h.b16 %v11823
  %v11929 = vunpack.c.l.b16 %v11824
  %v11930 = vunpack.c.h.b16 %v11824
  %v11931 = vunpack.c.l.b16 %v11825
  %v11932 = vunpack.c.h.b16 %v11825
  %v11933 = vunpack.c.l.b16 %v11826
  %v11934 = vunpack.c.h.b16 %v11826
  %v11935 = vunpack.c.l.b16 %v11827
  %v11936 = vunpack.c.h.b16 %v11827
  %v11937 = vunpack.c.l.b16 %v11828
  %v11938 = vunpack.c.h.b16 %v11828
  %v11939 = vunpack.c.l.b16 %v11829
  %v11940 = vunpack.c.h.b16 %v11829
  %v11941 = vunpack.c.l.b16 %v11830
  %v11942 = vunpack.c.h.b16 %v11830
  %v11943 = vunpack.c.l.b16 %v11831
  %v11944 = vunpack.c.h.b16 %v11831
  %v11945 = vunpack.c.l.b16 %v11832
  %v11946 = vunpack.c.h.b16 %v11832
  %v11947 = vunpack.c.l.b16 %v11833
  %v11948 = vunpack.c.h.b16 %v11833
  %v11949 = vunpack.c.l.b16 %v11834
  %v11950 = vunpack.c.h.b16 %v11834
  %v11951 = vunpack.c.l.b16 %v11835
  %v11952 = vunpack.c.h.b16 %v11835
  %v11953 = vpack.c.b16 %v11881, %v11875
  %v11954 = vpack.c.b16 %v11882, %v11876
  %v11955 = vpack.c.b16 %v11883, %v11877
  %v11956 = vpack.c.b16 %v11884, %v11878
  %v11957 = vpack.c.b16 %v11885, %v11879
  %v11958 = vpack.c.b16 %v11886, %v11880
  %v11959 = vpack.c.b16 %v11893, %v11887
  %v11960 = vpack.c.b16 %v11894, %v11888
  %v11961 = vpack.c.b16 %v11895, %v11889
  %v11962 = vpack.c.b16 %v11896, %v11890
  %v11963 = vpack.c.b16 %v11897, %v11891
  %v11964 = vpack.c.b16 %v11898, %v11892
  %v11965 = vpack.c.b16 %v11905, %v11899
  %v11966 = vpack.c.b16 %v11906, %v11900
  %v11967 = vpack.c.b16 %v11907, %v11901
  %v11968 = vpack.c.b16 %v11908, %v11902
  %v11969 = vpack.c.b16 %v11909, %v11903
  %v11970 = vpack.c.b16 %v11910, %v11904
  %v11971 = vpack.c.b16 %v11917, %v11911
  %v11972 = vpack.c.b16 %v11918, %v11912
  %v11973 = vpack.c.b16 %v11919, %v11913
  %v11974 = vpack.c.b16 %v11920, %v11914
  %v11975 = vpack.c.b16 %v11921, %v11915
  %v11976 = vpack.c.b16 %v11922, %v11916
  %v11977 = vpack.c.b16 %v11929, %v11923
  %v11978 = vpack.c.b16 %v11930, %v11924
  %v11979 = vpack.c.b16 %v11931, %v11925
  %v11980 = vpack.c.b16 %v11932, %v11926
  %v11981 = vpack.c.b16 %v11933, %v11927
  %v11982 = vpack.c.b16 %v11934, %v11928
  %v11983 = vpack.c.b16 %v11941, %v11935
  %v11984 = vpack.c.b16 %v11942, %v11936
  %v11985 = vpack.c.b16 %v11943, %v11937
  %v11986 = vpack.c.b16 %v11944, %v11938
  %v11987 = vpack.c.b16 %v11945, %v11939
  %v11988 = vpack.c.b16 %v11946, %v11940
  %v11989 = vpack.c.b16 %v11947, %v11947
  %v11990 = vpack.c.b16 %v11948, %v11948
  %v11991 = vpack.c.b16 %v11949, %v11949
  %v11992 = vpack.c.b16 %v11950, %v11950
  %v11993 = vpack.c.b16 %v11951, %v11951
  %v11994 = vpack.c.b16 %v11952, %v11952
  %vm12031 = vcmask 818176
  %v12033 = vsel %vm12031, %v11796, 0
  %vm12035 = vcmask 1041408
  %v12037 = vsel %vm12035, %v11989, 0
  %v12040 = vsel %vm12035, %v11990, 0
  %v12043 = vsel %vm12035, %v11991, 0
  %v12046 = vsel %vm12035, %v11992, 0
  %v12049 = vsel %vm12035, %v11993, 0
  %v12052 = vsel %vm12035, %v11994, 0
  %12054 = vmatpush.bf16.msra.mxu0 0
  %12055 = vmatpush.bf16.msra.mxu0 %v12037
  %12056 = vmatpush.bf16.msra.mxu0 %v11983
  %12057 = vmatpush.bf16.msra.mxu0 %v11977
  %12058 = vmatpush.bf16.msra.mxu0 %v11971
  %12059 = vmatpush.bf16.msra.mxu0 %v11965
  %12060 = vmatpush.bf16.msra.mxu0 %v11959
  %12061 = vmatpush.bf16.msra.mxu0 %v11953
  %12062 = vmatmul.bf16.gmra.mxu0 %v12033
  %v12063 = vpop.f32.mrf.mxu0
  %v12064 = vadd.f32 0.0, %v12063
  %v12065 = vpop.f32.mrf.mxu0
  %12066 = vdwg.mxu0
  %12067 = vmatpush.bf16.msra.mxu0 0
  %12068 = vmatpush.bf16.msra.mxu0 %v12040
  %12069 = vmatpush.bf16.msra.mxu0 %v11984
  %12070 = vmatpush.bf16.msra.mxu0 %v11978
  %12071 = vmatpush.bf16.msra.mxu0 %v11972
  %12072 = vmatpush.bf16.msra.mxu0 %v11966
  %12073 = vmatpush.bf16.msra.mxu0 %v11960
  %12074 = vmatpush.bf16.msra.mxu0 %v11954
  %12075 = vmatmul.bf16.gmra.mxu0 %v12033
  %v12076 = vpop.f32.mrf.mxu0
  %v12077 = vadd.f32 0.0, %v12076
  %v12078 = vpop.f32.mrf.mxu0
  %12079 = vdwg.mxu0
  %12080 = vmatpush.bf16.msra.mxu0 0
  %12081 = vmatpush.bf16.msra.mxu0 %v12043
  %12082 = vmatpush.bf16.msra.mxu0 %v11985
  %12083 = vmatpush.bf16.msra.mxu0 %v11979
  %12084 = vmatpush.bf16.msra.mxu0 %v11973
  %12085 = vmatpush.bf16.msra.mxu0 %v11967
  %12086 = vmatpush.bf16.msra.mxu0 %v11961
  %12087 = vmatpush.bf16.msra.mxu0 %v11955
  %12088 = vmatmul.bf16.gmra.mxu0 %v12033
  %v12089 = vpop.f32.mrf.mxu0
  %v12090 = vadd.f32 0.0, %v12089
  %v12091 = vpop.f32.mrf.mxu0
  %12092 = vdwg.mxu0
  %12093 = vmatpush.bf16.msra.mxu0 0
  %12094 = vmatpush.bf16.msra.mxu0 %v12046
  %12095 = vmatpush.bf16.msra.mxu0 %v11986
  %12096 = vmatpush.bf16.msra.mxu0 %v11980
  %12097 = vmatpush.bf16.msra.mxu0 %v11974
  %12098 = vmatpush.bf16.msra.mxu0 %v11968
  %12099 = vmatpush.bf16.msra.mxu0 %v11962
  %12100 = vmatpush.bf16.msra.mxu0 %v11956
  %12101 = vmatmul.bf16.gmra.mxu0 %v12033
  %v12102 = vpop.f32.mrf.mxu0
  %v12103 = vadd.f32 0.0, %v12102
  %v12104 = vpop.f32.mrf.mxu0
  %12105 = vdwg.mxu0
  %12106 = vmatpush.bf16.msra.mxu0 0
  %12107 = vmatpush.bf16.msra.mxu0 %v12049
  %12108 = vmatpush.bf16.msra.mxu0 %v11987
  %12109 = vmatpush.bf16.msra.mxu0 %v11981
  %12110 = vmatpush.bf16.msra.mxu0 %v11975
  %12111 = vmatpush.bf16.msra.mxu0 %v11969
  %12112 = vmatpush.bf16.msra.mxu0 %v11963
  %12113 = vmatpush.bf16.msra.mxu0 %v11957
  %12114 = vmatmul.bf16.gmra.mxu0 %v12033
  %v12115 = vpop.f32.mrf.mxu0
  %v12116 = vadd.f32 0.0, %v12115
  %v12117 = vpop.f32.mrf.mxu0
  %12118 = vdwg.mxu0
  %12119 = vmatpush.bf16.msra.mxu0 0
  %12120 = vmatpush.bf16.msra.mxu0 %v12052
  %12121 = vmatpush.bf16.msra.mxu0 %v11988
  %12122 = vmatpush.bf16.msra.mxu0 %v11982
  %12123 = vmatpush.bf16.msra.mxu0 %v11976
  %12124 = vmatpush.bf16.msra.mxu0 %v11970
  %12125 = vmatpush.bf16.msra.mxu0 %v11964
  %12126 = vmatpush.bf16.msra.mxu0 %v11958
  %12127 = vmatmul.bf16.gmra.mxu0 %v12033
  %v12128 = vpop.f32.mrf.mxu0
  %v12129 = vadd.f32 0.0, %v12128
  %v12130 = vpop.f32.mrf.mxu0
  %12131 = vdwg.mxu0
  %v12132 = vpack.c.bf16 %v12064, %v12064
  %v12133 = vpack.c.bf16 %v12077, %v12077
  %v12134 = vpack.c.bf16 %v12090, %v12090
  %v12135 = vpack.c.bf16 %v12103, %v12103
  %v12136 = vpack.c.bf16 %v12116, %v12116
  %v12137 = vpack.c.bf16 %v12129, %v12129
  %v12138 = vld [vmem:[%s9] sm:$0xf]
  %v12139 = vld [vmem:[%s9 + $0x4] sm:$0xf]
  %v12140 = vld [vmem:[%s9 + $0x8] sm:$0xf]
  %v12141 = vld [vmem:[%s9 + $0xc] sm:$0xf]
  %v12142 = vld [vmem:[%s9 + $0x10] sm:$0xf]
  %v12143 = vld [vmem:[%s9 + $0x14] sm:$0xf]
  %v12144 = vld [vmem:[%s9 + $0x18] sm:$0xf]
  %v12145 = vld [vmem:[%s9 + $0x1c] sm:$0xf]
  %v12146 = vld [vmem:[%s9 + $0x20] sm:$0xf]
  %v12147 = vld [vmem:[%s9 + $0x24] sm:$0xf]
  %v12148 = vld [vmem:[%s9 + $0x28] sm:$0xf]
  %v12149 = vld [vmem:[%s9 + $0x2c] sm:$0xf]
  %v12150 = vld [vmem:[%s9 + $0x30] sm:$0xf]
  %v12151 = vld [vmem:[%s9 + $0x34] sm:$0xf]
  %v12152 = vld [vmem:[%s9 + $0x38] sm:$0xf]
  %v12153 = vld [vmem:[%s9 + $0x3c] sm:$0xf]
  %v12154 = vld [vmem:[%s9 + $0x40] sm:$0xf]
  %v12155 = vld [vmem:[%s9 + $0x44] sm:$0xf]
  %v12156 = vld [vmem:[%s9 + $0x48] sm:$0xf]
  %v12157 = vld [vmem:[%s9 + $0x4c] sm:$0xf]
  %v12158 = vld [vmem:[%s9 + $0x50] sm:$0xf]
  %v12159 = vld [vmem:[%s9 + $0x54] sm:$0xf]
  %v12160 = vld [vmem:[%s9 + $0x58] sm:$0xf]
  %v12161 = vld [vmem:[%s9 + $0x5c] sm:$0xf]
  %v12162 = vld [vmem:[%s9 + $0x60] sm:$0xf]
  %v12163 = vld [vmem:[%s9 + $0x64] sm:$0xf]
  %v12164 = vld [vmem:[%s9 + $0x68] sm:$0xf]
  %v12165 = vld [vmem:[%s9 + $0x6c] sm:$0xf]
  %v12166 = vld [vmem:[%s9 + $0x70] sm:$0xf]
  %v12167 = vld [vmem:[%s9 + $0x74] sm:$0xf]
  %v12168 = vld [vmem:[%s9 + $0x78] sm:$0xf]
  %v12169 = vld [vmem:[%s9 + $0x7c] sm:$0xf]
  %v12170 = vld [vmem:[%s9 + $0x80] sm:$0xf]
  %v12171 = vld [vmem:[%s9 + $0x84] sm:$0xf]
  %v12172 = vld [vmem:[%s9 + $0x88] sm:$0xf]
  %v12173 = vld [vmem:[%s9 + $0x8c] sm:$0xf]
  %v12174 = vld [vmem:[%s9 + $0x90] sm:$0xf]
  %v12175 = vld [vmem:[%s9 + $0x94] sm:$0xf]
  %v12176 = vld [vmem:[%s9 + $0x98] sm:$0xf]
  %v12177 = vld [vmem:[%s9 + $0x9c] sm:$0xf]
  %v12178 = vld [vmem:[%s9 + $0xa0] sm:$0xf]
  %v12179 = vld [vmem:[%s9 + $0xa4] sm:$0xf]
  %v12180 = vld [vmem:[%s9 + $0xa8] sm:$0xf]
  %v12181 = vld [vmem:[%s9 + $0xac] sm:$0xf]
  %v12182 = vld [vmem:[%s9 + $0xb0] sm:$0xf]
  %v12183 = vld [vmem:[%s9 + $0xb4] sm:$0xf]
  %v12184 = vld [vmem:[%s9 + $0xb8] sm:$0xf]
  %v12185 = vld [vmem:[%s9 + $0xbc] sm:$0xf]
  %v12186 = vld [vmem:[%s9 + $0xc0] sm:$0xf]
  %v12187 = vld [vmem:[%s9 + $0xc4] sm:$0xf]
  %v12188 = vld [vmem:[%s9 + $0xc8] sm:$0xf]
  %v12189 = vld [vmem:[%s9 + $0xcc] sm:$0xf]
  %v12190 = vld [vmem:[%s9 + $0xd0] sm:$0xf]
  %v12191 = vld [vmem:[%s9 + $0xd4] sm:$0xf]
  %v12192 = vld [vmem:[%s9 + $0xd8] sm:$0xf]
  %v12193 = vld [vmem:[%s9 + $0xdc] sm:$0xf]
  %v12194 = vld [vmem:[%s9 + $0xe0] sm:$0xf]
  %v12195 = vld [vmem:[%s9 + $0xe4] sm:$0xf]
  %v12196 = vld [vmem:[%s9 + $0xe8] sm:$0xf]
  %v12197 = vld [vmem:[%s9 + $0xec] sm:$0xf]
  %v12198 = vld [vmem:[%s9 + $0xf0] sm:$0xf]
  %v12199 = vld [vmem:[%s9 + $0xf4] sm:$0xf]
  %v12200 = vld [vmem:[%s9 + $0xf8] sm:$0xf]
  %v12201 = vld [vmem:[%s9 + $0xfc] sm:$0xf]
  %v12202 = vld [vmem:[%s9 + $0x100] sm:$0xf]
  %v12203 = vld [vmem:[%s9 + $0x104] sm:$0xf]
  %v12204 = vld [vmem:[%s9 + $0x108] sm:$0xf]
  %v12205 = vld [vmem:[%s9 + $0x10c] sm:$0xf]
  %v12206 = vld [vmem:[%s9 + $0x110] sm:$0xf]
  %v12207 = vld [vmem:[%s9 + $0x114] sm:$0xf]
  %v12208 = vld [vmem:[%s9 + $0x118] sm:$0xf]
  %v12209 = vld [vmem:[%s9 + $0x11c] sm:$0xf]
  %v12210 = vld [vmem:[%s9 + $0x120] sm:$0xf]
  %v12211 = vld [vmem:[%s9 + $0x124] sm:$0xf]
  %v12212 = vld [vmem:[%s9 + $0x128] sm:$0xf]
  %v12213 = vld [vmem:[%s9 + $0x12c] sm:$0xf]
  %v12214 = vld [vmem:[%s9 + $0x130] sm:$0xf]
  %v12215 = vld [vmem:[%s9 + $0x134] sm:$0xf]
  %v12216 = vld [vmem:[%s9 + $0x138] sm:$0xf]
  %v12217 = vld [vmem:[%s9 + $0x13c] sm:$0xf]
  %v12218 = vld [vmem:[%s9 + $0x140] sm:$0xf]
  %v12219 = vld [vmem:[%s9 + $0x144] sm:$0xf]
  %v12220 = vld [vmem:[%s9 + $0x148] sm:$0xf]
  %v12221 = vld [vmem:[%s9 + $0x14c] sm:$0xf]
  %v12222 = vld [vmem:[%s9 + $0x150] sm:$0xf]
  %v12223 = vld [vmem:[%s9 + $0x154] sm:$0xf]
  %v12224 = vld [vmem:[%s9 + $0x158] sm:$0xf]
  %v12225 = vld [vmem:[%s9 + $0x15c] sm:$0xf]
  %v12226 = vld [vmem:[%s9 + $0x160] sm:$0xf]
  %v12227 = vld [vmem:[%s9 + $0x164] sm:$0xf]
  %v12228 = vld [vmem:[%s9 + $0x168] sm:$0xf]
  %v12229 = vld [vmem:[%s9 + $0x16c] sm:$0xf]
  %v12230 = vld [vmem:[%s9 + $0x170] sm:$0xf]
  %v12231 = vld [vmem:[%s9 + $0x174] sm:$0xf]
  %v12232 = vld [vmem:[%s9 + $0x178] sm:$0xf]
  %v12233 = vld [vmem:[%s9 + $0x17c] sm:$0xf]
  %v12234 = vld [vmem:[%s10] sm:$0x1]
  %v12236 = vperm.slane %v12234, 0
  %v12334 = vunpack.c.l.b16 %v12138
  %v12335 = vunpack.c.l.b16 %v12139
  %v12336 = vunpack.c.l.b16 %v12140
  %v12337 = vunpack.c.l.b16 %v12141
  %v12338 = vunpack.c.l.b16 %v12142
  %v12339 = vunpack.c.l.b16 %v12143
  %v12340 = vunpack.c.l.b16 %v12144
  %v12341 = vunpack.c.l.b16 %v12145
  %v12342 = vunpack.c.l.b16 %v12146
  %v12343 = vunpack.c.l.b16 %v12147
  %v12344 = vunpack.c.l.b16 %v12148
  %v12345 = vunpack.c.l.b16 %v12149
  %v12346 = vunpack.c.l.b16 %v12150
  %v12347 = vunpack.c.l.b16 %v12151
  %v12348 = vunpack.c.l.b16 %v12152
  %v12349 = vunpack.c.l.b16 %v12153
  %v12350 = vunpack.c.l.b16 %v12154
  %v12351 = vunpack.c.l.b16 %v12155
  %v12352 = vunpack.c.l.b16 %v12156
  %v12353 = vunpack.c.l.b16 %v12157
  %v12354 = vunpack.c.l.b16 %v12158
  %v12355 = vunpack.c.l.b16 %v12159
  %v12356 = vunpack.c.l.b16 %v12160
  %v12357 = vunpack.c.l.b16 %v12161
  %v12358 = vunpack.c.l.b16 %v12162
  %v12359 = vunpack.c.l.b16 %v12163
  %v12360 = vunpack.c.l.b16 %v12164
  %v12361 = vunpack.c.l.b16 %v12165
  %v12362 = vunpack.c.l.b16 %v12166
  %v12363 = vunpack.c.l.b16 %v12167
  %v12364 = vunpack.c.l.b16 %v12168
  %v12365 = vunpack.c.l.b16 %v12169
  %v12366 = vunpack.c.l.b16 %v12170
  %v12367 = vunpack.c.l.b16 %v12171
  %v12368 = vunpack.c.l.b16 %v12172
  %v12369 = vunpack.c.l.b16 %v12173
  %v12370 = vunpack.c.l.b16 %v12174
  %v12371 = vunpack.c.l.b16 %v12175
  %v12372 = vunpack.c.l.b16 %v12176
  %v12373 = vunpack.c.l.b16 %v12177
  %v12374 = vunpack.c.l.b16 %v12178
  %v12375 = vunpack.c.l.b16 %v12179
  %v12376 = vunpack.c.l.b16 %v12180
  %v12377 = vunpack.c.l.b16 %v12181
  %v12378 = vunpack.c.l.b16 %v12182
  %v12379 = vunpack.c.l.b16 %v12183
  %v12380 = vunpack.c.l.b16 %v12184
  %v12381 = vunpack.c.l.b16 %v12185
  %v12382 = vunpack.c.l.b16 %v12186
  %v12383 = vunpack.c.l.b16 %v12187
  %v12384 = vunpack.c.l.b16 %v12188
  %v12385 = vunpack.c.l.b16 %v12189
  %v12386 = vunpack.c.l.b16 %v12190
  %v12387 = vunpack.c.l.b16 %v12191
  %v12388 = vunpack.c.l.b16 %v12192
  %v12389 = vunpack.c.l.b16 %v12193
  %v12390 = vunpack.c.l.b16 %v12194
  %v12391 = vunpack.c.l.b16 %v12195
  %v12392 = vunpack.c.l.b16 %v12196
  %v12393 = vunpack.c.l.b16 %v12197
  %v12394 = vunpack.c.l.b16 %v12198
  %v12395 = vunpack.c.l.b16 %v12199
  %v12396 = vunpack.c.l.b16 %v12200
  %v12397 = vunpack.c.l.b16 %v12201
  %v12398 = vunpack.c.l.b16 %v12202
  %v12399 = vunpack.c.l.b16 %v12203
  %v12400 = vunpack.c.l.b16 %v12204
  %v12401 = vunpack.c.l.b16 %v12205
  %v12402 = vunpack.c.l.b16 %v12206
  %v12403 = vunpack.c.l.b16 %v12207
  %v12404 = vunpack.c.l.b16 %v12208
  %v12405 = vunpack.c.l.b16 %v12209
  %v12406 = vunpack.c.l.b16 %v12210
  %v12407 = vunpack.c.l.b16 %v12211
  %v12408 = vunpack.c.l.b16 %v12212
  %v12409 = vunpack.c.l.b16 %v12213
  %v12410 = vunpack.c.l.b16 %v12214
  %v12411 = vunpack.c.l.b16 %v12215
  %v12412 = vunpack.c.l.b16 %v12216
  %v12413 = vunpack.c.l.b16 %v12217
  %v12414 = vunpack.c.l.b16 %v12218
  %v12415 = vunpack.c.l.b16 %v12219
  %v12416 = vunpack.c.l.b16 %v12220
  %v12417 = vunpack.c.l.b16 %v12221
  %v12418 = vunpack.c.l.b16 %v12222
  %v12419 = vunpack.c.l.b16 %v12223
  %v12420 = vunpack.c.l.b16 %v12224
  %v12421 = vunpack.c.l.b16 %v12225
  %v12422 = vunpack.c.l.b16 %v12226
  %v12423 = vunpack.c.l.b16 %v12227
  %v12424 = vunpack.c.l.b16 %v12228
  %v12425 = vunpack.c.l.b16 %v12229
  %v12426 = vunpack.c.l.b16 %v12230
  %v12427 = vunpack.c.l.b16 %v12231
  %v12428 = vunpack.c.l.b16 %v12232
  %v12429 = vunpack.c.l.b16 %v12233
  %v12430 = vpack.c.b16 %v12335, %v12334
  %v12431 = vpack.c.b16 %v12337, %v12336
  %v12432 = vpack.c.b16 %v12339, %v12338
  %v12433 = vpack.c.b16 %v12341, %v12340
  %v12434 = vpack.c.b16 %v12343, %v12342
  %v12435 = vpack.c.b16 %v12345, %v12344
  %v12436 = vpack.c.b16 %v12347, %v12346
  %v12437 = vpack.c.b16 %v12349, %v12348
  %v12438 = vpack.c.b16 %v12351, %v12350
  %v12439 = vpack.c.b16 %v12353, %v12352
  %v12440 = vpack.c.b16 %v12355, %v12354
  %v12441 = vpack.c.b16 %v12357, %v12356
  %v12442 = vpack.c.b16 %v12359, %v12358
  %v12443 = vpack.c.b16 %v12361, %v12360
  %v12444 = vpack.c.b16 %v12363, %v12362
  %v12445 = vpack.c.b16 %v12365, %v12364
  %v12446 = vpack.c.b16 %v12367, %v12366
  %v12447 = vpack.c.b16 %v12369, %v12368
  %v12448 = vpack.c.b16 %v12371, %v12370
  %v12449 = vpack.c.b16 %v12373, %v12372
  %v12450 = vpack.c.b16 %v12375, %v12374
  %v12451 = vpack.c.b16 %v12377, %v12376
  %v12452 = vpack.c.b16 %v12379, %v12378
  %v12453 = vpack.c.b16 %v12381, %v12380
  %v12454 = vpack.c.b16 %v12383, %v12382
  %v12455 = vpack.c.b16 %v12385, %v12384
  %v12456 = vpack.c.b16 %v12387, %v12386
  %v12457 = vpack.c.b16 %v12389, %v12388
  %v12458 = vpack.c.b16 %v12391, %v12390
  %v12459 = vpack.c.b16 %v12393, %v12392
  %v12460 = vpack.c.b16 %v12395, %v12394
  %v12461 = vpack.c.b16 %v12397, %v12396
  %v12462 = vpack.c.b16 %v12399, %v12398
  %v12463 = vpack.c.b16 %v12401, %v12400
  %v12464 = vpack.c.b16 %v12403, %v12402
  %v12465 = vpack.c.b16 %v12405, %v12404
  %v12466 = vpack.c.b16 %v12407, %v12406
  %v12467 = vpack.c.b16 %v12409, %v12408
  %v12468 = vpack.c.b16 %v12411, %v12410
  %v12469 = vpack.c.b16 %v12413, %v12412
  %v12470 = vpack.c.b16 %v12415, %v12414
  %v12471 = vpack.c.b16 %v12417, %v12416
  %v12472 = vpack.c.b16 %v12419, %v12418
  %v12473 = vpack.c.b16 %v12421, %v12420
  %v12474 = vpack.c.b16 %v12423, %v12422
  %v12475 = vpack.c.b16 %v12425, %v12424
  %v12476 = vpack.c.b16 %v12427, %v12426
  %v12477 = vpack.c.b16 %v12429, %v12428
  %12526 = vmatpush.bf16.msra.mxu0 %v12437
  %12527 = vmatpush.bf16.msra.mxu0 %v12436
  %12528 = vmatpush.bf16.msra.mxu0 %v12435
  %12529 = vmatpush.bf16.msra.mxu0 %v12434
  %12530 = vmatpush.bf16.msra.mxu0 %v12433
  %12531 = vmatpush.bf16.msra.mxu0 %v12432
  %12532 = vmatpush.bf16.msra.mxu0 %v12431
  %12533 = vmatpush.bf16.msra.mxu0 %v12430
  %12534 = vmatmul.bf16.gmra.mxu0 %v12132
  %v12535 = vpop.f32.mrf.mxu0
  %v12536 = vadd.f32 %v12236, %v12535
  %v12537 = vpop.f32.mrf.mxu0
  %12538 = vdwg.mxu0
  %12539 = vmatpush.bf16.msra.mxu0 %v12445
  %12540 = vmatpush.bf16.msra.mxu0 %v12444
  %12541 = vmatpush.bf16.msra.mxu0 %v12443
  %12542 = vmatpush.bf16.msra.mxu0 %v12442
  %12543 = vmatpush.bf16.msra.mxu0 %v12441
  %12544 = vmatpush.bf16.msra.mxu0 %v12440
  %12545 = vmatpush.bf16.msra.mxu0 %v12439
  %12546 = vmatpush.bf16.msra.mxu0 %v12438
  %12547 = vmatmul.bf16.gmra.mxu0 %v12133
  %v12548 = vpop.f32.mrf.mxu0
  %v12549 = vadd.f32 %v12536, %v12548
  %v12550 = vpop.f32.mrf.mxu0
  %12551 = vdwg.mxu0
  %12552 = vmatpush.bf16.msra.mxu0 %v12453
  %12553 = vmatpush.bf16.msra.mxu0 %v12452
  %12554 = vmatpush.bf16.msra.mxu0 %v12451
  %12555 = vmatpush.bf16.msra.mxu0 %v12450
  %12556 = vmatpush.bf16.msra.mxu0 %v12449
  %12557 = vmatpush.bf16.msra.mxu0 %v12448
  %12558 = vmatpush.bf16.msra.mxu0 %v12447
  %12559 = vmatpush.bf16.msra.mxu0 %v12446
  %12560 = vmatmul.bf16.gmra.mxu0 %v12134
  %v12561 = vpop.f32.mrf.mxu0
  %v12562 = vadd.f32 %v12549, %v12561
  %v12563 = vpop.f32.mrf.mxu0
  %12564 = vdwg.mxu0
  %12565 = vmatpush.bf16.msra.mxu0 %v12461
  %12566 = vmatpush.bf16.msra.mxu0 %v12460
  %12567 = vmatpush.bf16.msra.mxu0 %v12459
  %12568 = vmatpush.bf16.msra.mxu0 %v12458
  %12569 = vmatpush.bf16.msra.mxu0 %v12457
  %12570 = vmatpush.bf16.msra.mxu0 %v12456
  %12571 = vmatpush.bf16.msra.mxu0 %v12455
  %12572 = vmatpush.bf16.msra.mxu0 %v12454
  %12573 = vmatmul.bf16.gmra.mxu0 %v12135
  %v12574 = vpop.f32.mrf.mxu0
  %v12575 = vadd.f32 %v12562, %v12574
  %v12576 = vpop.f32.mrf.mxu0
  %12577 = vdwg.mxu0
  %12578 = vmatpush.bf16.msra.mxu0 %v12469
  %12579 = vmatpush.bf16.msra.mxu0 %v12468
  %12580 = vmatpush.bf16.msra.mxu0 %v12467
  %12581 = vmatpush.bf16.msra.mxu0 %v12466
  %12582 = vmatpush.bf16.msra.mxu0 %v12465
  %12583 = vmatpush.bf16.msra.mxu0 %v12464
  %12584 = vmatpush.bf16.msra.mxu0 %v12463
  %12585 = vmatpush.bf16.msra.mxu0 %v12462
  %12586 = vmatmul.bf16.gmra.mxu0 %v12136
  %v12587 = vpop.f32.mrf.mxu0
  %v12588 = vadd.f32 %v12575, %v12587
  %v12589 = vpop.f32.mrf.mxu0
  %12590 = vdwg.mxu0
  %12591 = vmatpush.bf16.msra.mxu0 %v12477
  %12592 = vmatpush.bf16.msra.mxu0 %v12476
  %12593 = vmatpush.bf16.msra.mxu0 %v12475
  %12594 = vmatpush.bf16.msra.mxu0 %v12474
  %12595 = vmatpush.bf16.msra.mxu0 %v12473
  %12596 = vmatpush.bf16.msra.mxu0 %v12472
  %12597 = vmatpush.bf16.msra.mxu0 %v12471
  %12598 = vmatpush.bf16.msra.mxu0 %v12470
  %12599 = vmatmul.bf16.gmra.mxu0 %v12137
  %v12600 = vpop.f32.mrf.mxu0
  %v12601 = vadd.f32 %v12588, %v12600
  %v12602 = vpop.f32.mrf.mxu0
  %12603 = vdwg.mxu0
  %v12604 = vmax.f32 %v12601, 0.0
  %12606 = vrot.lane.b32.xlu0 %v12604, 32
  %v12607 = vpop.permute.xlu0 %12606
  %vm12609 = vcmask 261120
  %v12610 = vsel %vm12609, %v11787, %v12607
  %v12611 = vpack.c.bf16 %v12610, %v12610
  %v12612 = vld [vmem:[%s6] sm:$0xf]
  %v12613 = vld [vmem:[%s6 + $0x4] sm:$0xf]
  %v12614 = vld [vmem:[%s6 + $0x8] sm:$0xf]
  %v12615 = vld [vmem:[%s6 + $0xc] sm:$0xf]
  %v12616 = vld [vmem:[%s6 + $0x10] sm:$0xf]
  %v12617 = vld [vmem:[%s6 + $0x14] sm:$0xf]
  %v12618 = vld [vmem:[%s6 + $0x18] sm:$0xf]
  %v12619 = vld [vmem:[%s6 + $0x1c] sm:$0xf]
  %v12620 = vld [vmem:[%s7] sm:$0x1]
  %v12622 = vperm.slane %v12620, 0
  %v12632 = vunpack.c.l.b16 %v12612
  %v12633 = vunpack.c.l.b16 %v12613
  %v12634 = vunpack.c.l.b16 %v12614
  %v12635 = vunpack.c.l.b16 %v12615
  %v12636 = vunpack.c.l.b16 %v12616
  %v12637 = vunpack.c.l.b16 %v12617
  %v12638 = vunpack.c.l.b16 %v12618
  %v12639 = vunpack.c.l.b16 %v12619
  %v12640 = vpack.c.b16 %v12633, %v12632
  %v12641 = vpack.c.b16 %v12635, %v12634
  %v12642 = vpack.c.b16 %v12637, %v12636
  %v12643 = vpack.c.b16 %v12639, %v12638
  %v12649 = vsel %vm3151, %v12611, 0
  %12651 = vmatpush.bf16.msra.mxu0 0
  %12652 = vmatpush.bf16.msra.mxu0 0
  %12653 = vmatpush.bf16.msra.mxu0 0
  %12654 = vmatpush.bf16.msra.mxu0 0
  %12655 = vmatpush.bf16.msra.mxu0 %v12643
  %12656 = vmatpush.bf16.msra.mxu0 %v12642
  %12657 = vmatpush.bf16.msra.mxu0 %v12641
  %12658 = vmatpush.bf16.msra.mxu0 %v12640
  %12659 = vmatmul.bf16.gmra.mxu0 %v12649
  %v12660 = vpop.f32.mrf.mxu0
  %v12661 = vadd.f32 %v12622, %v12660
  %v12662 = vpop.f32.mrf.mxu0
  %12663 = vdwg.mxu0
  %v12664 = vsel %vm12609, %v12661, 0.0
  %12665 = vst [vmem:[%s11] sm:$0x3] %v12664
  // Predicated region
  $region46: #{contrastive_forward.1} parent=0 // pred_check
    _
  $region47: #{contrastive_forward.1} parent=0 // pred_check_branch
    %12667 = sbr.rel (0) target = $region49
  $region48: #{contrastive_forward.1} parent=0 // pred_region
    _
  $region49: #{contrastive_forward.1} parent=0 // pred_fallthru
    _
  // Predicated region
  $region50: #{contrastive_forward.1} parent=0 // pred_check
    _
  $region51: #{contrastive_forward.1} parent=0 // pred_check_branch
    %12669 = sbr.rel (0) target = $region53
  $region52: #{contrastive_forward.1} parent=0 // pred_region
    _
  $region53: #{contrastive_forward.1} parent=0 // pred_fallthru
    _

</llo_original>
